<compile_context>
chip_gen: v7x
topology: tpu7x:2x2x1
jax: 0.10.0
libtpu: 0.0.40
codegen_flags: <defaults>
</compile_context>

<pallas_src>
import functools
import math

import jax
import jax.numpy as jnp
from jax.experimental import pallas as pl
from jax.experimental.pallas import tpu as pltpu  # noqa: F401  (TPU backend)


# ------------------------- configuration (small, deterministic) -------------
class Configs:
    enc_in = 4
    seq_len = 16
    pred_len = 8
    e_layers = 2
    n_heads = 2
    d_model = 32
    d_ff = 64
    dropout = 0.0
    fc_dropout = 0.0
    head_dropout = 0.0
    individual = 0
    patch_len = 4
    stride = 4
    padding_patch = "end"
    revin = 1
    affine = 0
    subtract_last = 0
    use_nys = 0
    ablation = 0
    cf_dim = 16
    cf_depth = 1
    cf_heads = 2
    cf_mlp = 32
    cf_head_dim = 8
    cf_drop = 0.0
    mlp_hidden = 32
    mlp_drop = 0.0


CFG = Configs()
BN_EPS = 1e-5
BN_SCALE = 1.0 / math.sqrt(1.0 + BN_EPS)  # eval-mode BatchNorm1d with fresh stats
REVIN_EPS = 1e-5


def _gelu_exact(x):
    # nn.GELU() exact (erf) form.  erf is evaluated with the Abramowitz-Stegun
    # 7.1.26 polynomial (|err| < 1.5e-7) so the kernel only needs
    # exp / mul / add / div / where — all guaranteed to lower in Mosaic.
    a1, a2, a3 = 0.254829592, -0.284496736, 1.421413741
    a4, a5, pc = -1.453152027, 1.061405429, 0.3275911
    u = x * 0.7071067811865476  # x / sqrt(2)
    au = jnp.abs(u)
    t = 1.0 / (1.0 + pc * au)
    poly = ((((a5 * t + a4) * t + a3) * t + a2) * t + a1) * t
    erf_abs = 1.0 - poly * jnp.exp(-au * au)
    erf = jnp.where(u >= 0, erf_abs, -erf_abs)
    return 0.5 * x * (1.0 + erf)


# ------------------------- fused backbone kernel -----------------------------
def _backbone_kernel(
    x_ref, wp_ref, bp_ref, wpos_ref,
    wqkv_ref, bqkv_ref, wo_ref, bo_ref,
    w1_ref, b1_ref, w2_ref, b2_ref,
    wh_ref, bh_ref, o_ref,
    *, bc, seq_len, patch_len, stride, patch_num,
    d_model, n_heads, e_layers, pred_len,
):
    dh = d_model // n_heads
    scale = dh ** -0.5

    x = x_ref[...]                                        # [bc, seq_len]

    # ---- RevIN normalize (per series, over time; unbiased=False, affine off) ----
    m = jnp.mean(x, axis=-1, keepdims=True)               # [bc, 1]
    var = jnp.mean((x - m) ** 2, axis=-1, keepdims=True)
    std = jnp.sqrt(var + REVIN_EPS)
    z = (x - m) / std                                     # [bc, seq_len]

    # ---- ReplicationPad1d((0, stride)) + unfold(-1, patch_len, stride) ----
    last = jnp.broadcast_to(z[:, seq_len - 1:seq_len], (bc, stride))
    z_pad = jnp.concatenate([z, last], axis=-1)           # [bc, seq_len + stride]
    patches = jnp.stack(
        [z_pad[:, p * stride:p * stride + patch_len] for p in range(patch_num)],
        axis=1)                                           # [bc, patch_num, patch_len]

    # ---- broadcast every weight ONCE over the series axis so all matmuls below
    #      use the well-supported 3-D batched-einsum pattern (hoisted out of the
    #      layer loop; broadcast_in_dim is not CSE'd by JAX) ----
    def bcast(w):
        return jnp.broadcast_to(w[None], (bc,) + w.shape)

    wp_b = bcast(wp_ref[...])                             # [bc, patch_len, d_model]
    wqkv_b = [bcast(wqkv_ref[l]) for l in range(e_layers)]
    wo_b = [bcast(wo_ref[l]) for l in range(e_layers)]
    w1_b = [bcast(w1_ref[l]) for l in range(e_layers)]
    w2_b = [bcast(w2_ref[l]) for l in range(e_layers)]

    # ---- patch embedding + learnable positional embedding ("zeros" init) ----
    tok = jnp.einsum("bpl,bld->bpd", patches, wp_b,
                     preferred_element_type=jnp.float32)
    tok = tok + bp_ref[...] + wpos_ref[...][None]         # [bc, patch_num, d_model]

    # ---- Transformer encoder (res_attention, eval BatchNorm, GELU FFN) ----
    prev = [None] * n_heads  # pre-softmax scores carried across layers (per head)
    for l in range(e_layers):
        qkv = jnp.einsum("bpd,bde->bpe", tok, wqkv_b[l],
                         preferred_element_type=jnp.float32) + bqkv_ref[l]

        head_outs = []
        for h in range(n_heads):
            qh = qkv[:, :, h * dh:(h + 1) * dh]
            kh = qkv[:, :, d_model + h * dh:d_model + (h + 1) * dh]
            vh = qkv[:, :, 2 * d_model + h * dh:2 * d_model + (h + 1) * dh]
            s = jnp.einsum("bqd,bkd->bqk", qh, kh,
                           preferred_element_type=jnp.float32) * scale
            if prev[h] is not None:                       # residual attention
                s = s + prev[h]
            prev[h] = s
            s = s - jnp.max(s, axis=-1, keepdims=True)
            p_att = jnp.exp(s)
            p_att = p_att / jnp.sum(p_att, axis=-1, keepdims=True)
            head_outs.append(
                jnp.einsum("bqk,bkd->bqd", p_att, vh,
                           preferred_element_type=jnp.float32))
        attn = jnp.concatenate(head_outs, axis=-1)        # [bc, patch_num, d_model]

        src2 = jnp.einsum("bpd,bde->bpe", attn, wo_b[l],
                          preferred_element_type=jnp.float32) + bo_ref[l]
        tok = (tok + src2) * BN_SCALE                     # eval-mode BatchNorm1d

        ff = jnp.einsum("bpd,bde->bpe", tok, w1_b[l],
                        preferred_element_type=jnp.float32) + b1_ref[l]
        ff = _gelu_exact(ff)
        ff = jnp.einsum("bpd,bde->bpe", ff, w2_b[l],
                        preferred_element_type=jnp.float32) + b2_ref[l]
        tok = (tok + ff) * BN_SCALE                       # eval-mode BatchNorm1d

    # ---- flatten head (W_head rows pre-permuted to (patch, d_model) order) ----
    out = jnp.zeros((bc, pred_len), jnp.float32)
    for p in range(patch_num):
        out = out + jnp.dot(tok[:, p, :],
                            wh_ref[p * d_model:(p + 1) * d_model, :],
                            preferred_element_type=jnp.float32)
    out = out + bh_ref[...]

    # ---- RevIN de-normalize (affine disabled) ----
    o_ref[...] = (out * std + m).astype(o_ref.dtype)


# ------------------------- parameter init (deterministic) -------------------
def init_linear(key, fan_in, fan_out):
    k1, k2 = jax.random.split(key)
    bound = 1.0 / math.sqrt(fan_in)
    w = jax.random.uniform(k1, (fan_in, fan_out), jnp.float32, -bound, bound)
    b = jax.random.uniform(k2, (fan_out,), jnp.float32, -bound, bound)
    return w, b


def init_params(key):
    cfg = CFG
    D, PL_, ST, DFF, E = cfg.d_model, cfg.patch_len, cfg.stride, cfg.d_ff, cfg.e_layers
    PN = (cfg.seq_len - PL_) // ST + 1 + (1 if cfg.padding_patch == "end" else 0)
    keys = jax.random.split(key, 3 + E)
    params = {}

    w_p, b_p = init_linear(keys[0], PL_, D)
    params["W_P"] = w_p
    params["b_P"] = b_p[None, :]
    params["W_pos"] = jax.random.uniform(keys[1], (PN, D), jnp.float32, -0.02, 0.02)

    # Flatten head weight: generated in PyTorch's (d_model, patch_num) row order,
    # then permuted ONCE at init to (patch_num, d_model) order so the kernel can
    # consume the natural [.., patch, d_model] layout with no runtime transpose.
    w_head, b_head = init_linear(keys[2], D * PN, cfg.pred_len)
    params["W_head"] = (w_head.reshape(D, PN, cfg.pred_len)
                        .transpose(1, 0, 2).reshape(PN * D, cfg.pred_len))
    params["b_head"] = b_head[None, :]

    Wqkv, bqkv, Wo, bo, W1, b1, W2, b2 = ([] for _ in range(8))
    for l in range(E):
        lk = jax.random.split(keys[3 + l], 6)
        wq, bq_ = init_linear(lk[0], D, D)
        wk, bk_ = init_linear(lk[1], D, D)
        wv, bv_ = init_linear(lk[2], D, D)
        wo_, bo_ = init_linear(lk[3], D, D)
        w1_, b1_ = init_linear(lk[4], D, DFF)
        w2_, b2_ = init_linear(lk[5], DFF, D)
        Wqkv.append(jnp.concatenate([wq, wk, wv], axis=1))        # [D, 3D] fused QKV
        bqkv.append(jnp.concatenate([bq_, bk_, bv_])[None, :])    # [1, 3D]
        Wo.append(wo_); bo.append(bo_[None, :])
        W1.append(w1_); b1.append(b1_[None, :])
        W2.append(w2_); b2.append(b2_[None, :])
    params["Wqkv"] = jnp.stack(Wqkv)
    params["bqkv"] = jnp.stack(bqkv)
    params["Wo"] = jnp.stack(Wo)
    params["bo"] = jnp.stack(bo)
    params["W1"] = jnp.stack(W1)
    params["b1"] = jnp.stack(b1)
    params["W2"] = jnp.stack(W2)
    params["b2"] = jnp.stack(b2)
    return params


# ------------------------- forward pass (single grid-less pallas_call) -------
def mftnet_forward(params, x):
    # x: [B, seq_len, enc_in]  (layout the PyTorch module receives)
    cfg = CFG
    B, L, C = x.shape
    D, H, E = cfg.d_model, cfg.n_heads, cfg.e_layers
    PL_, ST, P = cfg.patch_len, cfg.stride, cfg.pred_len
    PN = (L - PL_) // ST + 1 + (1 if cfg.padding_patch == "end" else 0)
    BC = B * C

    # [B, L, C] -> [B, C, L] -> [BC, L]  (layout plumbing only, outside the kernel)
    xz = jnp.transpose(x, (0, 2, 1)).astype(jnp.float32).reshape(BC, L)

    kernel = functools.partial(
        _backbone_kernel,
        bc=BC, seq_len=L, patch_len=PL_, stride=ST, patch_num=PN,
        d_model=D, n_heads=H, e_layers=E, pred_len=P)

    # Single grid-less pallas_call: whole model (~75 KB of weights + activations)
    # is VMEM resident, one input DMA, one output write-back.  NB=1 on every TPU
    # generation — the per-step grid overhead outweighs any 2-TC sharding gain at
    # these shapes (per perf review).
    out = pl.pallas_call(
        kernel,
        out_shape=jax.ShapeDtypeStruct((BC, P), jnp.float32),
    )(xz, params["W_P"], params["b_P"], params["W_pos"],
      params["Wqkv"], params["bqkv"], params["Wo"], params["bo"],
      params["W1"], params["b1"], params["W2"], params["b2"],
      params["W_head"], params["b_head"])

    out = out.reshape(B, C, P)
    return jnp.transpose(out, (0, 2, 1))  # [B, pred_len, enc_in]


# ------------------------- run ------------------------------------------------
if __name__ == "__main__":
    key = jax.random.PRNGKey(0)
    pkey, xkey = jax.random.split(key)
    params = init_params(pkey)
    x = jax.random.normal(xkey, (2, CFG.seq_len, CFG.enc_in), jnp.float32)

    fwd = jax.jit(mftnet_forward)
    y = fwd(params, x)
    jax.block_until_ready(y)
    assert y.shape == (2, CFG.pred_len, CFG.enc_in), y.shape
    assert bool(jnp.all(jnp.isfinite(y)))
    print("KERNEL_OK")
</pallas_src>

<mosaic_0001>
module attributes {stable_mosaic.version = 11 : i64} {
  func.func @_backbone_kernel(%arg0: memref<8x16xf32, #tpu.memory_space<vmem>>, %arg1: memref<4x32xf32, #tpu.memory_space<vmem>>, %arg2: memref<1x32xf32, #tpu.memory_space<vmem>>, %arg3: memref<5x32xf32, #tpu.memory_space<vmem>>, %arg4: memref<2x32x96xf32, #tpu.memory_space<vmem>>, %arg5: memref<2x1x96xf32, #tpu.memory_space<vmem>>, %arg6: memref<2x32x32xf32, #tpu.memory_space<vmem>>, %arg7: memref<2x1x32xf32, #tpu.memory_space<vmem>>, %arg8: memref<2x32x64xf32, #tpu.memory_space<vmem>>, %arg9: memref<2x1x64xf32, #tpu.memory_space<vmem>>, %arg10: memref<2x64x32xf32, #tpu.memory_space<vmem>>, %arg11: memref<2x1x32xf32, #tpu.memory_space<vmem>>, %arg12: memref<160x8xf32, #tpu.memory_space<vmem>>, %arg13: memref<1x8xf32, #tpu.memory_space<vmem>>, %arg14: memref<8x8xf32, #tpu.memory_space<vmem>>) attributes {dimension_semantics = [], scalar_prefetch = 0 : i64, scratch_operands = 0 : i64, tpu.core_type = #tpu.core_type<tc>} {
    %c0 = arith.constant 0 : index
    %c0_0 = arith.constant 0 : index
    %0 = vector.load %arg0[%c0, %c0_0] : memref<8x16xf32, #tpu.memory_space<vmem>>, vector<8x16xf32>
    %cst = arith.constant dense<0.000000e+00> : vector<8xf32>
    %1 = vector.multi_reduction <add>, %0, %cst [1] : vector<8x16xf32> to vector<8xf32>
    %2 = vector.shape_cast %1 : vector<8xf32> to vector<8x1xf32>
    %cst_1 = arith.constant 1.600000e+01 : f32
    %3 = vector.broadcast %cst_1 : f32 to vector<8x1xf32>
    %4 = arith.divf %2, %3 : vector<8x1xf32>
    %5 = vector.broadcast %4 : vector<8x1xf32> to vector<8x16xf32>
    %6 = arith.subf %0, %5 : vector<8x16xf32>
    %7 = arith.mulf %6, %6 : vector<8x16xf32>
    %cst_2 = arith.constant dense<0.000000e+00> : vector<8xf32>
    %8 = vector.multi_reduction <add>, %7, %cst_2 [1] : vector<8x16xf32> to vector<8xf32>
    %9 = vector.shape_cast %8 : vector<8xf32> to vector<8x1xf32>
    %cst_3 = arith.constant 1.600000e+01 : f32
    %10 = vector.broadcast %cst_3 : f32 to vector<8x1xf32>
    %11 = arith.divf %9, %10 : vector<8x1xf32>
    %cst_4 = arith.constant 9.99999974E-6 : f32
    %12 = vector.broadcast %cst_4 : f32 to vector<8x1xf32>
    %13 = arith.addf %11, %12 : vector<8x1xf32>
    %14 = math.sqrt %13 : vector<8x1xf32>
    %15 = vector.broadcast %4 : vector<8x1xf32> to vector<8x16xf32>
    %16 = arith.subf %0, %15 : vector<8x16xf32>
    %17 = vector.broadcast %14 : vector<8x1xf32> to vector<8x16xf32>
    %18 = arith.divf %16, %17 : vector<8x16xf32>
    %19 = vector.extract_strided_slice %18 {offsets = [0, 15], sizes = [8, 1], strides = [1, 1]} : vector<8x16xf32> to vector<8x1xf32>
    %20 = vector.shape_cast %19 : vector<8x1xf32> to vector<8x1xf32>
    %21 = vector.broadcast %20 : vector<8x1xf32> to vector<8x4xf32>
    %22 = tpu.concatenate %18, %21 in 1 : vector<8x16xf32>, vector<8x4xf32> -> vector<8x20xf32>
    %23 = vector.extract_strided_slice %22 {offsets = [0, 0], sizes = [8, 4], strides = [1, 1]} : vector<8x20xf32> to vector<8x4xf32>
    %24 = vector.extract_strided_slice %22 {offsets = [0, 4], sizes = [8, 4], strides = [1, 1]} : vector<8x20xf32> to vector<8x4xf32>
    %25 = vector.extract_strided_slice %22 {offsets = [0, 8], sizes = [8, 4], strides = [1, 1]} : vector<8x20xf32> to vector<8x4xf32>
    %26 = vector.extract_strided_slice %22 {offsets = [0, 12], sizes = [8, 4], strides = [1, 1]} : vector<8x20xf32> to vector<8x4xf32>
    %27 = vector.extract_strided_slice %22 {offsets = [0, 16], sizes = [8, 4], strides = [1, 1]} : vector<8x20xf32> to vector<8x4xf32>
    %28 = vector.shape_cast %23 : vector<8x4xf32> to vector<8x1x4xf32>
    %29 = vector.shape_cast %24 : vector<8x4xf32> to vector<8x1x4xf32>
    %30 = vector.shape_cast %25 : vector<8x4xf32> to vector<8x1x4xf32>
    %31 = vector.shape_cast %26 : vector<8x4xf32> to vector<8x1x4xf32>
    %32 = vector.shape_cast %27 : vector<8x4xf32> to vector<8x1x4xf32>
    %33 = tpu.concatenate %28, %29, %30, %31, %32 in 1 : vector<8x1x4xf32>, vector<8x1x4xf32>, vector<8x1x4xf32>, vector<8x1x4xf32>, vector<8x1x4xf32> -> vector<8x5x4xf32>
    %c0_5 = arith.constant 0 : index
    %c0_6 = arith.constant 0 : index
    %34 = vector.load %arg1[%c0_5, %c0_6] : memref<4x32xf32, #tpu.memory_space<vmem>>, vector<4x32xf32>
    %35 = vector.shape_cast %34 : vector<4x32xf32> to vector<1x4x32xf32>
    %36 = vector.shape_cast %35 : vector<1x4x32xf32> to vector<1x4x32xf32>
    %37 = vector.broadcast %36 : vector<1x4x32xf32> to vector<8x4x32xf32>
    %c0_7 = arith.constant 0 : index
    %c0_8 = arith.constant 0 : index
    %c0_9 = arith.constant 0 : index
    %38 = vector.load %arg4[%c0_7, %c0_8, %c0_9] : memref<2x32x96xf32, #tpu.memory_space<vmem>>, vector<1x32x96xf32>
    %39 = vector.shape_cast %38 : vector<1x32x96xf32> to vector<32x96xf32>
    %40 = vector.shape_cast %39 : vector<32x96xf32> to vector<1x32x96xf32>
    %41 = vector.shape_cast %40 : vector<1x32x96xf32> to vector<1x32x96xf32>
    %42 = vector.broadcast %41 : vector<1x32x96xf32> to vector<8x32x96xf32>
    %c1 = arith.constant 1 : index
    %c0_10 = arith.constant 0 : index
    %c0_11 = arith.constant 0 : index
    %43 = vector.load %arg4[%c1, %c0_10, %c0_11] : memref<2x32x96xf32, #tpu.memory_space<vmem>>, vector<1x32x96xf32>
    %44 = vector.shape_cast %43 : vector<1x32x96xf32> to vector<32x96xf32>
    %45 = vector.shape_cast %44 : vector<32x96xf32> to vector<1x32x96xf32>
    %46 = vector.shape_cast %45 : vector<1x32x96xf32> to vector<1x32x96xf32>
    %47 = vector.broadcast %46 : vector<1x32x96xf32> to vector<8x32x96xf32>
    %c0_12 = arith.constant 0 : index
    %c0_13 = arith.constant 0 : index
    %c0_14 = arith.constant 0 : index
    %48 = vector.load %arg6[%c0_12, %c0_13, %c0_14] : memref<2x32x32xf32, #tpu.memory_space<vmem>>, vector<1x32x32xf32>
    %49 = vector.shape_cast %48 : vector<1x32x32xf32> to vector<32x32xf32>
    %50 = vector.shape_cast %49 : vector<32x32xf32> to vector<1x32x32xf32>
    %51 = vector.shape_cast %50 : vector<1x32x32xf32> to vector<1x32x32xf32>
    %52 = vector.broadcast %51 : vector<1x32x32xf32> to vector<8x32x32xf32>
    %c1_15 = arith.constant 1 : index
    %c0_16 = arith.constant 0 : index
    %c0_17 = arith.constant 0 : index
    %53 = vector.load %arg6[%c1_15, %c0_16, %c0_17] : memref<2x32x32xf32, #tpu.memory_space<vmem>>, vector<1x32x32xf32>
    %54 = vector.shape_cast %53 : vector<1x32x32xf32> to vector<32x32xf32>
    %55 = vector.shape_cast %54 : vector<32x32xf32> to vector<1x32x32xf32>
    %56 = vector.shape_cast %55 : vector<1x32x32xf32> to vector<1x32x32xf32>
    %57 = vector.broadcast %56 : vector<1x32x32xf32> to vector<8x32x32xf32>
    %c0_18 = arith.constant 0 : index
    %c0_19 = arith.constant 0 : index
    %c0_20 = arith.constant 0 : index
    %58 = vector.load %arg8[%c0_18, %c0_19, %c0_20] : memref<2x32x64xf32, #tpu.memory_space<vmem>>, vector<1x32x64xf32>
    %59 = vector.shape_cast %58 : vector<1x32x64xf32> to vector<32x64xf32>
    %60 = vector.shape_cast %59 : vector<32x64xf32> to vector<1x32x64xf32>
    %61 = vector.shape_cast %60 : vector<1x32x64xf32> to vector<1x32x64xf32>
    %62 = vector.broadcast %61 : vector<1x32x64xf32> to vector<8x32x64xf32>
    %c1_21 = arith.constant 1 : index
    %c0_22 = arith.constant 0 : index
    %c0_23 = arith.constant 0 : index
    %63 = vector.load %arg8[%c1_21, %c0_22, %c0_23] : memref<2x32x64xf32, #tpu.memory_space<vmem>>, vector<1x32x64xf32>
    %64 = vector.shape_cast %63 : vector<1x32x64xf32> to vector<32x64xf32>
    %65 = vector.shape_cast %64 : vector<32x64xf32> to vector<1x32x64xf32>
    %66 = vector.shape_cast %65 : vector<1x32x64xf32> to vector<1x32x64xf32>
    %67 = vector.broadcast %66 : vector<1x32x64xf32> to vector<8x32x64xf32>
    %c0_24 = arith.constant 0 : index
    %c0_25 = arith.constant 0 : index
    %c0_26 = arith.constant 0 : index
    %68 = vector.load %arg10[%c0_24, %c0_25, %c0_26] : memref<2x64x32xf32, #tpu.memory_space<vmem>>, vector<1x64x32xf32>
    %69 = vector.shape_cast %68 : vector<1x64x32xf32> to vector<64x32xf32>
    %70 = vector.shape_cast %69 : vector<64x32xf32> to vector<1x64x32xf32>
    %71 = vector.shape_cast %70 : vector<1x64x32xf32> to vector<1x64x32xf32>
    %72 = vector.broadcast %71 : vector<1x64x32xf32> to vector<8x64x32xf32>
    %c1_27 = arith.constant 1 : index
    %c0_28 = arith.constant 0 : index
    %c0_29 = arith.constant 0 : index
    %73 = vector.load %arg10[%c1_27, %c0_28, %c0_29] : memref<2x64x32xf32, #tpu.memory_space<vmem>>, vector<1x64x32xf32>
    %74 = vector.shape_cast %73 : vector<1x64x32xf32> to vector<64x32xf32>
    %75 = vector.shape_cast %74 : vector<64x32xf32> to vector<1x64x32xf32>
    %76 = vector.shape_cast %75 : vector<1x64x32xf32> to vector<1x64x32xf32>
    %77 = vector.broadcast %76 : vector<1x64x32xf32> to vector<8x64x32xf32>
    "tpu.trace_start"() <{level = 10 : i32, message = "bpl,bld->bpd"}> : () -> ()
    %cst_30 = arith.constant dense<0.000000e+00> : vector<8x5x32xf32>
    %78 = tpu.matmul %33, %37, %cst_30 {dimension_numbers = #tpu.dot_dimension_numbers<[2], [1], [1], [2], [0, 0, 0, 1, 1, 2], [0], [0]>} : vector<8x5x4xf32>, vector<8x4x32xf32>, vector<8x5x32xf32> -> vector<8x5x32xf32>
    "tpu.trace_stop"() : () -> ()
    %c0_31 = arith.constant 0 : index
    %c0_32 = arith.constant 0 : index
    %79 = vector.load %arg2[%c0_31, %c0_32] : memref<1x32xf32, #tpu.memory_space<vmem>>, vector<1x32xf32>
    %80 = vector.shape_cast %79 : vector<1x32xf32> to vector<1x1x32xf32>
    %81 = vector.broadcast %80 : vector<1x1x32xf32> to vector<8x5x32xf32>
    %82 = arith.addf %78, %81 : vector<8x5x32xf32>
    %c0_33 = arith.constant 0 : index
    %c0_34 = arith.constant 0 : index
    %83 = vector.load %arg3[%c0_33, %c0_34] : memref<5x32xf32, #tpu.memory_space<vmem>>, vector<5x32xf32>
    %84 = vector.shape_cast %83 : vector<5x32xf32> to vector<1x5x32xf32>
    %85 = vector.broadcast %84 : vector<1x5x32xf32> to vector<8x5x32xf32>
    %86 = arith.addf %82, %85 : vector<8x5x32xf32>
    "tpu.trace_start"() <{level = 10 : i32, message = "bpd,bde->bpe"}> : () -> ()
    %cst_35 = arith.constant dense<0.000000e+00> : vector<8x5x96xf32>
    %87 = tpu.matmul %86, %42, %cst_35 {dimension_numbers = #tpu.dot_dimension_numbers<[2], [1], [1], [2], [0, 0, 0, 1, 1, 2], [0], [0]>} : vector<8x5x32xf32>, vector<8x32x96xf32>, vector<8x5x96xf32> -> vector<8x5x96xf32>
    "tpu.trace_stop"() : () -> ()
    %c0_36 = arith.constant 0 : index
    %c0_37 = arith.constant 0 : index
    %c0_38 = arith.constant 0 : index
    %88 = vector.load %arg5[%c0_36, %c0_37, %c0_38] : memref<2x1x96xf32, #tpu.memory_space<vmem>>, vector<1x1x96xf32>
    %89 = vector.shape_cast %88 : vector<1x1x96xf32> to vector<1x96xf32>
    %90 = vector.shape_cast %89 : vector<1x96xf32> to vector<1x1x96xf32>
    %91 = vector.broadcast %90 : vector<1x1x96xf32> to vector<8x5x96xf32>
    %92 = arith.addf %87, %91 : vector<8x5x96xf32>
    %93 = vector.extract_strided_slice %92 {offsets = [0, 0, 0], sizes = [8, 5, 16], strides = [1, 1, 1]} : vector<8x5x96xf32> to vector<8x5x16xf32>
    %94 = vector.extract_strided_slice %92 {offsets = [0, 0, 32], sizes = [8, 5, 16], strides = [1, 1, 1]} : vector<8x5x96xf32> to vector<8x5x16xf32>
    %95 = vector.extract_strided_slice %92 {offsets = [0, 0, 64], sizes = [8, 5, 16], strides = [1, 1, 1]} : vector<8x5x96xf32> to vector<8x5x16xf32>
    "tpu.trace_start"() <{level = 10 : i32, message = "bqd,bkd->bqk"}> : () -> ()
    %cst_39 = arith.constant dense<0.000000e+00> : vector<8x5x5xf32>
    %96 = tpu.matmul %93, %94, %cst_39 {dimension_numbers = #tpu.dot_dimension_numbers<[2], [2], [1], [1], [0, 0, 0, 1, 1, 1], [0], [0]>} : vector<8x5x16xf32>, vector<8x5x16xf32>, vector<8x5x5xf32> -> vector<8x5x5xf32>
    "tpu.trace_stop"() : () -> ()
    %cst_40 = arith.constant 2.500000e-01 : f32
    %97 = vector.broadcast %cst_40 : f32 to vector<8x5x5xf32>
    %98 = arith.mulf %96, %97 : vector<8x5x5xf32>
    %cst_41 = arith.constant dense<0xFF800000> : vector<8x5xf32>
    %99 = vector.multi_reduction <maximumf>, %98, %cst_41 [2] : vector<8x5x5xf32> to vector<8x5xf32>
    %100 = vector.shape_cast %99 : vector<8x5xf32> to vector<8x5x1xf32>
    %101 = vector.broadcast %100 : vector<8x5x1xf32> to vector<8x5x5xf32>
    %102 = arith.subf %98, %101 : vector<8x5x5xf32>
    %103 = math.exp %102 : vector<8x5x5xf32>
    %cst_42 = arith.constant dense<0.000000e+00> : vector<8x5xf32>
    %104 = vector.multi_reduction <add>, %103, %cst_42 [2] : vector<8x5x5xf32> to vector<8x5xf32>
    %105 = vector.shape_cast %104 : vector<8x5xf32> to vector<8x5x1xf32>
    %106 = vector.broadcast %105 : vector<8x5x1xf32> to vector<8x5x5xf32>
    %107 = arith.divf %103, %106 : vector<8x5x5xf32>
    "tpu.trace_start"() <{level = 10 : i32, message = "bqk,bkd->bqd"}> : () -> ()
    %cst_43 = arith.constant dense<0.000000e+00> : vector<8x5x16xf32>
    %108 = tpu.matmul %107, %95, %cst_43 {dimension_numbers = #tpu.dot_dimension_numbers<[2], [1], [1], [2], [0, 0, 0, 1, 1, 2], [0], [0]>} : vector<8x5x5xf32>, vector<8x5x16xf32>, vector<8x5x16xf32> -> vector<8x5x16xf32>
    "tpu.trace_stop"() : () -> ()
    %109 = vector.extract_strided_slice %92 {offsets = [0, 0, 16], sizes = [8, 5, 16], strides = [1, 1, 1]} : vector<8x5x96xf32> to vector<8x5x16xf32>
    %110 = vector.extract_strided_slice %92 {offsets = [0, 0, 48], sizes = [8, 5, 16], strides = [1, 1, 1]} : vector<8x5x96xf32> to vector<8x5x16xf32>
    %111 = vector.extract_strided_slice %92 {offsets = [0, 0, 80], sizes = [8, 5, 16], strides = [1, 1, 1]} : vector<8x5x96xf32> to vector<8x5x16xf32>
    "tpu.trace_start"() <{level = 10 : i32, message = "bqd,bkd->bqk"}> : () -> ()
    %cst_44 = arith.constant dense<0.000000e+00> : vector<8x5x5xf32>
    %112 = tpu.matmul %109, %110, %cst_44 {dimension_numbers = #tpu.dot_dimension_numbers<[2], [2], [1], [1], [0, 0, 0, 1, 1, 1], [0], [0]>} : vector<8x5x16xf32>, vector<8x5x16xf32>, vector<8x5x5xf32> -> vector<8x5x5xf32>
    "tpu.trace_stop"() : () -> ()
    %cst_45 = arith.constant 2.500000e-01 : f32
    %113 = vector.broadcast %cst_45 : f32 to vector<8x5x5xf32>
    %114 = arith.mulf %112, %113 : vector<8x5x5xf32>
    %cst_46 = arith.constant dense<0xFF800000> : vector<8x5xf32>
    %115 = vector.multi_reduction <maximumf>, %114, %cst_46 [2] : vector<8x5x5xf32> to vector<8x5xf32>
    %116 = vector.shape_cast %115 : vector<8x5xf32> to vector<8x5x1xf32>
    %117 = vector.broadcast %116 : vector<8x5x1xf32> to vector<8x5x5xf32>
    %118 = arith.subf %114, %117 : vector<8x5x5xf32>
    %119 = math.exp %118 : vector<8x5x5xf32>
    %cst_47 = arith.constant dense<0.000000e+00> : vector<8x5xf32>
    %120 = vector.multi_reduction <add>, %119, %cst_47 [2] : vector<8x5x5xf32> to vector<8x5xf32>
    %121 = vector.shape_cast %120 : vector<8x5xf32> to vector<8x5x1xf32>
    %122 = vector.broadcast %121 : vector<8x5x1xf32> to vector<8x5x5xf32>
    %123 = arith.divf %119, %122 : vector<8x5x5xf32>
    "tpu.trace_start"() <{level = 10 : i32, message = "bqk,bkd->bqd"}> : () -> ()
    %cst_48 = arith.constant dense<0.000000e+00> : vector<8x5x16xf32>
    %124 = tpu.matmul %123, %111, %cst_48 {dimension_numbers = #tpu.dot_dimension_numbers<[2], [1], [1], [2], [0, 0, 0, 1, 1, 2], [0], [0]>} : vector<8x5x5xf32>, vector<8x5x16xf32>, vector<8x5x16xf32> -> vector<8x5x16xf32>
    "tpu.trace_stop"() : () -> ()
    %125 = tpu.concatenate %108, %124 in 2 : vector<8x5x16xf32>, vector<8x5x16xf32> -> vector<8x5x32xf32>
    "tpu.trace_start"() <{level = 10 : i32, message = "bpd,bde->bpe"}> : () -> ()
    %cst_49 = arith.constant dense<0.000000e+00> : vector<8x5x32xf32>
    %126 = tpu.matmul %125, %52, %cst_49 {dimension_numbers = #tpu.dot_dimension_numbers<[2], [1], [1], [2], [0, 0, 0, 1, 1, 2], [0], [0]>} : vector<8x5x32xf32>, vector<8x32x32xf32>, vector<8x5x32xf32> -> vector<8x5x32xf32>
    "tpu.trace_stop"() : () -> ()
    %c0_50 = arith.constant 0 : index
    %c0_51 = arith.constant 0 : index
    %c0_52 = arith.constant 0 : index
    %127 = vector.load %arg7[%c0_50, %c0_51, %c0_52] : memref<2x1x32xf32, #tpu.memory_space<vmem>>, vector<1x1x32xf32>
    %128 = vector.shape_cast %127 : vector<1x1x32xf32> to vector<1x32xf32>
    %129 = vector.shape_cast %128 : vector<1x32xf32> to vector<1x1x32xf32>
    %130 = vector.broadcast %129 : vector<1x1x32xf32> to vector<8x5x32xf32>
    %131 = arith.addf %126, %130 : vector<8x5x32xf32>
    %132 = arith.addf %86, %131 : vector<8x5x32xf32>
    %cst_53 = arith.constant 0.999994993 : f32
    %133 = vector.broadcast %cst_53 : f32 to vector<8x5x32xf32>
    %134 = arith.mulf %132, %133 : vector<8x5x32xf32>
    "tpu.trace_start"() <{level = 10 : i32, message = "bpd,bde->bpe"}> : () -> ()
    %cst_54 = arith.constant dense<0.000000e+00> : vector<8x5x64xf32>
    %135 = tpu.matmul %134, %62, %cst_54 {dimension_numbers = #tpu.dot_dimension_numbers<[2], [1], [1], [2], [0, 0, 0, 1, 1, 2], [0], [0]>} : vector<8x5x32xf32>, vector<8x32x64xf32>, vector<8x5x64xf32> -> vector<8x5x64xf32>
    "tpu.trace_stop"() : () -> ()
    %c0_55 = arith.constant 0 : index
    %c0_56 = arith.constant 0 : index
    %c0_57 = arith.constant 0 : index
    %136 = vector.load %arg9[%c0_55, %c0_56, %c0_57] : memref<2x1x64xf32, #tpu.memory_space<vmem>>, vector<1x1x64xf32>
    %137 = vector.shape_cast %136 : vector<1x1x64xf32> to vector<1x64xf32>
    %138 = vector.shape_cast %137 : vector<1x64xf32> to vector<1x1x64xf32>
    %139 = vector.broadcast %138 : vector<1x1x64xf32> to vector<8x5x64xf32>
    %140 = arith.addf %135, %139 : vector<8x5x64xf32>
    %cst_58 = arith.constant 0.707106769 : f32
    %141 = vector.broadcast %cst_58 : f32 to vector<8x5x64xf32>
    %142 = arith.mulf %140, %141 : vector<8x5x64xf32>
    %143 = math.absf %142 : vector<8x5x64xf32>
    %cst_59 = arith.constant 0.327591091 : f32
    %144 = vector.broadcast %cst_59 : f32 to vector<8x5x64xf32>
    %145 = arith.mulf %144, %143 : vector<8x5x64xf32>
    %cst_60 = arith.constant 1.000000e+00 : f32
    %146 = vector.broadcast %cst_60 : f32 to vector<8x5x64xf32>
    %147 = arith.addf %146, %145 : vector<8x5x64xf32>
    %cst_61 = arith.constant 1.000000e+00 : f32
    %148 = vector.broadcast %cst_61 : f32 to vector<8x5x64xf32>
    %149 = arith.divf %148, %147 : vector<8x5x64xf32>
    %cst_62 = arith.constant 1.06140542 : f32
    %150 = vector.broadcast %cst_62 : f32 to vector<8x5x64xf32>
    %151 = arith.mulf %150, %149 : vector<8x5x64xf32>
    %cst_63 = arith.constant -1.45315206 : f32
    %152 = vector.broadcast %cst_63 : f32 to vector<8x5x64xf32>
    %153 = arith.addf %151, %152 : vector<8x5x64xf32>
    %154 = arith.mulf %153, %149 : vector<8x5x64xf32>
    %cst_64 = arith.constant 1.42141378 : f32
    %155 = vector.broadcast %cst_64 : f32 to vector<8x5x64xf32>
    %156 = arith.addf %154, %155 : vector<8x5x64xf32>
    %157 = arith.mulf %156, %149 : vector<8x5x64xf32>
    %cst_65 = arith.constant -0.284496725 : f32
    %158 = vector.broadcast %cst_65 : f32 to vector<8x5x64xf32>
    %159 = arith.addf %157, %158 : vector<8x5x64xf32>
    %160 = arith.mulf %159, %149 : vector<8x5x64xf32>
    %cst_66 = arith.constant 0.254829586 : f32
    %161 = vector.broadcast %cst_66 : f32 to vector<8x5x64xf32>
    %162 = arith.addf %160, %161 : vector<8x5x64xf32>
    %163 = arith.mulf %162, %149 : vector<8x5x64xf32>
    %cst_67 = arith.constant 0.000000e+00 : f32
    %164 = vector.broadcast %cst_67 : f32 to vector<8x5x64xf32>
    %165 = arith.subf %164, %143 : vector<8x5x64xf32>
    %166 = arith.mulf %165, %143 : vector<8x5x64xf32>
    %167 = math.exp %166 : vector<8x5x64xf32>
    %168 = arith.mulf %163, %167 : vector<8x5x64xf32>
    %cst_68 = arith.constant 1.000000e+00 : f32
    %169 = vector.broadcast %cst_68 : f32 to vector<8x5x64xf32>
    %170 = arith.subf %169, %168 : vector<8x5x64xf32>
    %cst_69 = arith.constant 0.000000e+00 : f32
    %171 = vector.broadcast %cst_69 : f32 to vector<8x5x64xf32>
    %172 = arith.cmpf oge, %142, %171 : vector<8x5x64xf32>
    %cst_70 = arith.constant 0.000000e+00 : f32
    %173 = vector.broadcast %cst_70 : f32 to vector<8x5x64xf32>
    %174 = arith.subf %173, %170 : vector<8x5x64xf32>
    %175 = arith.select %172, %170, %174 : vector<8x5x64xi1>, vector<8x5x64xf32>
    %cst_71 = arith.constant 5.000000e-01 : f32
    %176 = vector.broadcast %cst_71 : f32 to vector<8x5x64xf32>
    %177 = arith.mulf %176, %140 : vector<8x5x64xf32>
    %cst_72 = arith.constant 1.000000e+00 : f32
    %178 = vector.broadcast %cst_72 : f32 to vector<8x5x64xf32>
    %179 = arith.addf %178, %175 : vector<8x5x64xf32>
    %180 = arith.mulf %177, %179 : vector<8x5x64xf32>
    "tpu.trace_start"() <{level = 10 : i32, message = "bpd,bde->bpe"}> : () -> ()
    %cst_73 = arith.constant dense<0.000000e+00> : vector<8x5x32xf32>
    %181 = tpu.matmul %180, %72, %cst_73 {dimension_numbers = #tpu.dot_dimension_numbers<[2], [1], [1], [2], [0, 0, 0, 1, 1, 2], [0], [0]>} : vector<8x5x64xf32>, vector<8x64x32xf32>, vector<8x5x32xf32> -> vector<8x5x32xf32>
    "tpu.trace_stop"() : () -> ()
    %c0_74 = arith.constant 0 : index
    %c0_75 = arith.constant 0 : index
    %c0_76 = arith.constant 0 : index
    %182 = vector.load %arg11[%c0_74, %c0_75, %c0_76] : memref<2x1x32xf32, #tpu.memory_space<vmem>>, vector<1x1x32xf32>
    %183 = vector.shape_cast %182 : vector<1x1x32xf32> to vector<1x32xf32>
    %184 = vector.shape_cast %183 : vector<1x32xf32> to vector<1x1x32xf32>
    %185 = vector.broadcast %184 : vector<1x1x32xf32> to vector<8x5x32xf32>
    %186 = arith.addf %181, %185 : vector<8x5x32xf32>
    %187 = arith.addf %134, %186 : vector<8x5x32xf32>
    %cst_77 = arith.constant 0.999994993 : f32
    %188 = vector.broadcast %cst_77 : f32 to vector<8x5x32xf32>
    %189 = arith.mulf %187, %188 : vector<8x5x32xf32>
    "tpu.trace_start"() <{level = 10 : i32, message = "bpd,bde->bpe"}> : () -> ()
    %cst_78 = arith.constant dense<0.000000e+00> : vector<8x5x96xf32>
    %190 = tpu.matmul %189, %47, %cst_78 {dimension_numbers = #tpu.dot_dimension_numbers<[2], [1], [1], [2], [0, 0, 0, 1, 1, 2], [0], [0]>} : vector<8x5x32xf32>, vector<8x32x96xf32>, vector<8x5x96xf32> -> vector<8x5x96xf32>
    "tpu.trace_stop"() : () -> ()
    %c1_79 = arith.constant 1 : index
    %c0_80 = arith.constant 0 : index
    %c0_81 = arith.constant 0 : index
    %191 = vector.load %arg5[%c1_79, %c0_80, %c0_81] : memref<2x1x96xf32, #tpu.memory_space<vmem>>, vector<1x1x96xf32>
    %192 = vector.shape_cast %191 : vector<1x1x96xf32> to vector<1x96xf32>
    %193 = vector.shape_cast %192 : vector<1x96xf32> to vector<1x1x96xf32>
    %194 = vector.broadcast %193 : vector<1x1x96xf32> to vector<8x5x96xf32>
    %195 = arith.addf %190, %194 : vector<8x5x96xf32>
    %196 = vector.extract_strided_slice %195 {offsets = [0, 0, 0], sizes = [8, 5, 16], strides = [1, 1, 1]} : vector<8x5x96xf32> to vector<8x5x16xf32>
    %197 = vector.extract_strided_slice %195 {offsets = [0, 0, 32], sizes = [8, 5, 16], strides = [1, 1, 1]} : vector<8x5x96xf32> to vector<8x5x16xf32>
    %198 = vector.extract_strided_slice %195 {offsets = [0, 0, 64], sizes = [8, 5, 16], strides = [1, 1, 1]} : vector<8x5x96xf32> to vector<8x5x16xf32>
    "tpu.trace_start"() <{level = 10 : i32, message = "bqd,bkd->bqk"}> : () -> ()
    %cst_82 = arith.constant dense<0.000000e+00> : vector<8x5x5xf32>
    %199 = tpu.matmul %196, %197, %cst_82 {dimension_numbers = #tpu.dot_dimension_numbers<[2], [2], [1], [1], [0, 0, 0, 1, 1, 1], [0], [0]>} : vector<8x5x16xf32>, vector<8x5x16xf32>, vector<8x5x5xf32> -> vector<8x5x5xf32>
    "tpu.trace_stop"() : () -> ()
    %cst_83 = arith.constant 2.500000e-01 : f32
    %200 = vector.broadcast %cst_83 : f32 to vector<8x5x5xf32>
    %201 = arith.mulf %199, %200 : vector<8x5x5xf32>
    %202 = arith.addf %201, %98 : vector<8x5x5xf32>
    %cst_84 = arith.constant dense<0xFF800000> : vector<8x5xf32>
    %203 = vector.multi_reduction <maximumf>, %202, %cst_84 [2] : vector<8x5x5xf32> to vector<8x5xf32>
    %204 = vector.shape_cast %203 : vector<8x5xf32> to vector<8x5x1xf32>
    %205 = vector.broadcast %204 : vector<8x5x1xf32> to vector<8x5x5xf32>
    %206 = arith.subf %202, %205 : vector<8x5x5xf32>
    %207 = math.exp %206 : vector<8x5x5xf32>
    %cst_85 = arith.constant dense<0.000000e+00> : vector<8x5xf32>
    %208 = vector.multi_reduction <add>, %207, %cst_85 [2] : vector<8x5x5xf32> to vector<8x5xf32>
    %209 = vector.shape_cast %208 : vector<8x5xf32> to vector<8x5x1xf32>
    %210 = vector.broadcast %209 : vector<8x5x1xf32> to vector<8x5x5xf32>
    %211 = arith.divf %207, %210 : vector<8x5x5xf32>
    "tpu.trace_start"() <{level = 10 : i32, message = "bqk,bkd->bqd"}> : () -> ()
    %cst_86 = arith.constant dense<0.000000e+00> : vector<8x5x16xf32>
    %212 = tpu.matmul %211, %198, %cst_86 {dimension_numbers = #tpu.dot_dimension_numbers<[2], [1], [1], [2], [0, 0, 0, 1, 1, 2], [0], [0]>} : vector<8x5x5xf32>, vector<8x5x16xf32>, vector<8x5x16xf32> -> vector<8x5x16xf32>
    "tpu.trace_stop"() : () -> ()
    %213 = vector.extract_strided_slice %195 {offsets = [0, 0, 16], sizes = [8, 5, 16], strides = [1, 1, 1]} : vector<8x5x96xf32> to vector<8x5x16xf32>
    %214 = vector.extract_strided_slice %195 {offsets = [0, 0, 48], sizes = [8, 5, 16], strides = [1, 1, 1]} : vector<8x5x96xf32> to vector<8x5x16xf32>
    %215 = vector.extract_strided_slice %195 {offsets = [0, 0, 80], sizes = [8, 5, 16], strides = [1, 1, 1]} : vector<8x5x96xf32> to vector<8x5x16xf32>
    "tpu.trace_start"() <{level = 10 : i32, message = "bqd,bkd->bqk"}> : () -> ()
    %cst_87 = arith.constant dense<0.000000e+00> : vector<8x5x5xf32>
    %216 = tpu.matmul %213, %214, %cst_87 {dimension_numbers = #tpu.dot_dimension_numbers<[2], [2], [1], [1], [0, 0, 0, 1, 1, 1], [0], [0]>} : vector<8x5x16xf32>, vector<8x5x16xf32>, vector<8x5x5xf32> -> vector<8x5x5xf32>
    "tpu.trace_stop"() : () -> ()
    %cst_88 = arith.constant 2.500000e-01 : f32
    %217 = vector.broadcast %cst_88 : f32 to vector<8x5x5xf32>
    %218 = arith.mulf %216, %217 : vector<8x5x5xf32>
    %219 = arith.addf %218, %114 : vector<8x5x5xf32>
    %cst_89 = arith.constant dense<0xFF800000> : vector<8x5xf32>
    %220 = vector.multi_reduction <maximumf>, %219, %cst_89 [2] : vector<8x5x5xf32> to vector<8x5xf32>
    %221 = vector.shape_cast %220 : vector<8x5xf32> to vector<8x5x1xf32>
    %222 = vector.broadcast %221 : vector<8x5x1xf32> to vector<8x5x5xf32>
    %223 = arith.subf %219, %222 : vector<8x5x5xf32>
    %224 = math.exp %223 : vector<8x5x5xf32>
    %cst_90 = arith.constant dense<0.000000e+00> : vector<8x5xf32>
    %225 = vector.multi_reduction <add>, %224, %cst_90 [2] : vector<8x5x5xf32> to vector<8x5xf32>
    %226 = vector.shape_cast %225 : vector<8x5xf32> to vector<8x5x1xf32>
    %227 = vector.broadcast %226 : vector<8x5x1xf32> to vector<8x5x5xf32>
    %228 = arith.divf %224, %227 : vector<8x5x5xf32>
    "tpu.trace_start"() <{level = 10 : i32, message = "bqk,bkd->bqd"}> : () -> ()
    %cst_91 = arith.constant dense<0.000000e+00> : vector<8x5x16xf32>
    %229 = tpu.matmul %228, %215, %cst_91 {dimension_numbers = #tpu.dot_dimension_numbers<[2], [1], [1], [2], [0, 0, 0, 1, 1, 2], [0], [0]>} : vector<8x5x5xf32>, vector<8x5x16xf32>, vector<8x5x16xf32> -> vector<8x5x16xf32>
    "tpu.trace_stop"() : () -> ()
    %230 = tpu.concatenate %212, %229 in 2 : vector<8x5x16xf32>, vector<8x5x16xf32> -> vector<8x5x32xf32>
    "tpu.trace_start"() <{level = 10 : i32, message = "bpd,bde->bpe"}> : () -> ()
    %cst_92 = arith.constant dense<0.000000e+00> : vector<8x5x32xf32>
    %231 = tpu.matmul %230, %57, %cst_92 {dimension_numbers = #tpu.dot_dimension_numbers<[2], [1], [1], [2], [0, 0, 0, 1, 1, 2], [0], [0]>} : vector<8x5x32xf32>, vector<8x32x32xf32>, vector<8x5x32xf32> -> vector<8x5x32xf32>
    "tpu.trace_stop"() : () -> ()
    %c1_93 = arith.constant 1 : index
    %c0_94 = arith.constant 0 : index
    %c0_95 = arith.constant 0 : index
    %232 = vector.load %arg7[%c1_93, %c0_94, %c0_95] : memref<2x1x32xf32, #tpu.memory_space<vmem>>, vector<1x1x32xf32>
    %233 = vector.shape_cast %232 : vector<1x1x32xf32> to vector<1x32xf32>
    %234 = vector.shape_cast %233 : vector<1x32xf32> to vector<1x1x32xf32>
    %235 = vector.broadcast %234 : vector<1x1x32xf32> to vector<8x5x32xf32>
    %236 = arith.addf %231, %235 : vector<8x5x32xf32>
    %237 = arith.addf %189, %236 : vector<8x5x32xf32>
    %cst_96 = arith.constant 0.999994993 : f32
    %238 = vector.broadcast %cst_96 : f32 to vector<8x5x32xf32>
    %239 = arith.mulf %237, %238 : vector<8x5x32xf32>
    "tpu.trace_start"() <{level = 10 : i32, message = "bpd,bde->bpe"}> : () -> ()
    %cst_97 = arith.constant dense<0.000000e+00> : vector<8x5x64xf32>
    %240 = tpu.matmul %239, %67, %cst_97 {dimension_numbers = #tpu.dot_dimension_numbers<[2], [1], [1], [2], [0, 0, 0, 1, 1, 2], [0], [0]>} : vector<8x5x32xf32>, vector<8x32x64xf32>, vector<8x5x64xf32> -> vector<8x5x64xf32>
    "tpu.trace_stop"() : () -> ()
    %c1_98 = arith.constant 1 : index
    %c0_99 = arith.constant 0 : index
    %c0_100 = arith.constant 0 : index
    %241 = vector.load %arg9[%c1_98, %c0_99, %c0_100] : memref<2x1x64xf32, #tpu.memory_space<vmem>>, vector<1x1x64xf32>
    %242 = vector.shape_cast %241 : vector<1x1x64xf32> to vector<1x64xf32>
    %243 = vector.shape_cast %242 : vector<1x64xf32> to vector<1x1x64xf32>
    %244 = vector.broadcast %243 : vector<1x1x64xf32> to vector<8x5x64xf32>
    %245 = arith.addf %240, %244 : vector<8x5x64xf32>
    %cst_101 = arith.constant 0.707106769 : f32
    %246 = vector.broadcast %cst_101 : f32 to vector<8x5x64xf32>
    %247 = arith.mulf %245, %246 : vector<8x5x64xf32>
    %248 = math.absf %247 : vector<8x5x64xf32>
    %cst_102 = arith.constant 0.327591091 : f32
    %249 = vector.broadcast %cst_102 : f32 to vector<8x5x64xf32>
    %250 = arith.mulf %249, %248 : vector<8x5x64xf32>
    %cst_103 = arith.constant 1.000000e+00 : f32
    %251 = vector.broadcast %cst_103 : f32 to vector<8x5x64xf32>
    %252 = arith.addf %251, %250 : vector<8x5x64xf32>
    %cst_104 = arith.constant 1.000000e+00 : f32
    %253 = vector.broadcast %cst_104 : f32 to vector<8x5x64xf32>
    %254 = arith.divf %253, %252 : vector<8x5x64xf32>
    %cst_105 = arith.constant 1.06140542 : f32
    %255 = vector.broadcast %cst_105 : f32 to vector<8x5x64xf32>
    %256 = arith.mulf %255, %254 : vector<8x5x64xf32>
    %cst_106 = arith.constant -1.45315206 : f32
    %257 = vector.broadcast %cst_106 : f32 to vector<8x5x64xf32>
    %258 = arith.addf %256, %257 : vector<8x5x64xf32>
    %259 = arith.mulf %258, %254 : vector<8x5x64xf32>
    %cst_107 = arith.constant 1.42141378 : f32
    %260 = vector.broadcast %cst_107 : f32 to vector<8x5x64xf32>
    %261 = arith.addf %259, %260 : vector<8x5x64xf32>
    %262 = arith.mulf %261, %254 : vector<8x5x64xf32>
    %cst_108 = arith.constant -0.284496725 : f32
    %263 = vector.broadcast %cst_108 : f32 to vector<8x5x64xf32>
    %264 = arith.addf %262, %263 : vector<8x5x64xf32>
    %265 = arith.mulf %264, %254 : vector<8x5x64xf32>
    %cst_109 = arith.constant 0.254829586 : f32
    %266 = vector.broadcast %cst_109 : f32 to vector<8x5x64xf32>
    %267 = arith.addf %265, %266 : vector<8x5x64xf32>
    %268 = arith.mulf %267, %254 : vector<8x5x64xf32>
    %cst_110 = arith.constant 0.000000e+00 : f32
    %269 = vector.broadcast %cst_110 : f32 to vector<8x5x64xf32>
    %270 = arith.subf %269, %248 : vector<8x5x64xf32>
    %271 = arith.mulf %270, %248 : vector<8x5x64xf32>
    %272 = math.exp %271 : vector<8x5x64xf32>
    %273 = arith.mulf %268, %272 : vector<8x5x64xf32>
    %cst_111 = arith.constant 1.000000e+00 : f32
    %274 = vector.broadcast %cst_111 : f32 to vector<8x5x64xf32>
    %275 = arith.subf %274, %273 : vector<8x5x64xf32>
    %cst_112 = arith.constant 0.000000e+00 : f32
    %276 = vector.broadcast %cst_112 : f32 to vector<8x5x64xf32>
    %277 = arith.cmpf oge, %247, %276 : vector<8x5x64xf32>
    %cst_113 = arith.constant 0.000000e+00 : f32
    %278 = vector.broadcast %cst_113 : f32 to vector<8x5x64xf32>
    %279 = arith.subf %278, %275 : vector<8x5x64xf32>
    %280 = arith.select %277, %275, %279 : vector<8x5x64xi1>, vector<8x5x64xf32>
    %cst_114 = arith.constant 5.000000e-01 : f32
    %281 = vector.broadcast %cst_114 : f32 to vector<8x5x64xf32>
    %282 = arith.mulf %281, %245 : vector<8x5x64xf32>
    %cst_115 = arith.constant 1.000000e+00 : f32
    %283 = vector.broadcast %cst_115 : f32 to vector<8x5x64xf32>
    %284 = arith.addf %283, %280 : vector<8x5x64xf32>
    %285 = arith.mulf %282, %284 : vector<8x5x64xf32>
    "tpu.trace_start"() <{level = 10 : i32, message = "bpd,bde->bpe"}> : () -> ()
    %cst_116 = arith.constant dense<0.000000e+00> : vector<8x5x32xf32>
    %286 = tpu.matmul %285, %77, %cst_116 {dimension_numbers = #tpu.dot_dimension_numbers<[2], [1], [1], [2], [0, 0, 0, 1, 1, 2], [0], [0]>} : vector<8x5x64xf32>, vector<8x64x32xf32>, vector<8x5x32xf32> -> vector<8x5x32xf32>
    "tpu.trace_stop"() : () -> ()
    %c1_117 = arith.constant 1 : index
    %c0_118 = arith.constant 0 : index
    %c0_119 = arith.constant 0 : index
    %287 = vector.load %arg11[%c1_117, %c0_118, %c0_119] : memref<2x1x32xf32, #tpu.memory_space<vmem>>, vector<1x1x32xf32>
    %288 = vector.shape_cast %287 : vector<1x1x32xf32> to vector<1x32xf32>
    %289 = vector.shape_cast %288 : vector<1x32xf32> to vector<1x1x32xf32>
    %290 = vector.broadcast %289 : vector<1x1x32xf32> to vector<8x5x32xf32>
    %291 = arith.addf %286, %290 : vector<8x5x32xf32>
    %292 = arith.addf %239, %291 : vector<8x5x32xf32>
    %cst_120 = arith.constant 0.999994993 : f32
    %293 = vector.broadcast %cst_120 : f32 to vector<8x5x32xf32>
    %294 = arith.mulf %292, %293 : vector<8x5x32xf32>
    %cst_121 = arith.constant 0.000000e+00 : f32
    %295 = vector.broadcast %cst_121 : f32 to vector<8x8xf32>
    %296 = vector.extract_strided_slice %294 {offsets = [0, 0, 0], sizes = [8, 1, 32], strides = [1, 1, 1]} : vector<8x5x32xf32> to vector<8x1x32xf32>
    %297 = vector.shape_cast %296 : vector<8x1x32xf32> to vector<8x32xf32>
    %c0_122 = arith.constant 0 : index
    %c0_123 = arith.constant 0 : index
    %298 = vector.load %arg12[%c0_122, %c0_123] : memref<160x8xf32, #tpu.memory_space<vmem>>, vector<32x8xf32>
    %cst_124 = arith.constant dense<0.000000e+00> : vector<8x8xf32>
    %299 = tpu.matmul %297, %298, %cst_124 {dimension_numbers = #tpu.dot_dimension_numbers<[1], [0], [0], [1], [0, 0, 1, 1], [], []>} : vector<8x32xf32>, vector<32x8xf32>, vector<8x8xf32> -> vector<8x8xf32>
    %300 = arith.addf %295, %299 : vector<8x8xf32>
    %301 = vector.extract_strided_slice %294 {offsets = [0, 1, 0], sizes = [8, 1, 32], strides = [1, 1, 1]} : vector<8x5x32xf32> to vector<8x1x32xf32>
    %302 = vector.shape_cast %301 : vector<8x1x32xf32> to vector<8x32xf32>
    %c32 = arith.constant 32 : index
    %c0_125 = arith.constant 0 : index
    %303 = vector.load %arg12[%c32, %c0_125] : memref<160x8xf32, #tpu.memory_space<vmem>>, vector<32x8xf32>
    %cst_126 = arith.constant dense<0.000000e+00> : vector<8x8xf32>
    %304 = tpu.matmul %302, %303, %cst_126 {dimension_numbers = #tpu.dot_dimension_numbers<[1], [0], [0], [1], [0, 0, 1, 1], [], []>} : vector<8x32xf32>, vector<32x8xf32>, vector<8x8xf32> -> vector<8x8xf32>
    %305 = arith.addf %300, %304 : vector<8x8xf32>
    %306 = vector.extract_strided_slice %294 {offsets = [0, 2, 0], sizes = [8, 1, 32], strides = [1, 1, 1]} : vector<8x5x32xf32> to vector<8x1x32xf32>
    %307 = vector.shape_cast %306 : vector<8x1x32xf32> to vector<8x32xf32>
    %c64 = arith.constant 64 : index
    %c0_127 = arith.constant 0 : index
    %308 = vector.load %arg12[%c64, %c0_127] : memref<160x8xf32, #tpu.memory_space<vmem>>, vector<32x8xf32>
    %cst_128 = arith.constant dense<0.000000e+00> : vector<8x8xf32>
    %309 = tpu.matmul %307, %308, %cst_128 {dimension_numbers = #tpu.dot_dimension_numbers<[1], [0], [0], [1], [0, 0, 1, 1], [], []>} : vector<8x32xf32>, vector<32x8xf32>, vector<8x8xf32> -> vector<8x8xf32>
    %310 = arith.addf %305, %309 : vector<8x8xf32>
    %311 = vector.extract_strided_slice %294 {offsets = [0, 3, 0], sizes = [8, 1, 32], strides = [1, 1, 1]} : vector<8x5x32xf32> to vector<8x1x32xf32>
    %312 = vector.shape_cast %311 : vector<8x1x32xf32> to vector<8x32xf32>
    %c96 = arith.constant 96 : index
    %c0_129 = arith.constant 0 : index
    %313 = vector.load %arg12[%c96, %c0_129] : memref<160x8xf32, #tpu.memory_space<vmem>>, vector<32x8xf32>
    %cst_130 = arith.constant dense<0.000000e+00> : vector<8x8xf32>
    %314 = tpu.matmul %312, %313, %cst_130 {dimension_numbers = #tpu.dot_dimension_numbers<[1], [0], [0], [1], [0, 0, 1, 1], [], []>} : vector<8x32xf32>, vector<32x8xf32>, vector<8x8xf32> -> vector<8x8xf32>
    %315 = arith.addf %310, %314 : vector<8x8xf32>
    %316 = vector.extract_strided_slice %294 {offsets = [0, 4, 0], sizes = [8, 1, 32], strides = [1, 1, 1]} : vector<8x5x32xf32> to vector<8x1x32xf32>
    %317 = vector.shape_cast %316 : vector<8x1x32xf32> to vector<8x32xf32>
    %c128 = arith.constant 128 : index
    %c0_131 = arith.constant 0 : index
    %318 = vector.load %arg12[%c128, %c0_131] : memref<160x8xf32, #tpu.memory_space<vmem>>, vector<32x8xf32>
    %cst_132 = arith.constant dense<0.000000e+00> : vector<8x8xf32>
    %319 = tpu.matmul %317, %318, %cst_132 {dimension_numbers = #tpu.dot_dimension_numbers<[1], [0], [0], [1], [0, 0, 1, 1], [], []>} : vector<8x32xf32>, vector<32x8xf32>, vector<8x8xf32> -> vector<8x8xf32>
    %320 = arith.addf %315, %319 : vector<8x8xf32>
    %c0_133 = arith.constant 0 : index
    %c0_134 = arith.constant 0 : index
    %321 = vector.load %arg13[%c0_133, %c0_134] : memref<1x8xf32, #tpu.memory_space<vmem>>, vector<1x8xf32>
    %322 = vector.broadcast %321 : vector<1x8xf32> to vector<8x8xf32>
    %323 = arith.addf %320, %322 : vector<8x8xf32>
    %324 = vector.broadcast %14 : vector<8x1xf32> to vector<8x8xf32>
    %325 = arith.mulf %323, %324 : vector<8x8xf32>
    %326 = vector.broadcast %4 : vector<8x1xf32> to vector<8x8xf32>
    %327 = arith.addf %325, %326 : vector<8x8xf32>
    %c0_135 = arith.constant 0 : index
    %c0_136 = arith.constant 0 : index
    %328 = vector.load %arg14[%c0_135, %c0_136] : memref<8x8xf32, #tpu.memory_space<vmem>>, vector<8x8xf32>
    tpu.vector_store %arg14[%c0_135, %c0_136], %327 {strides = array<i32>} : memref<8x8xf32, #tpu.memory_space<vmem>>, vector<8x8xf32>,
    return
  }
}

</mosaic_0001>

<llo_original>
// kernel: mftnet_forward.1
$region0: #{mftnet_forward.1}
  #allocation0 [shape = 'u32[]', space=smem, size = 0x4, offset = 0x4, fixed_abs, tag = 'smem constant byte address 0x4 - core index']
  #allocation1 [shape = 'u32[144,128]{1,0:T(1,128)}', space=vmem, size = 0x12000, scoped, tag = 'internal scratch']
  %s0 = inlined_call_operand.vmem [shape: f32[8,16], index: 0, kind: input, shape index: {}]
  %s1 = inlined_call_operand.vmem [shape: f32[4,32], index: 1, kind: input, shape index: {}]
  %s2 = inlined_call_operand.vmem [shape: f32[1,32], index: 2, kind: input, shape index: {}]
  %s3 = inlined_call_operand.vmem [shape: f32[5,32], index: 3, kind: input, shape index: {}]
  %s4 = inlined_call_operand.vmem [shape: f32[2,32,96], index: 4, kind: input, shape index: {}]
  %s5 = inlined_call_operand.vmem [shape: f32[2,1,96], index: 5, kind: input, shape index: {}]
  %s6 = inlined_call_operand.vmem [shape: f32[2,32,32], index: 6, kind: input, shape index: {}]
  %s7 = inlined_call_operand.vmem [shape: f32[2,1,32], index: 7, kind: input, shape index: {}]
  %s8 = inlined_call_operand.vmem [shape: f32[2,32,64], index: 8, kind: input, shape index: {}]
  %s9 = inlined_call_operand.vmem [shape: f32[2,1,64], index: 9, kind: input, shape index: {}]
  %s10 = inlined_call_operand.vmem [shape: f32[2,64,32], index: 10, kind: input, shape index: {}]
  %s11 = inlined_call_operand.vmem [shape: f32[2,1,32], index: 11, kind: input, shape index: {}]
  %s12 = inlined_call_operand.vmem [shape: f32[160,8], index: 12, kind: input, shape index: {}]
  %s13 = inlined_call_operand.vmem [shape: f32[1,8], index: 13, kind: input, shape index: {}]
  %s14 = inlined_call_operand.hbm [shape: f32[8,8], index: 14, kind: output, shape index: {}]
  %s15 = sld [smem:[#allocation0]]
  $region66: #{mftnet_forward.1} parent=0
    _
  %s17 = ssub.s32 1, %s15
  %s18 = scalar_select 0, %s17, %s15
  $region1: #{mftnet_forward.1} parent=0
    #allocation2 [shape = 'u8[4096]{0}', space=vmem, size = 0x1000, scoped, tag = 'output window, operand 0, single buffered']
    #allocation3 [shape = 's32[1]{0}', space=sflag, size = 0x4, scoped, tag = 'scoped memory for mftnet_forward.1']
    %19 = vsyncpa [#allocation3], 0
    // Predicated region
    $region2: #{mftnet_forward.1} parent=1 // pred_check
      _
    $region3: #{mftnet_forward.1} parent=1 // pred_check_branch
      %21 = sbr.rel (0) target = $region5
    $region4: #{mftnet_forward.1} parent=1 // pred_region
      _
    $region5: #{mftnet_forward.1} parent=1 // pred_fallthru
      _
    // Predicated region
    $region6: #{mftnet_forward.1} parent=1 // pred_check
      _
    $region7: #{mftnet_forward.1} parent=1 // pred_check_branch
      %23 = sbr.rel (0) target = $region9
    $region8: #{mftnet_forward.1} parent=1 // pred_region
      _
    $region9: #{mftnet_forward.1} parent=1 // pred_fallthru
      _
    // Predicated region
    $region10: #{mftnet_forward.1} parent=1 // pred_check
      _
    $region11: #{mftnet_forward.1} parent=1 // pred_check_branch
      %25 = sbr.rel (0) target = $region13
    $region12: #{mftnet_forward.1} parent=1 // pred_region
      _
    $region13: #{mftnet_forward.1} parent=1 // pred_fallthru
      _
    // Predicated region
    $region14: #{mftnet_forward.1} parent=1 // pred_check
      _
    $region15: #{mftnet_forward.1} parent=1 // pred_check_branch
      %27 = sbr.rel (0) target = $region17
    $region16: #{mftnet_forward.1} parent=1 // pred_region
      _
    $region17: #{mftnet_forward.1} parent=1 // pred_fallthru
      _
    // Predicated region
    $region18: #{mftnet_forward.1} parent=1 // pred_check
      _
    $region19: #{mftnet_forward.1} parent=1 // pred_check_branch
      %29 = sbr.rel (0) target = $region21
    $region20: #{mftnet_forward.1} parent=1 // pred_region
      _
    $region21: #{mftnet_forward.1} parent=1 // pred_fallthru
      _
    // Predicated region
    $region22: #{mftnet_forward.1} parent=1 // pred_check
      _
    $region23: #{mftnet_forward.1} parent=1 // pred_check_branch
      %31 = sbr.rel (0) target = $region25
    $region24: #{mftnet_forward.1} parent=1 // pred_region
      _
    $region25: #{mftnet_forward.1} parent=1 // pred_fallthru
      _
    // Predicated region
    $region26: #{mftnet_forward.1} parent=1 // pred_check
      _
    $region27: #{mftnet_forward.1} parent=1 // pred_check_branch
      %33 = sbr.rel (0) target = $region29
    $region28: #{mftnet_forward.1} parent=1 // pred_region
      _
    $region29: #{mftnet_forward.1} parent=1 // pred_fallthru
      _
    // Predicated region
    $region30: #{mftnet_forward.1} parent=1 // pred_check
      _
    $region31: #{mftnet_forward.1} parent=1 // pred_check_branch
      %35 = sbr.rel (0) target = $region33
    $region32: #{mftnet_forward.1} parent=1 // pred_region
      _
    $region33: #{mftnet_forward.1} parent=1 // pred_fallthru
      _
    // Predicated region
    $region34: #{mftnet_forward.1} parent=1 // pred_check
      _
    $region35: #{mftnet_forward.1} parent=1 // pred_check_branch
      %37 = sbr.rel (0) target = $region37
    $region36: #{mftnet_forward.1} parent=1 // pred_region
      _
    $region37: #{mftnet_forward.1} parent=1 // pred_fallthru
      _
    // Predicated region
    $region38: #{mftnet_forward.1} parent=1 // pred_check
      _
    $region39: #{mftnet_forward.1} parent=1 // pred_check_branch
      %39 = sbr.rel (0) target = $region41
    $region40: #{mftnet_forward.1} parent=1 // pred_region
      _
    $region41: #{mftnet_forward.1} parent=1 // pred_fallthru
      _
    // Predicated region
    $region42: #{mftnet_forward.1} parent=1 // pred_check
      _
    $region43: #{mftnet_forward.1} parent=1 // pred_check_branch
      %41 = sbr.rel (0) target = $region45
    $region44: #{mftnet_forward.1} parent=1 // pred_region
      _
    $region45: #{mftnet_forward.1} parent=1 // pred_fallthru
      _
    // Predicated region
    $region46: #{mftnet_forward.1} parent=1 // pred_check
      _
    $region47: #{mftnet_forward.1} parent=1 // pred_check_branch
      %43 = sbr.rel (0) target = $region49
    $region48: #{mftnet_forward.1} parent=1 // pred_region
      _
    $region49: #{mftnet_forward.1} parent=1 // pred_fallthru
      _
    // Predicated region
    $region50: #{mftnet_forward.1} parent=1 // pred_check
      _
    $region51: #{mftnet_forward.1} parent=1 // pred_check_branch
      %45 = sbr.rel (0) target = $region53
    $region52: #{mftnet_forward.1} parent=1 // pred_region
      _
    $region53: #{mftnet_forward.1} parent=1 // pred_fallthru
      _
    // Predicated region
    $region54: #{mftnet_forward.1} parent=1 // pred_check
      _
    $region55: #{mftnet_forward.1} parent=1 // pred_check_branch
      %47 = sbr.rel (0) target = $region57
    $region56: #{mftnet_forward.1} parent=1 // pred_region
      _
    $region57: #{mftnet_forward.1} parent=1 // pred_fallthru
      _
    %v48 = vld [vmem:[%s0] sm:$0xff]
    %vm49 = vcmask 130048
    %v50 = vsel %vm49, %v48, 0.0
    %51 = vadd.xlane.f32.xlu0 %v50
    %v52 = vpop.xlane.xlu0 %51
    %v53 = vrcp.pop 16.0
    %v54 = vmul.f32 %v52, %v53
    %v55 = vsub.f32 %v48, %v54
    %v56 = vmul.f32 %v55, %v55
    %v57 = vsel %vm49, %v56, 0.0
    %58 = vadd.xlane.f32.xlu0 %v57
    %v59 = vpop.xlane.xlu0 %58
    %v60 = vmul.f32 %v59, %v53
    %v61 = vadd.f32 %v60, 1e-05
    %v62 = vrsqrt.pop %v61
    %v63 = vmul.f32 %v61, %v62
    %vm64 = vcmp.eq.f32.partialorder %v61, inf
    %v65 = vsel %vm64, %v61, %v63
    %vm66 = vcmp.eq.f32.partialorder %v61, 0.0
    %v67 = vand.u32 %v61, 2147483648
    %v68 = vsel %vm66, %v67, %v65
    %v69 = vrcp.pop %v68
    %v70 = vmul.f32 %v55, %v69
    %72 = vset.pattern.permute.xlu0 15
    %73 = vperm.xlu0 %72, %v70
    %v74 = vpop.permute.xlu0 %73
    %v76 = vsel %vm49, %v70, %v74
    %v78 = vcombine.high %v76, %v76
    %v80 = vunpack.c.l.s4 1966171168
    %v81 = vunpack.c.0.s8 %v80
    %v82 = vlaneseq
    %v83 = vshrl.u32 %v82, 7
    %v84 = vsub.s32 %v81, %v83
    %v85 = vrot.slane %v76, %v84
    %v87 = vunpack.c.l.s4 1966171168
    %v88 = vunpack.c.0.s8 %v87
    %v89 = vlaneseq
    %v90 = vshrl.u32 %v89, 7
    %v91 = vsub.s32 %v88, %v90
    %v92 = vrot.slane %v78, %v91
    %v93 = vcombine.high %v85, %v85
    %v94 = vcombine.high %v92, %v92
    %v96 = vunpack.c.l.s4 1966171168
    %v97 = vunpack.c.0.s8 %v96
    %v98 = vlaneseq
    %v99 = vshrl.u32 %v98, 7
    %v100 = vsub.s32 %v97, %v99
    %v101 = vrot.slane %v85, %v100
    %v103 = vunpack.c.l.s4 1966171168
    %v104 = vunpack.c.0.s8 %v103
    %v105 = vlaneseq
    %v106 = vshrl.u32 %v105, 7
    %v107 = vsub.s32 %v104, %v106
    %v108 = vrot.slane %v92, %v107
    %v110 = vunpack.c.l.s4 1966171168
    %v111 = vunpack.c.0.s8 %v110
    %v112 = vlaneseq
    %v113 = vshrl.u32 %v112, 7
    %v114 = vsub.s32 %v111, %v113
    %v115 = vrot.slane %v93, %v114
    %v117 = vunpack.c.l.s4 1966171168
    %v118 = vunpack.c.0.s8 %v117
    %v119 = vlaneseq
    %v120 = vshrl.u32 %v119, 7
    %v121 = vsub.s32 %v118, %v120
    %v122 = vrot.slane %v94, %v121
    %v123 = vcombine.high %v101, %v101
    %v124 = vcombine.high %v108, %v108
    %v125 = vcombine.high %v115, %v115
    %v126 = vcombine.high %v122, %v122
    %v135 = vlaneseq
    %v136 = vshrl.u32 %v135, 7
    %v137 = vsub.s32 0, %v136
    %v138 = vrot.slane %v101, %v137
    %v139 = vlaneseq
    %v140 = vshrl.u32 %v139, 7
    %v141 = vsub.s32 0, %v140
    %v142 = vrot.slane %v115, %v141
    %v143 = vlaneseq
    %v144 = vshrl.u32 %v143, 7
    %v145 = vsub.s32 0, %v144
    %v146 = vrot.slane %v123, %v145
    %v147 = vlaneseq
    %v148 = vshrl.u32 %v147, 7
    %v149 = vsub.s32 0, %v148
    %v150 = vrot.slane %v125, %v149
    %v151 = vlaneseq
    %v152 = vshrl.u32 %v151, 7
    %v153 = vsub.s32 0, %v152
    %v154 = vrot.slane %v108, %v153
    %v155 = vlaneseq
    %v156 = vshrl.u32 %v155, 7
    %v157 = vsub.s32 0, %v156
    %v158 = vrot.slane %v122, %v157
    %v159 = vlaneseq
    %v160 = vshrl.u32 %v159, 7
    %v161 = vsub.s32 0, %v160
    %v162 = vrot.slane %v124, %v161
    %v163 = vlaneseq
    %v164 = vshrl.u32 %v163, 7
    %v165 = vsub.s32 0, %v164
    %v166 = vrot.slane %v126, %v165
    %167 = vrot.lane.b32.xlu0 %v138, 124
    %v168 = vpop.permute.xlu0 %167
    %169 = vrot.lane.b32.xlu0 %v142, 124
    %v170 = vpop.permute.xlu0 %169
    %171 = vrot.lane.b32.xlu0 %v146, 124
    %v172 = vpop.permute.xlu0 %171
    %173 = vrot.lane.b32.xlu0 %v150, 124
    %v174 = vpop.permute.xlu0 %173
    %175 = vrot.lane.b32.xlu0 %v154, 124
    %v176 = vpop.permute.xlu0 %175
    %177 = vrot.lane.b32.xlu0 %v158, 124
    %v178 = vpop.permute.xlu0 %177
    %179 = vrot.lane.b32.xlu0 %v162, 124
    %v180 = vpop.permute.xlu0 %179
    %181 = vrot.lane.b32.xlu0 %v166, 124
    %v182 = vpop.permute.xlu0 %181
    %191 = vrot.lane.b32.xlu0 %v138, 120
    %v192 = vpop.permute.xlu0 %191
    %193 = vrot.lane.b32.xlu0 %v142, 120
    %v194 = vpop.permute.xlu0 %193
    %195 = vrot.lane.b32.xlu0 %v146, 120
    %v196 = vpop.permute.xlu0 %195
    %197 = vrot.lane.b32.xlu0 %v150, 120
    %v198 = vpop.permute.xlu0 %197
    %199 = vrot.lane.b32.xlu0 %v154, 120
    %v200 = vpop.permute.xlu0 %199
    %201 = vrot.lane.b32.xlu0 %v158, 120
    %v202 = vpop.permute.xlu0 %201
    %203 = vrot.lane.b32.xlu0 %v162, 120
    %v204 = vpop.permute.xlu0 %203
    %205 = vrot.lane.b32.xlu0 %v166, 120
    %v206 = vpop.permute.xlu0 %205
    %215 = vrot.lane.b32.xlu0 %v138, 116
    %v216 = vpop.permute.xlu0 %215
    %217 = vrot.lane.b32.xlu0 %v142, 116
    %v218 = vpop.permute.xlu0 %217
    %219 = vrot.lane.b32.xlu0 %v146, 116
    %v220 = vpop.permute.xlu0 %219
    %221 = vrot.lane.b32.xlu0 %v150, 116
    %v222 = vpop.permute.xlu0 %221
    %223 = vrot.lane.b32.xlu0 %v154, 116
    %v224 = vpop.permute.xlu0 %223
    %225 = vrot.lane.b32.xlu0 %v158, 116
    %v226 = vpop.permute.xlu0 %225
    %227 = vrot.lane.b32.xlu0 %v162, 116
    %v228 = vpop.permute.xlu0 %227
    %229 = vrot.lane.b32.xlu0 %v166, 116
    %v230 = vpop.permute.xlu0 %229
    %239 = vrot.lane.b32.xlu0 %v138, 112
    %v240 = vpop.permute.xlu0 %239
    %241 = vrot.lane.b32.xlu0 %v142, 112
    %v242 = vpop.permute.xlu0 %241
    %243 = vrot.lane.b32.xlu0 %v146, 112
    %v244 = vpop.permute.xlu0 %243
    %245 = vrot.lane.b32.xlu0 %v150, 112
    %v246 = vpop.permute.xlu0 %245
    %247 = vrot.lane.b32.xlu0 %v154, 112
    %v248 = vpop.permute.xlu0 %247
    %249 = vrot.lane.b32.xlu0 %v158, 112
    %v250 = vpop.permute.xlu0 %249
    %251 = vrot.lane.b32.xlu0 %v162, 112
    %v252 = vpop.permute.xlu0 %251
    %253 = vrot.lane.b32.xlu0 %v166, 112
    %v254 = vpop.permute.xlu0 %253
    %vm263 = vcmask 1040384
    %v264 = vsel %vm263, %v101, %v168
    %v265 = vsel %vm263, %v115, %v170
    %v266 = vsel %vm263, %v123, %v172
    %v267 = vsel %vm263, %v125, %v174
    %v268 = vsel %vm263, %v108, %v176
    %v269 = vsel %vm263, %v122, %v178
    %v270 = vsel %vm263, %v124, %v180
    %v271 = vsel %vm263, %v126, %v182
    %vm272 = vcmask 1041408
    %v273 = vsel %vm272, %v264, %v192
    %v274 = vsel %vm272, %v265, %v194
    %v275 = vsel %vm272, %v266, %v196
    %v276 = vsel %vm272, %v267, %v198
    %v277 = vsel %vm272, %v268, %v200
    %v278 = vsel %vm272, %v269, %v202
    %v279 = vsel %vm272, %v270, %v204
    %v280 = vsel %vm272, %v271, %v206
    %vm281 = vcmask 1042432
    %v282 = vsel %vm281, %v273, %v216
    %v283 = vsel %vm281, %v274, %v218
    %v284 = vsel %vm281, %v275, %v220
    %v285 = vsel %vm281, %v276, %v222
    %v286 = vsel %vm281, %v277, %v224
    %v287 = vsel %vm281, %v278, %v226
    %v288 = vsel %vm281, %v279, %v228
    %v289 = vsel %vm281, %v280, %v230
    %vm290 = vcmask 1043456
    %v291 = vsel %vm290, %v282, %v240
    %v292 = vsel %vm290, %v283, %v242
    %v293 = vsel %vm290, %v284, %v244
    %v294 = vsel %vm290, %v285, %v246
    %v295 = vsel %vm290, %v286, %v248
    %v296 = vsel %vm290, %v287, %v250
    %v297 = vsel %vm290, %v288, %v252
    %v298 = vsel %vm290, %v289, %v254
    %v299 = vld [vmem:[%s1] sm:$0xf]
    %v300 = vld [vmem:[%s4] sm:$0xff]
    %v301 = vld [vmem:[%s4 + $0x8] sm:$0xff]
    %v302 = vld [vmem:[%s4 + $0x10] sm:$0xff]
    %v303 = vld [vmem:[%s4 + $0x18] sm:$0xff]
    %s304 = scalar_lea.vmem %s4, 32
    %v305 = vld [vmem:[%s304] sm:$0xff]
    %v306 = vld [vmem:[%s304 + $0x8] sm:$0xff]
    %v307 = vld [vmem:[%s304 + $0x10] sm:$0xff]
    %v308 = vld [vmem:[%s304 + $0x18] sm:$0xff]
    %v309 = vld [vmem:[%s6] sm:$0xff]
    %v310 = vld [vmem:[%s6 + $0x8] sm:$0xff]
    %v311 = vld [vmem:[%s6 + $0x10] sm:$0xff]
    %v312 = vld [vmem:[%s6 + $0x18] sm:$0xff]
    %s313 = scalar_lea.vmem %s6, 32
    %v314 = vld [vmem:[%s313] sm:$0xff]
    %v315 = vld [vmem:[%s313 + $0x8] sm:$0xff]
    %v316 = vld [vmem:[%s313 + $0x10] sm:$0xff]
    %v317 = vld [vmem:[%s313 + $0x18] sm:$0xff]
    %v318 = vld [vmem:[%s8] sm:$0xff]
    %v319 = vld [vmem:[%s8 + $0x8] sm:$0xff]
    %v320 = vld [vmem:[%s8 + $0x10] sm:$0xff]
    %v321 = vld [vmem:[%s8 + $0x18] sm:$0xff]
    %s322 = scalar_lea.vmem %s8, 32
    %v323 = vld [vmem:[%s322] sm:$0xff]
    %v324 = vld [vmem:[%s322 + $0x8] sm:$0xff]
    %v325 = vld [vmem:[%s322 + $0x10] sm:$0xff]
    %v326 = vld [vmem:[%s322 + $0x18] sm:$0xff]
    %v327 = vld [vmem:[%s10] sm:$0xff]
    %v328 = vld [vmem:[%s10 + $0x8] sm:$0xff]
    %v329 = vld [vmem:[%s10 + $0x10] sm:$0xff]
    %v330 = vld [vmem:[%s10 + $0x18] sm:$0xff]
    %v331 = vld [vmem:[%s10 + $0x20] sm:$0xff]
    %v332 = vld [vmem:[%s10 + $0x28] sm:$0xff]
    %v333 = vld [vmem:[%s10 + $0x30] sm:$0xff]
    %v334 = vld [vmem:[%s10 + $0x38] sm:$0xff]
    %s335 = scalar_lea.vmem %s10, 64
    %v336 = vld [vmem:[%s335] sm:$0xff]
    %v337 = vld [vmem:[%s335 + $0x8] sm:$0xff]
    %v338 = vld [vmem:[%s335 + $0x10] sm:$0xff]
    %v339 = vld [vmem:[%s335 + $0x18] sm:$0xff]
    %v340 = vld [vmem:[%s335 + $0x20] sm:$0xff]
    %v341 = vld [vmem:[%s335 + $0x28] sm:$0xff]
    %v342 = vld [vmem:[%s335 + $0x30] sm:$0xff]
    %v343 = vld [vmem:[%s335 + $0x38] sm:$0xff]
    %v344 = vld [vmem:[%s2] sm:$0x1]
    %v346 = vlaneseq
    %v347 = vshrl.u32 %v346, 7
    %v348 = vsub.s32 0, %v347
    %v349 = vrot.slane %v344, %v348
    %vm351 = vcmask 31744
    %v353 = vsel %vm351, %v291, 0
    %v356 = vsel %vm290, %v299, 0
    %358 = vmatprep.subr.mxu0 0.0
    %359 = vmatpush1.msra.mxu0 %v356
    %360 = vmatprep.subr.mxu0 0.0
    %361 = vmatpush1.msra.mxu0 0.0
    %362 = vmatprep.subr.mxu0 0.0
    %363 = vmatpush1.msra.mxu0 0.0
    %364 = vmatprep.subr.mxu0 0.0
    %365 = vmatpush1.msra.mxu0 0.0
    %366 = vmatprep.subr.mxu0 0.0
    %367 = vmatpush1.msra.mxu0 0.0
    %368 = vmatprep.subr.mxu0 0.0
    %369 = vmatpush1.msra.mxu0 0.0
    %370 = vmatprep.subr.mxu0 0.0
    %371 = vmatpush1.msra.mxu0 0.0
    %372 = vmatprep.subr.mxu0 0.0
    %373 = vmatpush1.msra.mxu0 0.0
    %374 = vmatprep.subr.mxu0 0.0
    %375 = vmatpush1.msra.mxu0 0.0
    %376 = vmatprep.subr.mxu0 0.0
    %377 = vmatpush1.msra.mxu0 0.0
    %378 = vmatprep.subr.mxu0 0.0
    %379 = vmatpush1.msra.mxu0 0.0
    %380 = vmatprep.subr.mxu0 0.0
    %381 = vmatpush1.msra.mxu0 0.0
    %382 = vmatprep.subr.mxu0 0.0
    %383 = vmatpush1.msra.mxu0 0.0
    %384 = vmatprep.subr.mxu0 0.0
    %385 = vmatpush1.msra.mxu0 0.0
    %386 = vmatprep.subr.mxu0 0.0
    %387 = vmatpush1.msra.mxu0 0.0
    %388 = vmatprep.subr.mxu0 0.0
    %389 = vmatpush1.msra.mxu0 0.0
    %390 = vmatprep.subr.mxu0 0.0
    %391 = vmatpush1.msra.mxu0 0.0
    %392 = vmatprep.subr.mxu0 0.0
    %393 = vmatpush1.msra.mxu0 0.0
    %394 = vmatprep.subr.mxu0 0.0
    %395 = vmatpush1.msra.mxu0 0.0
    %396 = vmatprep.subr.mxu0 0.0
    %397 = vmatpush1.msra.mxu0 0.0
    %398 = vmatprep.subr.mxu0 0.0
    %399 = vmatpush1.msra.mxu0 0.0
    %400 = vmatprep.subr.mxu0 0.0
    %401 = vmatpush1.msra.mxu0 0.0
    %402 = vmatprep.subr.mxu0 0.0
    %403 = vmatpush1.msra.mxu0 0.0
    %404 = vmatprep.subr.mxu0 0.0
    %405 = vmatpush1.msra.mxu0 0.0
    %406 = vmatprep.subr.mxu0 0.0
    %407 = vmatpush1.msra.mxu0 0.0
    %408 = vmatprep.subr.mxu0 0.0
    %409 = vmatpush1.msra.mxu0 0.0
    %410 = vmatprep.subr.mxu0 0.0
    %411 = vmatpush1.msra.mxu0 0.0
    %412 = vmatprep.subr.mxu0 0.0
    %413 = vmatpush1.msra.mxu0 0.0
    %414 = vmatprep.subr.mxu0 0.0
    %415 = vmatpush1.msra.mxu0 0.0
    %416 = vmatprep.subr.mxu0 0.0
    %417 = vmatpush1.msra.mxu0 0.0
    %418 = vmatprep.subr.mxu0 0.0
    %419 = vmatpush1.msra.mxu0 0.0
    %420 = vmatprep.subr.mxu0 0.0
    %421 = vmatpush1.msra.mxu0 0.0
    %422 = vmatprep.mubr.f32.mxu0 0.0
    %423 = vmatmul.mubr.f32.gmra.mrb[0].mxu0 %v353
    %v424 = vpop.f32.mrb[0].mxu0
    %v425 = vadd.f32 %v349, %v424
    %v426 = vpop.f32.mrb[0].mxu0
    %427 = vdwg.mxu0
    %v429 = vsel %vm351, %v292, 0
    %431 = vmatprep.subr.mxu0 0.0
    %432 = vmatpush1.msra.mxu0 %v356
    %433 = vmatprep.subr.mxu0 0.0
    %434 = vmatpush1.msra.mxu0 0.0
    %435 = vmatprep.subr.mxu0 0.0
    %436 = vmatpush1.msra.mxu0 0.0
    %437 = vmatprep.subr.mxu0 0.0
    %438 = vmatpush1.msra.mxu0 0.0
    %439 = vmatprep.subr.mxu0 0.0
    %440 = vmatpush1.msra.mxu0 0.0
    %441 = vmatprep.subr.mxu0 0.0
    %442 = vmatpush1.msra.mxu0 0.0
    %443 = vmatprep.subr.mxu0 0.0
    %444 = vmatpush1.msra.mxu0 0.0
    %445 = vmatprep.subr.mxu0 0.0
    %446 = vmatpush1.msra.mxu0 0.0
    %447 = vmatprep.subr.mxu0 0.0
    %448 = vmatpush1.msra.mxu0 0.0
    %449 = vmatprep.subr.mxu0 0.0
    %450 = vmatpush1.msra.mxu0 0.0
    %451 = vmatprep.subr.mxu0 0.0
    %452 = vmatpush1.msra.mxu0 0.0
    %453 = vmatprep.subr.mxu0 0.0
    %454 = vmatpush1.msra.mxu0 0.0
    %455 = vmatprep.subr.mxu0 0.0
    %456 = vmatpush1.msra.mxu0 0.0
    %457 = vmatprep.subr.mxu0 0.0
    %458 = vmatpush1.msra.mxu0 0.0
    %459 = vmatprep.subr.mxu0 0.0
    %460 = vmatpush1.msra.mxu0 0.0
    %461 = vmatprep.subr.mxu0 0.0
    %462 = vmatpush1.msra.mxu0 0.0
    %463 = vmatprep.subr.mxu0 0.0
    %464 = vmatpush1.msra.mxu0 0.0
    %465 = vmatprep.subr.mxu0 0.0
    %466 = vmatpush1.msra.mxu0 0.0
    %467 = vmatprep.subr.mxu0 0.0
    %468 = vmatpush1.msra.mxu0 0.0
    %469 = vmatprep.subr.mxu0 0.0
    %470 = vmatpush1.msra.mxu0 0.0
    %471 = vmatprep.subr.mxu0 0.0
    %472 = vmatpush1.msra.mxu0 0.0
    %473 = vmatprep.subr.mxu0 0.0
    %474 = vmatpush1.msra.mxu0 0.0
    %475 = vmatprep.subr.mxu0 0.0
    %476 = vmatpush1.msra.mxu0 0.0
    %477 = vmatprep.subr.mxu0 0.0
    %478 = vmatpush1.msra.mxu0 0.0
    %479 = vmatprep.subr.mxu0 0.0
    %480 = vmatpush1.msra.mxu0 0.0
    %481 = vmatprep.subr.mxu0 0.0
    %482 = vmatpush1.msra.mxu0 0.0
    %483 = vmatprep.subr.mxu0 0.0
    %484 = vmatpush1.msra.mxu0 0.0
    %485 = vmatprep.subr.mxu0 0.0
    %486 = vmatpush1.msra.mxu0 0.0
    %487 = vmatprep.subr.mxu0 0.0
    %488 = vmatpush1.msra.mxu0 0.0
    %489 = vmatprep.subr.mxu0 0.0
    %490 = vmatpush1.msra.mxu0 0.0
    %491 = vmatprep.subr.mxu0 0.0
    %492 = vmatpush1.msra.mxu0 0.0
    %493 = vmatprep.subr.mxu0 0.0
    %494 = vmatpush1.msra.mxu0 0.0
    %495 = vmatprep.mubr.f32.mxu0 0.0
    %496 = vmatmul.mubr.f32.gmra.mrb[0].mxu0 %v429
    %v497 = vpop.f32.mrb[0].mxu0
    %v498 = vadd.f32 %v349, %v497
    %v499 = vpop.f32.mrb[0].mxu0
    %500 = vdwg.mxu0
    %v502 = vsel %vm351, %v293, 0
    %504 = vmatprep.subr.mxu0 0.0
    %505 = vmatpush1.msra.mxu0 %v356
    %506 = vmatprep.subr.mxu0 0.0
    %507 = vmatpush1.msra.mxu0 0.0
    %508 = vmatprep.subr.mxu0 0.0
    %509 = vmatpush1.msra.mxu0 0.0
    %510 = vmatprep.subr.mxu0 0.0
    %511 = vmatpush1.msra.mxu0 0.0
    %512 = vmatprep.subr.mxu0 0.0
    %513 = vmatpush1.msra.mxu0 0.0
    %514 = vmatprep.subr.mxu0 0.0
    %515 = vmatpush1.msra.mxu0 0.0
    %516 = vmatprep.subr.mxu0 0.0
    %517 = vmatpush1.msra.mxu0 0.0
    %518 = vmatprep.subr.mxu0 0.0
    %519 = vmatpush1.msra.mxu0 0.0
    %520 = vmatprep.subr.mxu0 0.0
    %521 = vmatpush1.msra.mxu0 0.0
    %522 = vmatprep.subr.mxu0 0.0
    %523 = vmatpush1.msra.mxu0 0.0
    %524 = vmatprep.subr.mxu0 0.0
    %525 = vmatpush1.msra.mxu0 0.0
    %526 = vmatprep.subr.mxu0 0.0
    %527 = vmatpush1.msra.mxu0 0.0
    %528 = vmatprep.subr.mxu0 0.0
    %529 = vmatpush1.msra.mxu0 0.0
    %530 = vmatprep.subr.mxu0 0.0
    %531 = vmatpush1.msra.mxu0 0.0
    %532 = vmatprep.subr.mxu0 0.0
    %533 = vmatpush1.msra.mxu0 0.0
    %534 = vmatprep.subr.mxu0 0.0
    %535 = vmatpush1.msra.mxu0 0.0
    %536 = vmatprep.subr.mxu0 0.0
    %537 = vmatpush1.msra.mxu0 0.0
    %538 = vmatprep.subr.mxu0 0.0
    %539 = vmatpush1.msra.mxu0 0.0
    %540 = vmatprep.subr.mxu0 0.0
    %541 = vmatpush1.msra.mxu0 0.0
    %542 = vmatprep.subr.mxu0 0.0
    %543 = vmatpush1.msra.mxu0 0.0
    %544 = vmatprep.subr.mxu0 0.0
    %545 = vmatpush1.msra.mxu0 0.0
    %546 = vmatprep.subr.mxu0 0.0
    %547 = vmatpush1.msra.mxu0 0.0
    %548 = vmatprep.subr.mxu0 0.0
    %549 = vmatpush1.msra.mxu0 0.0
    %550 = vmatprep.subr.mxu0 0.0
    %551 = vmatpush1.msra.mxu0 0.0
    %552 = vmatprep.subr.mxu0 0.0
    %553 = vmatpush1.msra.mxu0 0.0
    %554 = vmatprep.subr.mxu0 0.0
    %555 = vmatpush1.msra.mxu0 0.0
    %556 = vmatprep.subr.mxu0 0.0
    %557 = vmatpush1.msra.mxu0 0.0
    %558 = vmatprep.subr.mxu0 0.0
    %559 = vmatpush1.msra.mxu0 0.0
    %560 = vmatprep.subr.mxu0 0.0
    %561 = vmatpush1.msra.mxu0 0.0
    %562 = vmatprep.subr.mxu0 0.0
    %563 = vmatpush1.msra.mxu0 0.0
    %564 = vmatprep.subr.mxu0 0.0
    %565 = vmatpush1.msra.mxu0 0.0
    %566 = vmatprep.subr.mxu0 0.0
    %567 = vmatpush1.msra.mxu0 0.0
    %568 = vmatprep.mubr.f32.mxu0 0.0
    %569 = vmatmul.mubr.f32.gmra.mrb[0].mxu0 %v502
    %v570 = vpop.f32.mrb[0].mxu0
    %v571 = vadd.f32 %v349, %v570
    %v572 = vpop.f32.mrb[0].mxu0
    %573 = vdwg.mxu0
    %v575 = vsel %vm351, %v294, 0
    %577 = vmatprep.subr.mxu0 0.0
    %578 = vmatpush1.msra.mxu0 %v356
    %579 = vmatprep.subr.mxu0 0.0
    %580 = vmatpush1.msra.mxu0 0.0
    %581 = vmatprep.subr.mxu0 0.0
    %582 = vmatpush1.msra.mxu0 0.0
    %583 = vmatprep.subr.mxu0 0.0
    %584 = vmatpush1.msra.mxu0 0.0
    %585 = vmatprep.subr.mxu0 0.0
    %586 = vmatpush1.msra.mxu0 0.0
    %587 = vmatprep.subr.mxu0 0.0
    %588 = vmatpush1.msra.mxu0 0.0
    %589 = vmatprep.subr.mxu0 0.0
    %590 = vmatpush1.msra.mxu0 0.0
    %591 = vmatprep.subr.mxu0 0.0
    %592 = vmatpush1.msra.mxu0 0.0
    %593 = vmatprep.subr.mxu0 0.0
    %594 = vmatpush1.msra.mxu0 0.0
    %595 = vmatprep.subr.mxu0 0.0
    %596 = vmatpush1.msra.mxu0 0.0
    %597 = vmatprep.subr.mxu0 0.0
    %598 = vmatpush1.msra.mxu0 0.0
    %599 = vmatprep.subr.mxu0 0.0
    %600 = vmatpush1.msra.mxu0 0.0
    %601 = vmatprep.subr.mxu0 0.0
    %602 = vmatpush1.msra.mxu0 0.0
    %603 = vmatprep.subr.mxu0 0.0
    %604 = vmatpush1.msra.mxu0 0.0
    %605 = vmatprep.subr.mxu0 0.0
    %606 = vmatpush1.msra.mxu0 0.0
    %607 = vmatprep.subr.mxu0 0.0
    %608 = vmatpush1.msra.mxu0 0.0
    %609 = vmatprep.subr.mxu0 0.0
    %610 = vmatpush1.msra.mxu0 0.0
    %611 = vmatprep.subr.mxu0 0.0
    %612 = vmatpush1.msra.mxu0 0.0
    %613 = vmatprep.subr.mxu0 0.0
    %614 = vmatpush1.msra.mxu0 0.0
    %615 = vmatprep.subr.mxu0 0.0
    %616 = vmatpush1.msra.mxu0 0.0
    %617 = vmatprep.subr.mxu0 0.0
    %618 = vmatpush1.msra.mxu0 0.0
    %619 = vmatprep.subr.mxu0 0.0
    %620 = vmatpush1.msra.mxu0 0.0
    %621 = vmatprep.subr.mxu0 0.0
    %622 = vmatpush1.msra.mxu0 0.0
    %623 = vmatprep.subr.mxu0 0.0
    %624 = vmatpush1.msra.mxu0 0.0
    %625 = vmatprep.subr.mxu0 0.0
    %626 = vmatpush1.msra.mxu0 0.0
    %627 = vmatprep.subr.mxu0 0.0
    %628 = vmatpush1.msra.mxu0 0.0
    %629 = vmatprep.subr.mxu0 0.0
    %630 = vmatpush1.msra.mxu0 0.0
    %631 = vmatprep.subr.mxu0 0.0
    %632 = vmatpush1.msra.mxu0 0.0
    %633 = vmatprep.subr.mxu0 0.0
    %634 = vmatpush1.msra.mxu0 0.0
    %635 = vmatprep.subr.mxu0 0.0
    %636 = vmatpush1.msra.mxu0 0.0
    %637 = vmatprep.subr.mxu0 0.0
    %638 = vmatpush1.msra.mxu0 0.0
    %639 = vmatprep.subr.mxu0 0.0
    %640 = vmatpush1.msra.mxu0 0.0
    %641 = vmatprep.mubr.f32.mxu0 0.0
    %642 = vmatmul.mubr.f32.gmra.mrb[0].mxu0 %v575
    %v643 = vpop.f32.mrb[0].mxu0
    %v644 = vadd.f32 %v349, %v643
    %v645 = vpop.f32.mrb[0].mxu0
    %646 = vdwg.mxu0
    %v648 = vsel %vm351, %v295, 0
    %650 = vmatprep.subr.mxu0 0.0
    %651 = vmatpush1.msra.mxu0 %v356
    %652 = vmatprep.subr.mxu0 0.0
    %653 = vmatpush1.msra.mxu0 0.0
    %654 = vmatprep.subr.mxu0 0.0
    %655 = vmatpush1.msra.mxu0 0.0
    %656 = vmatprep.subr.mxu0 0.0
    %657 = vmatpush1.msra.mxu0 0.0
    %658 = vmatprep.subr.mxu0 0.0
    %659 = vmatpush1.msra.mxu0 0.0
    %660 = vmatprep.subr.mxu0 0.0
    %661 = vmatpush1.msra.mxu0 0.0
    %662 = vmatprep.subr.mxu0 0.0
    %663 = vmatpush1.msra.mxu0 0.0
    %664 = vmatprep.subr.mxu0 0.0
    %665 = vmatpush1.msra.mxu0 0.0
    %666 = vmatprep.subr.mxu0 0.0
    %667 = vmatpush1.msra.mxu0 0.0
    %668 = vmatprep.subr.mxu0 0.0
    %669 = vmatpush1.msra.mxu0 0.0
    %670 = vmatprep.subr.mxu0 0.0
    %671 = vmatpush1.msra.mxu0 0.0
    %672 = vmatprep.subr.mxu0 0.0
    %673 = vmatpush1.msra.mxu0 0.0
    %674 = vmatprep.subr.mxu0 0.0
    %675 = vmatpush1.msra.mxu0 0.0
    %676 = vmatprep.subr.mxu0 0.0
    %677 = vmatpush1.msra.mxu0 0.0
    %678 = vmatprep.subr.mxu0 0.0
    %679 = vmatpush1.msra.mxu0 0.0
    %680 = vmatprep.subr.mxu0 0.0
    %681 = vmatpush1.msra.mxu0 0.0
    %682 = vmatprep.subr.mxu0 0.0
    %683 = vmatpush1.msra.mxu0 0.0
    %684 = vmatprep.subr.mxu0 0.0
    %685 = vmatpush1.msra.mxu0 0.0
    %686 = vmatprep.subr.mxu0 0.0
    %687 = vmatpush1.msra.mxu0 0.0
    %688 = vmatprep.subr.mxu0 0.0
    %689 = vmatpush1.msra.mxu0 0.0
    %690 = vmatprep.subr.mxu0 0.0
    %691 = vmatpush1.msra.mxu0 0.0
    %692 = vmatprep.subr.mxu0 0.0
    %693 = vmatpush1.msra.mxu0 0.0
    %694 = vmatprep.subr.mxu0 0.0
    %695 = vmatpush1.msra.mxu0 0.0
    %696 = vmatprep.subr.mxu0 0.0
    %697 = vmatpush1.msra.mxu0 0.0
    %698 = vmatprep.subr.mxu0 0.0
    %699 = vmatpush1.msra.mxu0 0.0
    %700 = vmatprep.subr.mxu0 0.0
    %701 = vmatpush1.msra.mxu0 0.0
    %702 = vmatprep.subr.mxu0 0.0
    %703 = vmatpush1.msra.mxu0 0.0
    %704 = vmatprep.subr.mxu0 0.0
    %705 = vmatpush1.msra.mxu0 0.0
    %706 = vmatprep.subr.mxu0 0.0
    %707 = vmatpush1.msra.mxu0 0.0
    %708 = vmatprep.subr.mxu0 0.0
    %709 = vmatpush1.msra.mxu0 0.0
    %710 = vmatprep.subr.mxu0 0.0
    %711 = vmatpush1.msra.mxu0 0.0
    %712 = vmatprep.subr.mxu0 0.0
    %713 = vmatpush1.msra.mxu0 0.0
    %714 = vmatprep.mubr.f32.mxu0 0.0
    %715 = vmatmul.mubr.f32.gmra.mrb[0].mxu0 %v648
    %v716 = vpop.f32.mrb[0].mxu0
    %v717 = vadd.f32 %v349, %v716
    %v718 = vpop.f32.mrb[0].mxu0
    %719 = vdwg.mxu0
    %v721 = vsel %vm351, %v296, 0
    %723 = vmatprep.subr.mxu0 0.0
    %724 = vmatpush1.msra.mxu0 %v356
    %725 = vmatprep.subr.mxu0 0.0
    %726 = vmatpush1.msra.mxu0 0.0
    %727 = vmatprep.subr.mxu0 0.0
    %728 = vmatpush1.msra.mxu0 0.0
    %729 = vmatprep.subr.mxu0 0.0
    %730 = vmatpush1.msra.mxu0 0.0
    %731 = vmatprep.subr.mxu0 0.0
    %732 = vmatpush1.msra.mxu0 0.0
    %733 = vmatprep.subr.mxu0 0.0
    %734 = vmatpush1.msra.mxu0 0.0
    %735 = vmatprep.subr.mxu0 0.0
    %736 = vmatpush1.msra.mxu0 0.0
    %737 = vmatprep.subr.mxu0 0.0
    %738 = vmatpush1.msra.mxu0 0.0
    %739 = vmatprep.subr.mxu0 0.0
    %740 = vmatpush1.msra.mxu0 0.0
    %741 = vmatprep.subr.mxu0 0.0
    %742 = vmatpush1.msra.mxu0 0.0
    %743 = vmatprep.subr.mxu0 0.0
    %744 = vmatpush1.msra.mxu0 0.0
    %745 = vmatprep.subr.mxu0 0.0
    %746 = vmatpush1.msra.mxu0 0.0
    %747 = vmatprep.subr.mxu0 0.0
    %748 = vmatpush1.msra.mxu0 0.0
    %749 = vmatprep.subr.mxu0 0.0
    %750 = vmatpush1.msra.mxu0 0.0
    %751 = vmatprep.subr.mxu0 0.0
    %752 = vmatpush1.msra.mxu0 0.0
    %753 = vmatprep.subr.mxu0 0.0
    %754 = vmatpush1.msra.mxu0 0.0
    %755 = vmatprep.subr.mxu0 0.0
    %756 = vmatpush1.msra.mxu0 0.0
    %757 = vmatprep.subr.mxu0 0.0
    %758 = vmatpush1.msra.mxu0 0.0
    %759 = vmatprep.subr.mxu0 0.0
    %760 = vmatpush1.msra.mxu0 0.0
    %761 = vmatprep.subr.mxu0 0.0
    %762 = vmatpush1.msra.mxu0 0.0
    %763 = vmatprep.subr.mxu0 0.0
    %764 = vmatpush1.msra.mxu0 0.0
    %765 = vmatprep.subr.mxu0 0.0
    %766 = vmatpush1.msra.mxu0 0.0
    %767 = vmatprep.subr.mxu0 0.0
    %768 = vmatpush1.msra.mxu0 0.0
    %769 = vmatprep.subr.mxu0 0.0
    %770 = vmatpush1.msra.mxu0 0.0
    %771 = vmatprep.subr.mxu0 0.0
    %772 = vmatpush1.msra.mxu0 0.0
    %773 = vmatprep.subr.mxu0 0.0
    %774 = vmatpush1.msra.mxu0 0.0
    %775 = vmatprep.subr.mxu0 0.0
    %776 = vmatpush1.msra.mxu0 0.0
    %777 = vmatprep.subr.mxu0 0.0
    %778 = vmatpush1.msra.mxu0 0.0
    %779 = vmatprep.subr.mxu0 0.0
    %780 = vmatpush1.msra.mxu0 0.0
    %781 = vmatprep.subr.mxu0 0.0
    %782 = vmatpush1.msra.mxu0 0.0
    %783 = vmatprep.subr.mxu0 0.0
    %784 = vmatpush1.msra.mxu0 0.0
    %785 = vmatprep.subr.mxu0 0.0
    %786 = vmatpush1.msra.mxu0 0.0
    %787 = vmatprep.mubr.f32.mxu0 0.0
    %788 = vmatmul.mubr.f32.gmra.mrb[0].mxu0 %v721
    %v789 = vpop.f32.mrb[0].mxu0
    %v790 = vadd.f32 %v349, %v789
    %v791 = vpop.f32.mrb[0].mxu0
    %792 = vdwg.mxu0
    %v794 = vsel %vm351, %v297, 0
    %796 = vmatprep.subr.mxu0 0.0
    %797 = vmatpush1.msra.mxu0 %v356
    %798 = vmatprep.subr.mxu0 0.0
    %799 = vmatpush1.msra.mxu0 0.0
    %800 = vmatprep.subr.mxu0 0.0
    %801 = vmatpush1.msra.mxu0 0.0
    %802 = vmatprep.subr.mxu0 0.0
    %803 = vmatpush1.msra.mxu0 0.0
    %804 = vmatprep.subr.mxu0 0.0
    %805 = vmatpush1.msra.mxu0 0.0
    %806 = vmatprep.subr.mxu0 0.0
    %807 = vmatpush1.msra.mxu0 0.0
    %808 = vmatprep.subr.mxu0 0.0
    %809 = vmatpush1.msra.mxu0 0.0
    %810 = vmatprep.subr.mxu0 0.0
    %811 = vmatpush1.msra.mxu0 0.0
    %812 = vmatprep.subr.mxu0 0.0
    %813 = vmatpush1.msra.mxu0 0.0
    %814 = vmatprep.subr.mxu0 0.0
    %815 = vmatpush1.msra.mxu0 0.0
    %816 = vmatprep.subr.mxu0 0.0
    %817 = vmatpush1.msra.mxu0 0.0
    %818 = vmatprep.subr.mxu0 0.0
    %819 = vmatpush1.msra.mxu0 0.0
    %820 = vmatprep.subr.mxu0 0.0
    %821 = vmatpush1.msra.mxu0 0.0
    %822 = vmatprep.subr.mxu0 0.0
    %823 = vmatpush1.msra.mxu0 0.0
    %824 = vmatprep.subr.mxu0 0.0
    %825 = vmatpush1.msra.mxu0 0.0
    %826 = vmatprep.subr.mxu0 0.0
    %827 = vmatpush1.msra.mxu0 0.0
    %828 = vmatprep.subr.mxu0 0.0
    %829 = vmatpush1.msra.mxu0 0.0
    %830 = vmatprep.subr.mxu0 0.0
    %831 = vmatpush1.msra.mxu0 0.0
    %832 = vmatprep.subr.mxu0 0.0
    %833 = vmatpush1.msra.mxu0 0.0
    %834 = vmatprep.subr.mxu0 0.0
    %835 = vmatpush1.msra.mxu0 0.0
    %836 = vmatprep.subr.mxu0 0.0
    %837 = vmatpush1.msra.mxu0 0.0
    %838 = vmatprep.subr.mxu0 0.0
    %839 = vmatpush1.msra.mxu0 0.0
    %840 = vmatprep.subr.mxu0 0.0
    %841 = vmatpush1.msra.mxu0 0.0
    %842 = vmatprep.subr.mxu0 0.0
    %843 = vmatpush1.msra.mxu0 0.0
    %844 = vmatprep.subr.mxu0 0.0
    %845 = vmatpush1.msra.mxu0 0.0
    %846 = vmatprep.subr.mxu0 0.0
    %847 = vmatpush1.msra.mxu0 0.0
    %848 = vmatprep.subr.mxu0 0.0
    %849 = vmatpush1.msra.mxu0 0.0
    %850 = vmatprep.subr.mxu0 0.0
    %851 = vmatpush1.msra.mxu0 0.0
    %852 = vmatprep.subr.mxu0 0.0
    %853 = vmatpush1.msra.mxu0 0.0
    %854 = vmatprep.subr.mxu0 0.0
    %855 = vmatpush1.msra.mxu0 0.0
    %856 = vmatprep.subr.mxu0 0.0
    %857 = vmatpush1.msra.mxu0 0.0
    %858 = vmatprep.subr.mxu0 0.0
    %859 = vmatpush1.msra.mxu0 0.0
    %860 = vmatprep.mubr.f32.mxu0 0.0
    %861 = vmatmul.mubr.f32.gmra.mrb[0].mxu0 %v794
    %v862 = vpop.f32.mrb[0].mxu0
    %v863 = vadd.f32 %v349, %v862
    %v864 = vpop.f32.mrb[0].mxu0
    %865 = vdwg.mxu0
    %v867 = vsel %vm351, %v298, 0
    %869 = vmatprep.subr.mxu0 0.0
    %870 = vmatpush1.msra.mxu0 %v356
    %871 = vmatprep.subr.mxu0 0.0
    %872 = vmatpush1.msra.mxu0 0.0
    %873 = vmatprep.subr.mxu0 0.0
    %874 = vmatpush1.msra.mxu0 0.0
    %875 = vmatprep.subr.mxu0 0.0
    %876 = vmatpush1.msra.mxu0 0.0
    %877 = vmatprep.subr.mxu0 0.0
    %878 = vmatpush1.msra.mxu0 0.0
    %879 = vmatprep.subr.mxu0 0.0
    %880 = vmatpush1.msra.mxu0 0.0
    %881 = vmatprep.subr.mxu0 0.0
    %882 = vmatpush1.msra.mxu0 0.0
    %883 = vmatprep.subr.mxu0 0.0
    %884 = vmatpush1.msra.mxu0 0.0
    %885 = vmatprep.subr.mxu0 0.0
    %886 = vmatpush1.msra.mxu0 0.0
    %887 = vmatprep.subr.mxu0 0.0
    %888 = vmatpush1.msra.mxu0 0.0
    %889 = vmatprep.subr.mxu0 0.0
    %890 = vmatpush1.msra.mxu0 0.0
    %891 = vmatprep.subr.mxu0 0.0
    %892 = vmatpush1.msra.mxu0 0.0
    %893 = vmatprep.subr.mxu0 0.0
    %894 = vmatpush1.msra.mxu0 0.0
    %895 = vmatprep.subr.mxu0 0.0
    %896 = vmatpush1.msra.mxu0 0.0
    %897 = vmatprep.subr.mxu0 0.0
    %898 = vmatpush1.msra.mxu0 0.0
    %899 = vmatprep.subr.mxu0 0.0
    %900 = vmatpush1.msra.mxu0 0.0
    %901 = vmatprep.subr.mxu0 0.0
    %902 = vmatpush1.msra.mxu0 0.0
    %903 = vmatprep.subr.mxu0 0.0
    %904 = vmatpush1.msra.mxu0 0.0
    %905 = vmatprep.subr.mxu0 0.0
    %906 = vmatpush1.msra.mxu0 0.0
    %907 = vmatprep.subr.mxu0 0.0
    %908 = vmatpush1.msra.mxu0 0.0
    %909 = vmatprep.subr.mxu0 0.0
    %910 = vmatpush1.msra.mxu0 0.0
    %911 = vmatprep.subr.mxu0 0.0
    %912 = vmatpush1.msra.mxu0 0.0
    %913 = vmatprep.subr.mxu0 0.0
    %914 = vmatpush1.msra.mxu0 0.0
    %915 = vmatprep.subr.mxu0 0.0
    %916 = vmatpush1.msra.mxu0 0.0
    %917 = vmatprep.subr.mxu0 0.0
    %918 = vmatpush1.msra.mxu0 0.0
    %919 = vmatprep.subr.mxu0 0.0
    %920 = vmatpush1.msra.mxu0 0.0
    %921 = vmatprep.subr.mxu0 0.0
    %922 = vmatpush1.msra.mxu0 0.0
    %923 = vmatprep.subr.mxu0 0.0
    %924 = vmatpush1.msra.mxu0 0.0
    %925 = vmatprep.subr.mxu0 0.0
    %926 = vmatpush1.msra.mxu0 0.0
    %927 = vmatprep.subr.mxu0 0.0
    %928 = vmatpush1.msra.mxu0 0.0
    %929 = vmatprep.subr.mxu0 0.0
    %930 = vmatpush1.msra.mxu0 0.0
    %931 = vmatprep.subr.mxu0 0.0
    %932 = vmatpush1.msra.mxu0 0.0
    %933 = vmatprep.mubr.f32.mxu0 0.0
    %934 = vmatmul.mubr.f32.gmra.mrb[0].mxu0 %v867
    %v935 = vpop.f32.mrb[0].mxu0
    %v936 = vadd.f32 %v349, %v935
    %v937 = vpop.f32.mrb[0].mxu0
    %938 = vdwg.mxu0
    %v939 = vld [vmem:[%s3] sm:$0x1f]
    %v940 = vadd.f32 %v425, %v939
    %v941 = vadd.f32 %v498, %v939
    %v942 = vadd.f32 %v571, %v939
    %v943 = vadd.f32 %v644, %v939
    %v944 = vadd.f32 %v717, %v939
    %v945 = vadd.f32 %v790, %v939
    %v946 = vadd.f32 %v863, %v939
    %v947 = vadd.f32 %v936, %v939
    %v948 = vld [vmem:[%s5] sm:$0x1]
    %v950 = vlaneseq
    %v951 = vshrl.u32 %v950, 7
    %v952 = vsub.s32 0, %v951
    %v953 = vrot.slane %v948, %v952
    %vm955 = vcmask 261120
    %v957 = vsel %vm955, %v940, 0
    %959 = vmatprep.subr.mxu0 0.0
    %960 = vmatpush1.msra.mxu0 %v300
    %961 = vmatprep.subr.mxu0 0.0
    %962 = vmatpush1.msra.mxu0 %v301
    %963 = vmatprep.subr.mxu0 0.0
    %964 = vmatpush1.msra.mxu0 %v302
    %965 = vmatprep.subr.mxu0 0.0
    %966 = vmatpush1.msra.mxu0 %v303
    %967 = vmatprep.subr.mxu0 0.0
    %968 = vmatpush1.msra.mxu0 0.0
    %969 = vmatprep.subr.mxu0 0.0
    %970 = vmatpush1.msra.mxu0 0.0
    %971 = vmatprep.subr.mxu0 0.0
    %972 = vmatpush1.msra.mxu0 0.0
    %973 = vmatprep.subr.mxu0 0.0
    %974 = vmatpush1.msra.mxu0 0.0
    %975 = vmatprep.subr.mxu0 0.0
    %976 = vmatpush1.msra.mxu0 0.0
    %977 = vmatprep.subr.mxu0 0.0
    %978 = vmatpush1.msra.mxu0 0.0
    %979 = vmatprep.subr.mxu0 0.0
    %980 = vmatpush1.msra.mxu0 0.0
    %981 = vmatprep.subr.mxu0 0.0
    %982 = vmatpush1.msra.mxu0 0.0
    %983 = vmatprep.subr.mxu0 0.0
    %984 = vmatpush1.msra.mxu0 0.0
    %985 = vmatprep.subr.mxu0 0.0
    %986 = vmatpush1.msra.mxu0 0.0
    %987 = vmatprep.subr.mxu0 0.0
    %988 = vmatpush1.msra.mxu0 0.0
    %989 = vmatprep.subr.mxu0 0.0
    %990 = vmatpush1.msra.mxu0 0.0
    %991 = vmatprep.subr.mxu0 0.0
    %992 = vmatpush1.msra.mxu0 0.0
    %993 = vmatprep.subr.mxu0 0.0
    %994 = vmatpush1.msra.mxu0 0.0
    %995 = vmatprep.subr.mxu0 0.0
    %996 = vmatpush1.msra.mxu0 0.0
    %997 = vmatprep.subr.mxu0 0.0
    %998 = vmatpush1.msra.mxu0 0.0
    %999 = vmatprep.subr.mxu0 0.0
    %1000 = vmatpush1.msra.mxu0 0.0
    %1001 = vmatprep.subr.mxu0 0.0
    %1002 = vmatpush1.msra.mxu0 0.0
    %1003 = vmatprep.subr.mxu0 0.0
    %1004 = vmatpush1.msra.mxu0 0.0
    %1005 = vmatprep.subr.mxu0 0.0
    %1006 = vmatpush1.msra.mxu0 0.0
    %1007 = vmatprep.subr.mxu0 0.0
    %1008 = vmatpush1.msra.mxu0 0.0
    %1009 = vmatprep.subr.mxu0 0.0
    %1010 = vmatpush1.msra.mxu0 0.0
    %1011 = vmatprep.subr.mxu0 0.0
    %1012 = vmatpush1.msra.mxu0 0.0
    %1013 = vmatprep.subr.mxu0 0.0
    %1014 = vmatpush1.msra.mxu0 0.0
    %1015 = vmatprep.subr.mxu0 0.0
    %1016 = vmatpush1.msra.mxu0 0.0
    %1017 = vmatprep.subr.mxu0 0.0
    %1018 = vmatpush1.msra.mxu0 0.0
    %1019 = vmatprep.subr.mxu0 0.0
    %1020 = vmatpush1.msra.mxu0 0.0
    %1021 = vmatprep.subr.mxu0 0.0
    %1022 = vmatpush1.msra.mxu0 0.0
    %1023 = vmatprep.mubr.f32.mxu0 0.0
    %1024 = vmatmul.mubr.f32.gmra.mrb[0].mxu0 %v957
    %v1025 = vpop.f32.mrb[0].mxu0
    %v1026 = vadd.f32 %v953, %v1025
    %v1027 = vpop.f32.mrb[0].mxu0
    %1028 = vdwg.mxu0
    %v1030 = vsel %vm955, %v941, 0
    %1032 = vmatprep.subr.mxu0 0.0
    %1033 = vmatpush1.msra.mxu0 %v300
    %1034 = vmatprep.subr.mxu0 0.0
    %1035 = vmatpush1.msra.mxu0 %v301
    %1036 = vmatprep.subr.mxu0 0.0
    %1037 = vmatpush1.msra.mxu0 %v302
    %1038 = vmatprep.subr.mxu0 0.0
    %1039 = vmatpush1.msra.mxu0 %v303
    %1040 = vmatprep.subr.mxu0 0.0
    %1041 = vmatpush1.msra.mxu0 0.0
    %1042 = vmatprep.subr.mxu0 0.0
    %1043 = vmatpush1.msra.mxu0 0.0
    %1044 = vmatprep.subr.mxu0 0.0
    %1045 = vmatpush1.msra.mxu0 0.0
    %1046 = vmatprep.subr.mxu0 0.0
    %1047 = vmatpush1.msra.mxu0 0.0
    %1048 = vmatprep.subr.mxu0 0.0
    %1049 = vmatpush1.msra.mxu0 0.0
    %1050 = vmatprep.subr.mxu0 0.0
    %1051 = vmatpush1.msra.mxu0 0.0
    %1052 = vmatprep.subr.mxu0 0.0
    %1053 = vmatpush1.msra.mxu0 0.0
    %1054 = vmatprep.subr.mxu0 0.0
    %1055 = vmatpush1.msra.mxu0 0.0
    %1056 = vmatprep.subr.mxu0 0.0
    %1057 = vmatpush1.msra.mxu0 0.0
    %1058 = vmatprep.subr.mxu0 0.0
    %1059 = vmatpush1.msra.mxu0 0.0
    %1060 = vmatprep.subr.mxu0 0.0
    %1061 = vmatpush1.msra.mxu0 0.0
    %1062 = vmatprep.subr.mxu0 0.0
    %1063 = vmatpush1.msra.mxu0 0.0
    %1064 = vmatprep.subr.mxu0 0.0
    %1065 = vmatpush1.msra.mxu0 0.0
    %1066 = vmatprep.subr.mxu0 0.0
    %1067 = vmatpush1.msra.mxu0 0.0
    %1068 = vmatprep.subr.mxu0 0.0
    %1069 = vmatpush1.msra.mxu0 0.0
    %1070 = vmatprep.subr.mxu0 0.0
    %1071 = vmatpush1.msra.mxu0 0.0
    %1072 = vmatprep.subr.mxu0 0.0
    %1073 = vmatpush1.msra.mxu0 0.0
    %1074 = vmatprep.subr.mxu0 0.0
    %1075 = vmatpush1.msra.mxu0 0.0
    %1076 = vmatprep.subr.mxu0 0.0
    %1077 = vmatpush1.msra.mxu0 0.0
    %1078 = vmatprep.subr.mxu0 0.0
    %1079 = vmatpush1.msra.mxu0 0.0
    %1080 = vmatprep.subr.mxu0 0.0
    %1081 = vmatpush1.msra.mxu0 0.0
    %1082 = vmatprep.subr.mxu0 0.0
    %1083 = vmatpush1.msra.mxu0 0.0
    %1084 = vmatprep.subr.mxu0 0.0
    %1085 = vmatpush1.msra.mxu0 0.0
    %1086 = vmatprep.subr.mxu0 0.0
    %1087 = vmatpush1.msra.mxu0 0.0
    %1088 = vmatprep.subr.mxu0 0.0
    %1089 = vmatpush1.msra.mxu0 0.0
    %1090 = vmatprep.subr.mxu0 0.0
    %1091 = vmatpush1.msra.mxu0 0.0
    %1092 = vmatprep.subr.mxu0 0.0
    %1093 = vmatpush1.msra.mxu0 0.0
    %1094 = vmatprep.subr.mxu0 0.0
    %1095 = vmatpush1.msra.mxu0 0.0
    %1096 = vmatprep.mubr.f32.mxu0 0.0
    %1097 = vmatmul.mubr.f32.gmra.mrb[0].mxu0 %v1030
    %v1098 = vpop.f32.mrb[0].mxu0
    %v1099 = vadd.f32 %v953, %v1098
    %v1100 = vpop.f32.mrb[0].mxu0
    %1101 = vdwg.mxu0
    %v1103 = vsel %vm955, %v942, 0
    %1105 = vmatprep.subr.mxu0 0.0
    %1106 = vmatpush1.msra.mxu0 %v300
    %1107 = vmatprep.subr.mxu0 0.0
    %1108 = vmatpush1.msra.mxu0 %v301
    %1109 = vmatprep.subr.mxu0 0.0
    %1110 = vmatpush1.msra.mxu0 %v302
    %1111 = vmatprep.subr.mxu0 0.0
    %1112 = vmatpush1.msra.mxu0 %v303
    %1113 = vmatprep.subr.mxu0 0.0
    %1114 = vmatpush1.msra.mxu0 0.0
    %1115 = vmatprep.subr.mxu0 0.0
    %1116 = vmatpush1.msra.mxu0 0.0
    %1117 = vmatprep.subr.mxu0 0.0
    %1118 = vmatpush1.msra.mxu0 0.0
    %1119 = vmatprep.subr.mxu0 0.0
    %1120 = vmatpush1.msra.mxu0 0.0
    %1121 = vmatprep.subr.mxu0 0.0
    %1122 = vmatpush1.msra.mxu0 0.0
    %1123 = vmatprep.subr.mxu0 0.0
    %1124 = vmatpush1.msra.mxu0 0.0
    %1125 = vmatprep.subr.mxu0 0.0
    %1126 = vmatpush1.msra.mxu0 0.0
    %1127 = vmatprep.subr.mxu0 0.0
    %1128 = vmatpush1.msra.mxu0 0.0
    %1129 = vmatprep.subr.mxu0 0.0
    %1130 = vmatpush1.msra.mxu0 0.0
    %1131 = vmatprep.subr.mxu0 0.0
    %1132 = vmatpush1.msra.mxu0 0.0
    %1133 = vmatprep.subr.mxu0 0.0
    %1134 = vmatpush1.msra.mxu0 0.0
    %1135 = vmatprep.subr.mxu0 0.0
    %1136 = vmatpush1.msra.mxu0 0.0
    %1137 = vmatprep.subr.mxu0 0.0
    %1138 = vmatpush1.msra.mxu0 0.0
    %1139 = vmatprep.subr.mxu0 0.0
    %1140 = vmatpush1.msra.mxu0 0.0
    %1141 = vmatprep.subr.mxu0 0.0
    %1142 = vmatpush1.msra.mxu0 0.0
    %1143 = vmatprep.subr.mxu0 0.0
    %1144 = vmatpush1.msra.mxu0 0.0
    %1145 = vmatprep.subr.mxu0 0.0
    %1146 = vmatpush1.msra.mxu0 0.0
    %1147 = vmatprep.subr.mxu0 0.0
    %1148 = vmatpush1.msra.mxu0 0.0
    %1149 = vmatprep.subr.mxu0 0.0
    %1150 = vmatpush1.msra.mxu0 0.0
    %1151 = vmatprep.subr.mxu0 0.0
    %1152 = vmatpush1.msra.mxu0 0.0
    %1153 = vmatprep.subr.mxu0 0.0
    %1154 = vmatpush1.msra.mxu0 0.0
    %1155 = vmatprep.subr.mxu0 0.0
    %1156 = vmatpush1.msra.mxu0 0.0
    %1157 = vmatprep.subr.mxu0 0.0
    %1158 = vmatpush1.msra.mxu0 0.0
    %1159 = vmatprep.subr.mxu0 0.0
    %1160 = vmatpush1.msra.mxu0 0.0
    %1161 = vmatprep.subr.mxu0 0.0
    %1162 = vmatpush1.msra.mxu0 0.0
    %1163 = vmatprep.subr.mxu0 0.0
    %1164 = vmatpush1.msra.mxu0 0.0
    %1165 = vmatprep.subr.mxu0 0.0
    %1166 = vmatpush1.msra.mxu0 0.0
    %1167 = vmatprep.subr.mxu0 0.0
    %1168 = vmatpush1.msra.mxu0 0.0
    %1169 = vmatprep.mubr.f32.mxu0 0.0
    %1170 = vmatmul.mubr.f32.gmra.mrb[0].mxu0 %v1103
    %v1171 = vpop.f32.mrb[0].mxu0
    %v1172 = vadd.f32 %v953, %v1171
    %v1173 = vpop.f32.mrb[0].mxu0
    %1174 = vdwg.mxu0
    %v1176 = vsel %vm955, %v943, 0
    %1178 = vmatprep.subr.mxu0 0.0
    %1179 = vmatpush1.msra.mxu0 %v300
    %1180 = vmatprep.subr.mxu0 0.0
    %1181 = vmatpush1.msra.mxu0 %v301
    %1182 = vmatprep.subr.mxu0 0.0
    %1183 = vmatpush1.msra.mxu0 %v302
    %1184 = vmatprep.subr.mxu0 0.0
    %1185 = vmatpush1.msra.mxu0 %v303
    %1186 = vmatprep.subr.mxu0 0.0
    %1187 = vmatpush1.msra.mxu0 0.0
    %1188 = vmatprep.subr.mxu0 0.0
    %1189 = vmatpush1.msra.mxu0 0.0
    %1190 = vmatprep.subr.mxu0 0.0
    %1191 = vmatpush1.msra.mxu0 0.0
    %1192 = vmatprep.subr.mxu0 0.0
    %1193 = vmatpush1.msra.mxu0 0.0
    %1194 = vmatprep.subr.mxu0 0.0
    %1195 = vmatpush1.msra.mxu0 0.0
    %1196 = vmatprep.subr.mxu0 0.0
    %1197 = vmatpush1.msra.mxu0 0.0
    %1198 = vmatprep.subr.mxu0 0.0
    %1199 = vmatpush1.msra.mxu0 0.0
    %1200 = vmatprep.subr.mxu0 0.0
    %1201 = vmatpush1.msra.mxu0 0.0
    %1202 = vmatprep.subr.mxu0 0.0
    %1203 = vmatpush1.msra.mxu0 0.0
    %1204 = vmatprep.subr.mxu0 0.0
    %1205 = vmatpush1.msra.mxu0 0.0
    %1206 = vmatprep.subr.mxu0 0.0
    %1207 = vmatpush1.msra.mxu0 0.0
    %1208 = vmatprep.subr.mxu0 0.0
    %1209 = vmatpush1.msra.mxu0 0.0
    %1210 = vmatprep.subr.mxu0 0.0
    %1211 = vmatpush1.msra.mxu0 0.0
    %1212 = vmatprep.subr.mxu0 0.0
    %1213 = vmatpush1.msra.mxu0 0.0
    %1214 = vmatprep.subr.mxu0 0.0
    %1215 = vmatpush1.msra.mxu0 0.0
    %1216 = vmatprep.subr.mxu0 0.0
    %1217 = vmatpush1.msra.mxu0 0.0
    %1218 = vmatprep.subr.mxu0 0.0
    %1219 = vmatpush1.msra.mxu0 0.0
    %1220 = vmatprep.subr.mxu0 0.0
    %1221 = vmatpush1.msra.mxu0 0.0
    %1222 = vmatprep.subr.mxu0 0.0
    %1223 = vmatpush1.msra.mxu0 0.0
    %1224 = vmatprep.subr.mxu0 0.0
    %1225 = vmatpush1.msra.mxu0 0.0
    %1226 = vmatprep.subr.mxu0 0.0
    %1227 = vmatpush1.msra.mxu0 0.0
    %1228 = vmatprep.subr.mxu0 0.0
    %1229 = vmatpush1.msra.mxu0 0.0
    %1230 = vmatprep.subr.mxu0 0.0
    %1231 = vmatpush1.msra.mxu0 0.0
    %1232 = vmatprep.subr.mxu0 0.0
    %1233 = vmatpush1.msra.mxu0 0.0
    %1234 = vmatprep.subr.mxu0 0.0
    %1235 = vmatpush1.msra.mxu0 0.0
    %1236 = vmatprep.subr.mxu0 0.0
    %1237 = vmatpush1.msra.mxu0 0.0
    %1238 = vmatprep.subr.mxu0 0.0
    %1239 = vmatpush1.msra.mxu0 0.0
    %1240 = vmatprep.subr.mxu0 0.0
    %1241 = vmatpush1.msra.mxu0 0.0
    %1242 = vmatprep.mubr.f32.mxu0 0.0
    %1243 = vmatmul.mubr.f32.gmra.mrb[0].mxu0 %v1176
    %v1244 = vpop.f32.mrb[0].mxu0
    %v1245 = vadd.f32 %v953, %v1244
    %v1246 = vpop.f32.mrb[0].mxu0
    %1247 = vdwg.mxu0
    %v1249 = vsel %vm955, %v944, 0
    %1251 = vmatprep.subr.mxu0 0.0
    %1252 = vmatpush1.msra.mxu0 %v300
    %1253 = vmatprep.subr.mxu0 0.0
    %1254 = vmatpush1.msra.mxu0 %v301
    %1255 = vmatprep.subr.mxu0 0.0
    %1256 = vmatpush1.msra.mxu0 %v302
    %1257 = vmatprep.subr.mxu0 0.0
    %1258 = vmatpush1.msra.mxu0 %v303
    %1259 = vmatprep.subr.mxu0 0.0
    %1260 = vmatpush1.msra.mxu0 0.0
    %1261 = vmatprep.subr.mxu0 0.0
    %1262 = vmatpush1.msra.mxu0 0.0
    %1263 = vmatprep.subr.mxu0 0.0
    %1264 = vmatpush1.msra.mxu0 0.0
    %1265 = vmatprep.subr.mxu0 0.0
    %1266 = vmatpush1.msra.mxu0 0.0
    %1267 = vmatprep.subr.mxu0 0.0
    %1268 = vmatpush1.msra.mxu0 0.0
    %1269 = vmatprep.subr.mxu0 0.0
    %1270 = vmatpush1.msra.mxu0 0.0
    %1271 = vmatprep.subr.mxu0 0.0
    %1272 = vmatpush1.msra.mxu0 0.0
    %1273 = vmatprep.subr.mxu0 0.0
    %1274 = vmatpush1.msra.mxu0 0.0
    %1275 = vmatprep.subr.mxu0 0.0
    %1276 = vmatpush1.msra.mxu0 0.0
    %1277 = vmatprep.subr.mxu0 0.0
    %1278 = vmatpush1.msra.mxu0 0.0
    %1279 = vmatprep.subr.mxu0 0.0
    %1280 = vmatpush1.msra.mxu0 0.0
    %1281 = vmatprep.subr.mxu0 0.0
    %1282 = vmatpush1.msra.mxu0 0.0
    %1283 = vmatprep.subr.mxu0 0.0
    %1284 = vmatpush1.msra.mxu0 0.0
    %1285 = vmatprep.subr.mxu0 0.0
    %1286 = vmatpush1.msra.mxu0 0.0
    %1287 = vmatprep.subr.mxu0 0.0
    %1288 = vmatpush1.msra.mxu0 0.0
    %1289 = vmatprep.subr.mxu0 0.0
    %1290 = vmatpush1.msra.mxu0 0.0
    %1291 = vmatprep.subr.mxu0 0.0
    %1292 = vmatpush1.msra.mxu0 0.0
    %1293 = vmatprep.subr.mxu0 0.0
    %1294 = vmatpush1.msra.mxu0 0.0
    %1295 = vmatprep.subr.mxu0 0.0
    %1296 = vmatpush1.msra.mxu0 0.0
    %1297 = vmatprep.subr.mxu0 0.0
    %1298 = vmatpush1.msra.mxu0 0.0
    %1299 = vmatprep.subr.mxu0 0.0
    %1300 = vmatpush1.msra.mxu0 0.0
    %1301 = vmatprep.subr.mxu0 0.0
    %1302 = vmatpush1.msra.mxu0 0.0
    %1303 = vmatprep.subr.mxu0 0.0
    %1304 = vmatpush1.msra.mxu0 0.0
    %1305 = vmatprep.subr.mxu0 0.0
    %1306 = vmatpush1.msra.mxu0 0.0
    %1307 = vmatprep.subr.mxu0 0.0
    %1308 = vmatpush1.msra.mxu0 0.0
    %1309 = vmatprep.subr.mxu0 0.0
    %1310 = vmatpush1.msra.mxu0 0.0
    %1311 = vmatprep.subr.mxu0 0.0
    %1312 = vmatpush1.msra.mxu0 0.0
    %1313 = vmatprep.subr.mxu0 0.0
    %1314 = vmatpush1.msra.mxu0 0.0
    %1315 = vmatprep.mubr.f32.mxu0 0.0
    %1316 = vmatmul.mubr.f32.gmra.mrb[0].mxu0 %v1249
    %v1317 = vpop.f32.mrb[0].mxu0
    %v1318 = vadd.f32 %v953, %v1317
    %v1319 = vpop.f32.mrb[0].mxu0
    %1320 = vdwg.mxu0
    %v1322 = vsel %vm955, %v945, 0
    %1324 = vmatprep.subr.mxu0 0.0
    %1325 = vmatpush1.msra.mxu0 %v300
    %1326 = vmatprep.subr.mxu0 0.0
    %1327 = vmatpush1.msra.mxu0 %v301
    %1328 = vmatprep.subr.mxu0 0.0
    %1329 = vmatpush1.msra.mxu0 %v302
    %1330 = vmatprep.subr.mxu0 0.0
    %1331 = vmatpush1.msra.mxu0 %v303
    %1332 = vmatprep.subr.mxu0 0.0
    %1333 = vmatpush1.msra.mxu0 0.0
    %1334 = vmatprep.subr.mxu0 0.0
    %1335 = vmatpush1.msra.mxu0 0.0
    %1336 = vmatprep.subr.mxu0 0.0
    %1337 = vmatpush1.msra.mxu0 0.0
    %1338 = vmatprep.subr.mxu0 0.0
    %1339 = vmatpush1.msra.mxu0 0.0
    %1340 = vmatprep.subr.mxu0 0.0
    %1341 = vmatpush1.msra.mxu0 0.0
    %1342 = vmatprep.subr.mxu0 0.0
    %1343 = vmatpush1.msra.mxu0 0.0
    %1344 = vmatprep.subr.mxu0 0.0
    %1345 = vmatpush1.msra.mxu0 0.0
    %1346 = vmatprep.subr.mxu0 0.0
    %1347 = vmatpush1.msra.mxu0 0.0
    %1348 = vmatprep.subr.mxu0 0.0
    %1349 = vmatpush1.msra.mxu0 0.0
    %1350 = vmatprep.subr.mxu0 0.0
    %1351 = vmatpush1.msra.mxu0 0.0
    %1352 = vmatprep.subr.mxu0 0.0
    %1353 = vmatpush1.msra.mxu0 0.0
    %1354 = vmatprep.subr.mxu0 0.0
    %1355 = vmatpush1.msra.mxu0 0.0
    %1356 = vmatprep.subr.mxu0 0.0
    %1357 = vmatpush1.msra.mxu0 0.0
    %1358 = vmatprep.subr.mxu0 0.0
    %1359 = vmatpush1.msra.mxu0 0.0
    %1360 = vmatprep.subr.mxu0 0.0
    %1361 = vmatpush1.msra.mxu0 0.0
    %1362 = vmatprep.subr.mxu0 0.0
    %1363 = vmatpush1.msra.mxu0 0.0
    %1364 = vmatprep.subr.mxu0 0.0
    %1365 = vmatpush1.msra.mxu0 0.0
    %1366 = vmatprep.subr.mxu0 0.0
    %1367 = vmatpush1.msra.mxu0 0.0
    %1368 = vmatprep.subr.mxu0 0.0
    %1369 = vmatpush1.msra.mxu0 0.0
    %1370 = vmatprep.subr.mxu0 0.0
    %1371 = vmatpush1.msra.mxu0 0.0
    %1372 = vmatprep.subr.mxu0 0.0
    %1373 = vmatpush1.msra.mxu0 0.0
    %1374 = vmatprep.subr.mxu0 0.0
    %1375 = vmatpush1.msra.mxu0 0.0
    %1376 = vmatprep.subr.mxu0 0.0
    %1377 = vmatpush1.msra.mxu0 0.0
    %1378 = vmatprep.subr.mxu0 0.0
    %1379 = vmatpush1.msra.mxu0 0.0
    %1380 = vmatprep.subr.mxu0 0.0
    %1381 = vmatpush1.msra.mxu0 0.0
    %1382 = vmatprep.subr.mxu0 0.0
    %1383 = vmatpush1.msra.mxu0 0.0
    %1384 = vmatprep.subr.mxu0 0.0
    %1385 = vmatpush1.msra.mxu0 0.0
    %1386 = vmatprep.subr.mxu0 0.0
    %1387 = vmatpush1.msra.mxu0 0.0
    %1388 = vmatprep.mubr.f32.mxu0 0.0
    %1389 = vmatmul.mubr.f32.gmra.mrb[0].mxu0 %v1322
    %v1390 = vpop.f32.mrb[0].mxu0
    %v1391 = vadd.f32 %v953, %v1390
    %v1392 = vpop.f32.mrb[0].mxu0
    %1393 = vdwg.mxu0
    %v1395 = vsel %vm955, %v946, 0
    %1397 = vmatprep.subr.mxu0 0.0
    %1398 = vmatpush1.msra.mxu0 %v300
    %1399 = vmatprep.subr.mxu0 0.0
    %1400 = vmatpush1.msra.mxu0 %v301
    %1401 = vmatprep.subr.mxu0 0.0
    %1402 = vmatpush1.msra.mxu0 %v302
    %1403 = vmatprep.subr.mxu0 0.0
    %1404 = vmatpush1.msra.mxu0 %v303
    %1405 = vmatprep.subr.mxu0 0.0
    %1406 = vmatpush1.msra.mxu0 0.0
    %1407 = vmatprep.subr.mxu0 0.0
    %1408 = vmatpush1.msra.mxu0 0.0
    %1409 = vmatprep.subr.mxu0 0.0
    %1410 = vmatpush1.msra.mxu0 0.0
    %1411 = vmatprep.subr.mxu0 0.0
    %1412 = vmatpush1.msra.mxu0 0.0
    %1413 = vmatprep.subr.mxu0 0.0
    %1414 = vmatpush1.msra.mxu0 0.0
    %1415 = vmatprep.subr.mxu0 0.0
    %1416 = vmatpush1.msra.mxu0 0.0
    %1417 = vmatprep.subr.mxu0 0.0
    %1418 = vmatpush1.msra.mxu0 0.0
    %1419 = vmatprep.subr.mxu0 0.0
    %1420 = vmatpush1.msra.mxu0 0.0
    %1421 = vmatprep.subr.mxu0 0.0
    %1422 = vmatpush1.msra.mxu0 0.0
    %1423 = vmatprep.subr.mxu0 0.0
    %1424 = vmatpush1.msra.mxu0 0.0
    %1425 = vmatprep.subr.mxu0 0.0
    %1426 = vmatpush1.msra.mxu0 0.0
    %1427 = vmatprep.subr.mxu0 0.0
    %1428 = vmatpush1.msra.mxu0 0.0
    %1429 = vmatprep.subr.mxu0 0.0
    %1430 = vmatpush1.msra.mxu0 0.0
    %1431 = vmatprep.subr.mxu0 0.0
    %1432 = vmatpush1.msra.mxu0 0.0
    %1433 = vmatprep.subr.mxu0 0.0
    %1434 = vmatpush1.msra.mxu0 0.0
    %1435 = vmatprep.subr.mxu0 0.0
    %1436 = vmatpush1.msra.mxu0 0.0
    %1437 = vmatprep.subr.mxu0 0.0
    %1438 = vmatpush1.msra.mxu0 0.0
    %1439 = vmatprep.subr.mxu0 0.0
    %1440 = vmatpush1.msra.mxu0 0.0
    %1441 = vmatprep.subr.mxu0 0.0
    %1442 = vmatpush1.msra.mxu0 0.0
    %1443 = vmatprep.subr.mxu0 0.0
    %1444 = vmatpush1.msra.mxu0 0.0
    %1445 = vmatprep.subr.mxu0 0.0
    %1446 = vmatpush1.msra.mxu0 0.0
    %1447 = vmatprep.subr.mxu0 0.0
    %1448 = vmatpush1.msra.mxu0 0.0
    %1449 = vmatprep.subr.mxu0 0.0
    %1450 = vmatpush1.msra.mxu0 0.0
    %1451 = vmatprep.subr.mxu0 0.0
    %1452 = vmatpush1.msra.mxu0 0.0
    %1453 = vmatprep.subr.mxu0 0.0
    %1454 = vmatpush1.msra.mxu0 0.0
    %1455 = vmatprep.subr.mxu0 0.0
    %1456 = vmatpush1.msra.mxu0 0.0
    %1457 = vmatprep.subr.mxu0 0.0
    %1458 = vmatpush1.msra.mxu0 0.0
    %1459 = vmatprep.subr.mxu0 0.0
    %1460 = vmatpush1.msra.mxu0 0.0
    %1461 = vmatprep.mubr.f32.mxu0 0.0
    %1462 = vmatmul.mubr.f32.gmra.mrb[0].mxu0 %v1395
    %v1463 = vpop.f32.mrb[0].mxu0
    %v1464 = vadd.f32 %v953, %v1463
    %v1465 = vpop.f32.mrb[0].mxu0
    %1466 = vdwg.mxu0
    %v1468 = vsel %vm955, %v947, 0
    %1470 = vmatprep.subr.mxu0 0.0
    %1471 = vmatpush1.msra.mxu0 %v300
    %1472 = vmatprep.subr.mxu0 0.0
    %1473 = vmatpush1.msra.mxu0 %v301
    %1474 = vmatprep.subr.mxu0 0.0
    %1475 = vmatpush1.msra.mxu0 %v302
    %1476 = vmatprep.subr.mxu0 0.0
    %1477 = vmatpush1.msra.mxu0 %v303
    %1478 = vmatprep.subr.mxu0 0.0
    %1479 = vmatpush1.msra.mxu0 0.0
    %1480 = vmatprep.subr.mxu0 0.0
    %1481 = vmatpush1.msra.mxu0 0.0
    %1482 = vmatprep.subr.mxu0 0.0
    %1483 = vmatpush1.msra.mxu0 0.0
    %1484 = vmatprep.subr.mxu0 0.0
    %1485 = vmatpush1.msra.mxu0 0.0
    %1486 = vmatprep.subr.mxu0 0.0
    %1487 = vmatpush1.msra.mxu0 0.0
    %1488 = vmatprep.subr.mxu0 0.0
    %1489 = vmatpush1.msra.mxu0 0.0
    %1490 = vmatprep.subr.mxu0 0.0
    %1491 = vmatpush1.msra.mxu0 0.0
    %1492 = vmatprep.subr.mxu0 0.0
    %1493 = vmatpush1.msra.mxu0 0.0
    %1494 = vmatprep.subr.mxu0 0.0
    %1495 = vmatpush1.msra.mxu0 0.0
    %1496 = vmatprep.subr.mxu0 0.0
    %1497 = vmatpush1.msra.mxu0 0.0
    %1498 = vmatprep.subr.mxu0 0.0
    %1499 = vmatpush1.msra.mxu0 0.0
    %1500 = vmatprep.subr.mxu0 0.0
    %1501 = vmatpush1.msra.mxu0 0.0
    %1502 = vmatprep.subr.mxu0 0.0
    %1503 = vmatpush1.msra.mxu0 0.0
    %1504 = vmatprep.subr.mxu0 0.0
    %1505 = vmatpush1.msra.mxu0 0.0
    %1506 = vmatprep.subr.mxu0 0.0
    %1507 = vmatpush1.msra.mxu0 0.0
    %1508 = vmatprep.subr.mxu0 0.0
    %1509 = vmatpush1.msra.mxu0 0.0
    %1510 = vmatprep.subr.mxu0 0.0
    %1511 = vmatpush1.msra.mxu0 0.0
    %1512 = vmatprep.subr.mxu0 0.0
    %1513 = vmatpush1.msra.mxu0 0.0
    %1514 = vmatprep.subr.mxu0 0.0
    %1515 = vmatpush1.msra.mxu0 0.0
    %1516 = vmatprep.subr.mxu0 0.0
    %1517 = vmatpush1.msra.mxu0 0.0
    %1518 = vmatprep.subr.mxu0 0.0
    %1519 = vmatpush1.msra.mxu0 0.0
    %1520 = vmatprep.subr.mxu0 0.0
    %1521 = vmatpush1.msra.mxu0 0.0
    %1522 = vmatprep.subr.mxu0 0.0
    %1523 = vmatpush1.msra.mxu0 0.0
    %1524 = vmatprep.subr.mxu0 0.0
    %1525 = vmatpush1.msra.mxu0 0.0
    %1526 = vmatprep.subr.mxu0 0.0
    %1527 = vmatpush1.msra.mxu0 0.0
    %1528 = vmatprep.subr.mxu0 0.0
    %1529 = vmatpush1.msra.mxu0 0.0
    %1530 = vmatprep.subr.mxu0 0.0
    %1531 = vmatpush1.msra.mxu0 0.0
    %1532 = vmatprep.subr.mxu0 0.0
    %1533 = vmatpush1.msra.mxu0 0.0
    %1534 = vmatprep.mubr.f32.mxu0 0.0
    %1535 = vmatmul.mubr.f32.gmra.mrb[0].mxu0 %v1468
    %v1536 = vpop.f32.mrb[0].mxu0
    %v1537 = vadd.f32 %v953, %v1536
    %v1538 = vpop.f32.mrb[0].mxu0
    %1539 = vdwg.mxu0
    %1541 = vrot.lane.b32.xlu0 %v1026, 96
    %v1542 = vpop.permute.xlu0 %1541
    %v1543 = vsel %vm49, %v1026, 0
    %v1545 = vsel %vm49, %v1542, 0
    %1547 = vmatprep.subr.mxu0 0.0
    %1548 = vmatpush1.xpose.msra.mxu0 %v1545
    %1549 = vmatprep.subr.mxu0 0.0
    %1550 = vmatpush1.xpose.msra.mxu0 0.0
    %1551 = vmatprep.subr.mxu0 0.0
    %1552 = vmatpush1.xpose.msra.mxu0 0.0
    %1553 = vmatprep.subr.mxu0 0.0
    %1554 = vmatpush1.xpose.msra.mxu0 0.0
    %1555 = vmatprep.subr.mxu0 0.0
    %1556 = vmatpush1.xpose.msra.mxu0 0.0
    %1557 = vmatprep.subr.mxu0 0.0
    %1558 = vmatpush1.xpose.msra.mxu0 0.0
    %1559 = vmatprep.subr.mxu0 0.0
    %1560 = vmatpush1.xpose.msra.mxu0 0.0
    %1561 = vmatprep.subr.mxu0 0.0
    %1562 = vmatpush1.xpose.msra.mxu0 0.0
    %1563 = vmatprep.subr.mxu0 0.0
    %1564 = vmatpush1.xpose.msra.mxu0 0.0
    %1565 = vmatprep.subr.mxu0 0.0
    %1566 = vmatpush1.xpose.msra.mxu0 0.0
    %1567 = vmatprep.subr.mxu0 0.0
    %1568 = vmatpush1.xpose.msra.mxu0 0.0
    %1569 = vmatprep.subr.mxu0 0.0
    %1570 = vmatpush1.xpose.msra.mxu0 0.0
    %1571 = vmatprep.subr.mxu0 0.0
    %1572 = vmatpush1.xpose.msra.mxu0 0.0
    %1573 = vmatprep.subr.mxu0 0.0
    %1574 = vmatpush1.xpose.msra.mxu0 0.0
    %1575 = vmatprep.subr.mxu0 0.0
    %1576 = vmatpush1.xpose.msra.mxu0 0.0
    %1577 = vmatprep.subr.mxu0 0.0
    %1578 = vmatpush1.xpose.msra.mxu0 0.0
    %1579 = vmatprep.subr.mxu0 0.0
    %1580 = vmatpush1.xpose.msra.mxu0 0.0
    %1581 = vmatprep.subr.mxu0 0.0
    %1582 = vmatpush1.xpose.msra.mxu0 0.0
    %1583 = vmatprep.subr.mxu0 0.0
    %1584 = vmatpush1.xpose.msra.mxu0 0.0
    %1585 = vmatprep.subr.mxu0 0.0
    %1586 = vmatpush1.xpose.msra.mxu0 0.0
    %1587 = vmatprep.subr.mxu0 0.0
    %1588 = vmatpush1.xpose.msra.mxu0 0.0
    %1589 = vmatprep.subr.mxu0 0.0
    %1590 = vmatpush1.xpose.msra.mxu0 0.0
    %1591 = vmatprep.subr.mxu0 0.0
    %1592 = vmatpush1.xpose.msra.mxu0 0.0
    %1593 = vmatprep.subr.mxu0 0.0
    %1594 = vmatpush1.xpose.msra.mxu0 0.0
    %1595 = vmatprep.subr.mxu0 0.0
    %1596 = vmatpush1.xpose.msra.mxu0 0.0
    %1597 = vmatprep.subr.mxu0 0.0
    %1598 = vmatpush1.xpose.msra.mxu0 0.0
    %1599 = vmatprep.subr.mxu0 0.0
    %1600 = vmatpush1.xpose.msra.mxu0 0.0
    %1601 = vmatprep.subr.mxu0 0.0
    %1602 = vmatpush1.xpose.msra.mxu0 0.0
    %1603 = vmatprep.subr.mxu0 0.0
    %1604 = vmatpush1.xpose.msra.mxu0 0.0
    %1605 = vmatprep.subr.mxu0 0.0
    %1606 = vmatpush1.xpose.msra.mxu0 0.0
    %1607 = vmatprep.subr.mxu0 0.0
    %1608 = vmatpush1.xpose.msra.mxu0 0.0
    %1609 = vmatprep.subr.mxu0 0.0
    %1610 = vmatpush1.xpose.msra.mxu0 0.0
    %1611 = vmatprep.mubr.f32.mxu0 0.0
    %1612 = vmatmul.mubr.f32.gmra.mrb[0].mxu0 %v1543
    %v1613 = vpop.f32.mrb[0].mxu0
    %v1614 = vadd.f32 0.0, %v1613
    %v1615 = vpop.f32.mrb[0].mxu0
    %1616 = vdwg.mxu0
    %1618 = vrot.lane.b32.xlu0 %v1099, 96
    %v1619 = vpop.permute.xlu0 %1618
    %v1620 = vsel %vm49, %v1099, 0
    %v1622 = vsel %vm49, %v1619, 0
    %1624 = vmatprep.subr.mxu0 0.0
    %1625 = vmatpush1.xpose.msra.mxu0 %v1622
    %1626 = vmatprep.subr.mxu0 0.0
    %1627 = vmatpush1.xpose.msra.mxu0 0.0
    %1628 = vmatprep.subr.mxu0 0.0
    %1629 = vmatpush1.xpose.msra.mxu0 0.0
    %1630 = vmatprep.subr.mxu0 0.0
    %1631 = vmatpush1.xpose.msra.mxu0 0.0
    %1632 = vmatprep.subr.mxu0 0.0
    %1633 = vmatpush1.xpose.msra.mxu0 0.0
    %1634 = vmatprep.subr.mxu0 0.0
    %1635 = vmatpush1.xpose.msra.mxu0 0.0
    %1636 = vmatprep.subr.mxu0 0.0
    %1637 = vmatpush1.xpose.msra.mxu0 0.0
    %1638 = vmatprep.subr.mxu0 0.0
    %1639 = vmatpush1.xpose.msra.mxu0 0.0
    %1640 = vmatprep.subr.mxu0 0.0
    %1641 = vmatpush1.xpose.msra.mxu0 0.0
    %1642 = vmatprep.subr.mxu0 0.0
    %1643 = vmatpush1.xpose.msra.mxu0 0.0
    %1644 = vmatprep.subr.mxu0 0.0
    %1645 = vmatpush1.xpose.msra.mxu0 0.0
    %1646 = vmatprep.subr.mxu0 0.0
    %1647 = vmatpush1.xpose.msra.mxu0 0.0
    %1648 = vmatprep.subr.mxu0 0.0
    %1649 = vmatpush1.xpose.msra.mxu0 0.0
    %1650 = vmatprep.subr.mxu0 0.0
    %1651 = vmatpush1.xpose.msra.mxu0 0.0
    %1652 = vmatprep.subr.mxu0 0.0
    %1653 = vmatpush1.xpose.msra.mxu0 0.0
    %1654 = vmatprep.subr.mxu0 0.0
    %1655 = vmatpush1.xpose.msra.mxu0 0.0
    %1656 = vmatprep.subr.mxu0 0.0
    %1657 = vmatpush1.xpose.msra.mxu0 0.0
    %1658 = vmatprep.subr.mxu0 0.0
    %1659 = vmatpush1.xpose.msra.mxu0 0.0
    %1660 = vmatprep.subr.mxu0 0.0
    %1661 = vmatpush1.xpose.msra.mxu0 0.0
    %1662 = vmatprep.subr.mxu0 0.0
    %1663 = vmatpush1.xpose.msra.mxu0 0.0
    %1664 = vmatprep.subr.mxu0 0.0
    %1665 = vmatpush1.xpose.msra.mxu0 0.0
    %1666 = vmatprep.subr.mxu0 0.0
    %1667 = vmatpush1.xpose.msra.mxu0 0.0
    %1668 = vmatprep.subr.mxu0 0.0
    %1669 = vmatpush1.xpose.msra.mxu0 0.0
    %1670 = vmatprep.subr.mxu0 0.0
    %1671 = vmatpush1.xpose.msra.mxu0 0.0
    %1672 = vmatprep.subr.mxu0 0.0
    %1673 = vmatpush1.xpose.msra.mxu0 0.0
    %1674 = vmatprep.subr.mxu0 0.0
    %1675 = vmatpush1.xpose.msra.mxu0 0.0
    %1676 = vmatprep.subr.mxu0 0.0
    %1677 = vmatpush1.xpose.msra.mxu0 0.0
    %1678 = vmatprep.subr.mxu0 0.0
    %1679 = vmatpush1.xpose.msra.mxu0 0.0
    %1680 = vmatprep.subr.mxu0 0.0
    %1681 = vmatpush1.xpose.msra.mxu0 0.0
    %1682 = vmatprep.subr.mxu0 0.0
    %1683 = vmatpush1.xpose.msra.mxu0 0.0
    %1684 = vmatprep.subr.mxu0 0.0
    %1685 = vmatpush1.xpose.msra.mxu0 0.0
    %1686 = vmatprep.subr.mxu0 0.0
    %1687 = vmatpush1.xpose.msra.mxu0 0.0
    %1688 = vmatprep.mubr.f32.mxu0 0.0
    %1689 = vmatmul.mubr.f32.gmra.mrb[0].mxu0 %v1620
    %v1690 = vpop.f32.mrb[0].mxu0
    %v1691 = vadd.f32 0.0, %v1690
    %v1692 = vpop.f32.mrb[0].mxu0
    %1693 = vdwg.mxu0
    %1695 = vrot.lane.b32.xlu0 %v1172, 96
    %v1696 = vpop.permute.xlu0 %1695
    %v1697 = vsel %vm49, %v1172, 0
    %v1699 = vsel %vm49, %v1696, 0
    %1701 = vmatprep.subr.mxu0 0.0
    %1702 = vmatpush1.xpose.msra.mxu0 %v1699
    %1703 = vmatprep.subr.mxu0 0.0
    %1704 = vmatpush1.xpose.msra.mxu0 0.0
    %1705 = vmatprep.subr.mxu0 0.0
    %1706 = vmatpush1.xpose.msra.mxu0 0.0
    %1707 = vmatprep.subr.mxu0 0.0
    %1708 = vmatpush1.xpose.msra.mxu0 0.0
    %1709 = vmatprep.subr.mxu0 0.0
    %1710 = vmatpush1.xpose.msra.mxu0 0.0
    %1711 = vmatprep.subr.mxu0 0.0
    %1712 = vmatpush1.xpose.msra.mxu0 0.0
    %1713 = vmatprep.subr.mxu0 0.0
    %1714 = vmatpush1.xpose.msra.mxu0 0.0
    %1715 = vmatprep.subr.mxu0 0.0
    %1716 = vmatpush1.xpose.msra.mxu0 0.0
    %1717 = vmatprep.subr.mxu0 0.0
    %1718 = vmatpush1.xpose.msra.mxu0 0.0
    %1719 = vmatprep.subr.mxu0 0.0
    %1720 = vmatpush1.xpose.msra.mxu0 0.0
    %1721 = vmatprep.subr.mxu0 0.0
    %1722 = vmatpush1.xpose.msra.mxu0 0.0
    %1723 = vmatprep.subr.mxu0 0.0
    %1724 = vmatpush1.xpose.msra.mxu0 0.0
    %1725 = vmatprep.subr.mxu0 0.0
    %1726 = vmatpush1.xpose.msra.mxu0 0.0
    %1727 = vmatprep.subr.mxu0 0.0
    %1728 = vmatpush1.xpose.msra.mxu0 0.0
    %1729 = vmatprep.subr.mxu0 0.0
    %1730 = vmatpush1.xpose.msra.mxu0 0.0
    %1731 = vmatprep.subr.mxu0 0.0
    %1732 = vmatpush1.xpose.msra.mxu0 0.0
    %1733 = vmatprep.subr.mxu0 0.0
    %1734 = vmatpush1.xpose.msra.mxu0 0.0
    %1735 = vmatprep.subr.mxu0 0.0
    %1736 = vmatpush1.xpose.msra.mxu0 0.0
    %1737 = vmatprep.subr.mxu0 0.0
    %1738 = vmatpush1.xpose.msra.mxu0 0.0
    %1739 = vmatprep.subr.mxu0 0.0
    %1740 = vmatpush1.xpose.msra.mxu0 0.0
    %1741 = vmatprep.subr.mxu0 0.0
    %1742 = vmatpush1.xpose.msra.mxu0 0.0
    %1743 = vmatprep.subr.mxu0 0.0
    %1744 = vmatpush1.xpose.msra.mxu0 0.0
    %1745 = vmatprep.subr.mxu0 0.0
    %1746 = vmatpush1.xpose.msra.mxu0 0.0
    %1747 = vmatprep.subr.mxu0 0.0
    %1748 = vmatpush1.xpose.msra.mxu0 0.0
    %1749 = vmatprep.subr.mxu0 0.0
    %1750 = vmatpush1.xpose.msra.mxu0 0.0
    %1751 = vmatprep.subr.mxu0 0.0
    %1752 = vmatpush1.xpose.msra.mxu0 0.0
    %1753 = vmatprep.subr.mxu0 0.0
    %1754 = vmatpush1.xpose.msra.mxu0 0.0
    %1755 = vmatprep.subr.mxu0 0.0
    %1756 = vmatpush1.xpose.msra.mxu0 0.0
    %1757 = vmatprep.subr.mxu0 0.0
    %1758 = vmatpush1.xpose.msra.mxu0 0.0
    %1759 = vmatprep.subr.mxu0 0.0
    %1760 = vmatpush1.xpose.msra.mxu0 0.0
    %1761 = vmatprep.subr.mxu0 0.0
    %1762 = vmatpush1.xpose.msra.mxu0 0.0
    %1763 = vmatprep.subr.mxu0 0.0
    %1764 = vmatpush1.xpose.msra.mxu0 0.0
    %1765 = vmatprep.mubr.f32.mxu0 0.0
    %1766 = vmatmul.mubr.f32.gmra.mrb[0].mxu0 %v1697
    %v1767 = vpop.f32.mrb[0].mxu0
    %v1768 = vadd.f32 0.0, %v1767
    %v1769 = vpop.f32.mrb[0].mxu0
    %1770 = vdwg.mxu0
    %1772 = vrot.lane.b32.xlu0 %v1245, 96
    %v1773 = vpop.permute.xlu0 %1772
    %v1774 = vsel %vm49, %v1245, 0
    %v1776 = vsel %vm49, %v1773, 0
    %1778 = vmatprep.subr.mxu0 0.0
    %1779 = vmatpush1.xpose.msra.mxu0 %v1776
    %1780 = vmatprep.subr.mxu0 0.0
    %1781 = vmatpush1.xpose.msra.mxu0 0.0
    %1782 = vmatprep.subr.mxu0 0.0
    %1783 = vmatpush1.xpose.msra.mxu0 0.0
    %1784 = vmatprep.subr.mxu0 0.0
    %1785 = vmatpush1.xpose.msra.mxu0 0.0
    %1786 = vmatprep.subr.mxu0 0.0
    %1787 = vmatpush1.xpose.msra.mxu0 0.0
    %1788 = vmatprep.subr.mxu0 0.0
    %1789 = vmatpush1.xpose.msra.mxu0 0.0
    %1790 = vmatprep.subr.mxu0 0.0
    %1791 = vmatpush1.xpose.msra.mxu0 0.0
    %1792 = vmatprep.subr.mxu0 0.0
    %1793 = vmatpush1.xpose.msra.mxu0 0.0
    %1794 = vmatprep.subr.mxu0 0.0
    %1795 = vmatpush1.xpose.msra.mxu0 0.0
    %1796 = vmatprep.subr.mxu0 0.0
    %1797 = vmatpush1.xpose.msra.mxu0 0.0
    %1798 = vmatprep.subr.mxu0 0.0
    %1799 = vmatpush1.xpose.msra.mxu0 0.0
    %1800 = vmatprep.subr.mxu0 0.0
    %1801 = vmatpush1.xpose.msra.mxu0 0.0
    %1802 = vmatprep.subr.mxu0 0.0
    %1803 = vmatpush1.xpose.msra.mxu0 0.0
    %1804 = vmatprep.subr.mxu0 0.0
    %1805 = vmatpush1.xpose.msra.mxu0 0.0
    %1806 = vmatprep.subr.mxu0 0.0
    %1807 = vmatpush1.xpose.msra.mxu0 0.0
    %1808 = vmatprep.subr.mxu0 0.0
    %1809 = vmatpush1.xpose.msra.mxu0 0.0
    %1810 = vmatprep.subr.mxu0 0.0
    %1811 = vmatpush1.xpose.msra.mxu0 0.0
    %1812 = vmatprep.subr.mxu0 0.0
    %1813 = vmatpush1.xpose.msra.mxu0 0.0
    %1814 = vmatprep.subr.mxu0 0.0
    %1815 = vmatpush1.xpose.msra.mxu0 0.0
    %1816 = vmatprep.subr.mxu0 0.0
    %1817 = vmatpush1.xpose.msra.mxu0 0.0
    %1818 = vmatprep.subr.mxu0 0.0
    %1819 = vmatpush1.xpose.msra.mxu0 0.0
    %1820 = vmatprep.subr.mxu0 0.0
    %1821 = vmatpush1.xpose.msra.mxu0 0.0
    %1822 = vmatprep.subr.mxu0 0.0
    %1823 = vmatpush1.xpose.msra.mxu0 0.0
    %1824 = vmatprep.subr.mxu0 0.0
    %1825 = vmatpush1.xpose.msra.mxu0 0.0
    %1826 = vmatprep.subr.mxu0 0.0
    %1827 = vmatpush1.xpose.msra.mxu0 0.0
    %1828 = vmatprep.subr.mxu0 0.0
    %1829 = vmatpush1.xpose.msra.mxu0 0.0
    %1830 = vmatprep.subr.mxu0 0.0
    %1831 = vmatpush1.xpose.msra.mxu0 0.0
    %1832 = vmatprep.subr.mxu0 0.0
    %1833 = vmatpush1.xpose.msra.mxu0 0.0
    %1834 = vmatprep.subr.mxu0 0.0
    %1835 = vmatpush1.xpose.msra.mxu0 0.0
    %1836 = vmatprep.subr.mxu0 0.0
    %1837 = vmatpush1.xpose.msra.mxu0 0.0
    %1838 = vmatprep.subr.mxu0 0.0
    %1839 = vmatpush1.xpose.msra.mxu0 0.0
    %1840 = vmatprep.subr.mxu0 0.0
    %1841 = vmatpush1.xpose.msra.mxu0 0.0
    %1842 = vmatprep.mubr.f32.mxu0 0.0
    %1843 = vmatmul.mubr.f32.gmra.mrb[0].mxu0 %v1774
    %v1844 = vpop.f32.mrb[0].mxu0
    %v1845 = vadd.f32 0.0, %v1844
    %v1846 = vpop.f32.mrb[0].mxu0
    %1847 = vdwg.mxu0
    %1849 = vrot.lane.b32.xlu0 %v1318, 96
    %v1850 = vpop.permute.xlu0 %1849
    %v1851 = vsel %vm49, %v1318, 0
    %v1853 = vsel %vm49, %v1850, 0
    %1855 = vmatprep.subr.mxu0 0.0
    %1856 = vmatpush1.xpose.msra.mxu0 %v1853
    %1857 = vmatprep.subr.mxu0 0.0
    %1858 = vmatpush1.xpose.msra.mxu0 0.0
    %1859 = vmatprep.subr.mxu0 0.0
    %1860 = vmatpush1.xpose.msra.mxu0 0.0
    %1861 = vmatprep.subr.mxu0 0.0
    %1862 = vmatpush1.xpose.msra.mxu0 0.0
    %1863 = vmatprep.subr.mxu0 0.0
    %1864 = vmatpush1.xpose.msra.mxu0 0.0
    %1865 = vmatprep.subr.mxu0 0.0
    %1866 = vmatpush1.xpose.msra.mxu0 0.0
    %1867 = vmatprep.subr.mxu0 0.0
    %1868 = vmatpush1.xpose.msra.mxu0 0.0
    %1869 = vmatprep.subr.mxu0 0.0
    %1870 = vmatpush1.xpose.msra.mxu0 0.0
    %1871 = vmatprep.subr.mxu0 0.0
    %1872 = vmatpush1.xpose.msra.mxu0 0.0
    %1873 = vmatprep.subr.mxu0 0.0
    %1874 = vmatpush1.xpose.msra.mxu0 0.0
    %1875 = vmatprep.subr.mxu0 0.0
    %1876 = vmatpush1.xpose.msra.mxu0 0.0
    %1877 = vmatprep.subr.mxu0 0.0
    %1878 = vmatpush1.xpose.msra.mxu0 0.0
    %1879 = vmatprep.subr.mxu0 0.0
    %1880 = vmatpush1.xpose.msra.mxu0 0.0
    %1881 = vmatprep.subr.mxu0 0.0
    %1882 = vmatpush1.xpose.msra.mxu0 0.0
    %1883 = vmatprep.subr.mxu0 0.0
    %1884 = vmatpush1.xpose.msra.mxu0 0.0
    %1885 = vmatprep.subr.mxu0 0.0
    %1886 = vmatpush1.xpose.msra.mxu0 0.0
    %1887 = vmatprep.subr.mxu0 0.0
    %1888 = vmatpush1.xpose.msra.mxu0 0.0
    %1889 = vmatprep.subr.mxu0 0.0
    %1890 = vmatpush1.xpose.msra.mxu0 0.0
    %1891 = vmatprep.subr.mxu0 0.0
    %1892 = vmatpush1.xpose.msra.mxu0 0.0
    %1893 = vmatprep.subr.mxu0 0.0
    %1894 = vmatpush1.xpose.msra.mxu0 0.0
    %1895 = vmatprep.subr.mxu0 0.0
    %1896 = vmatpush1.xpose.msra.mxu0 0.0
    %1897 = vmatprep.subr.mxu0 0.0
    %1898 = vmatpush1.xpose.msra.mxu0 0.0
    %1899 = vmatprep.subr.mxu0 0.0
    %1900 = vmatpush1.xpose.msra.mxu0 0.0
    %1901 = vmatprep.subr.mxu0 0.0
    %1902 = vmatpush1.xpose.msra.mxu0 0.0
    %1903 = vmatprep.subr.mxu0 0.0
    %1904 = vmatpush1.xpose.msra.mxu0 0.0
    %1905 = vmatprep.subr.mxu0 0.0
    %1906 = vmatpush1.xpose.msra.mxu0 0.0
    %1907 = vmatprep.subr.mxu0 0.0
    %1908 = vmatpush1.xpose.msra.mxu0 0.0
    %1909 = vmatprep.subr.mxu0 0.0
    %1910 = vmatpush1.xpose.msra.mxu0 0.0
    %1911 = vmatprep.subr.mxu0 0.0
    %1912 = vmatpush1.xpose.msra.mxu0 0.0
    %1913 = vmatprep.subr.mxu0 0.0
    %1914 = vmatpush1.xpose.msra.mxu0 0.0
    %1915 = vmatprep.subr.mxu0 0.0
    %1916 = vmatpush1.xpose.msra.mxu0 0.0
    %1917 = vmatprep.subr.mxu0 0.0
    %1918 = vmatpush1.xpose.msra.mxu0 0.0
    %1919 = vmatprep.mubr.f32.mxu0 0.0
    %1920 = vmatmul.mubr.f32.gmra.mrb[0].mxu0 %v1851
    %v1921 = vpop.f32.mrb[0].mxu0
    %v1922 = vadd.f32 0.0, %v1921
    %v1923 = vpop.f32.mrb[0].mxu0
    %1924 = vdwg.mxu0
    %1926 = vrot.lane.b32.xlu0 %v1391, 96
    %v1927 = vpop.permute.xlu0 %1926
    %v1928 = vsel %vm49, %v1391, 0
    %v1930 = vsel %vm49, %v1927, 0
    %1932 = vmatprep.subr.mxu0 0.0
    %1933 = vmatpush1.xpose.msra.mxu0 %v1930
    %1934 = vmatprep.subr.mxu0 0.0
    %1935 = vmatpush1.xpose.msra.mxu0 0.0
    %1936 = vmatprep.subr.mxu0 0.0
    %1937 = vmatpush1.xpose.msra.mxu0 0.0
    %1938 = vmatprep.subr.mxu0 0.0
    %1939 = vmatpush1.xpose.msra.mxu0 0.0
    %1940 = vmatprep.subr.mxu0 0.0
    %1941 = vmatpush1.xpose.msra.mxu0 0.0
    %1942 = vmatprep.subr.mxu0 0.0
    %1943 = vmatpush1.xpose.msra.mxu0 0.0
    %1944 = vmatprep.subr.mxu0 0.0
    %1945 = vmatpush1.xpose.msra.mxu0 0.0
    %1946 = vmatprep.subr.mxu0 0.0
    %1947 = vmatpush1.xpose.msra.mxu0 0.0
    %1948 = vmatprep.subr.mxu0 0.0
    %1949 = vmatpush1.xpose.msra.mxu0 0.0
    %1950 = vmatprep.subr.mxu0 0.0
    %1951 = vmatpush1.xpose.msra.mxu0 0.0
    %1952 = vmatprep.subr.mxu0 0.0
    %1953 = vmatpush1.xpose.msra.mxu0 0.0
    %1954 = vmatprep.subr.mxu0 0.0
    %1955 = vmatpush1.xpose.msra.mxu0 0.0
    %1956 = vmatprep.subr.mxu0 0.0
    %1957 = vmatpush1.xpose.msra.mxu0 0.0
    %1958 = vmatprep.subr.mxu0 0.0
    %1959 = vmatpush1.xpose.msra.mxu0 0.0
    %1960 = vmatprep.subr.mxu0 0.0
    %1961 = vmatpush1.xpose.msra.mxu0 0.0
    %1962 = vmatprep.subr.mxu0 0.0
    %1963 = vmatpush1.xpose.msra.mxu0 0.0
    %1964 = vmatprep.subr.mxu0 0.0
    %1965 = vmatpush1.xpose.msra.mxu0 0.0
    %1966 = vmatprep.subr.mxu0 0.0
    %1967 = vmatpush1.xpose.msra.mxu0 0.0
    %1968 = vmatprep.subr.mxu0 0.0
    %1969 = vmatpush1.xpose.msra.mxu0 0.0
    %1970 = vmatprep.subr.mxu0 0.0
    %1971 = vmatpush1.xpose.msra.mxu0 0.0
    %1972 = vmatprep.subr.mxu0 0.0
    %1973 = vmatpush1.xpose.msra.mxu0 0.0
    %1974 = vmatprep.subr.mxu0 0.0
    %1975 = vmatpush1.xpose.msra.mxu0 0.0
    %1976 = vmatprep.subr.mxu0 0.0
    %1977 = vmatpush1.xpose.msra.mxu0 0.0
    %1978 = vmatprep.subr.mxu0 0.0
    %1979 = vmatpush1.xpose.msra.mxu0 0.0
    %1980 = vmatprep.subr.mxu0 0.0
    %1981 = vmatpush1.xpose.msra.mxu0 0.0
    %1982 = vmatprep.subr.mxu0 0.0
    %1983 = vmatpush1.xpose.msra.mxu0 0.0
    %1984 = vmatprep.subr.mxu0 0.0
    %1985 = vmatpush1.xpose.msra.mxu0 0.0
    %1986 = vmatprep.subr.mxu0 0.0
    %1987 = vmatpush1.xpose.msra.mxu0 0.0
    %1988 = vmatprep.subr.mxu0 0.0
    %1989 = vmatpush1.xpose.msra.mxu0 0.0
    %1990 = vmatprep.subr.mxu0 0.0
    %1991 = vmatpush1.xpose.msra.mxu0 0.0
    %1992 = vmatprep.subr.mxu0 0.0
    %1993 = vmatpush1.xpose.msra.mxu0 0.0
    %1994 = vmatprep.subr.mxu0 0.0
    %1995 = vmatpush1.xpose.msra.mxu0 0.0
    %1996 = vmatprep.mubr.f32.mxu0 0.0
    %1997 = vmatmul.mubr.f32.gmra.mrb[0].mxu0 %v1928
    %v1998 = vpop.f32.mrb[0].mxu0
    %v1999 = vadd.f32 0.0, %v1998
    %v2000 = vpop.f32.mrb[0].mxu0
    %2001 = vdwg.mxu0
    %2003 = vrot.lane.b32.xlu0 %v1464, 96
    %v2004 = vpop.permute.xlu0 %2003
    %v2005 = vsel %vm49, %v1464, 0
    %v2007 = vsel %vm49, %v2004, 0
    %2009 = vmatprep.subr.mxu0 0.0
    %2010 = vmatpush1.xpose.msra.mxu0 %v2007
    %2011 = vmatprep.subr.mxu0 0.0
    %2012 = vmatpush1.xpose.msra.mxu0 0.0
    %2013 = vmatprep.subr.mxu0 0.0
    %2014 = vmatpush1.xpose.msra.mxu0 0.0
    %2015 = vmatprep.subr.mxu0 0.0
    %2016 = vmatpush1.xpose.msra.mxu0 0.0
    %2017 = vmatprep.subr.mxu0 0.0
    %2018 = vmatpush1.xpose.msra.mxu0 0.0
    %2019 = vmatprep.subr.mxu0 0.0
    %2020 = vmatpush1.xpose.msra.mxu0 0.0
    %2021 = vmatprep.subr.mxu0 0.0
    %2022 = vmatpush1.xpose.msra.mxu0 0.0
    %2023 = vmatprep.subr.mxu0 0.0
    %2024 = vmatpush1.xpose.msra.mxu0 0.0
    %2025 = vmatprep.subr.mxu0 0.0
    %2026 = vmatpush1.xpose.msra.mxu0 0.0
    %2027 = vmatprep.subr.mxu0 0.0
    %2028 = vmatpush1.xpose.msra.mxu0 0.0
    %2029 = vmatprep.subr.mxu0 0.0
    %2030 = vmatpush1.xpose.msra.mxu0 0.0
    %2031 = vmatprep.subr.mxu0 0.0
    %2032 = vmatpush1.xpose.msra.mxu0 0.0
    %2033 = vmatprep.subr.mxu0 0.0
    %2034 = vmatpush1.xpose.msra.mxu0 0.0
    %2035 = vmatprep.subr.mxu0 0.0
    %2036 = vmatpush1.xpose.msra.mxu0 0.0
    %2037 = vmatprep.subr.mxu0 0.0
    %2038 = vmatpush1.xpose.msra.mxu0 0.0
    %2039 = vmatprep.subr.mxu0 0.0
    %2040 = vmatpush1.xpose.msra.mxu0 0.0
    %2041 = vmatprep.subr.mxu0 0.0
    %2042 = vmatpush1.xpose.msra.mxu0 0.0
    %2043 = vmatprep.subr.mxu0 0.0
    %2044 = vmatpush1.xpose.msra.mxu0 0.0
    %2045 = vmatprep.subr.mxu0 0.0
    %2046 = vmatpush1.xpose.msra.mxu0 0.0
    %2047 = vmatprep.subr.mxu0 0.0
    %2048 = vmatpush1.xpose.msra.mxu0 0.0
    %2049 = vmatprep.subr.mxu0 0.0
    %2050 = vmatpush1.xpose.msra.mxu0 0.0
    %2051 = vmatprep.subr.mxu0 0.0
    %2052 = vmatpush1.xpose.msra.mxu0 0.0
    %2053 = vmatprep.subr.mxu0 0.0
    %2054 = vmatpush1.xpose.msra.mxu0 0.0
    %2055 = vmatprep.subr.mxu0 0.0
    %2056 = vmatpush1.xpose.msra.mxu0 0.0
    %2057 = vmatprep.subr.mxu0 0.0
    %2058 = vmatpush1.xpose.msra.mxu0 0.0
    %2059 = vmatprep.subr.mxu0 0.0
    %2060 = vmatpush1.xpose.msra.mxu0 0.0
    %2061 = vmatprep.subr.mxu0 0.0
    %2062 = vmatpush1.xpose.msra.mxu0 0.0
    %2063 = vmatprep.subr.mxu0 0.0
    %2064 = vmatpush1.xpose.msra.mxu0 0.0
    %2065 = vmatprep.subr.mxu0 0.0
    %2066 = vmatpush1.xpose.msra.mxu0 0.0
    %2067 = vmatprep.subr.mxu0 0.0
    %2068 = vmatpush1.xpose.msra.mxu0 0.0
    %2069 = vmatprep.subr.mxu0 0.0
    %2070 = vmatpush1.xpose.msra.mxu0 0.0
    %2071 = vmatprep.subr.mxu0 0.0
    %2072 = vmatpush1.xpose.msra.mxu0 0.0
    %2073 = vmatprep.mubr.f32.mxu0 0.0
    %2074 = vmatmul.mubr.f32.gmra.mrb[0].mxu0 %v2005
    %v2075 = vpop.f32.mrb[0].mxu0
    %v2076 = vadd.f32 0.0, %v2075
    %v2077 = vpop.f32.mrb[0].mxu0
    %2078 = vdwg.mxu0
    %2080 = vrot.lane.b32.xlu0 %v1537, 96
    %v2081 = vpop.permute.xlu0 %2080
    %v2082 = vsel %vm49, %v1537, 0
    %v2084 = vsel %vm49, %v2081, 0
    %2086 = vmatprep.subr.mxu0 0.0
    %2087 = vmatpush1.xpose.msra.mxu0 %v2084
    %2088 = vmatprep.subr.mxu0 0.0
    %2089 = vmatpush1.xpose.msra.mxu0 0.0
    %2090 = vmatprep.subr.mxu0 0.0
    %2091 = vmatpush1.xpose.msra.mxu0 0.0
    %2092 = vmatprep.subr.mxu0 0.0
    %2093 = vmatpush1.xpose.msra.mxu0 0.0
    %2094 = vmatprep.subr.mxu0 0.0
    %2095 = vmatpush1.xpose.msra.mxu0 0.0
    %2096 = vmatprep.subr.mxu0 0.0
    %2097 = vmatpush1.xpose.msra.mxu0 0.0
    %2098 = vmatprep.subr.mxu0 0.0
    %2099 = vmatpush1.xpose.msra.mxu0 0.0
    %2100 = vmatprep.subr.mxu0 0.0
    %2101 = vmatpush1.xpose.msra.mxu0 0.0
    %2102 = vmatprep.subr.mxu0 0.0
    %2103 = vmatpush1.xpose.msra.mxu0 0.0
    %2104 = vmatprep.subr.mxu0 0.0
    %2105 = vmatpush1.xpose.msra.mxu0 0.0
    %2106 = vmatprep.subr.mxu0 0.0
    %2107 = vmatpush1.xpose.msra.mxu0 0.0
    %2108 = vmatprep.subr.mxu0 0.0
    %2109 = vmatpush1.xpose.msra.mxu0 0.0
    %2110 = vmatprep.subr.mxu0 0.0
    %2111 = vmatpush1.xpose.msra.mxu0 0.0
    %2112 = vmatprep.subr.mxu0 0.0
    %2113 = vmatpush1.xpose.msra.mxu0 0.0
    %2114 = vmatprep.subr.mxu0 0.0
    %2115 = vmatpush1.xpose.msra.mxu0 0.0
    %2116 = vmatprep.subr.mxu0 0.0
    %2117 = vmatpush1.xpose.msra.mxu0 0.0
    %2118 = vmatprep.subr.mxu0 0.0
    %2119 = vmatpush1.xpose.msra.mxu0 0.0
    %2120 = vmatprep.subr.mxu0 0.0
    %2121 = vmatpush1.xpose.msra.mxu0 0.0
    %2122 = vmatprep.subr.mxu0 0.0
    %2123 = vmatpush1.xpose.msra.mxu0 0.0
    %2124 = vmatprep.subr.mxu0 0.0
    %2125 = vmatpush1.xpose.msra.mxu0 0.0
    %2126 = vmatprep.subr.mxu0 0.0
    %2127 = vmatpush1.xpose.msra.mxu0 0.0
    %2128 = vmatprep.subr.mxu0 0.0
    %2129 = vmatpush1.xpose.msra.mxu0 0.0
    %2130 = vmatprep.subr.mxu0 0.0
    %2131 = vmatpush1.xpose.msra.mxu0 0.0
    %2132 = vmatprep.subr.mxu0 0.0
    %2133 = vmatpush1.xpose.msra.mxu0 0.0
    %2134 = vmatprep.subr.mxu0 0.0
    %2135 = vmatpush1.xpose.msra.mxu0 0.0
    %2136 = vmatprep.subr.mxu0 0.0
    %2137 = vmatpush1.xpose.msra.mxu0 0.0
    %2138 = vmatprep.subr.mxu0 0.0
    %2139 = vmatpush1.xpose.msra.mxu0 0.0
    %2140 = vmatprep.subr.mxu0 0.0
    %2141 = vmatpush1.xpose.msra.mxu0 0.0
    %2142 = vmatprep.subr.mxu0 0.0
    %2143 = vmatpush1.xpose.msra.mxu0 0.0
    %2144 = vmatprep.subr.mxu0 0.0
    %2145 = vmatpush1.xpose.msra.mxu0 0.0
    %2146 = vmatprep.subr.mxu0 0.0
    %2147 = vmatpush1.xpose.msra.mxu0 0.0
    %2148 = vmatprep.subr.mxu0 0.0
    %2149 = vmatpush1.xpose.msra.mxu0 0.0
    %2150 = vmatprep.mubr.f32.mxu0 0.0
    %2151 = vmatmul.mubr.f32.gmra.mrb[0].mxu0 %v2082
    %v2152 = vpop.f32.mrb[0].mxu0
    %v2153 = vadd.f32 0.0, %v2152
    %v2154 = vpop.f32.mrb[0].mxu0
    %2155 = vdwg.mxu0
    %v2156 = vmul.f32 %v1614, 0.25
    %v2157 = vmul.f32 %v1691, 0.25
    %v2158 = vmul.f32 %v1768, 0.25
    %v2159 = vmul.f32 %v1845, 0.25
    %v2160 = vmul.f32 %v1922, 0.25
    %v2161 = vmul.f32 %v1999, 0.25
    %v2162 = vmul.f32 %v2076, 0.25
    %v2163 = vmul.f32 %v2153, 0.25
    %vm2164 = vcmask 36864
    %v2165 = vsel %vm2164, %v2156, -inf
    %2166 = vmax.xlane.f32.xlu0 %v2165
    %v2167 = vpop.xlane.xlu0 %2166
    %v2168 = vsel %vm2164, %v2157, -inf
    %2169 = vmax.xlane.f32.xlu0 %v2168
    %v2170 = vpop.xlane.xlu0 %2169
    %v2171 = vsel %vm2164, %v2158, -inf
    %2172 = vmax.xlane.f32.xlu0 %v2171
    %v2173 = vpop.xlane.xlu0 %2172
    %v2174 = vsel %vm2164, %v2159, -inf
    %2175 = vmax.xlane.f32.xlu0 %v2174
    %v2176 = vpop.xlane.xlu0 %2175
    %v2177 = vsel %vm2164, %v2160, -inf
    %2178 = vmax.xlane.f32.xlu0 %v2177
    %v2179 = vpop.xlane.xlu0 %2178
    %v2180 = vsel %vm2164, %v2161, -inf
    %2181 = vmax.xlane.f32.xlu0 %v2180
    %v2182 = vpop.xlane.xlu0 %2181
    %v2183 = vsel %vm2164, %v2162, -inf
    %2184 = vmax.xlane.f32.xlu0 %v2183
    %v2185 = vpop.xlane.xlu0 %2184
    %v2186 = vsel %vm2164, %v2163, -inf
    %2187 = vmax.xlane.f32.xlu0 %v2186
    %v2188 = vpop.xlane.xlu0 %2187
    %v2189 = vsub.f32 %v2156, %v2167
    %v2190 = vsub.f32 %v2157, %v2170
    %v2191 = vsub.f32 %v2158, %v2173
    %v2192 = vsub.f32 %v2159, %v2176
    %v2193 = vsub.f32 %v2160, %v2179
    %v2194 = vsub.f32 %v2161, %v2182
    %v2195 = vsub.f32 %v2162, %v2185
    %v2196 = vsub.f32 %v2163, %v2188
    %v2197 = vmul.f32 %v2189, 1.442695
    %v2198 = vpow.pop %v2197
    %v2199 = vmul.f32 %v2190, 1.442695
    %v2200 = vpow.pop %v2199
    %v2201 = vmul.f32 %v2191, 1.442695
    %v2202 = vpow.pop %v2201
    %v2203 = vmul.f32 %v2192, 1.442695
    %v2204 = vpow.pop %v2203
    %v2205 = vmul.f32 %v2193, 1.442695
    %v2206 = vpow.pop %v2205
    %v2207 = vmul.f32 %v2194, 1.442695
    %v2208 = vpow.pop %v2207
    %v2209 = vmul.f32 %v2195, 1.442695
    %v2210 = vpow.pop %v2209
    %v2211 = vmul.f32 %v2196, 1.442695
    %v2212 = vpow.pop %v2211
    %v2213 = vsel %vm2164, %v2198, 0.0
    %2214 = vadd.xlane.f32.xlu0 %v2213
    %v2215 = vpop.xlane.xlu0 %2214
    %v2216 = vsel %vm2164, %v2200, 0.0
    %2217 = vadd.xlane.f32.xlu0 %v2216
    %v2218 = vpop.xlane.xlu0 %2217
    %v2219 = vsel %vm2164, %v2202, 0.0
    %2220 = vadd.xlane.f32.xlu0 %v2219
    %v2221 = vpop.xlane.xlu0 %2220
    %v2222 = vsel %vm2164, %v2204, 0.0
    %2223 = vadd.xlane.f32.xlu0 %v2222
    %v2224 = vpop.xlane.xlu0 %2223
    %v2225 = vsel %vm2164, %v2206, 0.0
    %2226 = vadd.xlane.f32.xlu0 %v2225
    %v2227 = vpop.xlane.xlu0 %2226
    %v2228 = vsel %vm2164, %v2208, 0.0
    %2229 = vadd.xlane.f32.xlu0 %v2228
    %v2230 = vpop.xlane.xlu0 %2229
    %v2231 = vsel %vm2164, %v2210, 0.0
    %2232 = vadd.xlane.f32.xlu0 %v2231
    %v2233 = vpop.xlane.xlu0 %2232
    %v2234 = vsel %vm2164, %v2212, 0.0
    %2235 = vadd.xlane.f32.xlu0 %v2234
    %v2236 = vpop.xlane.xlu0 %2235
    %v2237 = vrcp.pop %v2215
    %v2238 = vmul.f32 %v2198, %v2237
    %v2239 = vrcp.pop %v2218
    %v2240 = vmul.f32 %v2200, %v2239
    %v2241 = vrcp.pop %v2221
    %v2242 = vmul.f32 %v2202, %v2241
    %v2243 = vrcp.pop %v2224
    %v2244 = vmul.f32 %v2204, %v2243
    %v2245 = vrcp.pop %v2227
    %v2246 = vmul.f32 %v2206, %v2245
    %v2247 = vrcp.pop %v2230
    %v2248 = vmul.f32 %v2208, %v2247
    %v2249 = vrcp.pop %v2233
    %v2250 = vmul.f32 %v2210, %v2249
    %v2251 = vrcp.pop %v2236
    %v2252 = vmul.f32 %v2212, %v2251
    %2253 = vrot.lane.b32.xlu0 %v1026, 64
    %v2254 = vpop.permute.xlu0 %2253
    %vm2255 = vcmask 39936
    %v2257 = vsel %vm2255, %v2238, 0
    %vm2259 = vcmask 1044480
    %v2260 = vsel %vm2259, %v2254, 0
    %2262 = vmatprep.subr.mxu0 0.0
    %2263 = vmatpush1.msra.mxu0 %v2260
    %2264 = vmatprep.subr.mxu0 0.0
    %2265 = vmatpush1.msra.mxu0 0.0
    %2266 = vmatprep.subr.mxu0 0.0
    %2267 = vmatpush1.msra.mxu0 0.0
    %2268 = vmatprep.subr.mxu0 0.0
    %2269 = vmatpush1.msra.mxu0 0.0
    %2270 = vmatprep.subr.mxu0 0.0
    %2271 = vmatpush1.msra.mxu0 0.0
    %2272 = vmatprep.subr.mxu0 0.0
    %2273 = vmatpush1.msra.mxu0 0.0
    %2274 = vmatprep.subr.mxu0 0.0
    %2275 = vmatpush1.msra.mxu0 0.0
    %2276 = vmatprep.subr.mxu0 0.0
    %2277 = vmatpush1.msra.mxu0 0.0
    %2278 = vmatprep.subr.mxu0 0.0
    %2279 = vmatpush1.msra.mxu0 0.0
    %2280 = vmatprep.subr.mxu0 0.0
    %2281 = vmatpush1.msra.mxu0 0.0
    %2282 = vmatprep.subr.mxu0 0.0
    %2283 = vmatpush1.msra.mxu0 0.0
    %2284 = vmatprep.subr.mxu0 0.0
    %2285 = vmatpush1.msra.mxu0 0.0
    %2286 = vmatprep.subr.mxu0 0.0
    %2287 = vmatpush1.msra.mxu0 0.0
    %2288 = vmatprep.subr.mxu0 0.0
    %2289 = vmatpush1.msra.mxu0 0.0
    %2290 = vmatprep.subr.mxu0 0.0
    %2291 = vmatpush1.msra.mxu0 0.0
    %2292 = vmatprep.subr.mxu0 0.0
    %2293 = vmatpush1.msra.mxu0 0.0
    %2294 = vmatprep.subr.mxu0 0.0
    %2295 = vmatpush1.msra.mxu0 0.0
    %2296 = vmatprep.subr.mxu0 0.0
    %2297 = vmatpush1.msra.mxu0 0.0
    %2298 = vmatprep.subr.mxu0 0.0
    %2299 = vmatpush1.msra.mxu0 0.0
    %2300 = vmatprep.subr.mxu0 0.0
    %2301 = vmatpush1.msra.mxu0 0.0
    %2302 = vmatprep.subr.mxu0 0.0
    %2303 = vmatpush1.msra.mxu0 0.0
    %2304 = vmatprep.subr.mxu0 0.0
    %2305 = vmatpush1.msra.mxu0 0.0
    %2306 = vmatprep.subr.mxu0 0.0
    %2307 = vmatpush1.msra.mxu0 0.0
    %2308 = vmatprep.subr.mxu0 0.0
    %2309 = vmatpush1.msra.mxu0 0.0
    %2310 = vmatprep.subr.mxu0 0.0
    %2311 = vmatpush1.msra.mxu0 0.0
    %2312 = vmatprep.subr.mxu0 0.0
    %2313 = vmatpush1.msra.mxu0 0.0
    %2314 = vmatprep.subr.mxu0 0.0
    %2315 = vmatpush1.msra.mxu0 0.0
    %2316 = vmatprep.subr.mxu0 0.0
    %2317 = vmatpush1.msra.mxu0 0.0
    %2318 = vmatprep.subr.mxu0 0.0
    %2319 = vmatpush1.msra.mxu0 0.0
    %2320 = vmatprep.subr.mxu0 0.0
    %2321 = vmatpush1.msra.mxu0 0.0
    %2322 = vmatprep.subr.mxu0 0.0
    %2323 = vmatpush1.msra.mxu0 0.0
    %2324 = vmatprep.subr.mxu0 0.0
    %2325 = vmatpush1.msra.mxu0 0.0
    %2326 = vmatprep.mubr.f32.mxu0 0.0
    %2327 = vmatmul.mubr.f32.gmra.mrb[0].mxu0 %v2257
    %v2328 = vpop.f32.mrb[0].mxu0
    %v2329 = vadd.f32 0.0, %v2328
    %v2330 = vpop.f32.mrb[0].mxu0
    %2331 = vdwg.mxu0
    %2332 = vrot.lane.b32.xlu0 %v1099, 64
    %v2333 = vpop.permute.xlu0 %2332
    %v2335 = vsel %vm2255, %v2240, 0
    %v2337 = vsel %vm2259, %v2333, 0
    %2339 = vmatprep.subr.mxu0 0.0
    %2340 = vmatpush1.msra.mxu0 %v2337
    %2341 = vmatprep.subr.mxu0 0.0
    %2342 = vmatpush1.msra.mxu0 0.0
    %2343 = vmatprep.subr.mxu0 0.0
    %2344 = vmatpush1.msra.mxu0 0.0
    %2345 = vmatprep.subr.mxu0 0.0
    %2346 = vmatpush1.msra.mxu0 0.0
    %2347 = vmatprep.subr.mxu0 0.0
    %2348 = vmatpush1.msra.mxu0 0.0
    %2349 = vmatprep.subr.mxu0 0.0
    %2350 = vmatpush1.msra.mxu0 0.0
    %2351 = vmatprep.subr.mxu0 0.0
    %2352 = vmatpush1.msra.mxu0 0.0
    %2353 = vmatprep.subr.mxu0 0.0
    %2354 = vmatpush1.msra.mxu0 0.0
    %2355 = vmatprep.subr.mxu0 0.0
    %2356 = vmatpush1.msra.mxu0 0.0
    %2357 = vmatprep.subr.mxu0 0.0
    %2358 = vmatpush1.msra.mxu0 0.0
    %2359 = vmatprep.subr.mxu0 0.0
    %2360 = vmatpush1.msra.mxu0 0.0
    %2361 = vmatprep.subr.mxu0 0.0
    %2362 = vmatpush1.msra.mxu0 0.0
    %2363 = vmatprep.subr.mxu0 0.0
    %2364 = vmatpush1.msra.mxu0 0.0
    %2365 = vmatprep.subr.mxu0 0.0
    %2366 = vmatpush1.msra.mxu0 0.0
    %2367 = vmatprep.subr.mxu0 0.0
    %2368 = vmatpush1.msra.mxu0 0.0
    %2369 = vmatprep.subr.mxu0 0.0
    %2370 = vmatpush1.msra.mxu0 0.0
    %2371 = vmatprep.subr.mxu0 0.0
    %2372 = vmatpush1.msra.mxu0 0.0
    %2373 = vmatprep.subr.mxu0 0.0
    %2374 = vmatpush1.msra.mxu0 0.0
    %2375 = vmatprep.subr.mxu0 0.0
    %2376 = vmatpush1.msra.mxu0 0.0
    %2377 = vmatprep.subr.mxu0 0.0
    %2378 = vmatpush1.msra.mxu0 0.0
    %2379 = vmatprep.subr.mxu0 0.0
    %2380 = vmatpush1.msra.mxu0 0.0
    %2381 = vmatprep.subr.mxu0 0.0
    %2382 = vmatpush1.msra.mxu0 0.0
    %2383 = vmatprep.subr.mxu0 0.0
    %2384 = vmatpush1.msra.mxu0 0.0
    %2385 = vmatprep.subr.mxu0 0.0
    %2386 = vmatpush1.msra.mxu0 0.0
    %2387 = vmatprep.subr.mxu0 0.0
    %2388 = vmatpush1.msra.mxu0 0.0
    %2389 = vmatprep.subr.mxu0 0.0
    %2390 = vmatpush1.msra.mxu0 0.0
    %2391 = vmatprep.subr.mxu0 0.0
    %2392 = vmatpush1.msra.mxu0 0.0
    %2393 = vmatprep.subr.mxu0 0.0
    %2394 = vmatpush1.msra.mxu0 0.0
    %2395 = vmatprep.subr.mxu0 0.0
    %2396 = vmatpush1.msra.mxu0 0.0
    %2397 = vmatprep.subr.mxu0 0.0
    %2398 = vmatpush1.msra.mxu0 0.0
    %2399 = vmatprep.subr.mxu0 0.0
    %2400 = vmatpush1.msra.mxu0 0.0
    %2401 = vmatprep.subr.mxu0 0.0
    %2402 = vmatpush1.msra.mxu0 0.0
    %2403 = vmatprep.mubr.f32.mxu0 0.0
    %2404 = vmatmul.mubr.f32.gmra.mrb[0].mxu0 %v2335
    %v2405 = vpop.f32.mrb[0].mxu0
    %v2406 = vadd.f32 0.0, %v2405
    %v2407 = vpop.f32.mrb[0].mxu0
    %2408 = vdwg.mxu0
    %2409 = vrot.lane.b32.xlu0 %v1172, 64
    %v2410 = vpop.permute.xlu0 %2409
    %v2412 = vsel %vm2255, %v2242, 0
    %v2414 = vsel %vm2259, %v2410, 0
    %2416 = vmatprep.subr.mxu0 0.0
    %2417 = vmatpush1.msra.mxu0 %v2414
    %2418 = vmatprep.subr.mxu0 0.0
    %2419 = vmatpush1.msra.mxu0 0.0
    %2420 = vmatprep.subr.mxu0 0.0
    %2421 = vmatpush1.msra.mxu0 0.0
    %2422 = vmatprep.subr.mxu0 0.0
    %2423 = vmatpush1.msra.mxu0 0.0
    %2424 = vmatprep.subr.mxu0 0.0
    %2425 = vmatpush1.msra.mxu0 0.0
    %2426 = vmatprep.subr.mxu0 0.0
    %2427 = vmatpush1.msra.mxu0 0.0
    %2428 = vmatprep.subr.mxu0 0.0
    %2429 = vmatpush1.msra.mxu0 0.0
    %2430 = vmatprep.subr.mxu0 0.0
    %2431 = vmatpush1.msra.mxu0 0.0
    %2432 = vmatprep.subr.mxu0 0.0
    %2433 = vmatpush1.msra.mxu0 0.0
    %2434 = vmatprep.subr.mxu0 0.0
    %2435 = vmatpush1.msra.mxu0 0.0
    %2436 = vmatprep.subr.mxu0 0.0
    %2437 = vmatpush1.msra.mxu0 0.0
    %2438 = vmatprep.subr.mxu0 0.0
    %2439 = vmatpush1.msra.mxu0 0.0
    %2440 = vmatprep.subr.mxu0 0.0
    %2441 = vmatpush1.msra.mxu0 0.0
    %2442 = vmatprep.subr.mxu0 0.0
    %2443 = vmatpush1.msra.mxu0 0.0
    %2444 = vmatprep.subr.mxu0 0.0
    %2445 = vmatpush1.msra.mxu0 0.0
    %2446 = vmatprep.subr.mxu0 0.0
    %2447 = vmatpush1.msra.mxu0 0.0
    %2448 = vmatprep.subr.mxu0 0.0
    %2449 = vmatpush1.msra.mxu0 0.0
    %2450 = vmatprep.subr.mxu0 0.0
    %2451 = vmatpush1.msra.mxu0 0.0
    %2452 = vmatprep.subr.mxu0 0.0
    %2453 = vmatpush1.msra.mxu0 0.0
    %2454 = vmatprep.subr.mxu0 0.0
    %2455 = vmatpush1.msra.mxu0 0.0
    %2456 = vmatprep.subr.mxu0 0.0
    %2457 = vmatpush1.msra.mxu0 0.0
    %2458 = vmatprep.subr.mxu0 0.0
    %2459 = vmatpush1.msra.mxu0 0.0
    %2460 = vmatprep.subr.mxu0 0.0
    %2461 = vmatpush1.msra.mxu0 0.0
    %2462 = vmatprep.subr.mxu0 0.0
    %2463 = vmatpush1.msra.mxu0 0.0
    %2464 = vmatprep.subr.mxu0 0.0
    %2465 = vmatpush1.msra.mxu0 0.0
    %2466 = vmatprep.subr.mxu0 0.0
    %2467 = vmatpush1.msra.mxu0 0.0
    %2468 = vmatprep.subr.mxu0 0.0
    %2469 = vmatpush1.msra.mxu0 0.0
    %2470 = vmatprep.subr.mxu0 0.0
    %2471 = vmatpush1.msra.mxu0 0.0
    %2472 = vmatprep.subr.mxu0 0.0
    %2473 = vmatpush1.msra.mxu0 0.0
    %2474 = vmatprep.subr.mxu0 0.0
    %2475 = vmatpush1.msra.mxu0 0.0
    %2476 = vmatprep.subr.mxu0 0.0
    %2477 = vmatpush1.msra.mxu0 0.0
    %2478 = vmatprep.subr.mxu0 0.0
    %2479 = vmatpush1.msra.mxu0 0.0
    %2480 = vmatprep.mubr.f32.mxu0 0.0
    %2481 = vmatmul.mubr.f32.gmra.mrb[0].mxu0 %v2412
    %v2482 = vpop.f32.mrb[0].mxu0
    %v2483 = vadd.f32 0.0, %v2482
    %v2484 = vpop.f32.mrb[0].mxu0
    %2485 = vdwg.mxu0
    %2486 = vrot.lane.b32.xlu0 %v1245, 64
    %v2487 = vpop.permute.xlu0 %2486
    %v2489 = vsel %vm2255, %v2244, 0
    %v2491 = vsel %vm2259, %v2487, 0
    %2493 = vmatprep.subr.mxu0 0.0
    %2494 = vmatpush1.msra.mxu0 %v2491
    %2495 = vmatprep.subr.mxu0 0.0
    %2496 = vmatpush1.msra.mxu0 0.0
    %2497 = vmatprep.subr.mxu0 0.0
    %2498 = vmatpush1.msra.mxu0 0.0
    %2499 = vmatprep.subr.mxu0 0.0
    %2500 = vmatpush1.msra.mxu0 0.0
    %2501 = vmatprep.subr.mxu0 0.0
    %2502 = vmatpush1.msra.mxu0 0.0
    %2503 = vmatprep.subr.mxu0 0.0
    %2504 = vmatpush1.msra.mxu0 0.0
    %2505 = vmatprep.subr.mxu0 0.0
    %2506 = vmatpush1.msra.mxu0 0.0
    %2507 = vmatprep.subr.mxu0 0.0
    %2508 = vmatpush1.msra.mxu0 0.0
    %2509 = vmatprep.subr.mxu0 0.0
    %2510 = vmatpush1.msra.mxu0 0.0
    %2511 = vmatprep.subr.mxu0 0.0
    %2512 = vmatpush1.msra.mxu0 0.0
    %2513 = vmatprep.subr.mxu0 0.0
    %2514 = vmatpush1.msra.mxu0 0.0
    %2515 = vmatprep.subr.mxu0 0.0
    %2516 = vmatpush1.msra.mxu0 0.0
    %2517 = vmatprep.subr.mxu0 0.0
    %2518 = vmatpush1.msra.mxu0 0.0
    %2519 = vmatprep.subr.mxu0 0.0
    %2520 = vmatpush1.msra.mxu0 0.0
    %2521 = vmatprep.subr.mxu0 0.0
    %2522 = vmatpush1.msra.mxu0 0.0
    %2523 = vmatprep.subr.mxu0 0.0
    %2524 = vmatpush1.msra.mxu0 0.0
    %2525 = vmatprep.subr.mxu0 0.0
    %2526 = vmatpush1.msra.mxu0 0.0
    %2527 = vmatprep.subr.mxu0 0.0
    %2528 = vmatpush1.msra.mxu0 0.0
    %2529 = vmatprep.subr.mxu0 0.0
    %2530 = vmatpush1.msra.mxu0 0.0
    %2531 = vmatprep.subr.mxu0 0.0
    %2532 = vmatpush1.msra.mxu0 0.0
    %2533 = vmatprep.subr.mxu0 0.0
    %2534 = vmatpush1.msra.mxu0 0.0
    %2535 = vmatprep.subr.mxu0 0.0
    %2536 = vmatpush1.msra.mxu0 0.0
    %2537 = vmatprep.subr.mxu0 0.0
    %2538 = vmatpush1.msra.mxu0 0.0
    %2539 = vmatprep.subr.mxu0 0.0
    %2540 = vmatpush1.msra.mxu0 0.0
    %2541 = vmatprep.subr.mxu0 0.0
    %2542 = vmatpush1.msra.mxu0 0.0
    %2543 = vmatprep.subr.mxu0 0.0
    %2544 = vmatpush1.msra.mxu0 0.0
    %2545 = vmatprep.subr.mxu0 0.0
    %2546 = vmatpush1.msra.mxu0 0.0
    %2547 = vmatprep.subr.mxu0 0.0
    %2548 = vmatpush1.msra.mxu0 0.0
    %2549 = vmatprep.subr.mxu0 0.0
    %2550 = vmatpush1.msra.mxu0 0.0
    %2551 = vmatprep.subr.mxu0 0.0
    %2552 = vmatpush1.msra.mxu0 0.0
    %2553 = vmatprep.subr.mxu0 0.0
    %2554 = vmatpush1.msra.mxu0 0.0
    %2555 = vmatprep.subr.mxu0 0.0
    %2556 = vmatpush1.msra.mxu0 0.0
    %2557 = vmatprep.mubr.f32.mxu0 0.0
    %2558 = vmatmul.mubr.f32.gmra.mrb[0].mxu0 %v2489
    %v2559 = vpop.f32.mrb[0].mxu0
    %v2560 = vadd.f32 0.0, %v2559
    %v2561 = vpop.f32.mrb[0].mxu0
    %2562 = vdwg.mxu0
    %2563 = vrot.lane.b32.xlu0 %v1318, 64
    %v2564 = vpop.permute.xlu0 %2563
    %v2566 = vsel %vm2255, %v2246, 0
    %v2568 = vsel %vm2259, %v2564, 0
    %2570 = vmatprep.subr.mxu0 0.0
    %2571 = vmatpush1.msra.mxu0 %v2568
    %2572 = vmatprep.subr.mxu0 0.0
    %2573 = vmatpush1.msra.mxu0 0.0
    %2574 = vmatprep.subr.mxu0 0.0
    %2575 = vmatpush1.msra.mxu0 0.0
    %2576 = vmatprep.subr.mxu0 0.0
    %2577 = vmatpush1.msra.mxu0 0.0
    %2578 = vmatprep.subr.mxu0 0.0
    %2579 = vmatpush1.msra.mxu0 0.0
    %2580 = vmatprep.subr.mxu0 0.0
    %2581 = vmatpush1.msra.mxu0 0.0
    %2582 = vmatprep.subr.mxu0 0.0
    %2583 = vmatpush1.msra.mxu0 0.0
    %2584 = vmatprep.subr.mxu0 0.0
    %2585 = vmatpush1.msra.mxu0 0.0
    %2586 = vmatprep.subr.mxu0 0.0
    %2587 = vmatpush1.msra.mxu0 0.0
    %2588 = vmatprep.subr.mxu0 0.0
    %2589 = vmatpush1.msra.mxu0 0.0
    %2590 = vmatprep.subr.mxu0 0.0
    %2591 = vmatpush1.msra.mxu0 0.0
    %2592 = vmatprep.subr.mxu0 0.0
    %2593 = vmatpush1.msra.mxu0 0.0
    %2594 = vmatprep.subr.mxu0 0.0
    %2595 = vmatpush1.msra.mxu0 0.0
    %2596 = vmatprep.subr.mxu0 0.0
    %2597 = vmatpush1.msra.mxu0 0.0
    %2598 = vmatprep.subr.mxu0 0.0
    %2599 = vmatpush1.msra.mxu0 0.0
    %2600 = vmatprep.subr.mxu0 0.0
    %2601 = vmatpush1.msra.mxu0 0.0
    %2602 = vmatprep.subr.mxu0 0.0
    %2603 = vmatpush1.msra.mxu0 0.0
    %2604 = vmatprep.subr.mxu0 0.0
    %2605 = vmatpush1.msra.mxu0 0.0
    %2606 = vmatprep.subr.mxu0 0.0
    %2607 = vmatpush1.msra.mxu0 0.0
    %2608 = vmatprep.subr.mxu0 0.0
    %2609 = vmatpush1.msra.mxu0 0.0
    %2610 = vmatprep.subr.mxu0 0.0
    %2611 = vmatpush1.msra.mxu0 0.0
    %2612 = vmatprep.subr.mxu0 0.0
    %2613 = vmatpush1.msra.mxu0 0.0
    %2614 = vmatprep.subr.mxu0 0.0
    %2615 = vmatpush1.msra.mxu0 0.0
    %2616 = vmatprep.subr.mxu0 0.0
    %2617 = vmatpush1.msra.mxu0 0.0
    %2618 = vmatprep.subr.mxu0 0.0
    %2619 = vmatpush1.msra.mxu0 0.0
    %2620 = vmatprep.subr.mxu0 0.0
    %2621 = vmatpush1.msra.mxu0 0.0
    %2622 = vmatprep.subr.mxu0 0.0
    %2623 = vmatpush1.msra.mxu0 0.0
    %2624 = vmatprep.subr.mxu0 0.0
    %2625 = vmatpush1.msra.mxu0 0.0
    %2626 = vmatprep.subr.mxu0 0.0
    %2627 = vmatpush1.msra.mxu0 0.0
    %2628 = vmatprep.subr.mxu0 0.0
    %2629 = vmatpush1.msra.mxu0 0.0
    %2630 = vmatprep.subr.mxu0 0.0
    %2631 = vmatpush1.msra.mxu0 0.0
    %2632 = vmatprep.subr.mxu0 0.0
    %2633 = vmatpush1.msra.mxu0 0.0
    %2634 = vmatprep.mubr.f32.mxu0 0.0
    %2635 = vmatmul.mubr.f32.gmra.mrb[0].mxu0 %v2566
    %v2636 = vpop.f32.mrb[0].mxu0
    %v2637 = vadd.f32 0.0, %v2636
    %v2638 = vpop.f32.mrb[0].mxu0
    %2639 = vdwg.mxu0
    %2640 = vrot.lane.b32.xlu0 %v1391, 64
    %v2641 = vpop.permute.xlu0 %2640
    %v2643 = vsel %vm2255, %v2248, 0
    %v2645 = vsel %vm2259, %v2641, 0
    %2647 = vmatprep.subr.mxu0 0.0
    %2648 = vmatpush1.msra.mxu0 %v2645
    %2649 = vmatprep.subr.mxu0 0.0
    %2650 = vmatpush1.msra.mxu0 0.0
    %2651 = vmatprep.subr.mxu0 0.0
    %2652 = vmatpush1.msra.mxu0 0.0
    %2653 = vmatprep.subr.mxu0 0.0
    %2654 = vmatpush1.msra.mxu0 0.0
    %2655 = vmatprep.subr.mxu0 0.0
    %2656 = vmatpush1.msra.mxu0 0.0
    %2657 = vmatprep.subr.mxu0 0.0
    %2658 = vmatpush1.msra.mxu0 0.0
    %2659 = vmatprep.subr.mxu0 0.0
    %2660 = vmatpush1.msra.mxu0 0.0
    %2661 = vmatprep.subr.mxu0 0.0
    %2662 = vmatpush1.msra.mxu0 0.0
    %2663 = vmatprep.subr.mxu0 0.0
    %2664 = vmatpush1.msra.mxu0 0.0
    %2665 = vmatprep.subr.mxu0 0.0
    %2666 = vmatpush1.msra.mxu0 0.0
    %2667 = vmatprep.subr.mxu0 0.0
    %2668 = vmatpush1.msra.mxu0 0.0
    %2669 = vmatprep.subr.mxu0 0.0
    %2670 = vmatpush1.msra.mxu0 0.0
    %2671 = vmatprep.subr.mxu0 0.0
    %2672 = vmatpush1.msra.mxu0 0.0
    %2673 = vmatprep.subr.mxu0 0.0
    %2674 = vmatpush1.msra.mxu0 0.0
    %2675 = vmatprep.subr.mxu0 0.0
    %2676 = vmatpush1.msra.mxu0 0.0
    %2677 = vmatprep.subr.mxu0 0.0
    %2678 = vmatpush1.msra.mxu0 0.0
    %2679 = vmatprep.subr.mxu0 0.0
    %2680 = vmatpush1.msra.mxu0 0.0
    %2681 = vmatprep.subr.mxu0 0.0
    %2682 = vmatpush1.msra.mxu0 0.0
    %2683 = vmatprep.subr.mxu0 0.0
    %2684 = vmatpush1.msra.mxu0 0.0
    %2685 = vmatprep.subr.mxu0 0.0
    %2686 = vmatpush1.msra.mxu0 0.0
    %2687 = vmatprep.subr.mxu0 0.0
    %2688 = vmatpush1.msra.mxu0 0.0
    %2689 = vmatprep.subr.mxu0 0.0
    %2690 = vmatpush1.msra.mxu0 0.0
    %2691 = vmatprep.subr.mxu0 0.0
    %2692 = vmatpush1.msra.mxu0 0.0
    %2693 = vmatprep.subr.mxu0 0.0
    %2694 = vmatpush1.msra.mxu0 0.0
    %2695 = vmatprep.subr.mxu0 0.0
    %2696 = vmatpush1.msra.mxu0 0.0
    %2697 = vmatprep.subr.mxu0 0.0
    %2698 = vmatpush1.msra.mxu0 0.0
    %2699 = vmatprep.subr.mxu0 0.0
    %2700 = vmatpush1.msra.mxu0 0.0
    %2701 = vmatprep.subr.mxu0 0.0
    %2702 = vmatpush1.msra.mxu0 0.0
    %2703 = vmatprep.subr.mxu0 0.0
    %2704 = vmatpush1.msra.mxu0 0.0
    %2705 = vmatprep.subr.mxu0 0.0
    %2706 = vmatpush1.msra.mxu0 0.0
    %2707 = vmatprep.subr.mxu0 0.0
    %2708 = vmatpush1.msra.mxu0 0.0
    %2709 = vmatprep.subr.mxu0 0.0
    %2710 = vmatpush1.msra.mxu0 0.0
    %2711 = vmatprep.mubr.f32.mxu0 0.0
    %2712 = vmatmul.mubr.f32.gmra.mrb[0].mxu0 %v2643
    %v2713 = vpop.f32.mrb[0].mxu0
    %v2714 = vadd.f32 0.0, %v2713
    %v2715 = vpop.f32.mrb[0].mxu0
    %2716 = vdwg.mxu0
    %2717 = vrot.lane.b32.xlu0 %v1464, 64
    %v2718 = vpop.permute.xlu0 %2717
    %v2720 = vsel %vm2255, %v2250, 0
    %v2722 = vsel %vm2259, %v2718, 0
    %2724 = vmatprep.subr.mxu0 0.0
    %2725 = vmatpush1.msra.mxu0 %v2722
    %2726 = vmatprep.subr.mxu0 0.0
    %2727 = vmatpush1.msra.mxu0 0.0
    %2728 = vmatprep.subr.mxu0 0.0
    %2729 = vmatpush1.msra.mxu0 0.0
    %2730 = vmatprep.subr.mxu0 0.0
    %2731 = vmatpush1.msra.mxu0 0.0
    %2732 = vmatprep.subr.mxu0 0.0
    %2733 = vmatpush1.msra.mxu0 0.0
    %2734 = vmatprep.subr.mxu0 0.0
    %2735 = vmatpush1.msra.mxu0 0.0
    %2736 = vmatprep.subr.mxu0 0.0
    %2737 = vmatpush1.msra.mxu0 0.0
    %2738 = vmatprep.subr.mxu0 0.0
    %2739 = vmatpush1.msra.mxu0 0.0
    %2740 = vmatprep.subr.mxu0 0.0
    %2741 = vmatpush1.msra.mxu0 0.0
    %2742 = vmatprep.subr.mxu0 0.0
    %2743 = vmatpush1.msra.mxu0 0.0
    %2744 = vmatprep.subr.mxu0 0.0
    %2745 = vmatpush1.msra.mxu0 0.0
    %2746 = vmatprep.subr.mxu0 0.0
    %2747 = vmatpush1.msra.mxu0 0.0
    %2748 = vmatprep.subr.mxu0 0.0
    %2749 = vmatpush1.msra.mxu0 0.0
    %2750 = vmatprep.subr.mxu0 0.0
    %2751 = vmatpush1.msra.mxu0 0.0
    %2752 = vmatprep.subr.mxu0 0.0
    %2753 = vmatpush1.msra.mxu0 0.0
    %2754 = vmatprep.subr.mxu0 0.0
    %2755 = vmatpush1.msra.mxu0 0.0
    %2756 = vmatprep.subr.mxu0 0.0
    %2757 = vmatpush1.msra.mxu0 0.0
    %2758 = vmatprep.subr.mxu0 0.0
    %2759 = vmatpush1.msra.mxu0 0.0
    %2760 = vmatprep.subr.mxu0 0.0
    %2761 = vmatpush1.msra.mxu0 0.0
    %2762 = vmatprep.subr.mxu0 0.0
    %2763 = vmatpush1.msra.mxu0 0.0
    %2764 = vmatprep.subr.mxu0 0.0
    %2765 = vmatpush1.msra.mxu0 0.0
    %2766 = vmatprep.subr.mxu0 0.0
    %2767 = vmatpush1.msra.mxu0 0.0
    %2768 = vmatprep.subr.mxu0 0.0
    %2769 = vmatpush1.msra.mxu0 0.0
    %2770 = vmatprep.subr.mxu0 0.0
    %2771 = vmatpush1.msra.mxu0 0.0
    %2772 = vmatprep.subr.mxu0 0.0
    %2773 = vmatpush1.msra.mxu0 0.0
    %2774 = vmatprep.subr.mxu0 0.0
    %2775 = vmatpush1.msra.mxu0 0.0
    %2776 = vmatprep.subr.mxu0 0.0
    %2777 = vmatpush1.msra.mxu0 0.0
    %2778 = vmatprep.subr.mxu0 0.0
    %2779 = vmatpush1.msra.mxu0 0.0
    %2780 = vmatprep.subr.mxu0 0.0
    %2781 = vmatpush1.msra.mxu0 0.0
    %2782 = vmatprep.subr.mxu0 0.0
    %2783 = vmatpush1.msra.mxu0 0.0
    %2784 = vmatprep.subr.mxu0 0.0
    %2785 = vmatpush1.msra.mxu0 0.0
    %2786 = vmatprep.subr.mxu0 0.0
    %2787 = vmatpush1.msra.mxu0 0.0
    %2788 = vmatprep.mubr.f32.mxu0 0.0
    %2789 = vmatmul.mubr.f32.gmra.mrb[0].mxu0 %v2720
    %v2790 = vpop.f32.mrb[0].mxu0
    %v2791 = vadd.f32 0.0, %v2790
    %v2792 = vpop.f32.mrb[0].mxu0
    %2793 = vdwg.mxu0
    %2794 = vrot.lane.b32.xlu0 %v1537, 64
    %v2795 = vpop.permute.xlu0 %2794
    %v2797 = vsel %vm2255, %v2252, 0
    %v2799 = vsel %vm2259, %v2795, 0
    %2801 = vmatprep.subr.mxu0 0.0
    %2802 = vmatpush1.msra.mxu0 %v2799
    %2803 = vmatprep.subr.mxu0 0.0
    %2804 = vmatpush1.msra.mxu0 0.0
    %2805 = vmatprep.subr.mxu0 0.0
    %2806 = vmatpush1.msra.mxu0 0.0
    %2807 = vmatprep.subr.mxu0 0.0
    %2808 = vmatpush1.msra.mxu0 0.0
    %2809 = vmatprep.subr.mxu0 0.0
    %2810 = vmatpush1.msra.mxu0 0.0
    %2811 = vmatprep.subr.mxu0 0.0
    %2812 = vmatpush1.msra.mxu0 0.0
    %2813 = vmatprep.subr.mxu0 0.0
    %2814 = vmatpush1.msra.mxu0 0.0
    %2815 = vmatprep.subr.mxu0 0.0
    %2816 = vmatpush1.msra.mxu0 0.0
    %2817 = vmatprep.subr.mxu0 0.0
    %2818 = vmatpush1.msra.mxu0 0.0
    %2819 = vmatprep.subr.mxu0 0.0
    %2820 = vmatpush1.msra.mxu0 0.0
    %2821 = vmatprep.subr.mxu0 0.0
    %2822 = vmatpush1.msra.mxu0 0.0
    %2823 = vmatprep.subr.mxu0 0.0
    %2824 = vmatpush1.msra.mxu0 0.0
    %2825 = vmatprep.subr.mxu0 0.0
    %2826 = vmatpush1.msra.mxu0 0.0
    %2827 = vmatprep.subr.mxu0 0.0
    %2828 = vmatpush1.msra.mxu0 0.0
    %2829 = vmatprep.subr.mxu0 0.0
    %2830 = vmatpush1.msra.mxu0 0.0
    %2831 = vmatprep.subr.mxu0 0.0
    %2832 = vmatpush1.msra.mxu0 0.0
    %2833 = vmatprep.subr.mxu0 0.0
    %2834 = vmatpush1.msra.mxu0 0.0
    %2835 = vmatprep.subr.mxu0 0.0
    %2836 = vmatpush1.msra.mxu0 0.0
    %2837 = vmatprep.subr.mxu0 0.0
    %2838 = vmatpush1.msra.mxu0 0.0
    %2839 = vmatprep.subr.mxu0 0.0
    %2840 = vmatpush1.msra.mxu0 0.0
    %2841 = vmatprep.subr.mxu0 0.0
    %2842 = vmatpush1.msra.mxu0 0.0
    %2843 = vmatprep.subr.mxu0 0.0
    %2844 = vmatpush1.msra.mxu0 0.0
    %2845 = vmatprep.subr.mxu0 0.0
    %2846 = vmatpush1.msra.mxu0 0.0
    %2847 = vmatprep.subr.mxu0 0.0
    %2848 = vmatpush1.msra.mxu0 0.0
    %2849 = vmatprep.subr.mxu0 0.0
    %2850 = vmatpush1.msra.mxu0 0.0
    %2851 = vmatprep.subr.mxu0 0.0
    %2852 = vmatpush1.msra.mxu0 0.0
    %2853 = vmatprep.subr.mxu0 0.0
    %2854 = vmatpush1.msra.mxu0 0.0
    %2855 = vmatprep.subr.mxu0 0.0
    %2856 = vmatpush1.msra.mxu0 0.0
    %2857 = vmatprep.subr.mxu0 0.0
    %2858 = vmatpush1.msra.mxu0 0.0
    %2859 = vmatprep.subr.mxu0 0.0
    %2860 = vmatpush1.msra.mxu0 0.0
    %2861 = vmatprep.subr.mxu0 0.0
    %2862 = vmatpush1.msra.mxu0 0.0
    %2863 = vmatprep.subr.mxu0 0.0
    %2864 = vmatpush1.msra.mxu0 0.0
    %2865 = vmatprep.mubr.f32.mxu0 0.0
    %2866 = vmatmul.mubr.f32.gmra.mrb[0].mxu0 %v2797
    %v2867 = vpop.f32.mrb[0].mxu0
    %v2868 = vadd.f32 0.0, %v2867
    %v2869 = vpop.f32.mrb[0].mxu0
    %2870 = vdwg.mxu0
    %2871 = vrot.lane.b32.xlu0 %v1026, 112
    %v2872 = vpop.permute.xlu0 %2871
    %2873 = vrot.lane.b32.xlu0 %v1026, 80
    %v2874 = vpop.permute.xlu0 %2873
    %v2875 = vsel %vm49, %v2872, 0
    %v2877 = vsel %vm49, %v2874, 0
    %2879 = vmatprep.subr.mxu0 0.0
    %2880 = vmatpush1.xpose.msra.mxu0 %v2877
    %2881 = vmatprep.subr.mxu0 0.0
    %2882 = vmatpush1.xpose.msra.mxu0 0.0
    %2883 = vmatprep.subr.mxu0 0.0
    %2884 = vmatpush1.xpose.msra.mxu0 0.0
    %2885 = vmatprep.subr.mxu0 0.0
    %2886 = vmatpush1.xpose.msra.mxu0 0.0
    %2887 = vmatprep.subr.mxu0 0.0
    %2888 = vmatpush1.xpose.msra.mxu0 0.0
    %2889 = vmatprep.subr.mxu0 0.0
    %2890 = vmatpush1.xpose.msra.mxu0 0.0
    %2891 = vmatprep.subr.mxu0 0.0
    %2892 = vmatpush1.xpose.msra.mxu0 0.0
    %2893 = vmatprep.subr.mxu0 0.0
    %2894 = vmatpush1.xpose.msra.mxu0 0.0
    %2895 = vmatprep.subr.mxu0 0.0
    %2896 = vmatpush1.xpose.msra.mxu0 0.0
    %2897 = vmatprep.subr.mxu0 0.0
    %2898 = vmatpush1.xpose.msra.mxu0 0.0
    %2899 = vmatprep.subr.mxu0 0.0
    %2900 = vmatpush1.xpose.msra.mxu0 0.0
    %2901 = vmatprep.subr.mxu0 0.0
    %2902 = vmatpush1.xpose.msra.mxu0 0.0
    %2903 = vmatprep.subr.mxu0 0.0
    %2904 = vmatpush1.xpose.msra.mxu0 0.0
    %2905 = vmatprep.subr.mxu0 0.0
    %2906 = vmatpush1.xpose.msra.mxu0 0.0
    %2907 = vmatprep.subr.mxu0 0.0
    %2908 = vmatpush1.xpose.msra.mxu0 0.0
    %2909 = vmatprep.subr.mxu0 0.0
    %2910 = vmatpush1.xpose.msra.mxu0 0.0
    %2911 = vmatprep.subr.mxu0 0.0
    %2912 = vmatpush1.xpose.msra.mxu0 0.0
    %2913 = vmatprep.subr.mxu0 0.0
    %2914 = vmatpush1.xpose.msra.mxu0 0.0
    %2915 = vmatprep.subr.mxu0 0.0
    %2916 = vmatpush1.xpose.msra.mxu0 0.0
    %2917 = vmatprep.subr.mxu0 0.0
    %2918 = vmatpush1.xpose.msra.mxu0 0.0
    %2919 = vmatprep.subr.mxu0 0.0
    %2920 = vmatpush1.xpose.msra.mxu0 0.0
    %2921 = vmatprep.subr.mxu0 0.0
    %2922 = vmatpush1.xpose.msra.mxu0 0.0
    %2923 = vmatprep.subr.mxu0 0.0
    %2924 = vmatpush1.xpose.msra.mxu0 0.0
    %2925 = vmatprep.subr.mxu0 0.0
    %2926 = vmatpush1.xpose.msra.mxu0 0.0
    %2927 = vmatprep.subr.mxu0 0.0
    %2928 = vmatpush1.xpose.msra.mxu0 0.0
    %2929 = vmatprep.subr.mxu0 0.0
    %2930 = vmatpush1.xpose.msra.mxu0 0.0
    %2931 = vmatprep.subr.mxu0 0.0
    %2932 = vmatpush1.xpose.msra.mxu0 0.0
    %2933 = vmatprep.subr.mxu0 0.0
    %2934 = vmatpush1.xpose.msra.mxu0 0.0
    %2935 = vmatprep.subr.mxu0 0.0
    %2936 = vmatpush1.xpose.msra.mxu0 0.0
    %2937 = vmatprep.subr.mxu0 0.0
    %2938 = vmatpush1.xpose.msra.mxu0 0.0
    %2939 = vmatprep.subr.mxu0 0.0
    %2940 = vmatpush1.xpose.msra.mxu0 0.0
    %2941 = vmatprep.subr.mxu0 0.0
    %2942 = vmatpush1.xpose.msra.mxu0 0.0
    %2943 = vmatprep.mubr.f32.mxu0 0.0
    %2944 = vmatmul.mubr.f32.gmra.mrb[0].mxu0 %v2875
    %v2945 = vpop.f32.mrb[0].mxu0
    %v2946 = vadd.f32 0.0, %v2945
    %v2947 = vpop.f32.mrb[0].mxu0
    %2948 = vdwg.mxu0
    %2949 = vrot.lane.b32.xlu0 %v1099, 112
    %v2950 = vpop.permute.xlu0 %2949
    %2951 = vrot.lane.b32.xlu0 %v1099, 80
    %v2952 = vpop.permute.xlu0 %2951
    %v2953 = vsel %vm49, %v2950, 0
    %v2955 = vsel %vm49, %v2952, 0
    %2957 = vmatprep.subr.mxu0 0.0
    %2958 = vmatpush1.xpose.msra.mxu0 %v2955
    %2959 = vmatprep.subr.mxu0 0.0
    %2960 = vmatpush1.xpose.msra.mxu0 0.0
    %2961 = vmatprep.subr.mxu0 0.0
    %2962 = vmatpush1.xpose.msra.mxu0 0.0
    %2963 = vmatprep.subr.mxu0 0.0
    %2964 = vmatpush1.xpose.msra.mxu0 0.0
    %2965 = vmatprep.subr.mxu0 0.0
    %2966 = vmatpush1.xpose.msra.mxu0 0.0
    %2967 = vmatprep.subr.mxu0 0.0
    %2968 = vmatpush1.xpose.msra.mxu0 0.0
    %2969 = vmatprep.subr.mxu0 0.0
    %2970 = vmatpush1.xpose.msra.mxu0 0.0
    %2971 = vmatprep.subr.mxu0 0.0
    %2972 = vmatpush1.xpose.msra.mxu0 0.0
    %2973 = vmatprep.subr.mxu0 0.0
    %2974 = vmatpush1.xpose.msra.mxu0 0.0
    %2975 = vmatprep.subr.mxu0 0.0
    %2976 = vmatpush1.xpose.msra.mxu0 0.0
    %2977 = vmatprep.subr.mxu0 0.0
    %2978 = vmatpush1.xpose.msra.mxu0 0.0
    %2979 = vmatprep.subr.mxu0 0.0
    %2980 = vmatpush1.xpose.msra.mxu0 0.0
    %2981 = vmatprep.subr.mxu0 0.0
    %2982 = vmatpush1.xpose.msra.mxu0 0.0
    %2983 = vmatprep.subr.mxu0 0.0
    %2984 = vmatpush1.xpose.msra.mxu0 0.0
    %2985 = vmatprep.subr.mxu0 0.0
    %2986 = vmatpush1.xpose.msra.mxu0 0.0
    %2987 = vmatprep.subr.mxu0 0.0
    %2988 = vmatpush1.xpose.msra.mxu0 0.0
    %2989 = vmatprep.subr.mxu0 0.0
    %2990 = vmatpush1.xpose.msra.mxu0 0.0
    %2991 = vmatprep.subr.mxu0 0.0
    %2992 = vmatpush1.xpose.msra.mxu0 0.0
    %2993 = vmatprep.subr.mxu0 0.0
    %2994 = vmatpush1.xpose.msra.mxu0 0.0
    %2995 = vmatprep.subr.mxu0 0.0
    %2996 = vmatpush1.xpose.msra.mxu0 0.0
    %2997 = vmatprep.subr.mxu0 0.0
    %2998 = vmatpush1.xpose.msra.mxu0 0.0
    %2999 = vmatprep.subr.mxu0 0.0
    %3000 = vmatpush1.xpose.msra.mxu0 0.0
    %3001 = vmatprep.subr.mxu0 0.0
    %3002 = vmatpush1.xpose.msra.mxu0 0.0
    %3003 = vmatprep.subr.mxu0 0.0
    %3004 = vmatpush1.xpose.msra.mxu0 0.0
    %3005 = vmatprep.subr.mxu0 0.0
    %3006 = vmatpush1.xpose.msra.mxu0 0.0
    %3007 = vmatprep.subr.mxu0 0.0
    %3008 = vmatpush1.xpose.msra.mxu0 0.0
    %3009 = vmatprep.subr.mxu0 0.0
    %3010 = vmatpush1.xpose.msra.mxu0 0.0
    %3011 = vmatprep.subr.mxu0 0.0
    %3012 = vmatpush1.xpose.msra.mxu0 0.0
    %3013 = vmatprep.subr.mxu0 0.0
    %3014 = vmatpush1.xpose.msra.mxu0 0.0
    %3015 = vmatprep.subr.mxu0 0.0
    %3016 = vmatpush1.xpose.msra.mxu0 0.0
    %3017 = vmatprep.subr.mxu0 0.0
    %3018 = vmatpush1.xpose.msra.mxu0 0.0
    %3019 = vmatprep.subr.mxu0 0.0
    %3020 = vmatpush1.xpose.msra.mxu0 0.0
    %3021 = vmatprep.mubr.f32.mxu0 0.0
    %3022 = vmatmul.mubr.f32.gmra.mrb[0].mxu0 %v2953
    %v3023 = vpop.f32.mrb[0].mxu0
    %v3024 = vadd.f32 0.0, %v3023
    %v3025 = vpop.f32.mrb[0].mxu0
    %3026 = vdwg.mxu0
    %3027 = vrot.lane.b32.xlu0 %v1172, 112
    %v3028 = vpop.permute.xlu0 %3027
    %3029 = vrot.lane.b32.xlu0 %v1172, 80
    %v3030 = vpop.permute.xlu0 %3029
    %v3031 = vsel %vm49, %v3028, 0
    %v3033 = vsel %vm49, %v3030, 0
    %3035 = vmatprep.subr.mxu0 0.0
    %3036 = vmatpush1.xpose.msra.mxu0 %v3033
    %3037 = vmatprep.subr.mxu0 0.0
    %3038 = vmatpush1.xpose.msra.mxu0 0.0
    %3039 = vmatprep.subr.mxu0 0.0
    %3040 = vmatpush1.xpose.msra.mxu0 0.0
    %3041 = vmatprep.subr.mxu0 0.0
    %3042 = vmatpush1.xpose.msra.mxu0 0.0
    %3043 = vmatprep.subr.mxu0 0.0
    %3044 = vmatpush1.xpose.msra.mxu0 0.0
    %3045 = vmatprep.subr.mxu0 0.0
    %3046 = vmatpush1.xpose.msra.mxu0 0.0
    %3047 = vmatprep.subr.mxu0 0.0
    %3048 = vmatpush1.xpose.msra.mxu0 0.0
    %3049 = vmatprep.subr.mxu0 0.0
    %3050 = vmatpush1.xpose.msra.mxu0 0.0
    %3051 = vmatprep.subr.mxu0 0.0
    %3052 = vmatpush1.xpose.msra.mxu0 0.0
    %3053 = vmatprep.subr.mxu0 0.0
    %3054 = vmatpush1.xpose.msra.mxu0 0.0
    %3055 = vmatprep.subr.mxu0 0.0
    %3056 = vmatpush1.xpose.msra.mxu0 0.0
    %3057 = vmatprep.subr.mxu0 0.0
    %3058 = vmatpush1.xpose.msra.mxu0 0.0
    %3059 = vmatprep.subr.mxu0 0.0
    %3060 = vmatpush1.xpose.msra.mxu0 0.0
    %3061 = vmatprep.subr.mxu0 0.0
    %3062 = vmatpush1.xpose.msra.mxu0 0.0
    %3063 = vmatprep.subr.mxu0 0.0
    %3064 = vmatpush1.xpose.msra.mxu0 0.0
    %3065 = vmatprep.subr.mxu0 0.0
    %3066 = vmatpush1.xpose.msra.mxu0 0.0
    %3067 = vmatprep.subr.mxu0 0.0
    %3068 = vmatpush1.xpose.msra.mxu0 0.0
    %3069 = vmatprep.subr.mxu0 0.0
    %3070 = vmatpush1.xpose.msra.mxu0 0.0
    %3071 = vmatprep.subr.mxu0 0.0
    %3072 = vmatpush1.xpose.msra.mxu0 0.0
    %3073 = vmatprep.subr.mxu0 0.0
    %3074 = vmatpush1.xpose.msra.mxu0 0.0
    %3075 = vmatprep.subr.mxu0 0.0
    %3076 = vmatpush1.xpose.msra.mxu0 0.0
    %3077 = vmatprep.subr.mxu0 0.0
    %3078 = vmatpush1.xpose.msra.mxu0 0.0
    %3079 = vmatprep.subr.mxu0 0.0
    %3080 = vmatpush1.xpose.msra.mxu0 0.0
    %3081 = vmatprep.subr.mxu0 0.0
    %3082 = vmatpush1.xpose.msra.mxu0 0.0
    %3083 = vmatprep.subr.mxu0 0.0
    %3084 = vmatpush1.xpose.msra.mxu0 0.0
    %3085 = vmatprep.subr.mxu0 0.0
    %3086 = vmatpush1.xpose.msra.mxu0 0.0
    %3087 = vmatprep.subr.mxu0 0.0
    %3088 = vmatpush1.xpose.msra.mxu0 0.0
    %3089 = vmatprep.subr.mxu0 0.0
    %3090 = vmatpush1.xpose.msra.mxu0 0.0
    %3091 = vmatprep.subr.mxu0 0.0
    %3092 = vmatpush1.xpose.msra.mxu0 0.0
    %3093 = vmatprep.subr.mxu0 0.0
    %3094 = vmatpush1.xpose.msra.mxu0 0.0
    %3095 = vmatprep.subr.mxu0 0.0
    %3096 = vmatpush1.xpose.msra.mxu0 0.0
    %3097 = vmatprep.subr.mxu0 0.0
    %3098 = vmatpush1.xpose.msra.mxu0 0.0
    %3099 = vmatprep.mubr.f32.mxu0 0.0
    %3100 = vmatmul.mubr.f32.gmra.mrb[0].mxu0 %v3031
    %v3101 = vpop.f32.mrb[0].mxu0
    %v3102 = vadd.f32 0.0, %v3101
    %v3103 = vpop.f32.mrb[0].mxu0
    %3104 = vdwg.mxu0
    %3105 = vrot.lane.b32.xlu0 %v1245, 112
    %v3106 = vpop.permute.xlu0 %3105
    %3107 = vrot.lane.b32.xlu0 %v1245, 80
    %v3108 = vpop.permute.xlu0 %3107
    %v3109 = vsel %vm49, %v3106, 0
    %v3111 = vsel %vm49, %v3108, 0
    %3113 = vmatprep.subr.mxu0 0.0
    %3114 = vmatpush1.xpose.msra.mxu0 %v3111
    %3115 = vmatprep.subr.mxu0 0.0
    %3116 = vmatpush1.xpose.msra.mxu0 0.0
    %3117 = vmatprep.subr.mxu0 0.0
    %3118 = vmatpush1.xpose.msra.mxu0 0.0
    %3119 = vmatprep.subr.mxu0 0.0
    %3120 = vmatpush1.xpose.msra.mxu0 0.0
    %3121 = vmatprep.subr.mxu0 0.0
    %3122 = vmatpush1.xpose.msra.mxu0 0.0
    %3123 = vmatprep.subr.mxu0 0.0
    %3124 = vmatpush1.xpose.msra.mxu0 0.0
    %3125 = vmatprep.subr.mxu0 0.0
    %3126 = vmatpush1.xpose.msra.mxu0 0.0
    %3127 = vmatprep.subr.mxu0 0.0
    %3128 = vmatpush1.xpose.msra.mxu0 0.0
    %3129 = vmatprep.subr.mxu0 0.0
    %3130 = vmatpush1.xpose.msra.mxu0 0.0
    %3131 = vmatprep.subr.mxu0 0.0
    %3132 = vmatpush1.xpose.msra.mxu0 0.0
    %3133 = vmatprep.subr.mxu0 0.0
    %3134 = vmatpush1.xpose.msra.mxu0 0.0
    %3135 = vmatprep.subr.mxu0 0.0
    %3136 = vmatpush1.xpose.msra.mxu0 0.0
    %3137 = vmatprep.subr.mxu0 0.0
    %3138 = vmatpush1.xpose.msra.mxu0 0.0
    %3139 = vmatprep.subr.mxu0 0.0
    %3140 = vmatpush1.xpose.msra.mxu0 0.0
    %3141 = vmatprep.subr.mxu0 0.0
    %3142 = vmatpush1.xpose.msra.mxu0 0.0
    %3143 = vmatprep.subr.mxu0 0.0
    %3144 = vmatpush1.xpose.msra.mxu0 0.0
    %3145 = vmatprep.subr.mxu0 0.0
    %3146 = vmatpush1.xpose.msra.mxu0 0.0
    %3147 = vmatprep.subr.mxu0 0.0
    %3148 = vmatpush1.xpose.msra.mxu0 0.0
    %3149 = vmatprep.subr.mxu0 0.0
    %3150 = vmatpush1.xpose.msra.mxu0 0.0
    %3151 = vmatprep.subr.mxu0 0.0
    %3152 = vmatpush1.xpose.msra.mxu0 0.0
    %3153 = vmatprep.subr.mxu0 0.0
    %3154 = vmatpush1.xpose.msra.mxu0 0.0
    %3155 = vmatprep.subr.mxu0 0.0
    %3156 = vmatpush1.xpose.msra.mxu0 0.0
    %3157 = vmatprep.subr.mxu0 0.0
    %3158 = vmatpush1.xpose.msra.mxu0 0.0
    %3159 = vmatprep.subr.mxu0 0.0
    %3160 = vmatpush1.xpose.msra.mxu0 0.0
    %3161 = vmatprep.subr.mxu0 0.0
    %3162 = vmatpush1.xpose.msra.mxu0 0.0
    %3163 = vmatprep.subr.mxu0 0.0
    %3164 = vmatpush1.xpose.msra.mxu0 0.0
    %3165 = vmatprep.subr.mxu0 0.0
    %3166 = vmatpush1.xpose.msra.mxu0 0.0
    %3167 = vmatprep.subr.mxu0 0.0
    %3168 = vmatpush1.xpose.msra.mxu0 0.0
    %3169 = vmatprep.subr.mxu0 0.0
    %3170 = vmatpush1.xpose.msra.mxu0 0.0
    %3171 = vmatprep.subr.mxu0 0.0
    %3172 = vmatpush1.xpose.msra.mxu0 0.0
    %3173 = vmatprep.subr.mxu0 0.0
    %3174 = vmatpush1.xpose.msra.mxu0 0.0
    %3175 = vmatprep.subr.mxu0 0.0
    %3176 = vmatpush1.xpose.msra.mxu0 0.0
    %3177 = vmatprep.mubr.f32.mxu0 0.0
    %3178 = vmatmul.mubr.f32.gmra.mrb[0].mxu0 %v3109
    %v3179 = vpop.f32.mrb[0].mxu0
    %v3180 = vadd.f32 0.0, %v3179
    %v3181 = vpop.f32.mrb[0].mxu0
    %3182 = vdwg.mxu0
    %3183 = vrot.lane.b32.xlu0 %v1318, 112
    %v3184 = vpop.permute.xlu0 %3183
    %3185 = vrot.lane.b32.xlu0 %v1318, 80
    %v3186 = vpop.permute.xlu0 %3185
    %v3187 = vsel %vm49, %v3184, 0
    %v3189 = vsel %vm49, %v3186, 0
    %3191 = vmatprep.subr.mxu0 0.0
    %3192 = vmatpush1.xpose.msra.mxu0 %v3189
    %3193 = vmatprep.subr.mxu0 0.0
    %3194 = vmatpush1.xpose.msra.mxu0 0.0
    %3195 = vmatprep.subr.mxu0 0.0
    %3196 = vmatpush1.xpose.msra.mxu0 0.0
    %3197 = vmatprep.subr.mxu0 0.0
    %3198 = vmatpush1.xpose.msra.mxu0 0.0
    %3199 = vmatprep.subr.mxu0 0.0
    %3200 = vmatpush1.xpose.msra.mxu0 0.0
    %3201 = vmatprep.subr.mxu0 0.0
    %3202 = vmatpush1.xpose.msra.mxu0 0.0
    %3203 = vmatprep.subr.mxu0 0.0
    %3204 = vmatpush1.xpose.msra.mxu0 0.0
    %3205 = vmatprep.subr.mxu0 0.0
    %3206 = vmatpush1.xpose.msra.mxu0 0.0
    %3207 = vmatprep.subr.mxu0 0.0
    %3208 = vmatpush1.xpose.msra.mxu0 0.0
    %3209 = vmatprep.subr.mxu0 0.0
    %3210 = vmatpush1.xpose.msra.mxu0 0.0
    %3211 = vmatprep.subr.mxu0 0.0
    %3212 = vmatpush1.xpose.msra.mxu0 0.0
    %3213 = vmatprep.subr.mxu0 0.0
    %3214 = vmatpush1.xpose.msra.mxu0 0.0
    %3215 = vmatprep.subr.mxu0 0.0
    %3216 = vmatpush1.xpose.msra.mxu0 0.0
    %3217 = vmatprep.subr.mxu0 0.0
    %3218 = vmatpush1.xpose.msra.mxu0 0.0
    %3219 = vmatprep.subr.mxu0 0.0
    %3220 = vmatpush1.xpose.msra.mxu0 0.0
    %3221 = vmatprep.subr.mxu0 0.0
    %3222 = vmatpush1.xpose.msra.mxu0 0.0
    %3223 = vmatprep.subr.mxu0 0.0
    %3224 = vmatpush1.xpose.msra.mxu0 0.0
    %3225 = vmatprep.subr.mxu0 0.0
    %3226 = vmatpush1.xpose.msra.mxu0 0.0
    %3227 = vmatprep.subr.mxu0 0.0
    %3228 = vmatpush1.xpose.msra.mxu0 0.0
    %3229 = vmatprep.subr.mxu0 0.0
    %3230 = vmatpush1.xpose.msra.mxu0 0.0
    %3231 = vmatprep.subr.mxu0 0.0
    %3232 = vmatpush1.xpose.msra.mxu0 0.0
    %3233 = vmatprep.subr.mxu0 0.0
    %3234 = vmatpush1.xpose.msra.mxu0 0.0
    %3235 = vmatprep.subr.mxu0 0.0
    %3236 = vmatpush1.xpose.msra.mxu0 0.0
    %3237 = vmatprep.subr.mxu0 0.0
    %3238 = vmatpush1.xpose.msra.mxu0 0.0
    %3239 = vmatprep.subr.mxu0 0.0
    %3240 = vmatpush1.xpose.msra.mxu0 0.0
    %3241 = vmatprep.subr.mxu0 0.0
    %3242 = vmatpush1.xpose.msra.mxu0 0.0
    %3243 = vmatprep.subr.mxu0 0.0
    %3244 = vmatpush1.xpose.msra.mxu0 0.0
    %3245 = vmatprep.subr.mxu0 0.0
    %3246 = vmatpush1.xpose.msra.mxu0 0.0
    %3247 = vmatprep.subr.mxu0 0.0
    %3248 = vmatpush1.xpose.msra.mxu0 0.0
    %3249 = vmatprep.subr.mxu0 0.0
    %3250 = vmatpush1.xpose.msra.mxu0 0.0
    %3251 = vmatprep.subr.mxu0 0.0
    %3252 = vmatpush1.xpose.msra.mxu0 0.0
    %3253 = vmatprep.subr.mxu0 0.0
    %3254 = vmatpush1.xpose.msra.mxu0 0.0
    %3255 = vmatprep.mubr.f32.mxu0 0.0
    %3256 = vmatmul.mubr.f32.gmra.mrb[0].mxu0 %v3187
    %v3257 = vpop.f32.mrb[0].mxu0
    %v3258 = vadd.f32 0.0, %v3257
    %v3259 = vpop.f32.mrb[0].mxu0
    %3260 = vdwg.mxu0
    %3261 = vrot.lane.b32.xlu0 %v1391, 112
    %v3262 = vpop.permute.xlu0 %3261
    %3263 = vrot.lane.b32.xlu0 %v1391, 80
    %v3264 = vpop.permute.xlu0 %3263
    %v3265 = vsel %vm49, %v3262, 0
    %v3267 = vsel %vm49, %v3264, 0
    %3269 = vmatprep.subr.mxu0 0.0
    %3270 = vmatpush1.xpose.msra.mxu0 %v3267
    %3271 = vmatprep.subr.mxu0 0.0
    %3272 = vmatpush1.xpose.msra.mxu0 0.0
    %3273 = vmatprep.subr.mxu0 0.0
    %3274 = vmatpush1.xpose.msra.mxu0 0.0
    %3275 = vmatprep.subr.mxu0 0.0
    %3276 = vmatpush1.xpose.msra.mxu0 0.0
    %3277 = vmatprep.subr.mxu0 0.0
    %3278 = vmatpush1.xpose.msra.mxu0 0.0
    %3279 = vmatprep.subr.mxu0 0.0
    %3280 = vmatpush1.xpose.msra.mxu0 0.0
    %3281 = vmatprep.subr.mxu0 0.0
    %3282 = vmatpush1.xpose.msra.mxu0 0.0
    %3283 = vmatprep.subr.mxu0 0.0
    %3284 = vmatpush1.xpose.msra.mxu0 0.0
    %3285 = vmatprep.subr.mxu0 0.0
    %3286 = vmatpush1.xpose.msra.mxu0 0.0
    %3287 = vmatprep.subr.mxu0 0.0
    %3288 = vmatpush1.xpose.msra.mxu0 0.0
    %3289 = vmatprep.subr.mxu0 0.0
    %3290 = vmatpush1.xpose.msra.mxu0 0.0
    %3291 = vmatprep.subr.mxu0 0.0
    %3292 = vmatpush1.xpose.msra.mxu0 0.0
    %3293 = vmatprep.subr.mxu0 0.0
    %3294 = vmatpush1.xpose.msra.mxu0 0.0
    %3295 = vmatprep.subr.mxu0 0.0
    %3296 = vmatpush1.xpose.msra.mxu0 0.0
    %3297 = vmatprep.subr.mxu0 0.0
    %3298 = vmatpush1.xpose.msra.mxu0 0.0
    %3299 = vmatprep.subr.mxu0 0.0
    %3300 = vmatpush1.xpose.msra.mxu0 0.0
    %3301 = vmatprep.subr.mxu0 0.0
    %3302 = vmatpush1.xpose.msra.mxu0 0.0
    %3303 = vmatprep.subr.mxu0 0.0
    %3304 = vmatpush1.xpose.msra.mxu0 0.0
    %3305 = vmatprep.subr.mxu0 0.0
    %3306 = vmatpush1.xpose.msra.mxu0 0.0
    %3307 = vmatprep.subr.mxu0 0.0
    %3308 = vmatpush1.xpose.msra.mxu0 0.0
    %3309 = vmatprep.subr.mxu0 0.0
    %3310 = vmatpush1.xpose.msra.mxu0 0.0
    %3311 = vmatprep.subr.mxu0 0.0
    %3312 = vmatpush1.xpose.msra.mxu0 0.0
    %3313 = vmatprep.subr.mxu0 0.0
    %3314 = vmatpush1.xpose.msra.mxu0 0.0
    %3315 = vmatprep.subr.mxu0 0.0
    %3316 = vmatpush1.xpose.msra.mxu0 0.0
    %3317 = vmatprep.subr.mxu0 0.0
    %3318 = vmatpush1.xpose.msra.mxu0 0.0
    %3319 = vmatprep.subr.mxu0 0.0
    %3320 = vmatpush1.xpose.msra.mxu0 0.0
    %3321 = vmatprep.subr.mxu0 0.0
    %3322 = vmatpush1.xpose.msra.mxu0 0.0
    %3323 = vmatprep.subr.mxu0 0.0
    %3324 = vmatpush1.xpose.msra.mxu0 0.0
    %3325 = vmatprep.subr.mxu0 0.0
    %3326 = vmatpush1.xpose.msra.mxu0 0.0
    %3327 = vmatprep.subr.mxu0 0.0
    %3328 = vmatpush1.xpose.msra.mxu0 0.0
    %3329 = vmatprep.subr.mxu0 0.0
    %3330 = vmatpush1.xpose.msra.mxu0 0.0
    %3331 = vmatprep.subr.mxu0 0.0
    %3332 = vmatpush1.xpose.msra.mxu0 0.0
    %3333 = vmatprep.mubr.f32.mxu0 0.0
    %3334 = vmatmul.mubr.f32.gmra.mrb[0].mxu0 %v3265
    %v3335 = vpop.f32.mrb[0].mxu0
    %v3336 = vadd.f32 0.0, %v3335
    %v3337 = vpop.f32.mrb[0].mxu0
    %3338 = vdwg.mxu0
    %3339 = vrot.lane.b32.xlu0 %v1464, 112
    %v3340 = vpop.permute.xlu0 %3339
    %3341 = vrot.lane.b32.xlu0 %v1464, 80
    %v3342 = vpop.permute.xlu0 %3341
    %v3343 = vsel %vm49, %v3340, 0
    %v3345 = vsel %vm49, %v3342, 0
    %3347 = vmatprep.subr.mxu0 0.0
    %3348 = vmatpush1.xpose.msra.mxu0 %v3345
    %3349 = vmatprep.subr.mxu0 0.0
    %3350 = vmatpush1.xpose.msra.mxu0 0.0
    %3351 = vmatprep.subr.mxu0 0.0
    %3352 = vmatpush1.xpose.msra.mxu0 0.0
    %3353 = vmatprep.subr.mxu0 0.0
    %3354 = vmatpush1.xpose.msra.mxu0 0.0
    %3355 = vmatprep.subr.mxu0 0.0
    %3356 = vmatpush1.xpose.msra.mxu0 0.0
    %3357 = vmatprep.subr.mxu0 0.0
    %3358 = vmatpush1.xpose.msra.mxu0 0.0
    %3359 = vmatprep.subr.mxu0 0.0
    %3360 = vmatpush1.xpose.msra.mxu0 0.0
    %3361 = vmatprep.subr.mxu0 0.0
    %3362 = vmatpush1.xpose.msra.mxu0 0.0
    %3363 = vmatprep.subr.mxu0 0.0
    %3364 = vmatpush1.xpose.msra.mxu0 0.0
    %3365 = vmatprep.subr.mxu0 0.0
    %3366 = vmatpush1.xpose.msra.mxu0 0.0
    %3367 = vmatprep.subr.mxu0 0.0
    %3368 = vmatpush1.xpose.msra.mxu0 0.0
    %3369 = vmatprep.subr.mxu0 0.0
    %3370 = vmatpush1.xpose.msra.mxu0 0.0
    %3371 = vmatprep.subr.mxu0 0.0
    %3372 = vmatpush1.xpose.msra.mxu0 0.0
    %3373 = vmatprep.subr.mxu0 0.0
    %3374 = vmatpush1.xpose.msra.mxu0 0.0
    %3375 = vmatprep.subr.mxu0 0.0
    %3376 = vmatpush1.xpose.msra.mxu0 0.0
    %3377 = vmatprep.subr.mxu0 0.0
    %3378 = vmatpush1.xpose.msra.mxu0 0.0
    %3379 = vmatprep.subr.mxu0 0.0
    %3380 = vmatpush1.xpose.msra.mxu0 0.0
    %3381 = vmatprep.subr.mxu0 0.0
    %3382 = vmatpush1.xpose.msra.mxu0 0.0
    %3383 = vmatprep.subr.mxu0 0.0
    %3384 = vmatpush1.xpose.msra.mxu0 0.0
    %3385 = vmatprep.subr.mxu0 0.0
    %3386 = vmatpush1.xpose.msra.mxu0 0.0
    %3387 = vmatprep.subr.mxu0 0.0
    %3388 = vmatpush1.xpose.msra.mxu0 0.0
    %3389 = vmatprep.subr.mxu0 0.0
    %3390 = vmatpush1.xpose.msra.mxu0 0.0
    %3391 = vmatprep.subr.mxu0 0.0
    %3392 = vmatpush1.xpose.msra.mxu0 0.0
    %3393 = vmatprep.subr.mxu0 0.0
    %3394 = vmatpush1.xpose.msra.mxu0 0.0
    %3395 = vmatprep.subr.mxu0 0.0
    %3396 = vmatpush1.xpose.msra.mxu0 0.0
    %3397 = vmatprep.subr.mxu0 0.0
    %3398 = vmatpush1.xpose.msra.mxu0 0.0
    %3399 = vmatprep.subr.mxu0 0.0
    %3400 = vmatpush1.xpose.msra.mxu0 0.0
    %3401 = vmatprep.subr.mxu0 0.0
    %3402 = vmatpush1.xpose.msra.mxu0 0.0
    %3403 = vmatprep.subr.mxu0 0.0
    %3404 = vmatpush1.xpose.msra.mxu0 0.0
    %3405 = vmatprep.subr.mxu0 0.0
    %3406 = vmatpush1.xpose.msra.mxu0 0.0
    %3407 = vmatprep.subr.mxu0 0.0
    %3408 = vmatpush1.xpose.msra.mxu0 0.0
    %3409 = vmatprep.subr.mxu0 0.0
    %3410 = vmatpush1.xpose.msra.mxu0 0.0
    %3411 = vmatprep.mubr.f32.mxu0 0.0
    %3412 = vmatmul.mubr.f32.gmra.mrb[0].mxu0 %v3343
    %v3413 = vpop.f32.mrb[0].mxu0
    %v3414 = vadd.f32 0.0, %v3413
    %v3415 = vpop.f32.mrb[0].mxu0
    %3416 = vdwg.mxu0
    %3417 = vrot.lane.b32.xlu0 %v1537, 112
    %v3418 = vpop.permute.xlu0 %3417
    %3419 = vrot.lane.b32.xlu0 %v1537, 80
    %v3420 = vpop.permute.xlu0 %3419
    %v3421 = vsel %vm49, %v3418, 0
    %v3423 = vsel %vm49, %v3420, 0
    %3425 = vmatprep.subr.mxu0 0.0
    %3426 = vmatpush1.xpose.msra.mxu0 %v3423
    %3427 = vmatprep.subr.mxu0 0.0
    %3428 = vmatpush1.xpose.msra.mxu0 0.0
    %3429 = vmatprep.subr.mxu0 0.0
    %3430 = vmatpush1.xpose.msra.mxu0 0.0
    %3431 = vmatprep.subr.mxu0 0.0
    %3432 = vmatpush1.xpose.msra.mxu0 0.0
    %3433 = vmatprep.subr.mxu0 0.0
    %3434 = vmatpush1.xpose.msra.mxu0 0.0
    %3435 = vmatprep.subr.mxu0 0.0
    %3436 = vmatpush1.xpose.msra.mxu0 0.0
    %3437 = vmatprep.subr.mxu0 0.0
    %3438 = vmatpush1.xpose.msra.mxu0 0.0
    %3439 = vmatprep.subr.mxu0 0.0
    %3440 = vmatpush1.xpose.msra.mxu0 0.0
    %3441 = vmatprep.subr.mxu0 0.0
    %3442 = vmatpush1.xpose.msra.mxu0 0.0
    %3443 = vmatprep.subr.mxu0 0.0
    %3444 = vmatpush1.xpose.msra.mxu0 0.0
    %3445 = vmatprep.subr.mxu0 0.0
    %3446 = vmatpush1.xpose.msra.mxu0 0.0
    %3447 = vmatprep.subr.mxu0 0.0
    %3448 = vmatpush1.xpose.msra.mxu0 0.0
    %3449 = vmatprep.subr.mxu0 0.0
    %3450 = vmatpush1.xpose.msra.mxu0 0.0
    %3451 = vmatprep.subr.mxu0 0.0
    %3452 = vmatpush1.xpose.msra.mxu0 0.0
    %3453 = vmatprep.subr.mxu0 0.0
    %3454 = vmatpush1.xpose.msra.mxu0 0.0
    %3455 = vmatprep.subr.mxu0 0.0
    %3456 = vmatpush1.xpose.msra.mxu0 0.0
    %3457 = vmatprep.subr.mxu0 0.0
    %3458 = vmatpush1.xpose.msra.mxu0 0.0
    %3459 = vmatprep.subr.mxu0 0.0
    %3460 = vmatpush1.xpose.msra.mxu0 0.0
    %3461 = vmatprep.subr.mxu0 0.0
    %3462 = vmatpush1.xpose.msra.mxu0 0.0
    %3463 = vmatprep.subr.mxu0 0.0
    %3464 = vmatpush1.xpose.msra.mxu0 0.0
    %3465 = vmatprep.subr.mxu0 0.0
    %3466 = vmatpush1.xpose.msra.mxu0 0.0
    %3467 = vmatprep.subr.mxu0 0.0
    %3468 = vmatpush1.xpose.msra.mxu0 0.0
    %3469 = vmatprep.subr.mxu0 0.0
    %3470 = vmatpush1.xpose.msra.mxu0 0.0
    %3471 = vmatprep.subr.mxu0 0.0
    %3472 = vmatpush1.xpose.msra.mxu0 0.0
    %3473 = vmatprep.subr.mxu0 0.0
    %3474 = vmatpush1.xpose.msra.mxu0 0.0
    %3475 = vmatprep.subr.mxu0 0.0
    %3476 = vmatpush1.xpose.msra.mxu0 0.0
    %3477 = vmatprep.subr.mxu0 0.0
    %3478 = vmatpush1.xpose.msra.mxu0 0.0
    %3479 = vmatprep.subr.mxu0 0.0
    %3480 = vmatpush1.xpose.msra.mxu0 0.0
    %3481 = vmatprep.subr.mxu0 0.0
    %3482 = vmatpush1.xpose.msra.mxu0 0.0
    %3483 = vmatprep.subr.mxu0 0.0
    %3484 = vmatpush1.xpose.msra.mxu0 0.0
    %3485 = vmatprep.subr.mxu0 0.0
    %3486 = vmatpush1.xpose.msra.mxu0 0.0
    %3487 = vmatprep.subr.mxu0 0.0
    %3488 = vmatpush1.xpose.msra.mxu0 0.0
    %3489 = vmatprep.mubr.f32.mxu0 0.0
    %3490 = vmatmul.mubr.f32.gmra.mrb[0].mxu0 %v3421
    %v3491 = vpop.f32.mrb[0].mxu0
    %v3492 = vadd.f32 0.0, %v3491
    %v3493 = vpop.f32.mrb[0].mxu0
    %3494 = vdwg.mxu0
    %v3495 = vmul.f32 %v2946, 0.25
    %v3496 = vmul.f32 %v3024, 0.25
    %v3497 = vmul.f32 %v3102, 0.25
    %v3498 = vmul.f32 %v3180, 0.25
    %v3499 = vmul.f32 %v3258, 0.25
    %v3500 = vmul.f32 %v3336, 0.25
    %v3501 = vmul.f32 %v3414, 0.25
    %v3502 = vmul.f32 %v3492, 0.25
    %v3503 = vsel %vm2164, %v3495, -inf
    %3504 = vmax.xlane.f32.xlu0 %v3503
    %v3505 = vpop.xlane.xlu0 %3504
    %v3506 = vsel %vm2164, %v3496, -inf
    %3507 = vmax.xlane.f32.xlu0 %v3506
    %v3508 = vpop.xlane.xlu0 %3507
    %v3509 = vsel %vm2164, %v3497, -inf
    %3510 = vmax.xlane.f32.xlu0 %v3509
    %v3511 = vpop.xlane.xlu0 %3510
    %v3512 = vsel %vm2164, %v3498, -inf
    %3513 = vmax.xlane.f32.xlu0 %v3512
    %v3514 = vpop.xlane.xlu0 %3513
    %v3515 = vsel %vm2164, %v3499, -inf
    %3516 = vmax.xlane.f32.xlu0 %v3515
    %v3517 = vpop.xlane.xlu0 %3516
    %v3518 = vsel %vm2164, %v3500, -inf
    %3519 = vmax.xlane.f32.xlu0 %v3518
    %v3520 = vpop.xlane.xlu0 %3519
    %v3521 = vsel %vm2164, %v3501, -inf
    %3522 = vmax.xlane.f32.xlu0 %v3521
    %v3523 = vpop.xlane.xlu0 %3522
    %v3524 = vsel %vm2164, %v3502, -inf
    %3525 = vmax.xlane.f32.xlu0 %v3524
    %v3526 = vpop.xlane.xlu0 %3525
    %v3527 = vsub.f32 %v3495, %v3505
    %v3528 = vsub.f32 %v3496, %v3508
    %v3529 = vsub.f32 %v3497, %v3511
    %v3530 = vsub.f32 %v3498, %v3514
    %v3531 = vsub.f32 %v3499, %v3517
    %v3532 = vsub.f32 %v3500, %v3520
    %v3533 = vsub.f32 %v3501, %v3523
    %v3534 = vsub.f32 %v3502, %v3526
    %v3535 = vmul.f32 %v3527, 1.442695
    %v3536 = vpow.pop %v3535
    %v3537 = vmul.f32 %v3528, 1.442695
    %v3538 = vpow.pop %v3537
    %v3539 = vmul.f32 %v3529, 1.442695
    %v3540 = vpow.pop %v3539
    %v3541 = vmul.f32 %v3530, 1.442695
    %v3542 = vpow.pop %v3541
    %v3543 = vmul.f32 %v3531, 1.442695
    %v3544 = vpow.pop %v3543
    %v3545 = vmul.f32 %v3532, 1.442695
    %v3546 = vpow.pop %v3545
    %v3547 = vmul.f32 %v3533, 1.442695
    %v3548 = vpow.pop %v3547
    %v3549 = vmul.f32 %v3534, 1.442695
    %v3550 = vpow.pop %v3549
    %v3551 = vsel %vm2164, %v3536, 0.0
    %3552 = vadd.xlane.f32.xlu0 %v3551
    %v3553 = vpop.xlane.xlu0 %3552
    %v3554 = vsel %vm2164, %v3538, 0.0
    %3555 = vadd.xlane.f32.xlu0 %v3554
    %v3556 = vpop.xlane.xlu0 %3555
    %v3557 = vsel %vm2164, %v3540, 0.0
    %3558 = vadd.xlane.f32.xlu0 %v3557
    %v3559 = vpop.xlane.xlu0 %3558
    %v3560 = vsel %vm2164, %v3542, 0.0
    %3561 = vadd.xlane.f32.xlu0 %v3560
    %v3562 = vpop.xlane.xlu0 %3561
    %v3563 = vsel %vm2164, %v3544, 0.0
    %3564 = vadd.xlane.f32.xlu0 %v3563
    %v3565 = vpop.xlane.xlu0 %3564
    %v3566 = vsel %vm2164, %v3546, 0.0
    %3567 = vadd.xlane.f32.xlu0 %v3566
    %v3568 = vpop.xlane.xlu0 %3567
    %v3569 = vsel %vm2164, %v3548, 0.0
    %3570 = vadd.xlane.f32.xlu0 %v3569
    %v3571 = vpop.xlane.xlu0 %3570
    %v3572 = vsel %vm2164, %v3550, 0.0
    %3573 = vadd.xlane.f32.xlu0 %v3572
    %v3574 = vpop.xlane.xlu0 %3573
    %v3575 = vrcp.pop %v3553
    %v3576 = vmul.f32 %v3536, %v3575
    %v3577 = vrcp.pop %v3556
    %v3578 = vmul.f32 %v3538, %v3577
    %v3579 = vrcp.pop %v3559
    %v3580 = vmul.f32 %v3540, %v3579
    %v3581 = vrcp.pop %v3562
    %v3582 = vmul.f32 %v3542, %v3581
    %v3583 = vrcp.pop %v3565
    %v3584 = vmul.f32 %v3544, %v3583
    %v3585 = vrcp.pop %v3568
    %v3586 = vmul.f32 %v3546, %v3585
    %v3587 = vrcp.pop %v3571
    %v3588 = vmul.f32 %v3548, %v3587
    %v3589 = vrcp.pop %v3574
    %v3590 = vmul.f32 %v3550, %v3589
    %3591 = vrot.lane.b32.xlu0 %v1026, 48
    %v3592 = vpop.permute.xlu0 %3591
    %v3594 = vsel %vm2255, %v3576, 0
    %v3596 = vsel %vm2259, %v3592, 0
    %3598 = vmatprep.subr.mxu0 0.0
    %3599 = vmatpush1.msra.mxu0 %v3596
    %3600 = vmatprep.subr.mxu0 0.0
    %3601 = vmatpush1.msra.mxu0 0.0
    %3602 = vmatprep.subr.mxu0 0.0
    %3603 = vmatpush1.msra.mxu0 0.0
    %3604 = vmatprep.subr.mxu0 0.0
    %3605 = vmatpush1.msra.mxu0 0.0
    %3606 = vmatprep.subr.mxu0 0.0
    %3607 = vmatpush1.msra.mxu0 0.0
    %3608 = vmatprep.subr.mxu0 0.0
    %3609 = vmatpush1.msra.mxu0 0.0
    %3610 = vmatprep.subr.mxu0 0.0
    %3611 = vmatpush1.msra.mxu0 0.0
    %3612 = vmatprep.subr.mxu0 0.0
    %3613 = vmatpush1.msra.mxu0 0.0
    %3614 = vmatprep.subr.mxu0 0.0
    %3615 = vmatpush1.msra.mxu0 0.0
    %3616 = vmatprep.subr.mxu0 0.0
    %3617 = vmatpush1.msra.mxu0 0.0
    %3618 = vmatprep.subr.mxu0 0.0
    %3619 = vmatpush1.msra.mxu0 0.0
    %3620 = vmatprep.subr.mxu0 0.0
    %3621 = vmatpush1.msra.mxu0 0.0
    %3622 = vmatprep.subr.mxu0 0.0
    %3623 = vmatpush1.msra.mxu0 0.0
    %3624 = vmatprep.subr.mxu0 0.0
    %3625 = vmatpush1.msra.mxu0 0.0
    %3626 = vmatprep.subr.mxu0 0.0
    %3627 = vmatpush1.msra.mxu0 0.0
    %3628 = vmatprep.subr.mxu0 0.0
    %3629 = vmatpush1.msra.mxu0 0.0
    %3630 = vmatprep.subr.mxu0 0.0
    %3631 = vmatpush1.msra.mxu0 0.0
    %3632 = vmatprep.subr.mxu0 0.0
    %3633 = vmatpush1.msra.mxu0 0.0
    %3634 = vmatprep.subr.mxu0 0.0
    %3635 = vmatpush1.msra.mxu0 0.0
    %3636 = vmatprep.subr.mxu0 0.0
    %3637 = vmatpush1.msra.mxu0 0.0
    %3638 = vmatprep.subr.mxu0 0.0
    %3639 = vmatpush1.msra.mxu0 0.0
    %3640 = vmatprep.subr.mxu0 0.0
    %3641 = vmatpush1.msra.mxu0 0.0
    %3642 = vmatprep.subr.mxu0 0.0
    %3643 = vmatpush1.msra.mxu0 0.0
    %3644 = vmatprep.subr.mxu0 0.0
    %3645 = vmatpush1.msra.mxu0 0.0
    %3646 = vmatprep.subr.mxu0 0.0
    %3647 = vmatpush1.msra.mxu0 0.0
    %3648 = vmatprep.subr.mxu0 0.0
    %3649 = vmatpush1.msra.mxu0 0.0
    %3650 = vmatprep.subr.mxu0 0.0
    %3651 = vmatpush1.msra.mxu0 0.0
    %3652 = vmatprep.subr.mxu0 0.0
    %3653 = vmatpush1.msra.mxu0 0.0
    %3654 = vmatprep.subr.mxu0 0.0
    %3655 = vmatpush1.msra.mxu0 0.0
    %3656 = vmatprep.subr.mxu0 0.0
    %3657 = vmatpush1.msra.mxu0 0.0
    %3658 = vmatprep.subr.mxu0 0.0
    %3659 = vmatpush1.msra.mxu0 0.0
    %3660 = vmatprep.subr.mxu0 0.0
    %3661 = vmatpush1.msra.mxu0 0.0
    %3662 = vmatprep.mubr.f32.mxu0 0.0
    %3663 = vmatmul.mubr.f32.gmra.mrb[0].mxu0 %v3594
    %v3664 = vpop.f32.mrb[0].mxu0
    %v3665 = vadd.f32 0.0, %v3664
    %v3666 = vpop.f32.mrb[0].mxu0
    %3667 = vdwg.mxu0
    %3668 = vrot.lane.b32.xlu0 %v1099, 48
    %v3669 = vpop.permute.xlu0 %3668
    %v3671 = vsel %vm2255, %v3578, 0
    %v3673 = vsel %vm2259, %v3669, 0
    %3675 = vmatprep.subr.mxu0 0.0
    %3676 = vmatpush1.msra.mxu0 %v3673
    %3677 = vmatprep.subr.mxu0 0.0
    %3678 = vmatpush1.msra.mxu0 0.0
    %3679 = vmatprep.subr.mxu0 0.0
    %3680 = vmatpush1.msra.mxu0 0.0
    %3681 = vmatprep.subr.mxu0 0.0
    %3682 = vmatpush1.msra.mxu0 0.0
    %3683 = vmatprep.subr.mxu0 0.0
    %3684 = vmatpush1.msra.mxu0 0.0
    %3685 = vmatprep.subr.mxu0 0.0
    %3686 = vmatpush1.msra.mxu0 0.0
    %3687 = vmatprep.subr.mxu0 0.0
    %3688 = vmatpush1.msra.mxu0 0.0
    %3689 = vmatprep.subr.mxu0 0.0
    %3690 = vmatpush1.msra.mxu0 0.0
    %3691 = vmatprep.subr.mxu0 0.0
    %3692 = vmatpush1.msra.mxu0 0.0
    %3693 = vmatprep.subr.mxu0 0.0
    %3694 = vmatpush1.msra.mxu0 0.0
    %3695 = vmatprep.subr.mxu0 0.0
    %3696 = vmatpush1.msra.mxu0 0.0
    %3697 = vmatprep.subr.mxu0 0.0
    %3698 = vmatpush1.msra.mxu0 0.0
    %3699 = vmatprep.subr.mxu0 0.0
    %3700 = vmatpush1.msra.mxu0 0.0
    %3701 = vmatprep.subr.mxu0 0.0
    %3702 = vmatpush1.msra.mxu0 0.0
    %3703 = vmatprep.subr.mxu0 0.0
    %3704 = vmatpush1.msra.mxu0 0.0
    %3705 = vmatprep.subr.mxu0 0.0
    %3706 = vmatpush1.msra.mxu0 0.0
    %3707 = vmatprep.subr.mxu0 0.0
    %3708 = vmatpush1.msra.mxu0 0.0
    %3709 = vmatprep.subr.mxu0 0.0
    %3710 = vmatpush1.msra.mxu0 0.0
    %3711 = vmatprep.subr.mxu0 0.0
    %3712 = vmatpush1.msra.mxu0 0.0
    %3713 = vmatprep.subr.mxu0 0.0
    %3714 = vmatpush1.msra.mxu0 0.0
    %3715 = vmatprep.subr.mxu0 0.0
    %3716 = vmatpush1.msra.mxu0 0.0
    %3717 = vmatprep.subr.mxu0 0.0
    %3718 = vmatpush1.msra.mxu0 0.0
    %3719 = vmatprep.subr.mxu0 0.0
    %3720 = vmatpush1.msra.mxu0 0.0
    %3721 = vmatprep.subr.mxu0 0.0
    %3722 = vmatpush1.msra.mxu0 0.0
    %3723 = vmatprep.subr.mxu0 0.0
    %3724 = vmatpush1.msra.mxu0 0.0
    %3725 = vmatprep.subr.mxu0 0.0
    %3726 = vmatpush1.msra.mxu0 0.0
    %3727 = vmatprep.subr.mxu0 0.0
    %3728 = vmatpush1.msra.mxu0 0.0
    %3729 = vmatprep.subr.mxu0 0.0
    %3730 = vmatpush1.msra.mxu0 0.0
    %3731 = vmatprep.subr.mxu0 0.0
    %3732 = vmatpush1.msra.mxu0 0.0
    %3733 = vmatprep.subr.mxu0 0.0
    %3734 = vmatpush1.msra.mxu0 0.0
    %3735 = vmatprep.subr.mxu0 0.0
    %3736 = vmatpush1.msra.mxu0 0.0
    %3737 = vmatprep.subr.mxu0 0.0
    %3738 = vmatpush1.msra.mxu0 0.0
    %3739 = vmatprep.mubr.f32.mxu0 0.0
    %3740 = vmatmul.mubr.f32.gmra.mrb[0].mxu0 %v3671
    %v3741 = vpop.f32.mrb[0].mxu0
    %v3742 = vadd.f32 0.0, %v3741
    %v3743 = vpop.f32.mrb[0].mxu0
    %3744 = vdwg.mxu0
    %3745 = vrot.lane.b32.xlu0 %v1172, 48
    %v3746 = vpop.permute.xlu0 %3745
    %v3748 = vsel %vm2255, %v3580, 0
    %v3750 = vsel %vm2259, %v3746, 0
    %3752 = vmatprep.subr.mxu0 0.0
    %3753 = vmatpush1.msra.mxu0 %v3750
    %3754 = vmatprep.subr.mxu0 0.0
    %3755 = vmatpush1.msra.mxu0 0.0
    %3756 = vmatprep.subr.mxu0 0.0
    %3757 = vmatpush1.msra.mxu0 0.0
    %3758 = vmatprep.subr.mxu0 0.0
    %3759 = vmatpush1.msra.mxu0 0.0
    %3760 = vmatprep.subr.mxu0 0.0
    %3761 = vmatpush1.msra.mxu0 0.0
    %3762 = vmatprep.subr.mxu0 0.0
    %3763 = vmatpush1.msra.mxu0 0.0
    %3764 = vmatprep.subr.mxu0 0.0
    %3765 = vmatpush1.msra.mxu0 0.0
    %3766 = vmatprep.subr.mxu0 0.0
    %3767 = vmatpush1.msra.mxu0 0.0
    %3768 = vmatprep.subr.mxu0 0.0
    %3769 = vmatpush1.msra.mxu0 0.0
    %3770 = vmatprep.subr.mxu0 0.0
    %3771 = vmatpush1.msra.mxu0 0.0
    %3772 = vmatprep.subr.mxu0 0.0
    %3773 = vmatpush1.msra.mxu0 0.0
    %3774 = vmatprep.subr.mxu0 0.0
    %3775 = vmatpush1.msra.mxu0 0.0
    %3776 = vmatprep.subr.mxu0 0.0
    %3777 = vmatpush1.msra.mxu0 0.0
    %3778 = vmatprep.subr.mxu0 0.0
    %3779 = vmatpush1.msra.mxu0 0.0
    %3780 = vmatprep.subr.mxu0 0.0
    %3781 = vmatpush1.msra.mxu0 0.0
    %3782 = vmatprep.subr.mxu0 0.0
    %3783 = vmatpush1.msra.mxu0 0.0
    %3784 = vmatprep.subr.mxu0 0.0
    %3785 = vmatpush1.msra.mxu0 0.0
    %3786 = vmatprep.subr.mxu0 0.0
    %3787 = vmatpush1.msra.mxu0 0.0
    %3788 = vmatprep.subr.mxu0 0.0
    %3789 = vmatpush1.msra.mxu0 0.0
    %3790 = vmatprep.subr.mxu0 0.0
    %3791 = vmatpush1.msra.mxu0 0.0
    %3792 = vmatprep.subr.mxu0 0.0
    %3793 = vmatpush1.msra.mxu0 0.0
    %3794 = vmatprep.subr.mxu0 0.0
    %3795 = vmatpush1.msra.mxu0 0.0
    %3796 = vmatprep.subr.mxu0 0.0
    %3797 = vmatpush1.msra.mxu0 0.0
    %3798 = vmatprep.subr.mxu0 0.0
    %3799 = vmatpush1.msra.mxu0 0.0
    %3800 = vmatprep.subr.mxu0 0.0
    %3801 = vmatpush1.msra.mxu0 0.0
    %3802 = vmatprep.subr.mxu0 0.0
    %3803 = vmatpush1.msra.mxu0 0.0
    %3804 = vmatprep.subr.mxu0 0.0
    %3805 = vmatpush1.msra.mxu0 0.0
    %3806 = vmatprep.subr.mxu0 0.0
    %3807 = vmatpush1.msra.mxu0 0.0
    %3808 = vmatprep.subr.mxu0 0.0
    %3809 = vmatpush1.msra.mxu0 0.0
    %3810 = vmatprep.subr.mxu0 0.0
    %3811 = vmatpush1.msra.mxu0 0.0
    %3812 = vmatprep.subr.mxu0 0.0
    %3813 = vmatpush1.msra.mxu0 0.0
    %3814 = vmatprep.subr.mxu0 0.0
    %3815 = vmatpush1.msra.mxu0 0.0
    %3816 = vmatprep.mubr.f32.mxu0 0.0
    %3817 = vmatmul.mubr.f32.gmra.mrb[0].mxu0 %v3748
    %v3818 = vpop.f32.mrb[0].mxu0
    %v3819 = vadd.f32 0.0, %v3818
    %v3820 = vpop.f32.mrb[0].mxu0
    %3821 = vdwg.mxu0
    %3822 = vrot.lane.b32.xlu0 %v1245, 48
    %v3823 = vpop.permute.xlu0 %3822
    %v3825 = vsel %vm2255, %v3582, 0
    %v3827 = vsel %vm2259, %v3823, 0
    %3829 = vmatprep.subr.mxu0 0.0
    %3830 = vmatpush1.msra.mxu0 %v3827
    %3831 = vmatprep.subr.mxu0 0.0
    %3832 = vmatpush1.msra.mxu0 0.0
    %3833 = vmatprep.subr.mxu0 0.0
    %3834 = vmatpush1.msra.mxu0 0.0
    %3835 = vmatprep.subr.mxu0 0.0
    %3836 = vmatpush1.msra.mxu0 0.0
    %3837 = vmatprep.subr.mxu0 0.0
    %3838 = vmatpush1.msra.mxu0 0.0
    %3839 = vmatprep.subr.mxu0 0.0
    %3840 = vmatpush1.msra.mxu0 0.0
    %3841 = vmatprep.subr.mxu0 0.0
    %3842 = vmatpush1.msra.mxu0 0.0
    %3843 = vmatprep.subr.mxu0 0.0
    %3844 = vmatpush1.msra.mxu0 0.0
    %3845 = vmatprep.subr.mxu0 0.0
    %3846 = vmatpush1.msra.mxu0 0.0
    %3847 = vmatprep.subr.mxu0 0.0
    %3848 = vmatpush1.msra.mxu0 0.0
    %3849 = vmatprep.subr.mxu0 0.0
    %3850 = vmatpush1.msra.mxu0 0.0
    %3851 = vmatprep.subr.mxu0 0.0
    %3852 = vmatpush1.msra.mxu0 0.0
    %3853 = vmatprep.subr.mxu0 0.0
    %3854 = vmatpush1.msra.mxu0 0.0
    %3855 = vmatprep.subr.mxu0 0.0
    %3856 = vmatpush1.msra.mxu0 0.0
    %3857 = vmatprep.subr.mxu0 0.0
    %3858 = vmatpush1.msra.mxu0 0.0
    %3859 = vmatprep.subr.mxu0 0.0
    %3860 = vmatpush1.msra.mxu0 0.0
    %3861 = vmatprep.subr.mxu0 0.0
    %3862 = vmatpush1.msra.mxu0 0.0
    %3863 = vmatprep.subr.mxu0 0.0
    %3864 = vmatpush1.msra.mxu0 0.0
    %3865 = vmatprep.subr.mxu0 0.0
    %3866 = vmatpush1.msra.mxu0 0.0
    %3867 = vmatprep.subr.mxu0 0.0
    %3868 = vmatpush1.msra.mxu0 0.0
    %3869 = vmatprep.subr.mxu0 0.0
    %3870 = vmatpush1.msra.mxu0 0.0
    %3871 = vmatprep.subr.mxu0 0.0
    %3872 = vmatpush1.msra.mxu0 0.0
    %3873 = vmatprep.subr.mxu0 0.0
    %3874 = vmatpush1.msra.mxu0 0.0
    %3875 = vmatprep.subr.mxu0 0.0
    %3876 = vmatpush1.msra.mxu0 0.0
    %3877 = vmatprep.subr.mxu0 0.0
    %3878 = vmatpush1.msra.mxu0 0.0
    %3879 = vmatprep.subr.mxu0 0.0
    %3880 = vmatpush1.msra.mxu0 0.0
    %3881 = vmatprep.subr.mxu0 0.0
    %3882 = vmatpush1.msra.mxu0 0.0
    %3883 = vmatprep.subr.mxu0 0.0
    %3884 = vmatpush1.msra.mxu0 0.0
    %3885 = vmatprep.subr.mxu0 0.0
    %3886 = vmatpush1.msra.mxu0 0.0
    %3887 = vmatprep.subr.mxu0 0.0
    %3888 = vmatpush1.msra.mxu0 0.0
    %3889 = vmatprep.subr.mxu0 0.0
    %3890 = vmatpush1.msra.mxu0 0.0
    %3891 = vmatprep.subr.mxu0 0.0
    %3892 = vmatpush1.msra.mxu0 0.0
    %3893 = vmatprep.mubr.f32.mxu0 0.0
    %3894 = vmatmul.mubr.f32.gmra.mrb[0].mxu0 %v3825
    %v3895 = vpop.f32.mrb[0].mxu0
    %v3896 = vadd.f32 0.0, %v3895
    %v3897 = vpop.f32.mrb[0].mxu0
    %3898 = vdwg.mxu0
    %3899 = vrot.lane.b32.xlu0 %v1318, 48
    %v3900 = vpop.permute.xlu0 %3899
    %v3902 = vsel %vm2255, %v3584, 0
    %v3904 = vsel %vm2259, %v3900, 0
    %3906 = vmatprep.subr.mxu0 0.0
    %3907 = vmatpush1.msra.mxu0 %v3904
    %3908 = vmatprep.subr.mxu0 0.0
    %3909 = vmatpush1.msra.mxu0 0.0
    %3910 = vmatprep.subr.mxu0 0.0
    %3911 = vmatpush1.msra.mxu0 0.0
    %3912 = vmatprep.subr.mxu0 0.0
    %3913 = vmatpush1.msra.mxu0 0.0
    %3914 = vmatprep.subr.mxu0 0.0
    %3915 = vmatpush1.msra.mxu0 0.0
    %3916 = vmatprep.subr.mxu0 0.0
    %3917 = vmatpush1.msra.mxu0 0.0
    %3918 = vmatprep.subr.mxu0 0.0
    %3919 = vmatpush1.msra.mxu0 0.0
    %3920 = vmatprep.subr.mxu0 0.0
    %3921 = vmatpush1.msra.mxu0 0.0
    %3922 = vmatprep.subr.mxu0 0.0
    %3923 = vmatpush1.msra.mxu0 0.0
    %3924 = vmatprep.subr.mxu0 0.0
    %3925 = vmatpush1.msra.mxu0 0.0
    %3926 = vmatprep.subr.mxu0 0.0
    %3927 = vmatpush1.msra.mxu0 0.0
    %3928 = vmatprep.subr.mxu0 0.0
    %3929 = vmatpush1.msra.mxu0 0.0
    %3930 = vmatprep.subr.mxu0 0.0
    %3931 = vmatpush1.msra.mxu0 0.0
    %3932 = vmatprep.subr.mxu0 0.0
    %3933 = vmatpush1.msra.mxu0 0.0
    %3934 = vmatprep.subr.mxu0 0.0
    %3935 = vmatpush1.msra.mxu0 0.0
    %3936 = vmatprep.subr.mxu0 0.0
    %3937 = vmatpush1.msra.mxu0 0.0
    %3938 = vmatprep.subr.mxu0 0.0
    %3939 = vmatpush1.msra.mxu0 0.0
    %3940 = vmatprep.subr.mxu0 0.0
    %3941 = vmatpush1.msra.mxu0 0.0
    %3942 = vmatprep.subr.mxu0 0.0
    %3943 = vmatpush1.msra.mxu0 0.0
    %3944 = vmatprep.subr.mxu0 0.0
    %3945 = vmatpush1.msra.mxu0 0.0
    %3946 = vmatprep.subr.mxu0 0.0
    %3947 = vmatpush1.msra.mxu0 0.0
    %3948 = vmatprep.subr.mxu0 0.0
    %3949 = vmatpush1.msra.mxu0 0.0
    %3950 = vmatprep.subr.mxu0 0.0
    %3951 = vmatpush1.msra.mxu0 0.0
    %3952 = vmatprep.subr.mxu0 0.0
    %3953 = vmatpush1.msra.mxu0 0.0
    %3954 = vmatprep.subr.mxu0 0.0
    %3955 = vmatpush1.msra.mxu0 0.0
    %3956 = vmatprep.subr.mxu0 0.0
    %3957 = vmatpush1.msra.mxu0 0.0
    %3958 = vmatprep.subr.mxu0 0.0
    %3959 = vmatpush1.msra.mxu0 0.0
    %3960 = vmatprep.subr.mxu0 0.0
    %3961 = vmatpush1.msra.mxu0 0.0
    %3962 = vmatprep.subr.mxu0 0.0
    %3963 = vmatpush1.msra.mxu0 0.0
    %3964 = vmatprep.subr.mxu0 0.0
    %3965 = vmatpush1.msra.mxu0 0.0
    %3966 = vmatprep.subr.mxu0 0.0
    %3967 = vmatpush1.msra.mxu0 0.0
    %3968 = vmatprep.subr.mxu0 0.0
    %3969 = vmatpush1.msra.mxu0 0.0
    %3970 = vmatprep.mubr.f32.mxu0 0.0
    %3971 = vmatmul.mubr.f32.gmra.mrb[0].mxu0 %v3902
    %v3972 = vpop.f32.mrb[0].mxu0
    %v3973 = vadd.f32 0.0, %v3972
    %v3974 = vpop.f32.mrb[0].mxu0
    %3975 = vdwg.mxu0
    %3976 = vrot.lane.b32.xlu0 %v1391, 48
    %v3977 = vpop.permute.xlu0 %3976
    %v3979 = vsel %vm2255, %v3586, 0
    %v3981 = vsel %vm2259, %v3977, 0
    %3983 = vmatprep.subr.mxu0 0.0
    %3984 = vmatpush1.msra.mxu0 %v3981
    %3985 = vmatprep.subr.mxu0 0.0
    %3986 = vmatpush1.msra.mxu0 0.0
    %3987 = vmatprep.subr.mxu0 0.0
    %3988 = vmatpush1.msra.mxu0 0.0
    %3989 = vmatprep.subr.mxu0 0.0
    %3990 = vmatpush1.msra.mxu0 0.0
    %3991 = vmatprep.subr.mxu0 0.0
    %3992 = vmatpush1.msra.mxu0 0.0
    %3993 = vmatprep.subr.mxu0 0.0
    %3994 = vmatpush1.msra.mxu0 0.0
    %3995 = vmatprep.subr.mxu0 0.0
    %3996 = vmatpush1.msra.mxu0 0.0
    %3997 = vmatprep.subr.mxu0 0.0
    %3998 = vmatpush1.msra.mxu0 0.0
    %3999 = vmatprep.subr.mxu0 0.0
    %4000 = vmatpush1.msra.mxu0 0.0
    %4001 = vmatprep.subr.mxu0 0.0
    %4002 = vmatpush1.msra.mxu0 0.0
    %4003 = vmatprep.subr.mxu0 0.0
    %4004 = vmatpush1.msra.mxu0 0.0
    %4005 = vmatprep.subr.mxu0 0.0
    %4006 = vmatpush1.msra.mxu0 0.0
    %4007 = vmatprep.subr.mxu0 0.0
    %4008 = vmatpush1.msra.mxu0 0.0
    %4009 = vmatprep.subr.mxu0 0.0
    %4010 = vmatpush1.msra.mxu0 0.0
    %4011 = vmatprep.subr.mxu0 0.0
    %4012 = vmatpush1.msra.mxu0 0.0
    %4013 = vmatprep.subr.mxu0 0.0
    %4014 = vmatpush1.msra.mxu0 0.0
    %4015 = vmatprep.subr.mxu0 0.0
    %4016 = vmatpush1.msra.mxu0 0.0
    %4017 = vmatprep.subr.mxu0 0.0
    %4018 = vmatpush1.msra.mxu0 0.0
    %4019 = vmatprep.subr.mxu0 0.0
    %4020 = vmatpush1.msra.mxu0 0.0
    %4021 = vmatprep.subr.mxu0 0.0
    %4022 = vmatpush1.msra.mxu0 0.0
    %4023 = vmatprep.subr.mxu0 0.0
    %4024 = vmatpush1.msra.mxu0 0.0
    %4025 = vmatprep.subr.mxu0 0.0
    %4026 = vmatpush1.msra.mxu0 0.0
    %4027 = vmatprep.subr.mxu0 0.0
    %4028 = vmatpush1.msra.mxu0 0.0
    %4029 = vmatprep.subr.mxu0 0.0
    %4030 = vmatpush1.msra.mxu0 0.0
    %4031 = vmatprep.subr.mxu0 0.0
    %4032 = vmatpush1.msra.mxu0 0.0
    %4033 = vmatprep.subr.mxu0 0.0
    %4034 = vmatpush1.msra.mxu0 0.0
    %4035 = vmatprep.subr.mxu0 0.0
    %4036 = vmatpush1.msra.mxu0 0.0
    %4037 = vmatprep.subr.mxu0 0.0
    %4038 = vmatpush1.msra.mxu0 0.0
    %4039 = vmatprep.subr.mxu0 0.0
    %4040 = vmatpush1.msra.mxu0 0.0
    %4041 = vmatprep.subr.mxu0 0.0
    %4042 = vmatpush1.msra.mxu0 0.0
    %4043 = vmatprep.subr.mxu0 0.0
    %4044 = vmatpush1.msra.mxu0 0.0
    %4045 = vmatprep.subr.mxu0 0.0
    %4046 = vmatpush1.msra.mxu0 0.0
    %4047 = vmatprep.mubr.f32.mxu0 0.0
    %4048 = vmatmul.mubr.f32.gmra.mrb[0].mxu0 %v3979
    %v4049 = vpop.f32.mrb[0].mxu0
    %v4050 = vadd.f32 0.0, %v4049
    %v4051 = vpop.f32.mrb[0].mxu0
    %4052 = vdwg.mxu0
    %4053 = vrot.lane.b32.xlu0 %v1464, 48
    %v4054 = vpop.permute.xlu0 %4053
    %v4056 = vsel %vm2255, %v3588, 0
    %v4058 = vsel %vm2259, %v4054, 0
    %4060 = vmatprep.subr.mxu0 0.0
    %4061 = vmatpush1.msra.mxu0 %v4058
    %4062 = vmatprep.subr.mxu0 0.0
    %4063 = vmatpush1.msra.mxu0 0.0
    %4064 = vmatprep.subr.mxu0 0.0
    %4065 = vmatpush1.msra.mxu0 0.0
    %4066 = vmatprep.subr.mxu0 0.0
    %4067 = vmatpush1.msra.mxu0 0.0
    %4068 = vmatprep.subr.mxu0 0.0
    %4069 = vmatpush1.msra.mxu0 0.0
    %4070 = vmatprep.subr.mxu0 0.0
    %4071 = vmatpush1.msra.mxu0 0.0
    %4072 = vmatprep.subr.mxu0 0.0
    %4073 = vmatpush1.msra.mxu0 0.0
    %4074 = vmatprep.subr.mxu0 0.0
    %4075 = vmatpush1.msra.mxu0 0.0
    %4076 = vmatprep.subr.mxu0 0.0
    %4077 = vmatpush1.msra.mxu0 0.0
    %4078 = vmatprep.subr.mxu0 0.0
    %4079 = vmatpush1.msra.mxu0 0.0
    %4080 = vmatprep.subr.mxu0 0.0
    %4081 = vmatpush1.msra.mxu0 0.0
    %4082 = vmatprep.subr.mxu0 0.0
    %4083 = vmatpush1.msra.mxu0 0.0
    %4084 = vmatprep.subr.mxu0 0.0
    %4085 = vmatpush1.msra.mxu0 0.0
    %4086 = vmatprep.subr.mxu0 0.0
    %4087 = vmatpush1.msra.mxu0 0.0
    %4088 = vmatprep.subr.mxu0 0.0
    %4089 = vmatpush1.msra.mxu0 0.0
    %4090 = vmatprep.subr.mxu0 0.0
    %4091 = vmatpush1.msra.mxu0 0.0
    %4092 = vmatprep.subr.mxu0 0.0
    %4093 = vmatpush1.msra.mxu0 0.0
    %4094 = vmatprep.subr.mxu0 0.0
    %4095 = vmatpush1.msra.mxu0 0.0
    %4096 = vmatprep.subr.mxu0 0.0
    %4097 = vmatpush1.msra.mxu0 0.0
    %4098 = vmatprep.subr.mxu0 0.0
    %4099 = vmatpush1.msra.mxu0 0.0
    %4100 = vmatprep.subr.mxu0 0.0
    %4101 = vmatpush1.msra.mxu0 0.0
    %4102 = vmatprep.subr.mxu0 0.0
    %4103 = vmatpush1.msra.mxu0 0.0
    %4104 = vmatprep.subr.mxu0 0.0
    %4105 = vmatpush1.msra.mxu0 0.0
    %4106 = vmatprep.subr.mxu0 0.0
    %4107 = vmatpush1.msra.mxu0 0.0
    %4108 = vmatprep.subr.mxu0 0.0
    %4109 = vmatpush1.msra.mxu0 0.0
    %4110 = vmatprep.subr.mxu0 0.0
    %4111 = vmatpush1.msra.mxu0 0.0
    %4112 = vmatprep.subr.mxu0 0.0
    %4113 = vmatpush1.msra.mxu0 0.0
    %4114 = vmatprep.subr.mxu0 0.0
    %4115 = vmatpush1.msra.mxu0 0.0
    %4116 = vmatprep.subr.mxu0 0.0
    %4117 = vmatpush1.msra.mxu0 0.0
    %4118 = vmatprep.subr.mxu0 0.0
    %4119 = vmatpush1.msra.mxu0 0.0
    %4120 = vmatprep.subr.mxu0 0.0
    %4121 = vmatpush1.msra.mxu0 0.0
    %4122 = vmatprep.subr.mxu0 0.0
    %4123 = vmatpush1.msra.mxu0 0.0
    %4124 = vmatprep.mubr.f32.mxu0 0.0
    %4125 = vmatmul.mubr.f32.gmra.mrb[0].mxu0 %v4056
    %v4126 = vpop.f32.mrb[0].mxu0
    %v4127 = vadd.f32 0.0, %v4126
    %v4128 = vpop.f32.mrb[0].mxu0
    %4129 = vdwg.mxu0
    %4130 = vrot.lane.b32.xlu0 %v1537, 48
    %v4131 = vpop.permute.xlu0 %4130
    %v4133 = vsel %vm2255, %v3590, 0
    %v4135 = vsel %vm2259, %v4131, 0
    %4137 = vmatprep.subr.mxu0 0.0
    %4138 = vmatpush1.msra.mxu0 %v4135
    %4139 = vmatprep.subr.mxu0 0.0
    %4140 = vmatpush1.msra.mxu0 0.0
    %4141 = vmatprep.subr.mxu0 0.0
    %4142 = vmatpush1.msra.mxu0 0.0
    %4143 = vmatprep.subr.mxu0 0.0
    %4144 = vmatpush1.msra.mxu0 0.0
    %4145 = vmatprep.subr.mxu0 0.0
    %4146 = vmatpush1.msra.mxu0 0.0
    %4147 = vmatprep.subr.mxu0 0.0
    %4148 = vmatpush1.msra.mxu0 0.0
    %4149 = vmatprep.subr.mxu0 0.0
    %4150 = vmatpush1.msra.mxu0 0.0
    %4151 = vmatprep.subr.mxu0 0.0
    %4152 = vmatpush1.msra.mxu0 0.0
    %4153 = vmatprep.subr.mxu0 0.0
    %4154 = vmatpush1.msra.mxu0 0.0
    %4155 = vmatprep.subr.mxu0 0.0
    %4156 = vmatpush1.msra.mxu0 0.0
    %4157 = vmatprep.subr.mxu0 0.0
    %4158 = vmatpush1.msra.mxu0 0.0
    %4159 = vmatprep.subr.mxu0 0.0
    %4160 = vmatpush1.msra.mxu0 0.0
    %4161 = vmatprep.subr.mxu0 0.0
    %4162 = vmatpush1.msra.mxu0 0.0
    %4163 = vmatprep.subr.mxu0 0.0
    %4164 = vmatpush1.msra.mxu0 0.0
    %4165 = vmatprep.subr.mxu0 0.0
    %4166 = vmatpush1.msra.mxu0 0.0
    %4167 = vmatprep.subr.mxu0 0.0
    %4168 = vmatpush1.msra.mxu0 0.0
    %4169 = vmatprep.subr.mxu0 0.0
    %4170 = vmatpush1.msra.mxu0 0.0
    %4171 = vmatprep.subr.mxu0 0.0
    %4172 = vmatpush1.msra.mxu0 0.0
    %4173 = vmatprep.subr.mxu0 0.0
    %4174 = vmatpush1.msra.mxu0 0.0
    %4175 = vmatprep.subr.mxu0 0.0
    %4176 = vmatpush1.msra.mxu0 0.0
    %4177 = vmatprep.subr.mxu0 0.0
    %4178 = vmatpush1.msra.mxu0 0.0
    %4179 = vmatprep.subr.mxu0 0.0
    %4180 = vmatpush1.msra.mxu0 0.0
    %4181 = vmatprep.subr.mxu0 0.0
    %4182 = vmatpush1.msra.mxu0 0.0
    %4183 = vmatprep.subr.mxu0 0.0
    %4184 = vmatpush1.msra.mxu0 0.0
    %4185 = vmatprep.subr.mxu0 0.0
    %4186 = vmatpush1.msra.mxu0 0.0
    %4187 = vmatprep.subr.mxu0 0.0
    %4188 = vmatpush1.msra.mxu0 0.0
    %4189 = vmatprep.subr.mxu0 0.0
    %4190 = vmatpush1.msra.mxu0 0.0
    %4191 = vmatprep.subr.mxu0 0.0
    %4192 = vmatpush1.msra.mxu0 0.0
    %4193 = vmatprep.subr.mxu0 0.0
    %4194 = vmatpush1.msra.mxu0 0.0
    %4195 = vmatprep.subr.mxu0 0.0
    %4196 = vmatpush1.msra.mxu0 0.0
    %4197 = vmatprep.subr.mxu0 0.0
    %4198 = vmatpush1.msra.mxu0 0.0
    %4199 = vmatprep.subr.mxu0 0.0
    %4200 = vmatpush1.msra.mxu0 0.0
    %4201 = vmatprep.mubr.f32.mxu0 0.0
    %4202 = vmatmul.mubr.f32.gmra.mrb[0].mxu0 %v4133
    %v4203 = vpop.f32.mrb[0].mxu0
    %v4204 = vadd.f32 0.0, %v4203
    %v4205 = vpop.f32.mrb[0].mxu0
    %4206 = vdwg.mxu0
    %4215 = vrot.lane.b32.xlu0 %v3665, 16
    %v4216 = vpop.permute.xlu0 %4215
    %4217 = vrot.lane.b32.xlu0 %v3742, 16
    %v4218 = vpop.permute.xlu0 %4217
    %4219 = vrot.lane.b32.xlu0 %v3819, 16
    %v4220 = vpop.permute.xlu0 %4219
    %4221 = vrot.lane.b32.xlu0 %v3896, 16
    %v4222 = vpop.permute.xlu0 %4221
    %4223 = vrot.lane.b32.xlu0 %v3973, 16
    %v4224 = vpop.permute.xlu0 %4223
    %4225 = vrot.lane.b32.xlu0 %v4050, 16
    %v4226 = vpop.permute.xlu0 %4225
    %4227 = vrot.lane.b32.xlu0 %v4127, 16
    %v4228 = vpop.permute.xlu0 %4227
    %4229 = vrot.lane.b32.xlu0 %v4204, 16
    %v4230 = vpop.permute.xlu0 %4229
    %v4239 = vsel %vm49, %v2329, %v4216
    %v4240 = vsel %vm49, %v2406, %v4218
    %v4241 = vsel %vm49, %v2483, %v4220
    %v4242 = vsel %vm49, %v2560, %v4222
    %v4243 = vsel %vm49, %v2637, %v4224
    %v4244 = vsel %vm49, %v2714, %v4226
    %v4245 = vsel %vm49, %v2791, %v4228
    %v4246 = vsel %vm49, %v2868, %v4230
    %v4247 = vld [vmem:[%s7] sm:$0x1]
    %v4249 = vlaneseq
    %v4250 = vshrl.u32 %v4249, 7
    %v4251 = vsub.s32 0, %v4250
    %v4252 = vrot.slane %v4247, %v4251
    %v4255 = vsel %vm955, %v4239, 0
    %4257 = vmatprep.subr.mxu0 0.0
    %4258 = vmatpush1.msra.mxu0 %v309
    %4259 = vmatprep.subr.mxu0 0.0
    %4260 = vmatpush1.msra.mxu0 %v310
    %4261 = vmatprep.subr.mxu0 0.0
    %4262 = vmatpush1.msra.mxu0 %v311
    %4263 = vmatprep.subr.mxu0 0.0
    %4264 = vmatpush1.msra.mxu0 %v312
    %4265 = vmatprep.subr.mxu0 0.0
    %4266 = vmatpush1.msra.mxu0 0.0
    %4267 = vmatprep.subr.mxu0 0.0
    %4268 = vmatpush1.msra.mxu0 0.0
    %4269 = vmatprep.subr.mxu0 0.0
    %4270 = vmatpush1.msra.mxu0 0.0
    %4271 = vmatprep.subr.mxu0 0.0
    %4272 = vmatpush1.msra.mxu0 0.0
    %4273 = vmatprep.subr.mxu0 0.0
    %4274 = vmatpush1.msra.mxu0 0.0
    %4275 = vmatprep.subr.mxu0 0.0
    %4276 = vmatpush1.msra.mxu0 0.0
    %4277 = vmatprep.subr.mxu0 0.0
    %4278 = vmatpush1.msra.mxu0 0.0
    %4279 = vmatprep.subr.mxu0 0.0
    %4280 = vmatpush1.msra.mxu0 0.0
    %4281 = vmatprep.subr.mxu0 0.0
    %4282 = vmatpush1.msra.mxu0 0.0
    %4283 = vmatprep.subr.mxu0 0.0
    %4284 = vmatpush1.msra.mxu0 0.0
    %4285 = vmatprep.subr.mxu0 0.0
    %4286 = vmatpush1.msra.mxu0 0.0
    %4287 = vmatprep.subr.mxu0 0.0
    %4288 = vmatpush1.msra.mxu0 0.0
    %4289 = vmatprep.subr.mxu0 0.0
    %4290 = vmatpush1.msra.mxu0 0.0
    %4291 = vmatprep.subr.mxu0 0.0
    %4292 = vmatpush1.msra.mxu0 0.0
    %4293 = vmatprep.subr.mxu0 0.0
    %4294 = vmatpush1.msra.mxu0 0.0
    %4295 = vmatprep.subr.mxu0 0.0
    %4296 = vmatpush1.msra.mxu0 0.0
    %4297 = vmatprep.subr.mxu0 0.0
    %4298 = vmatpush1.msra.mxu0 0.0
    %4299 = vmatprep.subr.mxu0 0.0
    %4300 = vmatpush1.msra.mxu0 0.0
    %4301 = vmatprep.subr.mxu0 0.0
    %4302 = vmatpush1.msra.mxu0 0.0
    %4303 = vmatprep.subr.mxu0 0.0
    %4304 = vmatpush1.msra.mxu0 0.0
    %4305 = vmatprep.subr.mxu0 0.0
    %4306 = vmatpush1.msra.mxu0 0.0
    %4307 = vmatprep.subr.mxu0 0.0
    %4308 = vmatpush1.msra.mxu0 0.0
    %4309 = vmatprep.subr.mxu0 0.0
    %4310 = vmatpush1.msra.mxu0 0.0
    %4311 = vmatprep.subr.mxu0 0.0
    %4312 = vmatpush1.msra.mxu0 0.0
    %4313 = vmatprep.subr.mxu0 0.0
    %4314 = vmatpush1.msra.mxu0 0.0
    %4315 = vmatprep.subr.mxu0 0.0
    %4316 = vmatpush1.msra.mxu0 0.0
    %4317 = vmatprep.subr.mxu0 0.0
    %4318 = vmatpush1.msra.mxu0 0.0
    %4319 = vmatprep.subr.mxu0 0.0
    %4320 = vmatpush1.msra.mxu0 0.0
    %4321 = vmatprep.mubr.f32.mxu0 0.0
    %4322 = vmatmul.mubr.f32.gmra.mrb[0].mxu0 %v4255
    %v4323 = vpop.f32.mrb[0].mxu0
    %v4324 = vadd.f32 %v4252, %v4323
    %v4325 = vpop.f32.mrb[0].mxu0
    %4326 = vdwg.mxu0
    %v4328 = vsel %vm955, %v4240, 0
    %4330 = vmatprep.subr.mxu0 0.0
    %4331 = vmatpush1.msra.mxu0 %v309
    %4332 = vmatprep.subr.mxu0 0.0
    %4333 = vmatpush1.msra.mxu0 %v310
    %4334 = vmatprep.subr.mxu0 0.0
    %4335 = vmatpush1.msra.mxu0 %v311
    %4336 = vmatprep.subr.mxu0 0.0
    %4337 = vmatpush1.msra.mxu0 %v312
    %4338 = vmatprep.subr.mxu0 0.0
    %4339 = vmatpush1.msra.mxu0 0.0
    %4340 = vmatprep.subr.mxu0 0.0
    %4341 = vmatpush1.msra.mxu0 0.0
    %4342 = vmatprep.subr.mxu0 0.0
    %4343 = vmatpush1.msra.mxu0 0.0
    %4344 = vmatprep.subr.mxu0 0.0
    %4345 = vmatpush1.msra.mxu0 0.0
    %4346 = vmatprep.subr.mxu0 0.0
    %4347 = vmatpush1.msra.mxu0 0.0
    %4348 = vmatprep.subr.mxu0 0.0
    %4349 = vmatpush1.msra.mxu0 0.0
    %4350 = vmatprep.subr.mxu0 0.0
    %4351 = vmatpush1.msra.mxu0 0.0
    %4352 = vmatprep.subr.mxu0 0.0
    %4353 = vmatpush1.msra.mxu0 0.0
    %4354 = vmatprep.subr.mxu0 0.0
    %4355 = vmatpush1.msra.mxu0 0.0
    %4356 = vmatprep.subr.mxu0 0.0
    %4357 = vmatpush1.msra.mxu0 0.0
    %4358 = vmatprep.subr.mxu0 0.0
    %4359 = vmatpush1.msra.mxu0 0.0
    %4360 = vmatprep.subr.mxu0 0.0
    %4361 = vmatpush1.msra.mxu0 0.0
    %4362 = vmatprep.subr.mxu0 0.0
    %4363 = vmatpush1.msra.mxu0 0.0
    %4364 = vmatprep.subr.mxu0 0.0
    %4365 = vmatpush1.msra.mxu0 0.0
    %4366 = vmatprep.subr.mxu0 0.0
    %4367 = vmatpush1.msra.mxu0 0.0
    %4368 = vmatprep.subr.mxu0 0.0
    %4369 = vmatpush1.msra.mxu0 0.0
    %4370 = vmatprep.subr.mxu0 0.0
    %4371 = vmatpush1.msra.mxu0 0.0
    %4372 = vmatprep.subr.mxu0 0.0
    %4373 = vmatpush1.msra.mxu0 0.0
    %4374 = vmatprep.subr.mxu0 0.0
    %4375 = vmatpush1.msra.mxu0 0.0
    %4376 = vmatprep.subr.mxu0 0.0
    %4377 = vmatpush1.msra.mxu0 0.0
    %4378 = vmatprep.subr.mxu0 0.0
    %4379 = vmatpush1.msra.mxu0 0.0
    %4380 = vmatprep.subr.mxu0 0.0
    %4381 = vmatpush1.msra.mxu0 0.0
    %4382 = vmatprep.subr.mxu0 0.0
    %4383 = vmatpush1.msra.mxu0 0.0
    %4384 = vmatprep.subr.mxu0 0.0
    %4385 = vmatpush1.msra.mxu0 0.0
    %4386 = vmatprep.subr.mxu0 0.0
    %4387 = vmatpush1.msra.mxu0 0.0
    %4388 = vmatprep.subr.mxu0 0.0
    %4389 = vmatpush1.msra.mxu0 0.0
    %4390 = vmatprep.subr.mxu0 0.0
    %4391 = vmatpush1.msra.mxu0 0.0
    %4392 = vmatprep.subr.mxu0 0.0
    %4393 = vmatpush1.msra.mxu0 0.0
    %4394 = vmatprep.mubr.f32.mxu0 0.0
    %4395 = vmatmul.mubr.f32.gmra.mrb[0].mxu0 %v4328
    %v4396 = vpop.f32.mrb[0].mxu0
    %v4397 = vadd.f32 %v4252, %v4396
    %v4398 = vpop.f32.mrb[0].mxu0
    %4399 = vdwg.mxu0
    %v4401 = vsel %vm955, %v4241, 0
    %4403 = vmatprep.subr.mxu0 0.0
    %4404 = vmatpush1.msra.mxu0 %v309
    %4405 = vmatprep.subr.mxu0 0.0
    %4406 = vmatpush1.msra.mxu0 %v310
    %4407 = vmatprep.subr.mxu0 0.0
    %4408 = vmatpush1.msra.mxu0 %v311
    %4409 = vmatprep.subr.mxu0 0.0
    %4410 = vmatpush1.msra.mxu0 %v312
    %4411 = vmatprep.subr.mxu0 0.0
    %4412 = vmatpush1.msra.mxu0 0.0
    %4413 = vmatprep.subr.mxu0 0.0
    %4414 = vmatpush1.msra.mxu0 0.0
    %4415 = vmatprep.subr.mxu0 0.0
    %4416 = vmatpush1.msra.mxu0 0.0
    %4417 = vmatprep.subr.mxu0 0.0
    %4418 = vmatpush1.msra.mxu0 0.0
    %4419 = vmatprep.subr.mxu0 0.0
    %4420 = vmatpush1.msra.mxu0 0.0
    %4421 = vmatprep.subr.mxu0 0.0
    %4422 = vmatpush1.msra.mxu0 0.0
    %4423 = vmatprep.subr.mxu0 0.0
    %4424 = vmatpush1.msra.mxu0 0.0
    %4425 = vmatprep.subr.mxu0 0.0
    %4426 = vmatpush1.msra.mxu0 0.0
    %4427 = vmatprep.subr.mxu0 0.0
    %4428 = vmatpush1.msra.mxu0 0.0
    %4429 = vmatprep.subr.mxu0 0.0
    %4430 = vmatpush1.msra.mxu0 0.0
    %4431 = vmatprep.subr.mxu0 0.0
    %4432 = vmatpush1.msra.mxu0 0.0
    %4433 = vmatprep.subr.mxu0 0.0
    %4434 = vmatpush1.msra.mxu0 0.0
    %4435 = vmatprep.subr.mxu0 0.0
    %4436 = vmatpush1.msra.mxu0 0.0
    %4437 = vmatprep.subr.mxu0 0.0
    %4438 = vmatpush1.msra.mxu0 0.0
    %4439 = vmatprep.subr.mxu0 0.0
    %4440 = vmatpush1.msra.mxu0 0.0
    %4441 = vmatprep.subr.mxu0 0.0
    %4442 = vmatpush1.msra.mxu0 0.0
    %4443 = vmatprep.subr.mxu0 0.0
    %4444 = vmatpush1.msra.mxu0 0.0
    %4445 = vmatprep.subr.mxu0 0.0
    %4446 = vmatpush1.msra.mxu0 0.0
    %4447 = vmatprep.subr.mxu0 0.0
    %4448 = vmatpush1.msra.mxu0 0.0
    %4449 = vmatprep.subr.mxu0 0.0
    %4450 = vmatpush1.msra.mxu0 0.0
    %4451 = vmatprep.subr.mxu0 0.0
    %4452 = vmatpush1.msra.mxu0 0.0
    %4453 = vmatprep.subr.mxu0 0.0
    %4454 = vmatpush1.msra.mxu0 0.0
    %4455 = vmatprep.subr.mxu0 0.0
    %4456 = vmatpush1.msra.mxu0 0.0
    %4457 = vmatprep.subr.mxu0 0.0
    %4458 = vmatpush1.msra.mxu0 0.0
    %4459 = vmatprep.subr.mxu0 0.0
    %4460 = vmatpush1.msra.mxu0 0.0
    %4461 = vmatprep.subr.mxu0 0.0
    %4462 = vmatpush1.msra.mxu0 0.0
    %4463 = vmatprep.subr.mxu0 0.0
    %4464 = vmatpush1.msra.mxu0 0.0
    %4465 = vmatprep.subr.mxu0 0.0
    %4466 = vmatpush1.msra.mxu0 0.0
    %4467 = vmatprep.mubr.f32.mxu0 0.0
    %4468 = vmatmul.mubr.f32.gmra.mrb[0].mxu0 %v4401
    %v4469 = vpop.f32.mrb[0].mxu0
    %v4470 = vadd.f32 %v4252, %v4469
    %v4471 = vpop.f32.mrb[0].mxu0
    %4472 = vdwg.mxu0
    %v4474 = vsel %vm955, %v4242, 0
    %4476 = vmatprep.subr.mxu0 0.0
    %4477 = vmatpush1.msra.mxu0 %v309
    %4478 = vmatprep.subr.mxu0 0.0
    %4479 = vmatpush1.msra.mxu0 %v310
    %4480 = vmatprep.subr.mxu0 0.0
    %4481 = vmatpush1.msra.mxu0 %v311
    %4482 = vmatprep.subr.mxu0 0.0
    %4483 = vmatpush1.msra.mxu0 %v312
    %4484 = vmatprep.subr.mxu0 0.0
    %4485 = vmatpush1.msra.mxu0 0.0
    %4486 = vmatprep.subr.mxu0 0.0
    %4487 = vmatpush1.msra.mxu0 0.0
    %4488 = vmatprep.subr.mxu0 0.0
    %4489 = vmatpush1.msra.mxu0 0.0
    %4490 = vmatprep.subr.mxu0 0.0
    %4491 = vmatpush1.msra.mxu0 0.0
    %4492 = vmatprep.subr.mxu0 0.0
    %4493 = vmatpush1.msra.mxu0 0.0
    %4494 = vmatprep.subr.mxu0 0.0
    %4495 = vmatpush1.msra.mxu0 0.0
    %4496 = vmatprep.subr.mxu0 0.0
    %4497 = vmatpush1.msra.mxu0 0.0
    %4498 = vmatprep.subr.mxu0 0.0
    %4499 = vmatpush1.msra.mxu0 0.0
    %4500 = vmatprep.subr.mxu0 0.0
    %4501 = vmatpush1.msra.mxu0 0.0
    %4502 = vmatprep.subr.mxu0 0.0
    %4503 = vmatpush1.msra.mxu0 0.0
    %4504 = vmatprep.subr.mxu0 0.0
    %4505 = vmatpush1.msra.mxu0 0.0
    %4506 = vmatprep.subr.mxu0 0.0
    %4507 = vmatpush1.msra.mxu0 0.0
    %4508 = vmatprep.subr.mxu0 0.0
    %4509 = vmatpush1.msra.mxu0 0.0
    %4510 = vmatprep.subr.mxu0 0.0
    %4511 = vmatpush1.msra.mxu0 0.0
    %4512 = vmatprep.subr.mxu0 0.0
    %4513 = vmatpush1.msra.mxu0 0.0
    %4514 = vmatprep.subr.mxu0 0.0
    %4515 = vmatpush1.msra.mxu0 0.0
    %4516 = vmatprep.subr.mxu0 0.0
    %4517 = vmatpush1.msra.mxu0 0.0
    %4518 = vmatprep.subr.mxu0 0.0
    %4519 = vmatpush1.msra.mxu0 0.0
    %4520 = vmatprep.subr.mxu0 0.0
    %4521 = vmatpush1.msra.mxu0 0.0
    %4522 = vmatprep.subr.mxu0 0.0
    %4523 = vmatpush1.msra.mxu0 0.0
    %4524 = vmatprep.subr.mxu0 0.0
    %4525 = vmatpush1.msra.mxu0 0.0
    %4526 = vmatprep.subr.mxu0 0.0
    %4527 = vmatpush1.msra.mxu0 0.0
    %4528 = vmatprep.subr.mxu0 0.0
    %4529 = vmatpush1.msra.mxu0 0.0
    %4530 = vmatprep.subr.mxu0 0.0
    %4531 = vmatpush1.msra.mxu0 0.0
    %4532 = vmatprep.subr.mxu0 0.0
    %4533 = vmatpush1.msra.mxu0 0.0
    %4534 = vmatprep.subr.mxu0 0.0
    %4535 = vmatpush1.msra.mxu0 0.0
    %4536 = vmatprep.subr.mxu0 0.0
    %4537 = vmatpush1.msra.mxu0 0.0
    %4538 = vmatprep.subr.mxu0 0.0
    %4539 = vmatpush1.msra.mxu0 0.0
    %4540 = vmatprep.mubr.f32.mxu0 0.0
    %4541 = vmatmul.mubr.f32.gmra.mrb[0].mxu0 %v4474
    %v4542 = vpop.f32.mrb[0].mxu0
    %v4543 = vadd.f32 %v4252, %v4542
    %v4544 = vpop.f32.mrb[0].mxu0
    %4545 = vdwg.mxu0
    %v4547 = vsel %vm955, %v4243, 0
    %4549 = vmatprep.subr.mxu0 0.0
    %4550 = vmatpush1.msra.mxu0 %v309
    %4551 = vmatprep.subr.mxu0 0.0
    %4552 = vmatpush1.msra.mxu0 %v310
    %4553 = vmatprep.subr.mxu0 0.0
    %4554 = vmatpush1.msra.mxu0 %v311
    %4555 = vmatprep.subr.mxu0 0.0
    %4556 = vmatpush1.msra.mxu0 %v312
    %4557 = vmatprep.subr.mxu0 0.0
    %4558 = vmatpush1.msra.mxu0 0.0
    %4559 = vmatprep.subr.mxu0 0.0
    %4560 = vmatpush1.msra.mxu0 0.0
    %4561 = vmatprep.subr.mxu0 0.0
    %4562 = vmatpush1.msra.mxu0 0.0
    %4563 = vmatprep.subr.mxu0 0.0
    %4564 = vmatpush1.msra.mxu0 0.0
    %4565 = vmatprep.subr.mxu0 0.0
    %4566 = vmatpush1.msra.mxu0 0.0
    %4567 = vmatprep.subr.mxu0 0.0
    %4568 = vmatpush1.msra.mxu0 0.0
    %4569 = vmatprep.subr.mxu0 0.0
    %4570 = vmatpush1.msra.mxu0 0.0
    %4571 = vmatprep.subr.mxu0 0.0
    %4572 = vmatpush1.msra.mxu0 0.0
    %4573 = vmatprep.subr.mxu0 0.0
    %4574 = vmatpush1.msra.mxu0 0.0
    %4575 = vmatprep.subr.mxu0 0.0
    %4576 = vmatpush1.msra.mxu0 0.0
    %4577 = vmatprep.subr.mxu0 0.0
    %4578 = vmatpush1.msra.mxu0 0.0
    %4579 = vmatprep.subr.mxu0 0.0
    %4580 = vmatpush1.msra.mxu0 0.0
    %4581 = vmatprep.subr.mxu0 0.0
    %4582 = vmatpush1.msra.mxu0 0.0
    %4583 = vmatprep.subr.mxu0 0.0
    %4584 = vmatpush1.msra.mxu0 0.0
    %4585 = vmatprep.subr.mxu0 0.0
    %4586 = vmatpush1.msra.mxu0 0.0
    %4587 = vmatprep.subr.mxu0 0.0
    %4588 = vmatpush1.msra.mxu0 0.0
    %4589 = vmatprep.subr.mxu0 0.0
    %4590 = vmatpush1.msra.mxu0 0.0
    %4591 = vmatprep.subr.mxu0 0.0
    %4592 = vmatpush1.msra.mxu0 0.0
    %4593 = vmatprep.subr.mxu0 0.0
    %4594 = vmatpush1.msra.mxu0 0.0
    %4595 = vmatprep.subr.mxu0 0.0
    %4596 = vmatpush1.msra.mxu0 0.0
    %4597 = vmatprep.subr.mxu0 0.0
    %4598 = vmatpush1.msra.mxu0 0.0
    %4599 = vmatprep.subr.mxu0 0.0
    %4600 = vmatpush1.msra.mxu0 0.0
    %4601 = vmatprep.subr.mxu0 0.0
    %4602 = vmatpush1.msra.mxu0 0.0
    %4603 = vmatprep.subr.mxu0 0.0
    %4604 = vmatpush1.msra.mxu0 0.0
    %4605 = vmatprep.subr.mxu0 0.0
    %4606 = vmatpush1.msra.mxu0 0.0
    %4607 = vmatprep.subr.mxu0 0.0
    %4608 = vmatpush1.msra.mxu0 0.0
    %4609 = vmatprep.subr.mxu0 0.0
    %4610 = vmatpush1.msra.mxu0 0.0
    %4611 = vmatprep.subr.mxu0 0.0
    %4612 = vmatpush1.msra.mxu0 0.0
    %4613 = vmatprep.mubr.f32.mxu0 0.0
    %4614 = vmatmul.mubr.f32.gmra.mrb[0].mxu0 %v4547
    %v4615 = vpop.f32.mrb[0].mxu0
    %v4616 = vadd.f32 %v4252, %v4615
    %v4617 = vpop.f32.mrb[0].mxu0
    %4618 = vdwg.mxu0
    %v4620 = vsel %vm955, %v4244, 0
    %4622 = vmatprep.subr.mxu0 0.0
    %4623 = vmatpush1.msra.mxu0 %v309
    %4624 = vmatprep.subr.mxu0 0.0
    %4625 = vmatpush1.msra.mxu0 %v310
    %4626 = vmatprep.subr.mxu0 0.0
    %4627 = vmatpush1.msra.mxu0 %v311
    %4628 = vmatprep.subr.mxu0 0.0
    %4629 = vmatpush1.msra.mxu0 %v312
    %4630 = vmatprep.subr.mxu0 0.0
    %4631 = vmatpush1.msra.mxu0 0.0
    %4632 = vmatprep.subr.mxu0 0.0
    %4633 = vmatpush1.msra.mxu0 0.0
    %4634 = vmatprep.subr.mxu0 0.0
    %4635 = vmatpush1.msra.mxu0 0.0
    %4636 = vmatprep.subr.mxu0 0.0
    %4637 = vmatpush1.msra.mxu0 0.0
    %4638 = vmatprep.subr.mxu0 0.0
    %4639 = vmatpush1.msra.mxu0 0.0
    %4640 = vmatprep.subr.mxu0 0.0
    %4641 = vmatpush1.msra.mxu0 0.0
    %4642 = vmatprep.subr.mxu0 0.0
    %4643 = vmatpush1.msra.mxu0 0.0
    %4644 = vmatprep.subr.mxu0 0.0
    %4645 = vmatpush1.msra.mxu0 0.0
    %4646 = vmatprep.subr.mxu0 0.0
    %4647 = vmatpush1.msra.mxu0 0.0
    %4648 = vmatprep.subr.mxu0 0.0
    %4649 = vmatpush1.msra.mxu0 0.0
    %4650 = vmatprep.subr.mxu0 0.0
    %4651 = vmatpush1.msra.mxu0 0.0
    %4652 = vmatprep.subr.mxu0 0.0
    %4653 = vmatpush1.msra.mxu0 0.0
    %4654 = vmatprep.subr.mxu0 0.0
    %4655 = vmatpush1.msra.mxu0 0.0
    %4656 = vmatprep.subr.mxu0 0.0
    %4657 = vmatpush1.msra.mxu0 0.0
    %4658 = vmatprep.subr.mxu0 0.0
    %4659 = vmatpush1.msra.mxu0 0.0
    %4660 = vmatprep.subr.mxu0 0.0
    %4661 = vmatpush1.msra.mxu0 0.0
    %4662 = vmatprep.subr.mxu0 0.0
    %4663 = vmatpush1.msra.mxu0 0.0
    %4664 = vmatprep.subr.mxu0 0.0
    %4665 = vmatpush1.msra.mxu0 0.0
    %4666 = vmatprep.subr.mxu0 0.0
    %4667 = vmatpush1.msra.mxu0 0.0
    %4668 = vmatprep.subr.mxu0 0.0
    %4669 = vmatpush1.msra.mxu0 0.0
    %4670 = vmatprep.subr.mxu0 0.0
    %4671 = vmatpush1.msra.mxu0 0.0
    %4672 = vmatprep.subr.mxu0 0.0
    %4673 = vmatpush1.msra.mxu0 0.0
    %4674 = vmatprep.subr.mxu0 0.0
    %4675 = vmatpush1.msra.mxu0 0.0
    %4676 = vmatprep.subr.mxu0 0.0
    %4677 = vmatpush1.msra.mxu0 0.0
    %4678 = vmatprep.subr.mxu0 0.0
    %4679 = vmatpush1.msra.mxu0 0.0
    %4680 = vmatprep.subr.mxu0 0.0
    %4681 = vmatpush1.msra.mxu0 0.0
    %4682 = vmatprep.subr.mxu0 0.0
    %4683 = vmatpush1.msra.mxu0 0.0
    %4684 = vmatprep.subr.mxu0 0.0
    %4685 = vmatpush1.msra.mxu0 0.0
    %4686 = vmatprep.mubr.f32.mxu0 0.0
    %4687 = vmatmul.mubr.f32.gmra.mrb[0].mxu0 %v4620
    %v4688 = vpop.f32.mrb[0].mxu0
    %v4689 = vadd.f32 %v4252, %v4688
    %v4690 = vpop.f32.mrb[0].mxu0
    %4691 = vdwg.mxu0
    %v4693 = vsel %vm955, %v4245, 0
    %4695 = vmatprep.subr.mxu0 0.0
    %4696 = vmatpush1.msra.mxu0 %v309
    %4697 = vmatprep.subr.mxu0 0.0
    %4698 = vmatpush1.msra.mxu0 %v310
    %4699 = vmatprep.subr.mxu0 0.0
    %4700 = vmatpush1.msra.mxu0 %v311
    %4701 = vmatprep.subr.mxu0 0.0
    %4702 = vmatpush1.msra.mxu0 %v312
    %4703 = vmatprep.subr.mxu0 0.0
    %4704 = vmatpush1.msra.mxu0 0.0
    %4705 = vmatprep.subr.mxu0 0.0
    %4706 = vmatpush1.msra.mxu0 0.0
    %4707 = vmatprep.subr.mxu0 0.0
    %4708 = vmatpush1.msra.mxu0 0.0
    %4709 = vmatprep.subr.mxu0 0.0
    %4710 = vmatpush1.msra.mxu0 0.0
    %4711 = vmatprep.subr.mxu0 0.0
    %4712 = vmatpush1.msra.mxu0 0.0
    %4713 = vmatprep.subr.mxu0 0.0
    %4714 = vmatpush1.msra.mxu0 0.0
    %4715 = vmatprep.subr.mxu0 0.0
    %4716 = vmatpush1.msra.mxu0 0.0
    %4717 = vmatprep.subr.mxu0 0.0
    %4718 = vmatpush1.msra.mxu0 0.0
    %4719 = vmatprep.subr.mxu0 0.0
    %4720 = vmatpush1.msra.mxu0 0.0
    %4721 = vmatprep.subr.mxu0 0.0
    %4722 = vmatpush1.msra.mxu0 0.0
    %4723 = vmatprep.subr.mxu0 0.0
    %4724 = vmatpush1.msra.mxu0 0.0
    %4725 = vmatprep.subr.mxu0 0.0
    %4726 = vmatpush1.msra.mxu0 0.0
    %4727 = vmatprep.subr.mxu0 0.0
    %4728 = vmatpush1.msra.mxu0 0.0
    %4729 = vmatprep.subr.mxu0 0.0
    %4730 = vmatpush1.msra.mxu0 0.0
    %4731 = vmatprep.subr.mxu0 0.0
    %4732 = vmatpush1.msra.mxu0 0.0
    %4733 = vmatprep.subr.mxu0 0.0
    %4734 = vmatpush1.msra.mxu0 0.0
    %4735 = vmatprep.subr.mxu0 0.0
    %4736 = vmatpush1.msra.mxu0 0.0
    %4737 = vmatprep.subr.mxu0 0.0
    %4738 = vmatpush1.msra.mxu0 0.0
    %4739 = vmatprep.subr.mxu0 0.0
    %4740 = vmatpush1.msra.mxu0 0.0
    %4741 = vmatprep.subr.mxu0 0.0
    %4742 = vmatpush1.msra.mxu0 0.0
    %4743 = vmatprep.subr.mxu0 0.0
    %4744 = vmatpush1.msra.mxu0 0.0
    %4745 = vmatprep.subr.mxu0 0.0
    %4746 = vmatpush1.msra.mxu0 0.0
    %4747 = vmatprep.subr.mxu0 0.0
    %4748 = vmatpush1.msra.mxu0 0.0
    %4749 = vmatprep.subr.mxu0 0.0
    %4750 = vmatpush1.msra.mxu0 0.0
    %4751 = vmatprep.subr.mxu0 0.0
    %4752 = vmatpush1.msra.mxu0 0.0
    %4753 = vmatprep.subr.mxu0 0.0
    %4754 = vmatpush1.msra.mxu0 0.0
    %4755 = vmatprep.subr.mxu0 0.0
    %4756 = vmatpush1.msra.mxu0 0.0
    %4757 = vmatprep.subr.mxu0 0.0
    %4758 = vmatpush1.msra.mxu0 0.0
    %4759 = vmatprep.mubr.f32.mxu0 0.0
    %4760 = vmatmul.mubr.f32.gmra.mrb[0].mxu0 %v4693
    %v4761 = vpop.f32.mrb[0].mxu0
    %v4762 = vadd.f32 %v4252, %v4761
    %v4763 = vpop.f32.mrb[0].mxu0
    %4764 = vdwg.mxu0
    %v4766 = vsel %vm955, %v4246, 0
    %4768 = vmatprep.subr.mxu0 0.0
    %4769 = vmatpush1.msra.mxu0 %v309
    %4770 = vmatprep.subr.mxu0 0.0
    %4771 = vmatpush1.msra.mxu0 %v310
    %4772 = vmatprep.subr.mxu0 0.0
    %4773 = vmatpush1.msra.mxu0 %v311
    %4774 = vmatprep.subr.mxu0 0.0
    %4775 = vmatpush1.msra.mxu0 %v312
    %4776 = vmatprep.subr.mxu0 0.0
    %4777 = vmatpush1.msra.mxu0 0.0
    %4778 = vmatprep.subr.mxu0 0.0
    %4779 = vmatpush1.msra.mxu0 0.0
    %4780 = vmatprep.subr.mxu0 0.0
    %4781 = vmatpush1.msra.mxu0 0.0
    %4782 = vmatprep.subr.mxu0 0.0
    %4783 = vmatpush1.msra.mxu0 0.0
    %4784 = vmatprep.subr.mxu0 0.0
    %4785 = vmatpush1.msra.mxu0 0.0
    %4786 = vmatprep.subr.mxu0 0.0
    %4787 = vmatpush1.msra.mxu0 0.0
    %4788 = vmatprep.subr.mxu0 0.0
    %4789 = vmatpush1.msra.mxu0 0.0
    %4790 = vmatprep.subr.mxu0 0.0
    %4791 = vmatpush1.msra.mxu0 0.0
    %4792 = vmatprep.subr.mxu0 0.0
    %4793 = vmatpush1.msra.mxu0 0.0
    %4794 = vmatprep.subr.mxu0 0.0
    %4795 = vmatpush1.msra.mxu0 0.0
    %4796 = vmatprep.subr.mxu0 0.0
    %4797 = vmatpush1.msra.mxu0 0.0
    %4798 = vmatprep.subr.mxu0 0.0
    %4799 = vmatpush1.msra.mxu0 0.0
    %4800 = vmatprep.subr.mxu0 0.0
    %4801 = vmatpush1.msra.mxu0 0.0
    %4802 = vmatprep.subr.mxu0 0.0
    %4803 = vmatpush1.msra.mxu0 0.0
    %4804 = vmatprep.subr.mxu0 0.0
    %4805 = vmatpush1.msra.mxu0 0.0
    %4806 = vmatprep.subr.mxu0 0.0
    %4807 = vmatpush1.msra.mxu0 0.0
    %4808 = vmatprep.subr.mxu0 0.0
    %4809 = vmatpush1.msra.mxu0 0.0
    %4810 = vmatprep.subr.mxu0 0.0
    %4811 = vmatpush1.msra.mxu0 0.0
    %4812 = vmatprep.subr.mxu0 0.0
    %4813 = vmatpush1.msra.mxu0 0.0
    %4814 = vmatprep.subr.mxu0 0.0
    %4815 = vmatpush1.msra.mxu0 0.0
    %4816 = vmatprep.subr.mxu0 0.0
    %4817 = vmatpush1.msra.mxu0 0.0
    %4818 = vmatprep.subr.mxu0 0.0
    %4819 = vmatpush1.msra.mxu0 0.0
    %4820 = vmatprep.subr.mxu0 0.0
    %4821 = vmatpush1.msra.mxu0 0.0
    %4822 = vmatprep.subr.mxu0 0.0
    %4823 = vmatpush1.msra.mxu0 0.0
    %4824 = vmatprep.subr.mxu0 0.0
    %4825 = vmatpush1.msra.mxu0 0.0
    %4826 = vmatprep.subr.mxu0 0.0
    %4827 = vmatpush1.msra.mxu0 0.0
    %4828 = vmatprep.subr.mxu0 0.0
    %4829 = vmatpush1.msra.mxu0 0.0
    %4830 = vmatprep.subr.mxu0 0.0
    %4831 = vmatpush1.msra.mxu0 0.0
    %4832 = vmatprep.mubr.f32.mxu0 0.0
    %4833 = vmatmul.mubr.f32.gmra.mrb[0].mxu0 %v4766
    %v4834 = vpop.f32.mrb[0].mxu0
    %v4835 = vadd.f32 %v4252, %v4834
    %v4836 = vpop.f32.mrb[0].mxu0
    %4837 = vdwg.mxu0
    %v4838 = vadd.f32 %v940, %v4324
    %v4839 = vadd.f32 %v941, %v4397
    %v4840 = vadd.f32 %v942, %v4470
    %v4841 = vadd.f32 %v943, %v4543
    %v4842 = vadd.f32 %v944, %v4616
    %v4843 = vadd.f32 %v945, %v4689
    %v4844 = vadd.f32 %v946, %v4762
    %v4845 = vadd.f32 %v947, %v4835
    %v4846 = vmul.f32 %v4838, 0.999995
    %v4847 = vmul.f32 %v4839, 0.999995
    %v4848 = vmul.f32 %v4840, 0.999995
    %v4849 = vmul.f32 %v4841, 0.999995
    %v4850 = vmul.f32 %v4842, 0.999995
    %v4851 = vmul.f32 %v4843, 0.999995
    %v4852 = vmul.f32 %v4844, 0.999995
    %v4853 = vmul.f32 %v4845, 0.999995
    %v4854 = vld [vmem:[%s9] sm:$0x1]
    %v4856 = vlaneseq
    %v4857 = vshrl.u32 %v4856, 7
    %v4858 = vsub.s32 0, %v4857
    %v4859 = vrot.slane %v4854, %v4858
    %v4862 = vsel %vm955, %v4846, 0
    %4864 = vmatprep.subr.mxu0 0.0
    %4865 = vmatpush1.msra.mxu0 %v318
    %4866 = vmatprep.subr.mxu0 0.0
    %4867 = vmatpush1.msra.mxu0 %v319
    %4868 = vmatprep.subr.mxu0 0.0
    %4869 = vmatpush1.msra.mxu0 %v320
    %4870 = vmatprep.subr.mxu0 0.0
    %4871 = vmatpush1.msra.mxu0 %v321
    %4872 = vmatprep.subr.mxu0 0.0
    %4873 = vmatpush1.msra.mxu0 0.0
    %4874 = vmatprep.subr.mxu0 0.0
    %4875 = vmatpush1.msra.mxu0 0.0
    %4876 = vmatprep.subr.mxu0 0.0
    %4877 = vmatpush1.msra.mxu0 0.0
    %4878 = vmatprep.subr.mxu0 0.0
    %4879 = vmatpush1.msra.mxu0 0.0
    %4880 = vmatprep.subr.mxu0 0.0
    %4881 = vmatpush1.msra.mxu0 0.0
    %4882 = vmatprep.subr.mxu0 0.0
    %4883 = vmatpush1.msra.mxu0 0.0
    %4884 = vmatprep.subr.mxu0 0.0
    %4885 = vmatpush1.msra.mxu0 0.0
    %4886 = vmatprep.subr.mxu0 0.0
    %4887 = vmatpush1.msra.mxu0 0.0
    %4888 = vmatprep.subr.mxu0 0.0
    %4889 = vmatpush1.msra.mxu0 0.0
    %4890 = vmatprep.subr.mxu0 0.0
    %4891 = vmatpush1.msra.mxu0 0.0
    %4892 = vmatprep.subr.mxu0 0.0
    %4893 = vmatpush1.msra.mxu0 0.0
    %4894 = vmatprep.subr.mxu0 0.0
    %4895 = vmatpush1.msra.mxu0 0.0
    %4896 = vmatprep.subr.mxu0 0.0
    %4897 = vmatpush1.msra.mxu0 0.0
    %4898 = vmatprep.subr.mxu0 0.0
    %4899 = vmatpush1.msra.mxu0 0.0
    %4900 = vmatprep.subr.mxu0 0.0
    %4901 = vmatpush1.msra.mxu0 0.0
    %4902 = vmatprep.subr.mxu0 0.0
    %4903 = vmatpush1.msra.mxu0 0.0
    %4904 = vmatprep.subr.mxu0 0.0
    %4905 = vmatpush1.msra.mxu0 0.0
    %4906 = vmatprep.subr.mxu0 0.0
    %4907 = vmatpush1.msra.mxu0 0.0
    %4908 = vmatprep.subr.mxu0 0.0
    %4909 = vmatpush1.msra.mxu0 0.0
    %4910 = vmatprep.subr.mxu0 0.0
    %4911 = vmatpush1.msra.mxu0 0.0
    %4912 = vmatprep.subr.mxu0 0.0
    %4913 = vmatpush1.msra.mxu0 0.0
    %4914 = vmatprep.subr.mxu0 0.0
    %4915 = vmatpush1.msra.mxu0 0.0
    %4916 = vmatprep.subr.mxu0 0.0
    %4917 = vmatpush1.msra.mxu0 0.0
    %4918 = vmatprep.subr.mxu0 0.0
    %4919 = vmatpush1.msra.mxu0 0.0
    %4920 = vmatprep.subr.mxu0 0.0
    %4921 = vmatpush1.msra.mxu0 0.0
    %4922 = vmatprep.subr.mxu0 0.0
    %4923 = vmatpush1.msra.mxu0 0.0
    %4924 = vmatprep.subr.mxu0 0.0
    %4925 = vmatpush1.msra.mxu0 0.0
    %4926 = vmatprep.subr.mxu0 0.0
    %4927 = vmatpush1.msra.mxu0 0.0
    %4928 = vmatprep.mubr.f32.mxu0 0.0
    %4929 = vmatmul.mubr.f32.gmra.mrb[0].mxu0 %v4862
    %v4930 = vpop.f32.mrb[0].mxu0
    %v4931 = vadd.f32 %v4859, %v4930
    %v4932 = vpop.f32.mrb[0].mxu0
    %4933 = vdwg.mxu0
    %v4935 = vsel %vm955, %v4847, 0
    %4937 = vmatprep.subr.mxu0 0.0
    %4938 = vmatpush1.msra.mxu0 %v318
    %4939 = vmatprep.subr.mxu0 0.0
    %4940 = vmatpush1.msra.mxu0 %v319
    %4941 = vmatprep.subr.mxu0 0.0
    %4942 = vmatpush1.msra.mxu0 %v320
    %4943 = vmatprep.subr.mxu0 0.0
    %4944 = vmatpush1.msra.mxu0 %v321
    %4945 = vmatprep.subr.mxu0 0.0
    %4946 = vmatpush1.msra.mxu0 0.0
    %4947 = vmatprep.subr.mxu0 0.0
    %4948 = vmatpush1.msra.mxu0 0.0
    %4949 = vmatprep.subr.mxu0 0.0
    %4950 = vmatpush1.msra.mxu0 0.0
    %4951 = vmatprep.subr.mxu0 0.0
    %4952 = vmatpush1.msra.mxu0 0.0
    %4953 = vmatprep.subr.mxu0 0.0
    %4954 = vmatpush1.msra.mxu0 0.0
    %4955 = vmatprep.subr.mxu0 0.0
    %4956 = vmatpush1.msra.mxu0 0.0
    %4957 = vmatprep.subr.mxu0 0.0
    %4958 = vmatpush1.msra.mxu0 0.0
    %4959 = vmatprep.subr.mxu0 0.0
    %4960 = vmatpush1.msra.mxu0 0.0
    %4961 = vmatprep.subr.mxu0 0.0
    %4962 = vmatpush1.msra.mxu0 0.0
    %4963 = vmatprep.subr.mxu0 0.0
    %4964 = vmatpush1.msra.mxu0 0.0
    %4965 = vmatprep.subr.mxu0 0.0
    %4966 = vmatpush1.msra.mxu0 0.0
    %4967 = vmatprep.subr.mxu0 0.0
    %4968 = vmatpush1.msra.mxu0 0.0
    %4969 = vmatprep.subr.mxu0 0.0
    %4970 = vmatpush1.msra.mxu0 0.0
    %4971 = vmatprep.subr.mxu0 0.0
    %4972 = vmatpush1.msra.mxu0 0.0
    %4973 = vmatprep.subr.mxu0 0.0
    %4974 = vmatpush1.msra.mxu0 0.0
    %4975 = vmatprep.subr.mxu0 0.0
    %4976 = vmatpush1.msra.mxu0 0.0
    %4977 = vmatprep.subr.mxu0 0.0
    %4978 = vmatpush1.msra.mxu0 0.0
    %4979 = vmatprep.subr.mxu0 0.0
    %4980 = vmatpush1.msra.mxu0 0.0
    %4981 = vmatprep.subr.mxu0 0.0
    %4982 = vmatpush1.msra.mxu0 0.0
    %4983 = vmatprep.subr.mxu0 0.0
    %4984 = vmatpush1.msra.mxu0 0.0
    %4985 = vmatprep.subr.mxu0 0.0
    %4986 = vmatpush1.msra.mxu0 0.0
    %4987 = vmatprep.subr.mxu0 0.0
    %4988 = vmatpush1.msra.mxu0 0.0
    %4989 = vmatprep.subr.mxu0 0.0
    %4990 = vmatpush1.msra.mxu0 0.0
    %4991 = vmatprep.subr.mxu0 0.0
    %4992 = vmatpush1.msra.mxu0 0.0
    %4993 = vmatprep.subr.mxu0 0.0
    %4994 = vmatpush1.msra.mxu0 0.0
    %4995 = vmatprep.subr.mxu0 0.0
    %4996 = vmatpush1.msra.mxu0 0.0
    %4997 = vmatprep.subr.mxu0 0.0
    %4998 = vmatpush1.msra.mxu0 0.0
    %4999 = vmatprep.subr.mxu0 0.0
    %5000 = vmatpush1.msra.mxu0 0.0
    %5001 = vmatprep.mubr.f32.mxu0 0.0
    %5002 = vmatmul.mubr.f32.gmra.mrb[0].mxu0 %v4935
    %v5003 = vpop.f32.mrb[0].mxu0
    %v5004 = vadd.f32 %v4859, %v5003
    %v5005 = vpop.f32.mrb[0].mxu0
    %5006 = vdwg.mxu0
    %v5008 = vsel %vm955, %v4848, 0
    %5010 = vmatprep.subr.mxu0 0.0
    %5011 = vmatpush1.msra.mxu0 %v318
    %5012 = vmatprep.subr.mxu0 0.0
    %5013 = vmatpush1.msra.mxu0 %v319
    %5014 = vmatprep.subr.mxu0 0.0
    %5015 = vmatpush1.msra.mxu0 %v320
    %5016 = vmatprep.subr.mxu0 0.0
    %5017 = vmatpush1.msra.mxu0 %v321
    %5018 = vmatprep.subr.mxu0 0.0
    %5019 = vmatpush1.msra.mxu0 0.0
    %5020 = vmatprep.subr.mxu0 0.0
    %5021 = vmatpush1.msra.mxu0 0.0
    %5022 = vmatprep.subr.mxu0 0.0
    %5023 = vmatpush1.msra.mxu0 0.0
    %5024 = vmatprep.subr.mxu0 0.0
    %5025 = vmatpush1.msra.mxu0 0.0
    %5026 = vmatprep.subr.mxu0 0.0
    %5027 = vmatpush1.msra.mxu0 0.0
    %5028 = vmatprep.subr.mxu0 0.0
    %5029 = vmatpush1.msra.mxu0 0.0
    %5030 = vmatprep.subr.mxu0 0.0
    %5031 = vmatpush1.msra.mxu0 0.0
    %5032 = vmatprep.subr.mxu0 0.0
    %5033 = vmatpush1.msra.mxu0 0.0
    %5034 = vmatprep.subr.mxu0 0.0
    %5035 = vmatpush1.msra.mxu0 0.0
    %5036 = vmatprep.subr.mxu0 0.0
    %5037 = vmatpush1.msra.mxu0 0.0
    %5038 = vmatprep.subr.mxu0 0.0
    %5039 = vmatpush1.msra.mxu0 0.0
    %5040 = vmatprep.subr.mxu0 0.0
    %5041 = vmatpush1.msra.mxu0 0.0
    %5042 = vmatprep.subr.mxu0 0.0
    %5043 = vmatpush1.msra.mxu0 0.0
    %5044 = vmatprep.subr.mxu0 0.0
    %5045 = vmatpush1.msra.mxu0 0.0
    %5046 = vmatprep.subr.mxu0 0.0
    %5047 = vmatpush1.msra.mxu0 0.0
    %5048 = vmatprep.subr.mxu0 0.0
    %5049 = vmatpush1.msra.mxu0 0.0
    %5050 = vmatprep.subr.mxu0 0.0
    %5051 = vmatpush1.msra.mxu0 0.0
    %5052 = vmatprep.subr.mxu0 0.0
    %5053 = vmatpush1.msra.mxu0 0.0
    %5054 = vmatprep.subr.mxu0 0.0
    %5055 = vmatpush1.msra.mxu0 0.0
    %5056 = vmatprep.subr.mxu0 0.0
    %5057 = vmatpush1.msra.mxu0 0.0
    %5058 = vmatprep.subr.mxu0 0.0
    %5059 = vmatpush1.msra.mxu0 0.0
    %5060 = vmatprep.subr.mxu0 0.0
    %5061 = vmatpush1.msra.mxu0 0.0
    %5062 = vmatprep.subr.mxu0 0.0
    %5063 = vmatpush1.msra.mxu0 0.0
    %5064 = vmatprep.subr.mxu0 0.0
    %5065 = vmatpush1.msra.mxu0 0.0
    %5066 = vmatprep.subr.mxu0 0.0
    %5067 = vmatpush1.msra.mxu0 0.0
    %5068 = vmatprep.subr.mxu0 0.0
    %5069 = vmatpush1.msra.mxu0 0.0
    %5070 = vmatprep.subr.mxu0 0.0
    %5071 = vmatpush1.msra.mxu0 0.0
    %5072 = vmatprep.subr.mxu0 0.0
    %5073 = vmatpush1.msra.mxu0 0.0
    %5074 = vmatprep.mubr.f32.mxu0 0.0
    %5075 = vmatmul.mubr.f32.gmra.mrb[0].mxu0 %v5008
    %v5076 = vpop.f32.mrb[0].mxu0
    %v5077 = vadd.f32 %v4859, %v5076
    %v5078 = vpop.f32.mrb[0].mxu0
    %5079 = vdwg.mxu0
    %v5081 = vsel %vm955, %v4849, 0
    %5083 = vmatprep.subr.mxu0 0.0
    %5084 = vmatpush1.msra.mxu0 %v318
    %5085 = vmatprep.subr.mxu0 0.0
    %5086 = vmatpush1.msra.mxu0 %v319
    %5087 = vmatprep.subr.mxu0 0.0
    %5088 = vmatpush1.msra.mxu0 %v320
    %5089 = vmatprep.subr.mxu0 0.0
    %5090 = vmatpush1.msra.mxu0 %v321
    %5091 = vmatprep.subr.mxu0 0.0
    %5092 = vmatpush1.msra.mxu0 0.0
    %5093 = vmatprep.subr.mxu0 0.0
    %5094 = vmatpush1.msra.mxu0 0.0
    %5095 = vmatprep.subr.mxu0 0.0
    %5096 = vmatpush1.msra.mxu0 0.0
    %5097 = vmatprep.subr.mxu0 0.0
    %5098 = vmatpush1.msra.mxu0 0.0
    %5099 = vmatprep.subr.mxu0 0.0
    %5100 = vmatpush1.msra.mxu0 0.0
    %5101 = vmatprep.subr.mxu0 0.0
    %5102 = vmatpush1.msra.mxu0 0.0
    %5103 = vmatprep.subr.mxu0 0.0
    %5104 = vmatpush1.msra.mxu0 0.0
    %5105 = vmatprep.subr.mxu0 0.0
    %5106 = vmatpush1.msra.mxu0 0.0
    %5107 = vmatprep.subr.mxu0 0.0
    %5108 = vmatpush1.msra.mxu0 0.0
    %5109 = vmatprep.subr.mxu0 0.0
    %5110 = vmatpush1.msra.mxu0 0.0
    %5111 = vmatprep.subr.mxu0 0.0
    %5112 = vmatpush1.msra.mxu0 0.0
    %5113 = vmatprep.subr.mxu0 0.0
    %5114 = vmatpush1.msra.mxu0 0.0
    %5115 = vmatprep.subr.mxu0 0.0
    %5116 = vmatpush1.msra.mxu0 0.0
    %5117 = vmatprep.subr.mxu0 0.0
    %5118 = vmatpush1.msra.mxu0 0.0
    %5119 = vmatprep.subr.mxu0 0.0
    %5120 = vmatpush1.msra.mxu0 0.0
    %5121 = vmatprep.subr.mxu0 0.0
    %5122 = vmatpush1.msra.mxu0 0.0
    %5123 = vmatprep.subr.mxu0 0.0
    %5124 = vmatpush1.msra.mxu0 0.0
    %5125 = vmatprep.subr.mxu0 0.0
    %5126 = vmatpush1.msra.mxu0 0.0
    %5127 = vmatprep.subr.mxu0 0.0
    %5128 = vmatpush1.msra.mxu0 0.0
    %5129 = vmatprep.subr.mxu0 0.0
    %5130 = vmatpush1.msra.mxu0 0.0
    %5131 = vmatprep.subr.mxu0 0.0
    %5132 = vmatpush1.msra.mxu0 0.0
    %5133 = vmatprep.subr.mxu0 0.0
    %5134 = vmatpush1.msra.mxu0 0.0
    %5135 = vmatprep.subr.mxu0 0.0
    %5136 = vmatpush1.msra.mxu0 0.0
    %5137 = vmatprep.subr.mxu0 0.0
    %5138 = vmatpush1.msra.mxu0 0.0
    %5139 = vmatprep.subr.mxu0 0.0
    %5140 = vmatpush1.msra.mxu0 0.0
    %5141 = vmatprep.subr.mxu0 0.0
    %5142 = vmatpush1.msra.mxu0 0.0
    %5143 = vmatprep.subr.mxu0 0.0
    %5144 = vmatpush1.msra.mxu0 0.0
    %5145 = vmatprep.subr.mxu0 0.0
    %5146 = vmatpush1.msra.mxu0 0.0
    %5147 = vmatprep.mubr.f32.mxu0 0.0
    %5148 = vmatmul.mubr.f32.gmra.mrb[0].mxu0 %v5081
    %v5149 = vpop.f32.mrb[0].mxu0
    %v5150 = vadd.f32 %v4859, %v5149
    %v5151 = vpop.f32.mrb[0].mxu0
    %5152 = vdwg.mxu0
    %v5154 = vsel %vm955, %v4850, 0
    %5156 = vmatprep.subr.mxu0 0.0
    %5157 = vmatpush1.msra.mxu0 %v318
    %5158 = vmatprep.subr.mxu0 0.0
    %5159 = vmatpush1.msra.mxu0 %v319
    %5160 = vmatprep.subr.mxu0 0.0
    %5161 = vmatpush1.msra.mxu0 %v320
    %5162 = vmatprep.subr.mxu0 0.0
    %5163 = vmatpush1.msra.mxu0 %v321
    %5164 = vmatprep.subr.mxu0 0.0
    %5165 = vmatpush1.msra.mxu0 0.0
    %5166 = vmatprep.subr.mxu0 0.0
    %5167 = vmatpush1.msra.mxu0 0.0
    %5168 = vmatprep.subr.mxu0 0.0
    %5169 = vmatpush1.msra.mxu0 0.0
    %5170 = vmatprep.subr.mxu0 0.0
    %5171 = vmatpush1.msra.mxu0 0.0
    %5172 = vmatprep.subr.mxu0 0.0
    %5173 = vmatpush1.msra.mxu0 0.0
    %5174 = vmatprep.subr.mxu0 0.0
    %5175 = vmatpush1.msra.mxu0 0.0
    %5176 = vmatprep.subr.mxu0 0.0
    %5177 = vmatpush1.msra.mxu0 0.0
    %5178 = vmatprep.subr.mxu0 0.0
    %5179 = vmatpush1.msra.mxu0 0.0
    %5180 = vmatprep.subr.mxu0 0.0
    %5181 = vmatpush1.msra.mxu0 0.0
    %5182 = vmatprep.subr.mxu0 0.0
    %5183 = vmatpush1.msra.mxu0 0.0
    %5184 = vmatprep.subr.mxu0 0.0
    %5185 = vmatpush1.msra.mxu0 0.0
    %5186 = vmatprep.subr.mxu0 0.0
    %5187 = vmatpush1.msra.mxu0 0.0
    %5188 = vmatprep.subr.mxu0 0.0
    %5189 = vmatpush1.msra.mxu0 0.0
    %5190 = vmatprep.subr.mxu0 0.0
    %5191 = vmatpush1.msra.mxu0 0.0
    %5192 = vmatprep.subr.mxu0 0.0
    %5193 = vmatpush1.msra.mxu0 0.0
    %5194 = vmatprep.subr.mxu0 0.0
    %5195 = vmatpush1.msra.mxu0 0.0
    %5196 = vmatprep.subr.mxu0 0.0
    %5197 = vmatpush1.msra.mxu0 0.0
    %5198 = vmatprep.subr.mxu0 0.0
    %5199 = vmatpush1.msra.mxu0 0.0
    %5200 = vmatprep.subr.mxu0 0.0
    %5201 = vmatpush1.msra.mxu0 0.0
    %5202 = vmatprep.subr.mxu0 0.0
    %5203 = vmatpush1.msra.mxu0 0.0
    %5204 = vmatprep.subr.mxu0 0.0
    %5205 = vmatpush1.msra.mxu0 0.0
    %5206 = vmatprep.subr.mxu0 0.0
    %5207 = vmatpush1.msra.mxu0 0.0
    %5208 = vmatprep.subr.mxu0 0.0
    %5209 = vmatpush1.msra.mxu0 0.0
    %5210 = vmatprep.subr.mxu0 0.0
    %5211 = vmatpush1.msra.mxu0 0.0
    %5212 = vmatprep.subr.mxu0 0.0
    %5213 = vmatpush1.msra.mxu0 0.0
    %5214 = vmatprep.subr.mxu0 0.0
    %5215 = vmatpush1.msra.mxu0 0.0
    %5216 = vmatprep.subr.mxu0 0.0
    %5217 = vmatpush1.msra.mxu0 0.0
    %5218 = vmatprep.subr.mxu0 0.0
    %5219 = vmatpush1.msra.mxu0 0.0
    %5220 = vmatprep.mubr.f32.mxu0 0.0
    %5221 = vmatmul.mubr.f32.gmra.mrb[0].mxu0 %v5154
    %v5222 = vpop.f32.mrb[0].mxu0
    %v5223 = vadd.f32 %v4859, %v5222
    %v5224 = vpop.f32.mrb[0].mxu0
    %5225 = vdwg.mxu0
    %v5227 = vsel %vm955, %v4851, 0
    %5229 = vmatprep.subr.mxu0 0.0
    %5230 = vmatpush1.msra.mxu0 %v318
    %5231 = vmatprep.subr.mxu0 0.0
    %5232 = vmatpush1.msra.mxu0 %v319
    %5233 = vmatprep.subr.mxu0 0.0
    %5234 = vmatpush1.msra.mxu0 %v320
    %5235 = vmatprep.subr.mxu0 0.0
    %5236 = vmatpush1.msra.mxu0 %v321
    %5237 = vmatprep.subr.mxu0 0.0
    %5238 = vmatpush1.msra.mxu0 0.0
    %5239 = vmatprep.subr.mxu0 0.0
    %5240 = vmatpush1.msra.mxu0 0.0
    %5241 = vmatprep.subr.mxu0 0.0
    %5242 = vmatpush1.msra.mxu0 0.0
    %5243 = vmatprep.subr.mxu0 0.0
    %5244 = vmatpush1.msra.mxu0 0.0
    %5245 = vmatprep.subr.mxu0 0.0
    %5246 = vmatpush1.msra.mxu0 0.0
    %5247 = vmatprep.subr.mxu0 0.0
    %5248 = vmatpush1.msra.mxu0 0.0
    %5249 = vmatprep.subr.mxu0 0.0
    %5250 = vmatpush1.msra.mxu0 0.0
    %5251 = vmatprep.subr.mxu0 0.0
    %5252 = vmatpush1.msra.mxu0 0.0
    %5253 = vmatprep.subr.mxu0 0.0
    %5254 = vmatpush1.msra.mxu0 0.0
    %5255 = vmatprep.subr.mxu0 0.0
    %5256 = vmatpush1.msra.mxu0 0.0
    %5257 = vmatprep.subr.mxu0 0.0
    %5258 = vmatpush1.msra.mxu0 0.0
    %5259 = vmatprep.subr.mxu0 0.0
    %5260 = vmatpush1.msra.mxu0 0.0
    %5261 = vmatprep.subr.mxu0 0.0
    %5262 = vmatpush1.msra.mxu0 0.0
    %5263 = vmatprep.subr.mxu0 0.0
    %5264 = vmatpush1.msra.mxu0 0.0
    %5265 = vmatprep.subr.mxu0 0.0
    %5266 = vmatpush1.msra.mxu0 0.0
    %5267 = vmatprep.subr.mxu0 0.0
    %5268 = vmatpush1.msra.mxu0 0.0
    %5269 = vmatprep.subr.mxu0 0.0
    %5270 = vmatpush1.msra.mxu0 0.0
    %5271 = vmatprep.subr.mxu0 0.0
    %5272 = vmatpush1.msra.mxu0 0.0
    %5273 = vmatprep.subr.mxu0 0.0
    %5274 = vmatpush1.msra.mxu0 0.0
    %5275 = vmatprep.subr.mxu0 0.0
    %5276 = vmatpush1.msra.mxu0 0.0
    %5277 = vmatprep.subr.mxu0 0.0
    %5278 = vmatpush1.msra.mxu0 0.0
    %5279 = vmatprep.subr.mxu0 0.0
    %5280 = vmatpush1.msra.mxu0 0.0
    %5281 = vmatprep.subr.mxu0 0.0
    %5282 = vmatpush1.msra.mxu0 0.0
    %5283 = vmatprep.subr.mxu0 0.0
    %5284 = vmatpush1.msra.mxu0 0.0
    %5285 = vmatprep.subr.mxu0 0.0
    %5286 = vmatpush1.msra.mxu0 0.0
    %5287 = vmatprep.subr.mxu0 0.0
    %5288 = vmatpush1.msra.mxu0 0.0
    %5289 = vmatprep.subr.mxu0 0.0
    %5290 = vmatpush1.msra.mxu0 0.0
    %5291 = vmatprep.subr.mxu0 0.0
    %5292 = vmatpush1.msra.mxu0 0.0
    %5293 = vmatprep.mubr.f32.mxu0 0.0
    %5294 = vmatmul.mubr.f32.gmra.mrb[0].mxu0 %v5227
    %v5295 = vpop.f32.mrb[0].mxu0
    %v5296 = vadd.f32 %v4859, %v5295
    %v5297 = vpop.f32.mrb[0].mxu0
    %5298 = vdwg.mxu0
    %v5300 = vsel %vm955, %v4852, 0
    %5302 = vmatprep.subr.mxu0 0.0
    %5303 = vmatpush1.msra.mxu0 %v318
    %5304 = vmatprep.subr.mxu0 0.0
    %5305 = vmatpush1.msra.mxu0 %v319
    %5306 = vmatprep.subr.mxu0 0.0
    %5307 = vmatpush1.msra.mxu0 %v320
    %5308 = vmatprep.subr.mxu0 0.0
    %5309 = vmatpush1.msra.mxu0 %v321
    %5310 = vmatprep.subr.mxu0 0.0
    %5311 = vmatpush1.msra.mxu0 0.0
    %5312 = vmatprep.subr.mxu0 0.0
    %5313 = vmatpush1.msra.mxu0 0.0
    %5314 = vmatprep.subr.mxu0 0.0
    %5315 = vmatpush1.msra.mxu0 0.0
    %5316 = vmatprep.subr.mxu0 0.0
    %5317 = vmatpush1.msra.mxu0 0.0
    %5318 = vmatprep.subr.mxu0 0.0
    %5319 = vmatpush1.msra.mxu0 0.0
    %5320 = vmatprep.subr.mxu0 0.0
    %5321 = vmatpush1.msra.mxu0 0.0
    %5322 = vmatprep.subr.mxu0 0.0
    %5323 = vmatpush1.msra.mxu0 0.0
    %5324 = vmatprep.subr.mxu0 0.0
    %5325 = vmatpush1.msra.mxu0 0.0
    %5326 = vmatprep.subr.mxu0 0.0
    %5327 = vmatpush1.msra.mxu0 0.0
    %5328 = vmatprep.subr.mxu0 0.0
    %5329 = vmatpush1.msra.mxu0 0.0
    %5330 = vmatprep.subr.mxu0 0.0
    %5331 = vmatpush1.msra.mxu0 0.0
    %5332 = vmatprep.subr.mxu0 0.0
    %5333 = vmatpush1.msra.mxu0 0.0
    %5334 = vmatprep.subr.mxu0 0.0
    %5335 = vmatpush1.msra.mxu0 0.0
    %5336 = vmatprep.subr.mxu0 0.0
    %5337 = vmatpush1.msra.mxu0 0.0
    %5338 = vmatprep.subr.mxu0 0.0
    %5339 = vmatpush1.msra.mxu0 0.0
    %5340 = vmatprep.subr.mxu0 0.0
    %5341 = vmatpush1.msra.mxu0 0.0
    %5342 = vmatprep.subr.mxu0 0.0
    %5343 = vmatpush1.msra.mxu0 0.0
    %5344 = vmatprep.subr.mxu0 0.0
    %5345 = vmatpush1.msra.mxu0 0.0
    %5346 = vmatprep.subr.mxu0 0.0
    %5347 = vmatpush1.msra.mxu0 0.0
    %5348 = vmatprep.subr.mxu0 0.0
    %5349 = vmatpush1.msra.mxu0 0.0
    %5350 = vmatprep.subr.mxu0 0.0
    %5351 = vmatpush1.msra.mxu0 0.0
    %5352 = vmatprep.subr.mxu0 0.0
    %5353 = vmatpush1.msra.mxu0 0.0
    %5354 = vmatprep.subr.mxu0 0.0
    %5355 = vmatpush1.msra.mxu0 0.0
    %5356 = vmatprep.subr.mxu0 0.0
    %5357 = vmatpush1.msra.mxu0 0.0
    %5358 = vmatprep.subr.mxu0 0.0
    %5359 = vmatpush1.msra.mxu0 0.0
    %5360 = vmatprep.subr.mxu0 0.0
    %5361 = vmatpush1.msra.mxu0 0.0
    %5362 = vmatprep.subr.mxu0 0.0
    %5363 = vmatpush1.msra.mxu0 0.0
    %5364 = vmatprep.subr.mxu0 0.0
    %5365 = vmatpush1.msra.mxu0 0.0
    %5366 = vmatprep.mubr.f32.mxu0 0.0
    %5367 = vmatmul.mubr.f32.gmra.mrb[0].mxu0 %v5300
    %v5368 = vpop.f32.mrb[0].mxu0
    %v5369 = vadd.f32 %v4859, %v5368
    %v5370 = vpop.f32.mrb[0].mxu0
    %5371 = vdwg.mxu0
    %v5373 = vsel %vm955, %v4853, 0
    %5375 = vmatprep.subr.mxu0 0.0
    %5376 = vmatpush1.msra.mxu0 %v318
    %5377 = vmatprep.subr.mxu0 0.0
    %5378 = vmatpush1.msra.mxu0 %v319
    %5379 = vmatprep.subr.mxu0 0.0
    %5380 = vmatpush1.msra.mxu0 %v320
    %5381 = vmatprep.subr.mxu0 0.0
    %5382 = vmatpush1.msra.mxu0 %v321
    %5383 = vmatprep.subr.mxu0 0.0
    %5384 = vmatpush1.msra.mxu0 0.0
    %5385 = vmatprep.subr.mxu0 0.0
    %5386 = vmatpush1.msra.mxu0 0.0
    %5387 = vmatprep.subr.mxu0 0.0
    %5388 = vmatpush1.msra.mxu0 0.0
    %5389 = vmatprep.subr.mxu0 0.0
    %5390 = vmatpush1.msra.mxu0 0.0
    %5391 = vmatprep.subr.mxu0 0.0
    %5392 = vmatpush1.msra.mxu0 0.0
    %5393 = vmatprep.subr.mxu0 0.0
    %5394 = vmatpush1.msra.mxu0 0.0
    %5395 = vmatprep.subr.mxu0 0.0
    %5396 = vmatpush1.msra.mxu0 0.0
    %5397 = vmatprep.subr.mxu0 0.0
    %5398 = vmatpush1.msra.mxu0 0.0
    %5399 = vmatprep.subr.mxu0 0.0
    %5400 = vmatpush1.msra.mxu0 0.0
    %5401 = vmatprep.subr.mxu0 0.0
    %5402 = vmatpush1.msra.mxu0 0.0
    %5403 = vmatprep.subr.mxu0 0.0
    %5404 = vmatpush1.msra.mxu0 0.0
    %5405 = vmatprep.subr.mxu0 0.0
    %5406 = vmatpush1.msra.mxu0 0.0
    %5407 = vmatprep.subr.mxu0 0.0
    %5408 = vmatpush1.msra.mxu0 0.0
    %5409 = vmatprep.subr.mxu0 0.0
    %5410 = vmatpush1.msra.mxu0 0.0
    %5411 = vmatprep.subr.mxu0 0.0
    %5412 = vmatpush1.msra.mxu0 0.0
    %5413 = vmatprep.subr.mxu0 0.0
    %5414 = vmatpush1.msra.mxu0 0.0
    %5415 = vmatprep.subr.mxu0 0.0
    %5416 = vmatpush1.msra.mxu0 0.0
    %5417 = vmatprep.subr.mxu0 0.0
    %5418 = vmatpush1.msra.mxu0 0.0
    %5419 = vmatprep.subr.mxu0 0.0
    %5420 = vmatpush1.msra.mxu0 0.0
    %5421 = vmatprep.subr.mxu0 0.0
    %5422 = vmatpush1.msra.mxu0 0.0
    %5423 = vmatprep.subr.mxu0 0.0
    %5424 = vmatpush1.msra.mxu0 0.0
    %5425 = vmatprep.subr.mxu0 0.0
    %5426 = vmatpush1.msra.mxu0 0.0
    %5427 = vmatprep.subr.mxu0 0.0
    %5428 = vmatpush1.msra.mxu0 0.0
    %5429 = vmatprep.subr.mxu0 0.0
    %5430 = vmatpush1.msra.mxu0 0.0
    %5431 = vmatprep.subr.mxu0 0.0
    %5432 = vmatpush1.msra.mxu0 0.0
    %5433 = vmatprep.subr.mxu0 0.0
    %5434 = vmatpush1.msra.mxu0 0.0
    %5435 = vmatprep.subr.mxu0 0.0
    %5436 = vmatpush1.msra.mxu0 0.0
    %5437 = vmatprep.subr.mxu0 0.0
    %5438 = vmatpush1.msra.mxu0 0.0
    %5439 = vmatprep.mubr.f32.mxu0 0.0
    %5440 = vmatmul.mubr.f32.gmra.mrb[0].mxu0 %v5373
    %v5441 = vpop.f32.mrb[0].mxu0
    %v5442 = vadd.f32 %v4859, %v5441
    %v5443 = vpop.f32.mrb[0].mxu0
    %5444 = vdwg.mxu0
    %v5445 = vmul.f32 %v4931, 0.70710677
    %v5446 = vmul.f32 %v5004, 0.70710677
    %v5447 = vmul.f32 %v5077, 0.70710677
    %v5448 = vmul.f32 %v5150, 0.70710677
    %v5449 = vmul.f32 %v5223, 0.70710677
    %v5450 = vmul.f32 %v5296, 0.70710677
    %v5451 = vmul.f32 %v5369, 0.70710677
    %v5452 = vmul.f32 %v5442, 0.70710677
    %v5453 = vand.u32 2147483647, %v5445
    %v5454 = vand.u32 2147483647, %v5446
    %v5455 = vand.u32 2147483647, %v5447
    %v5456 = vand.u32 2147483647, %v5448
    %v5457 = vand.u32 2147483647, %v5449
    %v5458 = vand.u32 2147483647, %v5450
    %v5459 = vand.u32 2147483647, %v5451
    %v5460 = vand.u32 2147483647, %v5452
    %v5461 = vmul.f32 %v5453, 0.3275911
    %v5462 = vmul.f32 %v5454, 0.3275911
    %v5463 = vmul.f32 %v5455, 0.3275911
    %v5464 = vmul.f32 %v5456, 0.3275911
    %v5465 = vmul.f32 %v5457, 0.3275911
    %v5466 = vmul.f32 %v5458, 0.3275911
    %v5467 = vmul.f32 %v5459, 0.3275911
    %v5468 = vmul.f32 %v5460, 0.3275911
    %v5469 = vadd.f32 %v5461, 1.0
    %v5470 = vadd.f32 %v5462, 1.0
    %v5471 = vadd.f32 %v5463, 1.0
    %v5472 = vadd.f32 %v5464, 1.0
    %v5473 = vadd.f32 %v5465, 1.0
    %v5474 = vadd.f32 %v5466, 1.0
    %v5475 = vadd.f32 %v5467, 1.0
    %v5476 = vadd.f32 %v5468, 1.0
    %v5477 = vrcp.pop %v5469
    %v5478 = vmul.f32 1.0, %v5477
    %v5479 = vrcp.pop %v5470
    %v5480 = vmul.f32 1.0, %v5479
    %v5481 = vrcp.pop %v5471
    %v5482 = vmul.f32 1.0, %v5481
    %v5483 = vrcp.pop %v5472
    %v5484 = vmul.f32 1.0, %v5483
    %v5485 = vrcp.pop %v5473
    %v5486 = vmul.f32 1.0, %v5485
    %v5487 = vrcp.pop %v5474
    %v5488 = vmul.f32 1.0, %v5487
    %v5489 = vrcp.pop %v5475
    %v5490 = vmul.f32 1.0, %v5489
    %v5491 = vrcp.pop %v5476
    %v5492 = vmul.f32 1.0, %v5491
    %v5493 = vmul.f32 %v5478, 1.0614054
    %v5494 = vmul.f32 %v5480, 1.0614054
    %v5495 = vmul.f32 %v5482, 1.0614054
    %v5496 = vmul.f32 %v5484, 1.0614054
    %v5497 = vmul.f32 %v5486, 1.0614054
    %v5498 = vmul.f32 %v5488, 1.0614054
    %v5499 = vmul.f32 %v5490, 1.0614054
    %v5500 = vmul.f32 %v5492, 1.0614054
    %v5501 = vadd.f32 %v5493, -1.4531521
    %v5502 = vadd.f32 %v5494, -1.4531521
    %v5503 = vadd.f32 %v5495, -1.4531521
    %v5504 = vadd.f32 %v5496, -1.4531521
    %v5505 = vadd.f32 %v5497, -1.4531521
    %v5506 = vadd.f32 %v5498, -1.4531521
    %v5507 = vadd.f32 %v5499, -1.4531521
    %v5508 = vadd.f32 %v5500, -1.4531521
    %v5509 = vmul.f32 %v5501, %v5478
    %v5510 = vmul.f32 %v5502, %v5480
    %v5511 = vmul.f32 %v5503, %v5482
    %v5512 = vmul.f32 %v5504, %v5484
    %v5513 = vmul.f32 %v5505, %v5486
    %v5514 = vmul.f32 %v5506, %v5488
    %v5515 = vmul.f32 %v5507, %v5490
    %v5516 = vmul.f32 %v5508, %v5492
    %v5517 = vadd.f32 %v5509, 1.4214138
    %v5518 = vadd.f32 %v5510, 1.4214138
    %v5519 = vadd.f32 %v5511, 1.4214138
    %v5520 = vadd.f32 %v5512, 1.4214138
    %v5521 = vadd.f32 %v5513, 1.4214138
    %v5522 = vadd.f32 %v5514, 1.4214138
    %v5523 = vadd.f32 %v5515, 1.4214138
    %v5524 = vadd.f32 %v5516, 1.4214138
    %v5525 = vmul.f32 %v5517, %v5478
    %v5526 = vmul.f32 %v5518, %v5480
    %v5527 = vmul.f32 %v5519, %v5482
    %v5528 = vmul.f32 %v5520, %v5484
    %v5529 = vmul.f32 %v5521, %v5486
    %v5530 = vmul.f32 %v5522, %v5488
    %v5531 = vmul.f32 %v5523, %v5490
    %v5532 = vmul.f32 %v5524, %v5492
    %v5533 = vadd.f32 %v5525, -0.28449672
    %v5534 = vadd.f32 %v5526, -0.28449672
    %v5535 = vadd.f32 %v5527, -0.28449672
    %v5536 = vadd.f32 %v5528, -0.28449672
    %v5537 = vadd.f32 %v5529, -0.28449672
    %v5538 = vadd.f32 %v5530, -0.28449672
    %v5539 = vadd.f32 %v5531, -0.28449672
    %v5540 = vadd.f32 %v5532, -0.28449672
    %v5541 = vmul.f32 %v5533, %v5478
    %v5542 = vmul.f32 %v5534, %v5480
    %v5543 = vmul.f32 %v5535, %v5482
    %v5544 = vmul.f32 %v5536, %v5484
    %v5545 = vmul.f32 %v5537, %v5486
    %v5546 = vmul.f32 %v5538, %v5488
    %v5547 = vmul.f32 %v5539, %v5490
    %v5548 = vmul.f32 %v5540, %v5492
    %v5549 = vadd.f32 %v5541, 0.2548296
    %v5550 = vadd.f32 %v5542, 0.2548296
    %v5551 = vadd.f32 %v5543, 0.2548296
    %v5552 = vadd.f32 %v5544, 0.2548296
    %v5553 = vadd.f32 %v5545, 0.2548296
    %v5554 = vadd.f32 %v5546, 0.2548296
    %v5555 = vadd.f32 %v5547, 0.2548296
    %v5556 = vadd.f32 %v5548, 0.2548296
    %v5557 = vmul.f32 %v5549, %v5478
    %v5558 = vmul.f32 %v5550, %v5480
    %v5559 = vmul.f32 %v5551, %v5482
    %v5560 = vmul.f32 %v5552, %v5484
    %v5561 = vmul.f32 %v5553, %v5486
    %v5562 = vmul.f32 %v5554, %v5488
    %v5563 = vmul.f32 %v5555, %v5490
    %v5564 = vmul.f32 %v5556, %v5492
    %v5565 = vsub.f32 0.0, %v5453
    %v5566 = vsub.f32 0.0, %v5454
    %v5567 = vsub.f32 0.0, %v5455
    %v5568 = vsub.f32 0.0, %v5456
    %v5569 = vsub.f32 0.0, %v5457
    %v5570 = vsub.f32 0.0, %v5458
    %v5571 = vsub.f32 0.0, %v5459
    %v5572 = vsub.f32 0.0, %v5460
    %v5573 = vmul.f32 %v5565, %v5453
    %v5574 = vmul.f32 %v5566, %v5454
    %v5575 = vmul.f32 %v5567, %v5455
    %v5576 = vmul.f32 %v5568, %v5456
    %v5577 = vmul.f32 %v5569, %v5457
    %v5578 = vmul.f32 %v5570, %v5458
    %v5579 = vmul.f32 %v5571, %v5459
    %v5580 = vmul.f32 %v5572, %v5460
    %v5581 = vmul.f32 %v5573, 1.442695
    %v5582 = vpow.pop %v5581
    %v5583 = vmul.f32 %v5574, 1.442695
    %v5584 = vpow.pop %v5583
    %v5585 = vmul.f32 %v5575, 1.442695
    %v5586 = vpow.pop %v5585
    %v5587 = vmul.f32 %v5576, 1.442695
    %v5588 = vpow.pop %v5587
    %v5589 = vmul.f32 %v5577, 1.442695
    %v5590 = vpow.pop %v5589
    %v5591 = vmul.f32 %v5578, 1.442695
    %v5592 = vpow.pop %v5591
    %v5593 = vmul.f32 %v5579, 1.442695
    %v5594 = vpow.pop %v5593
    %v5595 = vmul.f32 %v5580, 1.442695
    %v5596 = vpow.pop %v5595
    %v5597 = vmul.f32 %v5557, %v5582
    %v5598 = vmul.f32 %v5558, %v5584
    %v5599 = vmul.f32 %v5559, %v5586
    %v5600 = vmul.f32 %v5560, %v5588
    %v5601 = vmul.f32 %v5561, %v5590
    %v5602 = vmul.f32 %v5562, %v5592
    %v5603 = vmul.f32 %v5563, %v5594
    %v5604 = vmul.f32 %v5564, %v5596
    %v5605 = vsub.f32 1.0, %v5597
    %v5606 = vsub.f32 1.0, %v5598
    %v5607 = vsub.f32 1.0, %v5599
    %v5608 = vsub.f32 1.0, %v5600
    %v5609 = vsub.f32 1.0, %v5601
    %v5610 = vsub.f32 1.0, %v5602
    %v5611 = vsub.f32 1.0, %v5603
    %v5612 = vsub.f32 1.0, %v5604
    %vm5613 = vcmp.ge.f32.partialorder %v5445, 0.0
    %vm5614 = vcmp.ge.f32.partialorder %v5446, 0.0
    %vm5615 = vcmp.ge.f32.partialorder %v5447, 0.0
    %vm5616 = vcmp.ge.f32.partialorder %v5448, 0.0
    %vm5617 = vcmp.ge.f32.partialorder %v5449, 0.0
    %vm5618 = vcmp.ge.f32.partialorder %v5450, 0.0
    %vm5619 = vcmp.ge.f32.partialorder %v5451, 0.0
    %vm5620 = vcmp.ge.f32.partialorder %v5452, 0.0
    %v5621 = vsub.f32 0.0, %v5605
    %v5622 = vsub.f32 0.0, %v5606
    %v5623 = vsub.f32 0.0, %v5607
    %v5624 = vsub.f32 0.0, %v5608
    %v5625 = vsub.f32 0.0, %v5609
    %v5626 = vsub.f32 0.0, %v5610
    %v5627 = vsub.f32 0.0, %v5611
    %v5628 = vsub.f32 0.0, %v5612
    %v5629 = vsel %vm5613, %v5605, %v5621
    %v5630 = vsel %vm5614, %v5606, %v5622
    %v5631 = vsel %vm5615, %v5607, %v5623
    %v5632 = vsel %vm5616, %v5608, %v5624
    %v5633 = vsel %vm5617, %v5609, %v5625
    %v5634 = vsel %vm5618, %v5610, %v5626
    %v5635 = vsel %vm5619, %v5611, %v5627
    %v5636 = vsel %vm5620, %v5612, %v5628
    %v5637 = vmul.f32 %v4931, 0.5
    %v5638 = vmul.f32 %v5004, 0.5
    %v5639 = vmul.f32 %v5077, 0.5
    %v5640 = vmul.f32 %v5150, 0.5
    %v5641 = vmul.f32 %v5223, 0.5
    %v5642 = vmul.f32 %v5296, 0.5
    %v5643 = vmul.f32 %v5369, 0.5
    %v5644 = vmul.f32 %v5442, 0.5
    %v5645 = vadd.f32 %v5629, 1.0
    %v5646 = vadd.f32 %v5630, 1.0
    %v5647 = vadd.f32 %v5631, 1.0
    %v5648 = vadd.f32 %v5632, 1.0
    %v5649 = vadd.f32 %v5633, 1.0
    %v5650 = vadd.f32 %v5634, 1.0
    %v5651 = vadd.f32 %v5635, 1.0
    %v5652 = vadd.f32 %v5636, 1.0
    %v5653 = vmul.f32 %v5637, %v5645
    %v5654 = vmul.f32 %v5638, %v5646
    %v5655 = vmul.f32 %v5639, %v5647
    %v5656 = vmul.f32 %v5640, %v5648
    %v5657 = vmul.f32 %v5641, %v5649
    %v5658 = vmul.f32 %v5642, %v5650
    %v5659 = vmul.f32 %v5643, %v5651
    %v5660 = vmul.f32 %v5644, %v5652
    %v5661 = vld [vmem:[%s11] sm:$0x1]
    %v5663 = vlaneseq
    %v5664 = vshrl.u32 %v5663, 7
    %v5665 = vsub.s32 0, %v5664
    %v5666 = vrot.slane %v5661, %v5665
    %vm5668 = vcmask 523264
    %v5670 = vsel %vm5668, %v5653, 0
    %5672 = vmatprep.subr.mxu0 0.0
    %5673 = vmatpush1.msra.mxu0 %v327
    %5674 = vmatprep.subr.mxu0 0.0
    %5675 = vmatpush1.msra.mxu0 %v328
    %5676 = vmatprep.subr.mxu0 0.0
    %5677 = vmatpush1.msra.mxu0 %v329
    %5678 = vmatprep.subr.mxu0 0.0
    %5679 = vmatpush1.msra.mxu0 %v330
    %5680 = vmatprep.subr.mxu0 0.0
    %5681 = vmatpush1.msra.mxu0 %v331
    %5682 = vmatprep.subr.mxu0 0.0
    %5683 = vmatpush1.msra.mxu0 %v332
    %5684 = vmatprep.subr.mxu0 0.0
    %5685 = vmatpush1.msra.mxu0 %v333
    %5686 = vmatprep.subr.mxu0 0.0
    %5687 = vmatpush1.msra.mxu0 %v334
    %5688 = vmatprep.subr.mxu0 0.0
    %5689 = vmatpush1.msra.mxu0 0.0
    %5690 = vmatprep.subr.mxu0 0.0
    %5691 = vmatpush1.msra.mxu0 0.0
    %5692 = vmatprep.subr.mxu0 0.0
    %5693 = vmatpush1.msra.mxu0 0.0
    %5694 = vmatprep.subr.mxu0 0.0
    %5695 = vmatpush1.msra.mxu0 0.0
    %5696 = vmatprep.subr.mxu0 0.0
    %5697 = vmatpush1.msra.mxu0 0.0
    %5698 = vmatprep.subr.mxu0 0.0
    %5699 = vmatpush1.msra.mxu0 0.0
    %5700 = vmatprep.subr.mxu0 0.0
    %5701 = vmatpush1.msra.mxu0 0.0
    %5702 = vmatprep.subr.mxu0 0.0
    %5703 = vmatpush1.msra.mxu0 0.0
    %5704 = vmatprep.subr.mxu0 0.0
    %5705 = vmatpush1.msra.mxu0 0.0
    %5706 = vmatprep.subr.mxu0 0.0
    %5707 = vmatpush1.msra.mxu0 0.0
    %5708 = vmatprep.subr.mxu0 0.0
    %5709 = vmatpush1.msra.mxu0 0.0
    %5710 = vmatprep.subr.mxu0 0.0
    %5711 = vmatpush1.msra.mxu0 0.0
    %5712 = vmatprep.subr.mxu0 0.0
    %5713 = vmatpush1.msra.mxu0 0.0
    %5714 = vmatprep.subr.mxu0 0.0
    %5715 = vmatpush1.msra.mxu0 0.0
    %5716 = vmatprep.subr.mxu0 0.0
    %5717 = vmatpush1.msra.mxu0 0.0
    %5718 = vmatprep.subr.mxu0 0.0
    %5719 = vmatpush1.msra.mxu0 0.0
    %5720 = vmatprep.subr.mxu0 0.0
    %5721 = vmatpush1.msra.mxu0 0.0
    %5722 = vmatprep.subr.mxu0 0.0
    %5723 = vmatpush1.msra.mxu0 0.0
    %5724 = vmatprep.subr.mxu0 0.0
    %5725 = vmatpush1.msra.mxu0 0.0
    %5726 = vmatprep.subr.mxu0 0.0
    %5727 = vmatpush1.msra.mxu0 0.0
    %5728 = vmatprep.subr.mxu0 0.0
    %5729 = vmatpush1.msra.mxu0 0.0
    %5730 = vmatprep.subr.mxu0 0.0
    %5731 = vmatpush1.msra.mxu0 0.0
    %5732 = vmatprep.subr.mxu0 0.0
    %5733 = vmatpush1.msra.mxu0 0.0
    %5734 = vmatprep.subr.mxu0 0.0
    %5735 = vmatpush1.msra.mxu0 0.0
    %5736 = vmatprep.mubr.f32.mxu0 0.0
    %5737 = vmatmul.mubr.f32.gmra.mrb[0].mxu0 %v5670
    %v5738 = vpop.f32.mrb[0].mxu0
    %v5739 = vadd.f32 %v5666, %v5738
    %v5740 = vpop.f32.mrb[0].mxu0
    %5741 = vdwg.mxu0
    %v5743 = vsel %vm5668, %v5654, 0
    %5745 = vmatprep.subr.mxu0 0.0
    %5746 = vmatpush1.msra.mxu0 %v327
    %5747 = vmatprep.subr.mxu0 0.0
    %5748 = vmatpush1.msra.mxu0 %v328
    %5749 = vmatprep.subr.mxu0 0.0
    %5750 = vmatpush1.msra.mxu0 %v329
    %5751 = vmatprep.subr.mxu0 0.0
    %5752 = vmatpush1.msra.mxu0 %v330
    %5753 = vmatprep.subr.mxu0 0.0
    %5754 = vmatpush1.msra.mxu0 %v331
    %5755 = vmatprep.subr.mxu0 0.0
    %5756 = vmatpush1.msra.mxu0 %v332
    %5757 = vmatprep.subr.mxu0 0.0
    %5758 = vmatpush1.msra.mxu0 %v333
    %5759 = vmatprep.subr.mxu0 0.0
    %5760 = vmatpush1.msra.mxu0 %v334
    %5761 = vmatprep.subr.mxu0 0.0
    %5762 = vmatpush1.msra.mxu0 0.0
    %5763 = vmatprep.subr.mxu0 0.0
    %5764 = vmatpush1.msra.mxu0 0.0
    %5765 = vmatprep.subr.mxu0 0.0
    %5766 = vmatpush1.msra.mxu0 0.0
    %5767 = vmatprep.subr.mxu0 0.0
    %5768 = vmatpush1.msra.mxu0 0.0
    %5769 = vmatprep.subr.mxu0 0.0
    %5770 = vmatpush1.msra.mxu0 0.0
    %5771 = vmatprep.subr.mxu0 0.0
    %5772 = vmatpush1.msra.mxu0 0.0
    %5773 = vmatprep.subr.mxu0 0.0
    %5774 = vmatpush1.msra.mxu0 0.0
    %5775 = vmatprep.subr.mxu0 0.0
    %5776 = vmatpush1.msra.mxu0 0.0
    %5777 = vmatprep.subr.mxu0 0.0
    %5778 = vmatpush1.msra.mxu0 0.0
    %5779 = vmatprep.subr.mxu0 0.0
    %5780 = vmatpush1.msra.mxu0 0.0
    %5781 = vmatprep.subr.mxu0 0.0
    %5782 = vmatpush1.msra.mxu0 0.0
    %5783 = vmatprep.subr.mxu0 0.0
    %5784 = vmatpush1.msra.mxu0 0.0
    %5785 = vmatprep.subr.mxu0 0.0
    %5786 = vmatpush1.msra.mxu0 0.0
    %5787 = vmatprep.subr.mxu0 0.0
    %5788 = vmatpush1.msra.mxu0 0.0
    %5789 = vmatprep.subr.mxu0 0.0
    %5790 = vmatpush1.msra.mxu0 0.0
    %5791 = vmatprep.subr.mxu0 0.0
    %5792 = vmatpush1.msra.mxu0 0.0
    %5793 = vmatprep.subr.mxu0 0.0
    %5794 = vmatpush1.msra.mxu0 0.0
    %5795 = vmatprep.subr.mxu0 0.0
    %5796 = vmatpush1.msra.mxu0 0.0
    %5797 = vmatprep.subr.mxu0 0.0
    %5798 = vmatpush1.msra.mxu0 0.0
    %5799 = vmatprep.subr.mxu0 0.0
    %5800 = vmatpush1.msra.mxu0 0.0
    %5801 = vmatprep.subr.mxu0 0.0
    %5802 = vmatpush1.msra.mxu0 0.0
    %5803 = vmatprep.subr.mxu0 0.0
    %5804 = vmatpush1.msra.mxu0 0.0
    %5805 = vmatprep.subr.mxu0 0.0
    %5806 = vmatpush1.msra.mxu0 0.0
    %5807 = vmatprep.subr.mxu0 0.0
    %5808 = vmatpush1.msra.mxu0 0.0
    %5809 = vmatprep.mubr.f32.mxu0 0.0
    %5810 = vmatmul.mubr.f32.gmra.mrb[0].mxu0 %v5743
    %v5811 = vpop.f32.mrb[0].mxu0
    %v5812 = vadd.f32 %v5666, %v5811
    %v5813 = vpop.f32.mrb[0].mxu0
    %5814 = vdwg.mxu0
    %v5816 = vsel %vm5668, %v5655, 0
    %5818 = vmatprep.subr.mxu0 0.0
    %5819 = vmatpush1.msra.mxu0 %v327
    %5820 = vmatprep.subr.mxu0 0.0
    %5821 = vmatpush1.msra.mxu0 %v328
    %5822 = vmatprep.subr.mxu0 0.0
    %5823 = vmatpush1.msra.mxu0 %v329
    %5824 = vmatprep.subr.mxu0 0.0
    %5825 = vmatpush1.msra.mxu0 %v330
    %5826 = vmatprep.subr.mxu0 0.0
    %5827 = vmatpush1.msra.mxu0 %v331
    %5828 = vmatprep.subr.mxu0 0.0
    %5829 = vmatpush1.msra.mxu0 %v332
    %5830 = vmatprep.subr.mxu0 0.0
    %5831 = vmatpush1.msra.mxu0 %v333
    %5832 = vmatprep.subr.mxu0 0.0
    %5833 = vmatpush1.msra.mxu0 %v334
    %5834 = vmatprep.subr.mxu0 0.0
    %5835 = vmatpush1.msra.mxu0 0.0
    %5836 = vmatprep.subr.mxu0 0.0
    %5837 = vmatpush1.msra.mxu0 0.0
    %5838 = vmatprep.subr.mxu0 0.0
    %5839 = vmatpush1.msra.mxu0 0.0
    %5840 = vmatprep.subr.mxu0 0.0
    %5841 = vmatpush1.msra.mxu0 0.0
    %5842 = vmatprep.subr.mxu0 0.0
    %5843 = vmatpush1.msra.mxu0 0.0
    %5844 = vmatprep.subr.mxu0 0.0
    %5845 = vmatpush1.msra.mxu0 0.0
    %5846 = vmatprep.subr.mxu0 0.0
    %5847 = vmatpush1.msra.mxu0 0.0
    %5848 = vmatprep.subr.mxu0 0.0
    %5849 = vmatpush1.msra.mxu0 0.0
    %5850 = vmatprep.subr.mxu0 0.0
    %5851 = vmatpush1.msra.mxu0 0.0
    %5852 = vmatprep.subr.mxu0 0.0
    %5853 = vmatpush1.msra.mxu0 0.0
    %5854 = vmatprep.subr.mxu0 0.0
    %5855 = vmatpush1.msra.mxu0 0.0
    %5856 = vmatprep.subr.mxu0 0.0
    %5857 = vmatpush1.msra.mxu0 0.0
    %5858 = vmatprep.subr.mxu0 0.0
    %5859 = vmatpush1.msra.mxu0 0.0
    %5860 = vmatprep.subr.mxu0 0.0
    %5861 = vmatpush1.msra.mxu0 0.0
    %5862 = vmatprep.subr.mxu0 0.0
    %5863 = vmatpush1.msra.mxu0 0.0
    %5864 = vmatprep.subr.mxu0 0.0
    %5865 = vmatpush1.msra.mxu0 0.0
    %5866 = vmatprep.subr.mxu0 0.0
    %5867 = vmatpush1.msra.mxu0 0.0
    %5868 = vmatprep.subr.mxu0 0.0
    %5869 = vmatpush1.msra.mxu0 0.0
    %5870 = vmatprep.subr.mxu0 0.0
    %5871 = vmatpush1.msra.mxu0 0.0
    %5872 = vmatprep.subr.mxu0 0.0
    %5873 = vmatpush1.msra.mxu0 0.0
    %5874 = vmatprep.subr.mxu0 0.0
    %5875 = vmatpush1.msra.mxu0 0.0
    %5876 = vmatprep.subr.mxu0 0.0
    %5877 = vmatpush1.msra.mxu0 0.0
    %5878 = vmatprep.subr.mxu0 0.0
    %5879 = vmatpush1.msra.mxu0 0.0
    %5880 = vmatprep.subr.mxu0 0.0
    %5881 = vmatpush1.msra.mxu0 0.0
    %5882 = vmatprep.mubr.f32.mxu0 0.0
    %5883 = vmatmul.mubr.f32.gmra.mrb[0].mxu0 %v5816
    %v5884 = vpop.f32.mrb[0].mxu0
    %v5885 = vadd.f32 %v5666, %v5884
    %v5886 = vpop.f32.mrb[0].mxu0
    %5887 = vdwg.mxu0
    %v5889 = vsel %vm5668, %v5656, 0
    %5891 = vmatprep.subr.mxu0 0.0
    %5892 = vmatpush1.msra.mxu0 %v327
    %5893 = vmatprep.subr.mxu0 0.0
    %5894 = vmatpush1.msra.mxu0 %v328
    %5895 = vmatprep.subr.mxu0 0.0
    %5896 = vmatpush1.msra.mxu0 %v329
    %5897 = vmatprep.subr.mxu0 0.0
    %5898 = vmatpush1.msra.mxu0 %v330
    %5899 = vmatprep.subr.mxu0 0.0
    %5900 = vmatpush1.msra.mxu0 %v331
    %5901 = vmatprep.subr.mxu0 0.0
    %5902 = vmatpush1.msra.mxu0 %v332
    %5903 = vmatprep.subr.mxu0 0.0
    %5904 = vmatpush1.msra.mxu0 %v333
    %5905 = vmatprep.subr.mxu0 0.0
    %5906 = vmatpush1.msra.mxu0 %v334
    %5907 = vmatprep.subr.mxu0 0.0
    %5908 = vmatpush1.msra.mxu0 0.0
    %5909 = vmatprep.subr.mxu0 0.0
    %5910 = vmatpush1.msra.mxu0 0.0
    %5911 = vmatprep.subr.mxu0 0.0
    %5912 = vmatpush1.msra.mxu0 0.0
    %5913 = vmatprep.subr.mxu0 0.0
    %5914 = vmatpush1.msra.mxu0 0.0
    %5915 = vmatprep.subr.mxu0 0.0
    %5916 = vmatpush1.msra.mxu0 0.0
    %5917 = vmatprep.subr.mxu0 0.0
    %5918 = vmatpush1.msra.mxu0 0.0
    %5919 = vmatprep.subr.mxu0 0.0
    %5920 = vmatpush1.msra.mxu0 0.0
    %5921 = vmatprep.subr.mxu0 0.0
    %5922 = vmatpush1.msra.mxu0 0.0
    %5923 = vmatprep.subr.mxu0 0.0
    %5924 = vmatpush1.msra.mxu0 0.0
    %5925 = vmatprep.subr.mxu0 0.0
    %5926 = vmatpush1.msra.mxu0 0.0
    %5927 = vmatprep.subr.mxu0 0.0
    %5928 = vmatpush1.msra.mxu0 0.0
    %5929 = vmatprep.subr.mxu0 0.0
    %5930 = vmatpush1.msra.mxu0 0.0
    %5931 = vmatprep.subr.mxu0 0.0
    %5932 = vmatpush1.msra.mxu0 0.0
    %5933 = vmatprep.subr.mxu0 0.0
    %5934 = vmatpush1.msra.mxu0 0.0
    %5935 = vmatprep.subr.mxu0 0.0
    %5936 = vmatpush1.msra.mxu0 0.0
    %5937 = vmatprep.subr.mxu0 0.0
    %5938 = vmatpush1.msra.mxu0 0.0
    %5939 = vmatprep.subr.mxu0 0.0
    %5940 = vmatpush1.msra.mxu0 0.0
    %5941 = vmatprep.subr.mxu0 0.0
    %5942 = vmatpush1.msra.mxu0 0.0
    %5943 = vmatprep.subr.mxu0 0.0
    %5944 = vmatpush1.msra.mxu0 0.0
    %5945 = vmatprep.subr.mxu0 0.0
    %5946 = vmatpush1.msra.mxu0 0.0
    %5947 = vmatprep.subr.mxu0 0.0
    %5948 = vmatpush1.msra.mxu0 0.0
    %5949 = vmatprep.subr.mxu0 0.0
    %5950 = vmatpush1.msra.mxu0 0.0
    %5951 = vmatprep.subr.mxu0 0.0
    %5952 = vmatpush1.msra.mxu0 0.0
    %5953 = vmatprep.subr.mxu0 0.0
    %5954 = vmatpush1.msra.mxu0 0.0
    %5955 = vmatprep.mubr.f32.mxu0 0.0
    %5956 = vmatmul.mubr.f32.gmra.mrb[0].mxu0 %v5889
    %v5957 = vpop.f32.mrb[0].mxu0
    %v5958 = vadd.f32 %v5666, %v5957
    %v5959 = vpop.f32.mrb[0].mxu0
    %5960 = vdwg.mxu0
    %v5962 = vsel %vm5668, %v5657, 0
    %5964 = vmatprep.subr.mxu0 0.0
    %5965 = vmatpush1.msra.mxu0 %v327
    %5966 = vmatprep.subr.mxu0 0.0
    %5967 = vmatpush1.msra.mxu0 %v328
    %5968 = vmatprep.subr.mxu0 0.0
    %5969 = vmatpush1.msra.mxu0 %v329
    %5970 = vmatprep.subr.mxu0 0.0
    %5971 = vmatpush1.msra.mxu0 %v330
    %5972 = vmatprep.subr.mxu0 0.0
    %5973 = vmatpush1.msra.mxu0 %v331
    %5974 = vmatprep.subr.mxu0 0.0
    %5975 = vmatpush1.msra.mxu0 %v332
    %5976 = vmatprep.subr.mxu0 0.0
    %5977 = vmatpush1.msra.mxu0 %v333
    %5978 = vmatprep.subr.mxu0 0.0
    %5979 = vmatpush1.msra.mxu0 %v334
    %5980 = vmatprep.subr.mxu0 0.0
    %5981 = vmatpush1.msra.mxu0 0.0
    %5982 = vmatprep.subr.mxu0 0.0
    %5983 = vmatpush1.msra.mxu0 0.0
    %5984 = vmatprep.subr.mxu0 0.0
    %5985 = vmatpush1.msra.mxu0 0.0
    %5986 = vmatprep.subr.mxu0 0.0
    %5987 = vmatpush1.msra.mxu0 0.0
    %5988 = vmatprep.subr.mxu0 0.0
    %5989 = vmatpush1.msra.mxu0 0.0
    %5990 = vmatprep.subr.mxu0 0.0
    %5991 = vmatpush1.msra.mxu0 0.0
    %5992 = vmatprep.subr.mxu0 0.0
    %5993 = vmatpush1.msra.mxu0 0.0
    %5994 = vmatprep.subr.mxu0 0.0
    %5995 = vmatpush1.msra.mxu0 0.0
    %5996 = vmatprep.subr.mxu0 0.0
    %5997 = vmatpush1.msra.mxu0 0.0
    %5998 = vmatprep.subr.mxu0 0.0
    %5999 = vmatpush1.msra.mxu0 0.0
    %6000 = vmatprep.subr.mxu0 0.0
    %6001 = vmatpush1.msra.mxu0 0.0
    %6002 = vmatprep.subr.mxu0 0.0
    %6003 = vmatpush1.msra.mxu0 0.0
    %6004 = vmatprep.subr.mxu0 0.0
    %6005 = vmatpush1.msra.mxu0 0.0
    %6006 = vmatprep.subr.mxu0 0.0
    %6007 = vmatpush1.msra.mxu0 0.0
    %6008 = vmatprep.subr.mxu0 0.0
    %6009 = vmatpush1.msra.mxu0 0.0
    %6010 = vmatprep.subr.mxu0 0.0
    %6011 = vmatpush1.msra.mxu0 0.0
    %6012 = vmatprep.subr.mxu0 0.0
    %6013 = vmatpush1.msra.mxu0 0.0
    %6014 = vmatprep.subr.mxu0 0.0
    %6015 = vmatpush1.msra.mxu0 0.0
    %6016 = vmatprep.subr.mxu0 0.0
    %6017 = vmatpush1.msra.mxu0 0.0
    %6018 = vmatprep.subr.mxu0 0.0
    %6019 = vmatpush1.msra.mxu0 0.0
    %6020 = vmatprep.subr.mxu0 0.0
    %6021 = vmatpush1.msra.mxu0 0.0
    %6022 = vmatprep.subr.mxu0 0.0
    %6023 = vmatpush1.msra.mxu0 0.0
    %6024 = vmatprep.subr.mxu0 0.0
    %6025 = vmatpush1.msra.mxu0 0.0
    %6026 = vmatprep.subr.mxu0 0.0
    %6027 = vmatpush1.msra.mxu0 0.0
    %6028 = vmatprep.mubr.f32.mxu0 0.0
    %6029 = vmatmul.mubr.f32.gmra.mrb[0].mxu0 %v5962
    %v6030 = vpop.f32.mrb[0].mxu0
    %v6031 = vadd.f32 %v5666, %v6030
    %v6032 = vpop.f32.mrb[0].mxu0
    %6033 = vdwg.mxu0
    %v6035 = vsel %vm5668, %v5658, 0
    %6037 = vmatprep.subr.mxu0 0.0
    %6038 = vmatpush1.msra.mxu0 %v327
    %6039 = vmatprep.subr.mxu0 0.0
    %6040 = vmatpush1.msra.mxu0 %v328
    %6041 = vmatprep.subr.mxu0 0.0
    %6042 = vmatpush1.msra.mxu0 %v329
    %6043 = vmatprep.subr.mxu0 0.0
    %6044 = vmatpush1.msra.mxu0 %v330
    %6045 = vmatprep.subr.mxu0 0.0
    %6046 = vmatpush1.msra.mxu0 %v331
    %6047 = vmatprep.subr.mxu0 0.0
    %6048 = vmatpush1.msra.mxu0 %v332
    %6049 = vmatprep.subr.mxu0 0.0
    %6050 = vmatpush1.msra.mxu0 %v333
    %6051 = vmatprep.subr.mxu0 0.0
    %6052 = vmatpush1.msra.mxu0 %v334
    %6053 = vmatprep.subr.mxu0 0.0
    %6054 = vmatpush1.msra.mxu0 0.0
    %6055 = vmatprep.subr.mxu0 0.0
    %6056 = vmatpush1.msra.mxu0 0.0
    %6057 = vmatprep.subr.mxu0 0.0
    %6058 = vmatpush1.msra.mxu0 0.0
    %6059 = vmatprep.subr.mxu0 0.0
    %6060 = vmatpush1.msra.mxu0 0.0
    %6061 = vmatprep.subr.mxu0 0.0
    %6062 = vmatpush1.msra.mxu0 0.0
    %6063 = vmatprep.subr.mxu0 0.0
    %6064 = vmatpush1.msra.mxu0 0.0
    %6065 = vmatprep.subr.mxu0 0.0
    %6066 = vmatpush1.msra.mxu0 0.0
    %6067 = vmatprep.subr.mxu0 0.0
    %6068 = vmatpush1.msra.mxu0 0.0
    %6069 = vmatprep.subr.mxu0 0.0
    %6070 = vmatpush1.msra.mxu0 0.0
    %6071 = vmatprep.subr.mxu0 0.0
    %6072 = vmatpush1.msra.mxu0 0.0
    %6073 = vmatprep.subr.mxu0 0.0
    %6074 = vmatpush1.msra.mxu0 0.0
    %6075 = vmatprep.subr.mxu0 0.0
    %6076 = vmatpush1.msra.mxu0 0.0
    %6077 = vmatprep.subr.mxu0 0.0
    %6078 = vmatpush1.msra.mxu0 0.0
    %6079 = vmatprep.subr.mxu0 0.0
    %6080 = vmatpush1.msra.mxu0 0.0
    %6081 = vmatprep.subr.mxu0 0.0
    %6082 = vmatpush1.msra.mxu0 0.0
    %6083 = vmatprep.subr.mxu0 0.0
    %6084 = vmatpush1.msra.mxu0 0.0
    %6085 = vmatprep.subr.mxu0 0.0
    %6086 = vmatpush1.msra.mxu0 0.0
    %6087 = vmatprep.subr.mxu0 0.0
    %6088 = vmatpush1.msra.mxu0 0.0
    %6089 = vmatprep.subr.mxu0 0.0
    %6090 = vmatpush1.msra.mxu0 0.0
    %6091 = vmatprep.subr.mxu0 0.0
    %6092 = vmatpush1.msra.mxu0 0.0
    %6093 = vmatprep.subr.mxu0 0.0
    %6094 = vmatpush1.msra.mxu0 0.0
    %6095 = vmatprep.subr.mxu0 0.0
    %6096 = vmatpush1.msra.mxu0 0.0
    %6097 = vmatprep.subr.mxu0 0.0
    %6098 = vmatpush1.msra.mxu0 0.0
    %6099 = vmatprep.subr.mxu0 0.0
    %6100 = vmatpush1.msra.mxu0 0.0
    %6101 = vmatprep.mubr.f32.mxu0 0.0
    %6102 = vmatmul.mubr.f32.gmra.mrb[0].mxu0 %v6035
    %v6103 = vpop.f32.mrb[0].mxu0
    %v6104 = vadd.f32 %v5666, %v6103
    %v6105 = vpop.f32.mrb[0].mxu0
    %6106 = vdwg.mxu0
    %v6108 = vsel %vm5668, %v5659, 0
    %6110 = vmatprep.subr.mxu0 0.0
    %6111 = vmatpush1.msra.mxu0 %v327
    %6112 = vmatprep.subr.mxu0 0.0
    %6113 = vmatpush1.msra.mxu0 %v328
    %6114 = vmatprep.subr.mxu0 0.0
    %6115 = vmatpush1.msra.mxu0 %v329
    %6116 = vmatprep.subr.mxu0 0.0
    %6117 = vmatpush1.msra.mxu0 %v330
    %6118 = vmatprep.subr.mxu0 0.0
    %6119 = vmatpush1.msra.mxu0 %v331
    %6120 = vmatprep.subr.mxu0 0.0
    %6121 = vmatpush1.msra.mxu0 %v332
    %6122 = vmatprep.subr.mxu0 0.0
    %6123 = vmatpush1.msra.mxu0 %v333
    %6124 = vmatprep.subr.mxu0 0.0
    %6125 = vmatpush1.msra.mxu0 %v334
    %6126 = vmatprep.subr.mxu0 0.0
    %6127 = vmatpush1.msra.mxu0 0.0
    %6128 = vmatprep.subr.mxu0 0.0
    %6129 = vmatpush1.msra.mxu0 0.0
    %6130 = vmatprep.subr.mxu0 0.0
    %6131 = vmatpush1.msra.mxu0 0.0
    %6132 = vmatprep.subr.mxu0 0.0
    %6133 = vmatpush1.msra.mxu0 0.0
    %6134 = vmatprep.subr.mxu0 0.0
    %6135 = vmatpush1.msra.mxu0 0.0
    %6136 = vmatprep.subr.mxu0 0.0
    %6137 = vmatpush1.msra.mxu0 0.0
    %6138 = vmatprep.subr.mxu0 0.0
    %6139 = vmatpush1.msra.mxu0 0.0
    %6140 = vmatprep.subr.mxu0 0.0
    %6141 = vmatpush1.msra.mxu0 0.0
    %6142 = vmatprep.subr.mxu0 0.0
    %6143 = vmatpush1.msra.mxu0 0.0
    %6144 = vmatprep.subr.mxu0 0.0
    %6145 = vmatpush1.msra.mxu0 0.0
    %6146 = vmatprep.subr.mxu0 0.0
    %6147 = vmatpush1.msra.mxu0 0.0
    %6148 = vmatprep.subr.mxu0 0.0
    %6149 = vmatpush1.msra.mxu0 0.0
    %6150 = vmatprep.subr.mxu0 0.0
    %6151 = vmatpush1.msra.mxu0 0.0
    %6152 = vmatprep.subr.mxu0 0.0
    %6153 = vmatpush1.msra.mxu0 0.0
    %6154 = vmatprep.subr.mxu0 0.0
    %6155 = vmatpush1.msra.mxu0 0.0
    %6156 = vmatprep.subr.mxu0 0.0
    %6157 = vmatpush1.msra.mxu0 0.0
    %6158 = vmatprep.subr.mxu0 0.0
    %6159 = vmatpush1.msra.mxu0 0.0
    %6160 = vmatprep.subr.mxu0 0.0
    %6161 = vmatpush1.msra.mxu0 0.0
    %6162 = vmatprep.subr.mxu0 0.0
    %6163 = vmatpush1.msra.mxu0 0.0
    %6164 = vmatprep.subr.mxu0 0.0
    %6165 = vmatpush1.msra.mxu0 0.0
    %6166 = vmatprep.subr.mxu0 0.0
    %6167 = vmatpush1.msra.mxu0 0.0
    %6168 = vmatprep.subr.mxu0 0.0
    %6169 = vmatpush1.msra.mxu0 0.0
    %6170 = vmatprep.subr.mxu0 0.0
    %6171 = vmatpush1.msra.mxu0 0.0
    %6172 = vmatprep.subr.mxu0 0.0
    %6173 = vmatpush1.msra.mxu0 0.0
    %6174 = vmatprep.mubr.f32.mxu0 0.0
    %6175 = vmatmul.mubr.f32.gmra.mrb[0].mxu0 %v6108
    %v6176 = vpop.f32.mrb[0].mxu0
    %v6177 = vadd.f32 %v5666, %v6176
    %v6178 = vpop.f32.mrb[0].mxu0
    %6179 = vdwg.mxu0
    %v6181 = vsel %vm5668, %v5660, 0
    %6183 = vmatprep.subr.mxu0 0.0
    %6184 = vmatpush1.msra.mxu0 %v327
    %6185 = vmatprep.subr.mxu0 0.0
    %6186 = vmatpush1.msra.mxu0 %v328
    %6187 = vmatprep.subr.mxu0 0.0
    %6188 = vmatpush1.msra.mxu0 %v329
    %6189 = vmatprep.subr.mxu0 0.0
    %6190 = vmatpush1.msra.mxu0 %v330
    %6191 = vmatprep.subr.mxu0 0.0
    %6192 = vmatpush1.msra.mxu0 %v331
    %6193 = vmatprep.subr.mxu0 0.0
    %6194 = vmatpush1.msra.mxu0 %v332
    %6195 = vmatprep.subr.mxu0 0.0
    %6196 = vmatpush1.msra.mxu0 %v333
    %6197 = vmatprep.subr.mxu0 0.0
    %6198 = vmatpush1.msra.mxu0 %v334
    %6199 = vmatprep.subr.mxu0 0.0
    %6200 = vmatpush1.msra.mxu0 0.0
    %6201 = vmatprep.subr.mxu0 0.0
    %6202 = vmatpush1.msra.mxu0 0.0
    %6203 = vmatprep.subr.mxu0 0.0
    %6204 = vmatpush1.msra.mxu0 0.0
    %6205 = vmatprep.subr.mxu0 0.0
    %6206 = vmatpush1.msra.mxu0 0.0
    %6207 = vmatprep.subr.mxu0 0.0
    %6208 = vmatpush1.msra.mxu0 0.0
    %6209 = vmatprep.subr.mxu0 0.0
    %6210 = vmatpush1.msra.mxu0 0.0
    %6211 = vmatprep.subr.mxu0 0.0
    %6212 = vmatpush1.msra.mxu0 0.0
    %6213 = vmatprep.subr.mxu0 0.0
    %6214 = vmatpush1.msra.mxu0 0.0
    %6215 = vmatprep.subr.mxu0 0.0
    %6216 = vmatpush1.msra.mxu0 0.0
    %6217 = vmatprep.subr.mxu0 0.0
    %6218 = vmatpush1.msra.mxu0 0.0
    %6219 = vmatprep.subr.mxu0 0.0
    %6220 = vmatpush1.msra.mxu0 0.0
    %6221 = vmatprep.subr.mxu0 0.0
    %6222 = vmatpush1.msra.mxu0 0.0
    %6223 = vmatprep.subr.mxu0 0.0
    %6224 = vmatpush1.msra.mxu0 0.0
    %6225 = vmatprep.subr.mxu0 0.0
    %6226 = vmatpush1.msra.mxu0 0.0
    %6227 = vmatprep.subr.mxu0 0.0
    %6228 = vmatpush1.msra.mxu0 0.0
    %6229 = vmatprep.subr.mxu0 0.0
    %6230 = vmatpush1.msra.mxu0 0.0
    %6231 = vmatprep.subr.mxu0 0.0
    %6232 = vmatpush1.msra.mxu0 0.0
    %6233 = vmatprep.subr.mxu0 0.0
    %6234 = vmatpush1.msra.mxu0 0.0
    %6235 = vmatprep.subr.mxu0 0.0
    %6236 = vmatpush1.msra.mxu0 0.0
    %6237 = vmatprep.subr.mxu0 0.0
    %6238 = vmatpush1.msra.mxu0 0.0
    %6239 = vmatprep.subr.mxu0 0.0
    %6240 = vmatpush1.msra.mxu0 0.0
    %6241 = vmatprep.subr.mxu0 0.0
    %6242 = vmatpush1.msra.mxu0 0.0
    %6243 = vmatprep.subr.mxu0 0.0
    %6244 = vmatpush1.msra.mxu0 0.0
    %6245 = vmatprep.subr.mxu0 0.0
    %6246 = vmatpush1.msra.mxu0 0.0
    %6247 = vmatprep.mubr.f32.mxu0 0.0
    %6248 = vmatmul.mubr.f32.gmra.mrb[0].mxu0 %v6181
    %v6249 = vpop.f32.mrb[0].mxu0
    %v6250 = vadd.f32 %v5666, %v6249
    %v6251 = vpop.f32.mrb[0].mxu0
    %6252 = vdwg.mxu0
    %v6253 = vadd.f32 %v4846, %v5739
    %v6254 = vadd.f32 %v4847, %v5812
    %v6255 = vadd.f32 %v4848, %v5885
    %v6256 = vadd.f32 %v4849, %v5958
    %v6257 = vadd.f32 %v4850, %v6031
    %v6258 = vadd.f32 %v4851, %v6104
    %v6259 = vadd.f32 %v4852, %v6177
    %v6260 = vadd.f32 %v4853, %v6250
    %v6261 = vmul.f32 %v6253, 0.999995
    %v6262 = vmul.f32 %v6254, 0.999995
    %v6263 = vmul.f32 %v6255, 0.999995
    %v6264 = vmul.f32 %v6256, 0.999995
    %v6265 = vmul.f32 %v6257, 0.999995
    %v6266 = vmul.f32 %v6258, 0.999995
    %v6267 = vmul.f32 %v6259, 0.999995
    %v6268 = vmul.f32 %v6260, 0.999995
    %s6269 = scalar_lea.vmem %s5, 1
    %v6270 = vld [vmem:[%s6269] sm:$0x1]
    %v6272 = vlaneseq
    %v6273 = vshrl.u32 %v6272, 7
    %v6274 = vsub.s32 0, %v6273
    %v6275 = vrot.slane %v6270, %v6274
    %v6278 = vsel %vm955, %v6261, 0
    %6280 = vmatprep.subr.mxu0 0.0
    %6281 = vmatpush1.msra.mxu0 %v305
    %6282 = vmatprep.subr.mxu0 0.0
    %6283 = vmatpush1.msra.mxu0 %v306
    %6284 = vmatprep.subr.mxu0 0.0
    %6285 = vmatpush1.msra.mxu0 %v307
    %6286 = vmatprep.subr.mxu0 0.0
    %6287 = vmatpush1.msra.mxu0 %v308
    %6288 = vmatprep.subr.mxu0 0.0
    %6289 = vmatpush1.msra.mxu0 0.0
    %6290 = vmatprep.subr.mxu0 0.0
    %6291 = vmatpush1.msra.mxu0 0.0
    %6292 = vmatprep.subr.mxu0 0.0
    %6293 = vmatpush1.msra.mxu0 0.0
    %6294 = vmatprep.subr.mxu0 0.0
    %6295 = vmatpush1.msra.mxu0 0.0
    %6296 = vmatprep.subr.mxu0 0.0
    %6297 = vmatpush1.msra.mxu0 0.0
    %6298 = vmatprep.subr.mxu0 0.0
    %6299 = vmatpush1.msra.mxu0 0.0
    %6300 = vmatprep.subr.mxu0 0.0
    %6301 = vmatpush1.msra.mxu0 0.0
    %6302 = vmatprep.subr.mxu0 0.0
    %6303 = vmatpush1.msra.mxu0 0.0
    %6304 = vmatprep.subr.mxu0 0.0
    %6305 = vmatpush1.msra.mxu0 0.0
    %6306 = vmatprep.subr.mxu0 0.0
    %6307 = vmatpush1.msra.mxu0 0.0
    %6308 = vmatprep.subr.mxu0 0.0
    %6309 = vmatpush1.msra.mxu0 0.0
    %6310 = vmatprep.subr.mxu0 0.0
    %6311 = vmatpush1.msra.mxu0 0.0
    %6312 = vmatprep.subr.mxu0 0.0
    %6313 = vmatpush1.msra.mxu0 0.0
    %6314 = vmatprep.subr.mxu0 0.0
    %6315 = vmatpush1.msra.mxu0 0.0
    %6316 = vmatprep.subr.mxu0 0.0
    %6317 = vmatpush1.msra.mxu0 0.0
    %6318 = vmatprep.subr.mxu0 0.0
    %6319 = vmatpush1.msra.mxu0 0.0
    %6320 = vmatprep.subr.mxu0 0.0
    %6321 = vmatpush1.msra.mxu0 0.0
    %6322 = vmatprep.subr.mxu0 0.0
    %6323 = vmatpush1.msra.mxu0 0.0
    %6324 = vmatprep.subr.mxu0 0.0
    %6325 = vmatpush1.msra.mxu0 0.0
    %6326 = vmatprep.subr.mxu0 0.0
    %6327 = vmatpush1.msra.mxu0 0.0
    %6328 = vmatprep.subr.mxu0 0.0
    %6329 = vmatpush1.msra.mxu0 0.0
    %6330 = vmatprep.subr.mxu0 0.0
    %6331 = vmatpush1.msra.mxu0 0.0
    %6332 = vmatprep.subr.mxu0 0.0
    %6333 = vmatpush1.msra.mxu0 0.0
    %6334 = vmatprep.subr.mxu0 0.0
    %6335 = vmatpush1.msra.mxu0 0.0
    %6336 = vmatprep.subr.mxu0 0.0
    %6337 = vmatpush1.msra.mxu0 0.0
    %6338 = vmatprep.subr.mxu0 0.0
    %6339 = vmatpush1.msra.mxu0 0.0
    %6340 = vmatprep.subr.mxu0 0.0
    %6341 = vmatpush1.msra.mxu0 0.0
    %6342 = vmatprep.subr.mxu0 0.0
    %6343 = vmatpush1.msra.mxu0 0.0
    %6344 = vmatprep.mubr.f32.mxu0 0.0
    %6345 = vmatmul.mubr.f32.gmra.mrb[0].mxu0 %v6278
    %v6346 = vpop.f32.mrb[0].mxu0
    %v6347 = vadd.f32 %v6275, %v6346
    %v6348 = vpop.f32.mrb[0].mxu0
    %6349 = vdwg.mxu0
    %v6351 = vsel %vm955, %v6262, 0
    %6353 = vmatprep.subr.mxu0 0.0
    %6354 = vmatpush1.msra.mxu0 %v305
    %6355 = vmatprep.subr.mxu0 0.0
    %6356 = vmatpush1.msra.mxu0 %v306
    %6357 = vmatprep.subr.mxu0 0.0
    %6358 = vmatpush1.msra.mxu0 %v307
    %6359 = vmatprep.subr.mxu0 0.0
    %6360 = vmatpush1.msra.mxu0 %v308
    %6361 = vmatprep.subr.mxu0 0.0
    %6362 = vmatpush1.msra.mxu0 0.0
    %6363 = vmatprep.subr.mxu0 0.0
    %6364 = vmatpush1.msra.mxu0 0.0
    %6365 = vmatprep.subr.mxu0 0.0
    %6366 = vmatpush1.msra.mxu0 0.0
    %6367 = vmatprep.subr.mxu0 0.0
    %6368 = vmatpush1.msra.mxu0 0.0
    %6369 = vmatprep.subr.mxu0 0.0
    %6370 = vmatpush1.msra.mxu0 0.0
    %6371 = vmatprep.subr.mxu0 0.0
    %6372 = vmatpush1.msra.mxu0 0.0
    %6373 = vmatprep.subr.mxu0 0.0
    %6374 = vmatpush1.msra.mxu0 0.0
    %6375 = vmatprep.subr.mxu0 0.0
    %6376 = vmatpush1.msra.mxu0 0.0
    %6377 = vmatprep.subr.mxu0 0.0
    %6378 = vmatpush1.msra.mxu0 0.0
    %6379 = vmatprep.subr.mxu0 0.0
    %6380 = vmatpush1.msra.mxu0 0.0
    %6381 = vmatprep.subr.mxu0 0.0
    %6382 = vmatpush1.msra.mxu0 0.0
    %6383 = vmatprep.subr.mxu0 0.0
    %6384 = vmatpush1.msra.mxu0 0.0
    %6385 = vmatprep.subr.mxu0 0.0
    %6386 = vmatpush1.msra.mxu0 0.0
    %6387 = vmatprep.subr.mxu0 0.0
    %6388 = vmatpush1.msra.mxu0 0.0
    %6389 = vmatprep.subr.mxu0 0.0
    %6390 = vmatpush1.msra.mxu0 0.0
    %6391 = vmatprep.subr.mxu0 0.0
    %6392 = vmatpush1.msra.mxu0 0.0
    %6393 = vmatprep.subr.mxu0 0.0
    %6394 = vmatpush1.msra.mxu0 0.0
    %6395 = vmatprep.subr.mxu0 0.0
    %6396 = vmatpush1.msra.mxu0 0.0
    %6397 = vmatprep.subr.mxu0 0.0
    %6398 = vmatpush1.msra.mxu0 0.0
    %6399 = vmatprep.subr.mxu0 0.0
    %6400 = vmatpush1.msra.mxu0 0.0
    %6401 = vmatprep.subr.mxu0 0.0
    %6402 = vmatpush1.msra.mxu0 0.0
    %6403 = vmatprep.subr.mxu0 0.0
    %6404 = vmatpush1.msra.mxu0 0.0
    %6405 = vmatprep.subr.mxu0 0.0
    %6406 = vmatpush1.msra.mxu0 0.0
    %6407 = vmatprep.subr.mxu0 0.0
    %6408 = vmatpush1.msra.mxu0 0.0
    %6409 = vmatprep.subr.mxu0 0.0
    %6410 = vmatpush1.msra.mxu0 0.0
    %6411 = vmatprep.subr.mxu0 0.0
    %6412 = vmatpush1.msra.mxu0 0.0
    %6413 = vmatprep.subr.mxu0 0.0
    %6414 = vmatpush1.msra.mxu0 0.0
    %6415 = vmatprep.subr.mxu0 0.0
    %6416 = vmatpush1.msra.mxu0 0.0
    %6417 = vmatprep.mubr.f32.mxu0 0.0
    %6418 = vmatmul.mubr.f32.gmra.mrb[0].mxu0 %v6351
    %v6419 = vpop.f32.mrb[0].mxu0
    %v6420 = vadd.f32 %v6275, %v6419
    %v6421 = vpop.f32.mrb[0].mxu0
    %6422 = vdwg.mxu0
    %v6424 = vsel %vm955, %v6263, 0
    %6426 = vmatprep.subr.mxu0 0.0
    %6427 = vmatpush1.msra.mxu0 %v305
    %6428 = vmatprep.subr.mxu0 0.0
    %6429 = vmatpush1.msra.mxu0 %v306
    %6430 = vmatprep.subr.mxu0 0.0
    %6431 = vmatpush1.msra.mxu0 %v307
    %6432 = vmatprep.subr.mxu0 0.0
    %6433 = vmatpush1.msra.mxu0 %v308
    %6434 = vmatprep.subr.mxu0 0.0
    %6435 = vmatpush1.msra.mxu0 0.0
    %6436 = vmatprep.subr.mxu0 0.0
    %6437 = vmatpush1.msra.mxu0 0.0
    %6438 = vmatprep.subr.mxu0 0.0
    %6439 = vmatpush1.msra.mxu0 0.0
    %6440 = vmatprep.subr.mxu0 0.0
    %6441 = vmatpush1.msra.mxu0 0.0
    %6442 = vmatprep.subr.mxu0 0.0
    %6443 = vmatpush1.msra.mxu0 0.0
    %6444 = vmatprep.subr.mxu0 0.0
    %6445 = vmatpush1.msra.mxu0 0.0
    %6446 = vmatprep.subr.mxu0 0.0
    %6447 = vmatpush1.msra.mxu0 0.0
    %6448 = vmatprep.subr.mxu0 0.0
    %6449 = vmatpush1.msra.mxu0 0.0
    %6450 = vmatprep.subr.mxu0 0.0
    %6451 = vmatpush1.msra.mxu0 0.0
    %6452 = vmatprep.subr.mxu0 0.0
    %6453 = vmatpush1.msra.mxu0 0.0
    %6454 = vmatprep.subr.mxu0 0.0
    %6455 = vmatpush1.msra.mxu0 0.0
    %6456 = vmatprep.subr.mxu0 0.0
    %6457 = vmatpush1.msra.mxu0 0.0
    %6458 = vmatprep.subr.mxu0 0.0
    %6459 = vmatpush1.msra.mxu0 0.0
    %6460 = vmatprep.subr.mxu0 0.0
    %6461 = vmatpush1.msra.mxu0 0.0
    %6462 = vmatprep.subr.mxu0 0.0
    %6463 = vmatpush1.msra.mxu0 0.0
    %6464 = vmatprep.subr.mxu0 0.0
    %6465 = vmatpush1.msra.mxu0 0.0
    %6466 = vmatprep.subr.mxu0 0.0
    %6467 = vmatpush1.msra.mxu0 0.0
    %6468 = vmatprep.subr.mxu0 0.0
    %6469 = vmatpush1.msra.mxu0 0.0
    %6470 = vmatprep.subr.mxu0 0.0
    %6471 = vmatpush1.msra.mxu0 0.0
    %6472 = vmatprep.subr.mxu0 0.0
    %6473 = vmatpush1.msra.mxu0 0.0
    %6474 = vmatprep.subr.mxu0 0.0
    %6475 = vmatpush1.msra.mxu0 0.0
    %6476 = vmatprep.subr.mxu0 0.0
    %6477 = vmatpush1.msra.mxu0 0.0
    %6478 = vmatprep.subr.mxu0 0.0
    %6479 = vmatpush1.msra.mxu0 0.0
    %6480 = vmatprep.subr.mxu0 0.0
    %6481 = vmatpush1.msra.mxu0 0.0
    %6482 = vmatprep.subr.mxu0 0.0
    %6483 = vmatpush1.msra.mxu0 0.0
    %6484 = vmatprep.subr.mxu0 0.0
    %6485 = vmatpush1.msra.mxu0 0.0
    %6486 = vmatprep.subr.mxu0 0.0
    %6487 = vmatpush1.msra.mxu0 0.0
    %6488 = vmatprep.subr.mxu0 0.0
    %6489 = vmatpush1.msra.mxu0 0.0
    %6490 = vmatprep.mubr.f32.mxu0 0.0
    %6491 = vmatmul.mubr.f32.gmra.mrb[0].mxu0 %v6424
    %v6492 = vpop.f32.mrb[0].mxu0
    %v6493 = vadd.f32 %v6275, %v6492
    %v6494 = vpop.f32.mrb[0].mxu0
    %6495 = vdwg.mxu0
    %v6497 = vsel %vm955, %v6264, 0
    %6499 = vmatprep.subr.mxu0 0.0
    %6500 = vmatpush1.msra.mxu0 %v305
    %6501 = vmatprep.subr.mxu0 0.0
    %6502 = vmatpush1.msra.mxu0 %v306
    %6503 = vmatprep.subr.mxu0 0.0
    %6504 = vmatpush1.msra.mxu0 %v307
    %6505 = vmatprep.subr.mxu0 0.0
    %6506 = vmatpush1.msra.mxu0 %v308
    %6507 = vmatprep.subr.mxu0 0.0
    %6508 = vmatpush1.msra.mxu0 0.0
    %6509 = vmatprep.subr.mxu0 0.0
    %6510 = vmatpush1.msra.mxu0 0.0
    %6511 = vmatprep.subr.mxu0 0.0
    %6512 = vmatpush1.msra.mxu0 0.0
    %6513 = vmatprep.subr.mxu0 0.0
    %6514 = vmatpush1.msra.mxu0 0.0
    %6515 = vmatprep.subr.mxu0 0.0
    %6516 = vmatpush1.msra.mxu0 0.0
    %6517 = vmatprep.subr.mxu0 0.0
    %6518 = vmatpush1.msra.mxu0 0.0
    %6519 = vmatprep.subr.mxu0 0.0
    %6520 = vmatpush1.msra.mxu0 0.0
    %6521 = vmatprep.subr.mxu0 0.0
    %6522 = vmatpush1.msra.mxu0 0.0
    %6523 = vmatprep.subr.mxu0 0.0
    %6524 = vmatpush1.msra.mxu0 0.0
    %6525 = vmatprep.subr.mxu0 0.0
    %6526 = vmatpush1.msra.mxu0 0.0
    %6527 = vmatprep.subr.mxu0 0.0
    %6528 = vmatpush1.msra.mxu0 0.0
    %6529 = vmatprep.subr.mxu0 0.0
    %6530 = vmatpush1.msra.mxu0 0.0
    %6531 = vmatprep.subr.mxu0 0.0
    %6532 = vmatpush1.msra.mxu0 0.0
    %6533 = vmatprep.subr.mxu0 0.0
    %6534 = vmatpush1.msra.mxu0 0.0
    %6535 = vmatprep.subr.mxu0 0.0
    %6536 = vmatpush1.msra.mxu0 0.0
    %6537 = vmatprep.subr.mxu0 0.0
    %6538 = vmatpush1.msra.mxu0 0.0
    %6539 = vmatprep.subr.mxu0 0.0
    %6540 = vmatpush1.msra.mxu0 0.0
    %6541 = vmatprep.subr.mxu0 0.0
    %6542 = vmatpush1.msra.mxu0 0.0
    %6543 = vmatprep.subr.mxu0 0.0
    %6544 = vmatpush1.msra.mxu0 0.0
    %6545 = vmatprep.subr.mxu0 0.0
    %6546 = vmatpush1.msra.mxu0 0.0
    %6547 = vmatprep.subr.mxu0 0.0
    %6548 = vmatpush1.msra.mxu0 0.0
    %6549 = vmatprep.subr.mxu0 0.0
    %6550 = vmatpush1.msra.mxu0 0.0
    %6551 = vmatprep.subr.mxu0 0.0
    %6552 = vmatpush1.msra.mxu0 0.0
    %6553 = vmatprep.subr.mxu0 0.0
    %6554 = vmatpush1.msra.mxu0 0.0
    %6555 = vmatprep.subr.mxu0 0.0
    %6556 = vmatpush1.msra.mxu0 0.0
    %6557 = vmatprep.subr.mxu0 0.0
    %6558 = vmatpush1.msra.mxu0 0.0
    %6559 = vmatprep.subr.mxu0 0.0
    %6560 = vmatpush1.msra.mxu0 0.0
    %6561 = vmatprep.subr.mxu0 0.0
    %6562 = vmatpush1.msra.mxu0 0.0
    %6563 = vmatprep.mubr.f32.mxu0 0.0
    %6564 = vmatmul.mubr.f32.gmra.mrb[0].mxu0 %v6497
    %v6565 = vpop.f32.mrb[0].mxu0
    %v6566 = vadd.f32 %v6275, %v6565
    %v6567 = vpop.f32.mrb[0].mxu0
    %6568 = vdwg.mxu0
    %v6570 = vsel %vm955, %v6265, 0
    %6572 = vmatprep.subr.mxu0 0.0
    %6573 = vmatpush1.msra.mxu0 %v305
    %6574 = vmatprep.subr.mxu0 0.0
    %6575 = vmatpush1.msra.mxu0 %v306
    %6576 = vmatprep.subr.mxu0 0.0
    %6577 = vmatpush1.msra.mxu0 %v307
    %6578 = vmatprep.subr.mxu0 0.0
    %6579 = vmatpush1.msra.mxu0 %v308
    %6580 = vmatprep.subr.mxu0 0.0
    %6581 = vmatpush1.msra.mxu0 0.0
    %6582 = vmatprep.subr.mxu0 0.0
    %6583 = vmatpush1.msra.mxu0 0.0
    %6584 = vmatprep.subr.mxu0 0.0
    %6585 = vmatpush1.msra.mxu0 0.0
    %6586 = vmatprep.subr.mxu0 0.0
    %6587 = vmatpush1.msra.mxu0 0.0
    %6588 = vmatprep.subr.mxu0 0.0
    %6589 = vmatpush1.msra.mxu0 0.0
    %6590 = vmatprep.subr.mxu0 0.0
    %6591 = vmatpush1.msra.mxu0 0.0
    %6592 = vmatprep.subr.mxu0 0.0
    %6593 = vmatpush1.msra.mxu0 0.0
    %6594 = vmatprep.subr.mxu0 0.0
    %6595 = vmatpush1.msra.mxu0 0.0
    %6596 = vmatprep.subr.mxu0 0.0
    %6597 = vmatpush1.msra.mxu0 0.0
    %6598 = vmatprep.subr.mxu0 0.0
    %6599 = vmatpush1.msra.mxu0 0.0
    %6600 = vmatprep.subr.mxu0 0.0
    %6601 = vmatpush1.msra.mxu0 0.0
    %6602 = vmatprep.subr.mxu0 0.0
    %6603 = vmatpush1.msra.mxu0 0.0
    %6604 = vmatprep.subr.mxu0 0.0
    %6605 = vmatpush1.msra.mxu0 0.0
    %6606 = vmatprep.subr.mxu0 0.0
    %6607 = vmatpush1.msra.mxu0 0.0
    %6608 = vmatprep.subr.mxu0 0.0
    %6609 = vmatpush1.msra.mxu0 0.0
    %6610 = vmatprep.subr.mxu0 0.0
    %6611 = vmatpush1.msra.mxu0 0.0
    %6612 = vmatprep.subr.mxu0 0.0
    %6613 = vmatpush1.msra.mxu0 0.0
    %6614 = vmatprep.subr.mxu0 0.0
    %6615 = vmatpush1.msra.mxu0 0.0
    %6616 = vmatprep.subr.mxu0 0.0
    %6617 = vmatpush1.msra.mxu0 0.0
    %6618 = vmatprep.subr.mxu0 0.0
    %6619 = vmatpush1.msra.mxu0 0.0
    %6620 = vmatprep.subr.mxu0 0.0
    %6621 = vmatpush1.msra.mxu0 0.0
    %6622 = vmatprep.subr.mxu0 0.0
    %6623 = vmatpush1.msra.mxu0 0.0
    %6624 = vmatprep.subr.mxu0 0.0
    %6625 = vmatpush1.msra.mxu0 0.0
    %6626 = vmatprep.subr.mxu0 0.0
    %6627 = vmatpush1.msra.mxu0 0.0
    %6628 = vmatprep.subr.mxu0 0.0
    %6629 = vmatpush1.msra.mxu0 0.0
    %6630 = vmatprep.subr.mxu0 0.0
    %6631 = vmatpush1.msra.mxu0 0.0
    %6632 = vmatprep.subr.mxu0 0.0
    %6633 = vmatpush1.msra.mxu0 0.0
    %6634 = vmatprep.subr.mxu0 0.0
    %6635 = vmatpush1.msra.mxu0 0.0
    %6636 = vmatprep.mubr.f32.mxu0 0.0
    %6637 = vmatmul.mubr.f32.gmra.mrb[0].mxu0 %v6570
    %v6638 = vpop.f32.mrb[0].mxu0
    %v6639 = vadd.f32 %v6275, %v6638
    %v6640 = vpop.f32.mrb[0].mxu0
    %6641 = vdwg.mxu0
    %v6643 = vsel %vm955, %v6266, 0
    %6645 = vmatprep.subr.mxu0 0.0
    %6646 = vmatpush1.msra.mxu0 %v305
    %6647 = vmatprep.subr.mxu0 0.0
    %6648 = vmatpush1.msra.mxu0 %v306
    %6649 = vmatprep.subr.mxu0 0.0
    %6650 = vmatpush1.msra.mxu0 %v307
    %6651 = vmatprep.subr.mxu0 0.0
    %6652 = vmatpush1.msra.mxu0 %v308
    %6653 = vmatprep.subr.mxu0 0.0
    %6654 = vmatpush1.msra.mxu0 0.0
    %6655 = vmatprep.subr.mxu0 0.0
    %6656 = vmatpush1.msra.mxu0 0.0
    %6657 = vmatprep.subr.mxu0 0.0
    %6658 = vmatpush1.msra.mxu0 0.0
    %6659 = vmatprep.subr.mxu0 0.0
    %6660 = vmatpush1.msra.mxu0 0.0
    %6661 = vmatprep.subr.mxu0 0.0
    %6662 = vmatpush1.msra.mxu0 0.0
    %6663 = vmatprep.subr.mxu0 0.0
    %6664 = vmatpush1.msra.mxu0 0.0
    %6665 = vmatprep.subr.mxu0 0.0
    %6666 = vmatpush1.msra.mxu0 0.0
    %6667 = vmatprep.subr.mxu0 0.0
    %6668 = vmatpush1.msra.mxu0 0.0
    %6669 = vmatprep.subr.mxu0 0.0
    %6670 = vmatpush1.msra.mxu0 0.0
    %6671 = vmatprep.subr.mxu0 0.0
    %6672 = vmatpush1.msra.mxu0 0.0
    %6673 = vmatprep.subr.mxu0 0.0
    %6674 = vmatpush1.msra.mxu0 0.0
    %6675 = vmatprep.subr.mxu0 0.0
    %6676 = vmatpush1.msra.mxu0 0.0
    %6677 = vmatprep.subr.mxu0 0.0
    %6678 = vmatpush1.msra.mxu0 0.0
    %6679 = vmatprep.subr.mxu0 0.0
    %6680 = vmatpush1.msra.mxu0 0.0
    %6681 = vmatprep.subr.mxu0 0.0
    %6682 = vmatpush1.msra.mxu0 0.0
    %6683 = vmatprep.subr.mxu0 0.0
    %6684 = vmatpush1.msra.mxu0 0.0
    %6685 = vmatprep.subr.mxu0 0.0
    %6686 = vmatpush1.msra.mxu0 0.0
    %6687 = vmatprep.subr.mxu0 0.0
    %6688 = vmatpush1.msra.mxu0 0.0
    %6689 = vmatprep.subr.mxu0 0.0
    %6690 = vmatpush1.msra.mxu0 0.0
    %6691 = vmatprep.subr.mxu0 0.0
    %6692 = vmatpush1.msra.mxu0 0.0
    %6693 = vmatprep.subr.mxu0 0.0
    %6694 = vmatpush1.msra.mxu0 0.0
    %6695 = vmatprep.subr.mxu0 0.0
    %6696 = vmatpush1.msra.mxu0 0.0
    %6697 = vmatprep.subr.mxu0 0.0
    %6698 = vmatpush1.msra.mxu0 0.0
    %6699 = vmatprep.subr.mxu0 0.0
    %6700 = vmatpush1.msra.mxu0 0.0
    %6701 = vmatprep.subr.mxu0 0.0
    %6702 = vmatpush1.msra.mxu0 0.0
    %6703 = vmatprep.subr.mxu0 0.0
    %6704 = vmatpush1.msra.mxu0 0.0
    %6705 = vmatprep.subr.mxu0 0.0
    %6706 = vmatpush1.msra.mxu0 0.0
    %6707 = vmatprep.subr.mxu0 0.0
    %6708 = vmatpush1.msra.mxu0 0.0
    %6709 = vmatprep.mubr.f32.mxu0 0.0
    %6710 = vmatmul.mubr.f32.gmra.mrb[0].mxu0 %v6643
    %v6711 = vpop.f32.mrb[0].mxu0
    %v6712 = vadd.f32 %v6275, %v6711
    %v6713 = vpop.f32.mrb[0].mxu0
    %6714 = vdwg.mxu0
    %v6716 = vsel %vm955, %v6267, 0
    %6718 = vmatprep.subr.mxu0 0.0
    %6719 = vmatpush1.msra.mxu0 %v305
    %6720 = vmatprep.subr.mxu0 0.0
    %6721 = vmatpush1.msra.mxu0 %v306
    %6722 = vmatprep.subr.mxu0 0.0
    %6723 = vmatpush1.msra.mxu0 %v307
    %6724 = vmatprep.subr.mxu0 0.0
    %6725 = vmatpush1.msra.mxu0 %v308
    %6726 = vmatprep.subr.mxu0 0.0
    %6727 = vmatpush1.msra.mxu0 0.0
    %6728 = vmatprep.subr.mxu0 0.0
    %6729 = vmatpush1.msra.mxu0 0.0
    %6730 = vmatprep.subr.mxu0 0.0
    %6731 = vmatpush1.msra.mxu0 0.0
    %6732 = vmatprep.subr.mxu0 0.0
    %6733 = vmatpush1.msra.mxu0 0.0
    %6734 = vmatprep.subr.mxu0 0.0
    %6735 = vmatpush1.msra.mxu0 0.0
    %6736 = vmatprep.subr.mxu0 0.0
    %6737 = vmatpush1.msra.mxu0 0.0
    %6738 = vmatprep.subr.mxu0 0.0
    %6739 = vmatpush1.msra.mxu0 0.0
    %6740 = vmatprep.subr.mxu0 0.0
    %6741 = vmatpush1.msra.mxu0 0.0
    %6742 = vmatprep.subr.mxu0 0.0
    %6743 = vmatpush1.msra.mxu0 0.0
    %6744 = vmatprep.subr.mxu0 0.0
    %6745 = vmatpush1.msra.mxu0 0.0
    %6746 = vmatprep.subr.mxu0 0.0
    %6747 = vmatpush1.msra.mxu0 0.0
    %6748 = vmatprep.subr.mxu0 0.0
    %6749 = vmatpush1.msra.mxu0 0.0
    %6750 = vmatprep.subr.mxu0 0.0
    %6751 = vmatpush1.msra.mxu0 0.0
    %6752 = vmatprep.subr.mxu0 0.0
    %6753 = vmatpush1.msra.mxu0 0.0
    %6754 = vmatprep.subr.mxu0 0.0
    %6755 = vmatpush1.msra.mxu0 0.0
    %6756 = vmatprep.subr.mxu0 0.0
    %6757 = vmatpush1.msra.mxu0 0.0
    %6758 = vmatprep.subr.mxu0 0.0
    %6759 = vmatpush1.msra.mxu0 0.0
    %6760 = vmatprep.subr.mxu0 0.0
    %6761 = vmatpush1.msra.mxu0 0.0
    %6762 = vmatprep.subr.mxu0 0.0
    %6763 = vmatpush1.msra.mxu0 0.0
    %6764 = vmatprep.subr.mxu0 0.0
    %6765 = vmatpush1.msra.mxu0 0.0
    %6766 = vmatprep.subr.mxu0 0.0
    %6767 = vmatpush1.msra.mxu0 0.0
    %6768 = vmatprep.subr.mxu0 0.0
    %6769 = vmatpush1.msra.mxu0 0.0
    %6770 = vmatprep.subr.mxu0 0.0
    %6771 = vmatpush1.msra.mxu0 0.0
    %6772 = vmatprep.subr.mxu0 0.0
    %6773 = vmatpush1.msra.mxu0 0.0
    %6774 = vmatprep.subr.mxu0 0.0
    %6775 = vmatpush1.msra.mxu0 0.0
    %6776 = vmatprep.subr.mxu0 0.0
    %6777 = vmatpush1.msra.mxu0 0.0
    %6778 = vmatprep.subr.mxu0 0.0
    %6779 = vmatpush1.msra.mxu0 0.0
    %6780 = vmatprep.subr.mxu0 0.0
    %6781 = vmatpush1.msra.mxu0 0.0
    %6782 = vmatprep.mubr.f32.mxu0 0.0
    %6783 = vmatmul.mubr.f32.gmra.mrb[0].mxu0 %v6716
    %v6784 = vpop.f32.mrb[0].mxu0
    %v6785 = vadd.f32 %v6275, %v6784
    %v6786 = vpop.f32.mrb[0].mxu0
    %6787 = vdwg.mxu0
    %v6789 = vsel %vm955, %v6268, 0
    %6791 = vmatprep.subr.mxu0 0.0
    %6792 = vmatpush1.msra.mxu0 %v305
    %6793 = vmatprep.subr.mxu0 0.0
    %6794 = vmatpush1.msra.mxu0 %v306
    %6795 = vmatprep.subr.mxu0 0.0
    %6796 = vmatpush1.msra.mxu0 %v307
    %6797 = vmatprep.subr.mxu0 0.0
    %6798 = vmatpush1.msra.mxu0 %v308
    %6799 = vmatprep.subr.mxu0 0.0
    %6800 = vmatpush1.msra.mxu0 0.0
    %6801 = vmatprep.subr.mxu0 0.0
    %6802 = vmatpush1.msra.mxu0 0.0
    %6803 = vmatprep.subr.mxu0 0.0
    %6804 = vmatpush1.msra.mxu0 0.0
    %6805 = vmatprep.subr.mxu0 0.0
    %6806 = vmatpush1.msra.mxu0 0.0
    %6807 = vmatprep.subr.mxu0 0.0
    %6808 = vmatpush1.msra.mxu0 0.0
    %6809 = vmatprep.subr.mxu0 0.0
    %6810 = vmatpush1.msra.mxu0 0.0
    %6811 = vmatprep.subr.mxu0 0.0
    %6812 = vmatpush1.msra.mxu0 0.0
    %6813 = vmatprep.subr.mxu0 0.0
    %6814 = vmatpush1.msra.mxu0 0.0
    %6815 = vmatprep.subr.mxu0 0.0
    %6816 = vmatpush1.msra.mxu0 0.0
    %6817 = vmatprep.subr.mxu0 0.0
    %6818 = vmatpush1.msra.mxu0 0.0
    %6819 = vmatprep.subr.mxu0 0.0
    %6820 = vmatpush1.msra.mxu0 0.0
    %6821 = vmatprep.subr.mxu0 0.0
    %6822 = vmatpush1.msra.mxu0 0.0
    %6823 = vmatprep.subr.mxu0 0.0
    %6824 = vmatpush1.msra.mxu0 0.0
    %6825 = vmatprep.subr.mxu0 0.0
    %6826 = vmatpush1.msra.mxu0 0.0
    %6827 = vmatprep.subr.mxu0 0.0
    %6828 = vmatpush1.msra.mxu0 0.0
    %6829 = vmatprep.subr.mxu0 0.0
    %6830 = vmatpush1.msra.mxu0 0.0
    %6831 = vmatprep.subr.mxu0 0.0
    %6832 = vmatpush1.msra.mxu0 0.0
    %6833 = vmatprep.subr.mxu0 0.0
    %6834 = vmatpush1.msra.mxu0 0.0
    %6835 = vmatprep.subr.mxu0 0.0
    %6836 = vmatpush1.msra.mxu0 0.0
    %6837 = vmatprep.subr.mxu0 0.0
    %6838 = vmatpush1.msra.mxu0 0.0
    %6839 = vmatprep.subr.mxu0 0.0
    %6840 = vmatpush1.msra.mxu0 0.0
    %6841 = vmatprep.subr.mxu0 0.0
    %6842 = vmatpush1.msra.mxu0 0.0
    %6843 = vmatprep.subr.mxu0 0.0
    %6844 = vmatpush1.msra.mxu0 0.0
    %6845 = vmatprep.subr.mxu0 0.0
    %6846 = vmatpush1.msra.mxu0 0.0
    %6847 = vmatprep.subr.mxu0 0.0
    %6848 = vmatpush1.msra.mxu0 0.0
    %6849 = vmatprep.subr.mxu0 0.0
    %6850 = vmatpush1.msra.mxu0 0.0
    %6851 = vmatprep.subr.mxu0 0.0
    %6852 = vmatpush1.msra.mxu0 0.0
    %6853 = vmatprep.subr.mxu0 0.0
    %6854 = vmatpush1.msra.mxu0 0.0
    %6855 = vmatprep.mubr.f32.mxu0 0.0
    %6856 = vmatmul.mubr.f32.gmra.mrb[0].mxu0 %v6789
    %v6857 = vpop.f32.mrb[0].mxu0
    %v6858 = vadd.f32 %v6275, %v6857
    %v6859 = vpop.f32.mrb[0].mxu0
    %6860 = vdwg.mxu0
    %6862 = vrot.lane.b32.xlu0 %v6347, 96
    %v6863 = vpop.permute.xlu0 %6862
    %v6864 = vsel %vm49, %v6347, 0
    %v6866 = vsel %vm49, %v6863, 0
    %6868 = vmatprep.subr.mxu0 0.0
    %6869 = vmatpush1.xpose.msra.mxu0 %v6866
    %6870 = vmatprep.subr.mxu0 0.0
    %6871 = vmatpush1.xpose.msra.mxu0 0.0
    %6872 = vmatprep.subr.mxu0 0.0
    %6873 = vmatpush1.xpose.msra.mxu0 0.0
    %6874 = vmatprep.subr.mxu0 0.0
    %6875 = vmatpush1.xpose.msra.mxu0 0.0
    %6876 = vmatprep.subr.mxu0 0.0
    %6877 = vmatpush1.xpose.msra.mxu0 0.0
    %6878 = vmatprep.subr.mxu0 0.0
    %6879 = vmatpush1.xpose.msra.mxu0 0.0
    %6880 = vmatprep.subr.mxu0 0.0
    %6881 = vmatpush1.xpose.msra.mxu0 0.0
    %6882 = vmatprep.subr.mxu0 0.0
    %6883 = vmatpush1.xpose.msra.mxu0 0.0
    %6884 = vmatprep.subr.mxu0 0.0
    %6885 = vmatpush1.xpose.msra.mxu0 0.0
    %6886 = vmatprep.subr.mxu0 0.0
    %6887 = vmatpush1.xpose.msra.mxu0 0.0
    %6888 = vmatprep.subr.mxu0 0.0
    %6889 = vmatpush1.xpose.msra.mxu0 0.0
    %6890 = vmatprep.subr.mxu0 0.0
    %6891 = vmatpush1.xpose.msra.mxu0 0.0
    %6892 = vmatprep.subr.mxu0 0.0
    %6893 = vmatpush1.xpose.msra.mxu0 0.0
    %6894 = vmatprep.subr.mxu0 0.0
    %6895 = vmatpush1.xpose.msra.mxu0 0.0
    %6896 = vmatprep.subr.mxu0 0.0
    %6897 = vmatpush1.xpose.msra.mxu0 0.0
    %6898 = vmatprep.subr.mxu0 0.0
    %6899 = vmatpush1.xpose.msra.mxu0 0.0
    %6900 = vmatprep.subr.mxu0 0.0
    %6901 = vmatpush1.xpose.msra.mxu0 0.0
    %6902 = vmatprep.subr.mxu0 0.0
    %6903 = vmatpush1.xpose.msra.mxu0 0.0
    %6904 = vmatprep.subr.mxu0 0.0
    %6905 = vmatpush1.xpose.msra.mxu0 0.0
    %6906 = vmatprep.subr.mxu0 0.0
    %6907 = vmatpush1.xpose.msra.mxu0 0.0
    %6908 = vmatprep.subr.mxu0 0.0
    %6909 = vmatpush1.xpose.msra.mxu0 0.0
    %6910 = vmatprep.subr.mxu0 0.0
    %6911 = vmatpush1.xpose.msra.mxu0 0.0
    %6912 = vmatprep.subr.mxu0 0.0
    %6913 = vmatpush1.xpose.msra.mxu0 0.0
    %6914 = vmatprep.subr.mxu0 0.0
    %6915 = vmatpush1.xpose.msra.mxu0 0.0
    %6916 = vmatprep.subr.mxu0 0.0
    %6917 = vmatpush1.xpose.msra.mxu0 0.0
    %6918 = vmatprep.subr.mxu0 0.0
    %6919 = vmatpush1.xpose.msra.mxu0 0.0
    %6920 = vmatprep.subr.mxu0 0.0
    %6921 = vmatpush1.xpose.msra.mxu0 0.0
    %6922 = vmatprep.subr.mxu0 0.0
    %6923 = vmatpush1.xpose.msra.mxu0 0.0
    %6924 = vmatprep.subr.mxu0 0.0
    %6925 = vmatpush1.xpose.msra.mxu0 0.0
    %6926 = vmatprep.subr.mxu0 0.0
    %6927 = vmatpush1.xpose.msra.mxu0 0.0
    %6928 = vmatprep.subr.mxu0 0.0
    %6929 = vmatpush1.xpose.msra.mxu0 0.0
    %6930 = vmatprep.subr.mxu0 0.0
    %6931 = vmatpush1.xpose.msra.mxu0 0.0
    %6932 = vmatprep.mubr.f32.mxu0 0.0
    %6933 = vmatmul.mubr.f32.gmra.mrb[0].mxu0 %v6864
    %v6934 = vpop.f32.mrb[0].mxu0
    %v6935 = vadd.f32 0.0, %v6934
    %v6936 = vpop.f32.mrb[0].mxu0
    %6937 = vdwg.mxu0
    %6939 = vrot.lane.b32.xlu0 %v6420, 96
    %v6940 = vpop.permute.xlu0 %6939
    %v6941 = vsel %vm49, %v6420, 0
    %v6943 = vsel %vm49, %v6940, 0
    %6945 = vmatprep.subr.mxu0 0.0
    %6946 = vmatpush1.xpose.msra.mxu0 %v6943
    %6947 = vmatprep.subr.mxu0 0.0
    %6948 = vmatpush1.xpose.msra.mxu0 0.0
    %6949 = vmatprep.subr.mxu0 0.0
    %6950 = vmatpush1.xpose.msra.mxu0 0.0
    %6951 = vmatprep.subr.mxu0 0.0
    %6952 = vmatpush1.xpose.msra.mxu0 0.0
    %6953 = vmatprep.subr.mxu0 0.0
    %6954 = vmatpush1.xpose.msra.mxu0 0.0
    %6955 = vmatprep.subr.mxu0 0.0
    %6956 = vmatpush1.xpose.msra.mxu0 0.0
    %6957 = vmatprep.subr.mxu0 0.0
    %6958 = vmatpush1.xpose.msra.mxu0 0.0
    %6959 = vmatprep.subr.mxu0 0.0
    %6960 = vmatpush1.xpose.msra.mxu0 0.0
    %6961 = vmatprep.subr.mxu0 0.0
    %6962 = vmatpush1.xpose.msra.mxu0 0.0
    %6963 = vmatprep.subr.mxu0 0.0
    %6964 = vmatpush1.xpose.msra.mxu0 0.0
    %6965 = vmatprep.subr.mxu0 0.0
    %6966 = vmatpush1.xpose.msra.mxu0 0.0
    %6967 = vmatprep.subr.mxu0 0.0
    %6968 = vmatpush1.xpose.msra.mxu0 0.0
    %6969 = vmatprep.subr.mxu0 0.0
    %6970 = vmatpush1.xpose.msra.mxu0 0.0
    %6971 = vmatprep.subr.mxu0 0.0
    %6972 = vmatpush1.xpose.msra.mxu0 0.0
    %6973 = vmatprep.subr.mxu0 0.0
    %6974 = vmatpush1.xpose.msra.mxu0 0.0
    %6975 = vmatprep.subr.mxu0 0.0
    %6976 = vmatpush1.xpose.msra.mxu0 0.0
    %6977 = vmatprep.subr.mxu0 0.0
    %6978 = vmatpush1.xpose.msra.mxu0 0.0
    %6979 = vmatprep.subr.mxu0 0.0
    %6980 = vmatpush1.xpose.msra.mxu0 0.0
    %6981 = vmatprep.subr.mxu0 0.0
    %6982 = vmatpush1.xpose.msra.mxu0 0.0
    %6983 = vmatprep.subr.mxu0 0.0
    %6984 = vmatpush1.xpose.msra.mxu0 0.0
    %6985 = vmatprep.subr.mxu0 0.0
    %6986 = vmatpush1.xpose.msra.mxu0 0.0
    %6987 = vmatprep.subr.mxu0 0.0
    %6988 = vmatpush1.xpose.msra.mxu0 0.0
    %6989 = vmatprep.subr.mxu0 0.0
    %6990 = vmatpush1.xpose.msra.mxu0 0.0
    %6991 = vmatprep.subr.mxu0 0.0
    %6992 = vmatpush1.xpose.msra.mxu0 0.0
    %6993 = vmatprep.subr.mxu0 0.0
    %6994 = vmatpush1.xpose.msra.mxu0 0.0
    %6995 = vmatprep.subr.mxu0 0.0
    %6996 = vmatpush1.xpose.msra.mxu0 0.0
    %6997 = vmatprep.subr.mxu0 0.0
    %6998 = vmatpush1.xpose.msra.mxu0 0.0
    %6999 = vmatprep.subr.mxu0 0.0
    %7000 = vmatpush1.xpose.msra.mxu0 0.0
    %7001 = vmatprep.subr.mxu0 0.0
    %7002 = vmatpush1.xpose.msra.mxu0 0.0
    %7003 = vmatprep.subr.mxu0 0.0
    %7004 = vmatpush1.xpose.msra.mxu0 0.0
    %7005 = vmatprep.subr.mxu0 0.0
    %7006 = vmatpush1.xpose.msra.mxu0 0.0
    %7007 = vmatprep.subr.mxu0 0.0
    %7008 = vmatpush1.xpose.msra.mxu0 0.0
    %7009 = vmatprep.mubr.f32.mxu0 0.0
    %7010 = vmatmul.mubr.f32.gmra.mrb[0].mxu0 %v6941
    %v7011 = vpop.f32.mrb[0].mxu0
    %v7012 = vadd.f32 0.0, %v7011
    %v7013 = vpop.f32.mrb[0].mxu0
    %7014 = vdwg.mxu0
    %7016 = vrot.lane.b32.xlu0 %v6493, 96
    %v7017 = vpop.permute.xlu0 %7016
    %v7018 = vsel %vm49, %v6493, 0
    %v7020 = vsel %vm49, %v7017, 0
    %7022 = vmatprep.subr.mxu0 0.0
    %7023 = vmatpush1.xpose.msra.mxu0 %v7020
    %7024 = vmatprep.subr.mxu0 0.0
    %7025 = vmatpush1.xpose.msra.mxu0 0.0
    %7026 = vmatprep.subr.mxu0 0.0
    %7027 = vmatpush1.xpose.msra.mxu0 0.0
    %7028 = vmatprep.subr.mxu0 0.0
    %7029 = vmatpush1.xpose.msra.mxu0 0.0
    %7030 = vmatprep.subr.mxu0 0.0
    %7031 = vmatpush1.xpose.msra.mxu0 0.0
    %7032 = vmatprep.subr.mxu0 0.0
    %7033 = vmatpush1.xpose.msra.mxu0 0.0
    %7034 = vmatprep.subr.mxu0 0.0
    %7035 = vmatpush1.xpose.msra.mxu0 0.0
    %7036 = vmatprep.subr.mxu0 0.0
    %7037 = vmatpush1.xpose.msra.mxu0 0.0
    %7038 = vmatprep.subr.mxu0 0.0
    %7039 = vmatpush1.xpose.msra.mxu0 0.0
    %7040 = vmatprep.subr.mxu0 0.0
    %7041 = vmatpush1.xpose.msra.mxu0 0.0
    %7042 = vmatprep.subr.mxu0 0.0
    %7043 = vmatpush1.xpose.msra.mxu0 0.0
    %7044 = vmatprep.subr.mxu0 0.0
    %7045 = vmatpush1.xpose.msra.mxu0 0.0
    %7046 = vmatprep.subr.mxu0 0.0
    %7047 = vmatpush1.xpose.msra.mxu0 0.0
    %7048 = vmatprep.subr.mxu0 0.0
    %7049 = vmatpush1.xpose.msra.mxu0 0.0
    %7050 = vmatprep.subr.mxu0 0.0
    %7051 = vmatpush1.xpose.msra.mxu0 0.0
    %7052 = vmatprep.subr.mxu0 0.0
    %7053 = vmatpush1.xpose.msra.mxu0 0.0
    %7054 = vmatprep.subr.mxu0 0.0
    %7055 = vmatpush1.xpose.msra.mxu0 0.0
    %7056 = vmatprep.subr.mxu0 0.0
    %7057 = vmatpush1.xpose.msra.mxu0 0.0
    %7058 = vmatprep.subr.mxu0 0.0
    %7059 = vmatpush1.xpose.msra.mxu0 0.0
    %7060 = vmatprep.subr.mxu0 0.0
    %7061 = vmatpush1.xpose.msra.mxu0 0.0
    %7062 = vmatprep.subr.mxu0 0.0
    %7063 = vmatpush1.xpose.msra.mxu0 0.0
    %7064 = vmatprep.subr.mxu0 0.0
    %7065 = vmatpush1.xpose.msra.mxu0 0.0
    %7066 = vmatprep.subr.mxu0 0.0
    %7067 = vmatpush1.xpose.msra.mxu0 0.0
    %7068 = vmatprep.subr.mxu0 0.0
    %7069 = vmatpush1.xpose.msra.mxu0 0.0
    %7070 = vmatprep.subr.mxu0 0.0
    %7071 = vmatpush1.xpose.msra.mxu0 0.0
    %7072 = vmatprep.subr.mxu0 0.0
    %7073 = vmatpush1.xpose.msra.mxu0 0.0
    %7074 = vmatprep.subr.mxu0 0.0
    %7075 = vmatpush1.xpose.msra.mxu0 0.0
    %7076 = vmatprep.subr.mxu0 0.0
    %7077 = vmatpush1.xpose.msra.mxu0 0.0
    %7078 = vmatprep.subr.mxu0 0.0
    %7079 = vmatpush1.xpose.msra.mxu0 0.0
    %7080 = vmatprep.subr.mxu0 0.0
    %7081 = vmatpush1.xpose.msra.mxu0 0.0
    %7082 = vmatprep.subr.mxu0 0.0
    %7083 = vmatpush1.xpose.msra.mxu0 0.0
    %7084 = vmatprep.subr.mxu0 0.0
    %7085 = vmatpush1.xpose.msra.mxu0 0.0
    %7086 = vmatprep.mubr.f32.mxu0 0.0
    %7087 = vmatmul.mubr.f32.gmra.mrb[0].mxu0 %v7018
    %v7088 = vpop.f32.mrb[0].mxu0
    %v7089 = vadd.f32 0.0, %v7088
    %v7090 = vpop.f32.mrb[0].mxu0
    %7091 = vdwg.mxu0
    %7093 = vrot.lane.b32.xlu0 %v6566, 96
    %v7094 = vpop.permute.xlu0 %7093
    %v7095 = vsel %vm49, %v6566, 0
    %v7097 = vsel %vm49, %v7094, 0
    %7099 = vmatprep.subr.mxu0 0.0
    %7100 = vmatpush1.xpose.msra.mxu0 %v7097
    %7101 = vmatprep.subr.mxu0 0.0
    %7102 = vmatpush1.xpose.msra.mxu0 0.0
    %7103 = vmatprep.subr.mxu0 0.0
    %7104 = vmatpush1.xpose.msra.mxu0 0.0
    %7105 = vmatprep.subr.mxu0 0.0
    %7106 = vmatpush1.xpose.msra.mxu0 0.0
    %7107 = vmatprep.subr.mxu0 0.0
    %7108 = vmatpush1.xpose.msra.mxu0 0.0
    %7109 = vmatprep.subr.mxu0 0.0
    %7110 = vmatpush1.xpose.msra.mxu0 0.0
    %7111 = vmatprep.subr.mxu0 0.0
    %7112 = vmatpush1.xpose.msra.mxu0 0.0
    %7113 = vmatprep.subr.mxu0 0.0
    %7114 = vmatpush1.xpose.msra.mxu0 0.0
    %7115 = vmatprep.subr.mxu0 0.0
    %7116 = vmatpush1.xpose.msra.mxu0 0.0
    %7117 = vmatprep.subr.mxu0 0.0
    %7118 = vmatpush1.xpose.msra.mxu0 0.0
    %7119 = vmatprep.subr.mxu0 0.0
    %7120 = vmatpush1.xpose.msra.mxu0 0.0
    %7121 = vmatprep.subr.mxu0 0.0
    %7122 = vmatpush1.xpose.msra.mxu0 0.0
    %7123 = vmatprep.subr.mxu0 0.0
    %7124 = vmatpush1.xpose.msra.mxu0 0.0
    %7125 = vmatprep.subr.mxu0 0.0
    %7126 = vmatpush1.xpose.msra.mxu0 0.0
    %7127 = vmatprep.subr.mxu0 0.0
    %7128 = vmatpush1.xpose.msra.mxu0 0.0
    %7129 = vmatprep.subr.mxu0 0.0
    %7130 = vmatpush1.xpose.msra.mxu0 0.0
    %7131 = vmatprep.subr.mxu0 0.0
    %7132 = vmatpush1.xpose.msra.mxu0 0.0
    %7133 = vmatprep.subr.mxu0 0.0
    %7134 = vmatpush1.xpose.msra.mxu0 0.0
    %7135 = vmatprep.subr.mxu0 0.0
    %7136 = vmatpush1.xpose.msra.mxu0 0.0
    %7137 = vmatprep.subr.mxu0 0.0
    %7138 = vmatpush1.xpose.msra.mxu0 0.0
    %7139 = vmatprep.subr.mxu0 0.0
    %7140 = vmatpush1.xpose.msra.mxu0 0.0
    %7141 = vmatprep.subr.mxu0 0.0
    %7142 = vmatpush1.xpose.msra.mxu0 0.0
    %7143 = vmatprep.subr.mxu0 0.0
    %7144 = vmatpush1.xpose.msra.mxu0 0.0
    %7145 = vmatprep.subr.mxu0 0.0
    %7146 = vmatpush1.xpose.msra.mxu0 0.0
    %7147 = vmatprep.subr.mxu0 0.0
    %7148 = vmatpush1.xpose.msra.mxu0 0.0
    %7149 = vmatprep.subr.mxu0 0.0
    %7150 = vmatpush1.xpose.msra.mxu0 0.0
    %7151 = vmatprep.subr.mxu0 0.0
    %7152 = vmatpush1.xpose.msra.mxu0 0.0
    %7153 = vmatprep.subr.mxu0 0.0
    %7154 = vmatpush1.xpose.msra.mxu0 0.0
    %7155 = vmatprep.subr.mxu0 0.0
    %7156 = vmatpush1.xpose.msra.mxu0 0.0
    %7157 = vmatprep.subr.mxu0 0.0
    %7158 = vmatpush1.xpose.msra.mxu0 0.0
    %7159 = vmatprep.subr.mxu0 0.0
    %7160 = vmatpush1.xpose.msra.mxu0 0.0
    %7161 = vmatprep.subr.mxu0 0.0
    %7162 = vmatpush1.xpose.msra.mxu0 0.0
    %7163 = vmatprep.mubr.f32.mxu0 0.0
    %7164 = vmatmul.mubr.f32.gmra.mrb[0].mxu0 %v7095
    %v7165 = vpop.f32.mrb[0].mxu0
    %v7166 = vadd.f32 0.0, %v7165
    %v7167 = vpop.f32.mrb[0].mxu0
    %7168 = vdwg.mxu0
    %7170 = vrot.lane.b32.xlu0 %v6639, 96
    %v7171 = vpop.permute.xlu0 %7170
    %v7172 = vsel %vm49, %v6639, 0
    %v7174 = vsel %vm49, %v7171, 0
    %7176 = vmatprep.subr.mxu0 0.0
    %7177 = vmatpush1.xpose.msra.mxu0 %v7174
    %7178 = vmatprep.subr.mxu0 0.0
    %7179 = vmatpush1.xpose.msra.mxu0 0.0
    %7180 = vmatprep.subr.mxu0 0.0
    %7181 = vmatpush1.xpose.msra.mxu0 0.0
    %7182 = vmatprep.subr.mxu0 0.0
    %7183 = vmatpush1.xpose.msra.mxu0 0.0
    %7184 = vmatprep.subr.mxu0 0.0
    %7185 = vmatpush1.xpose.msra.mxu0 0.0
    %7186 = vmatprep.subr.mxu0 0.0
    %7187 = vmatpush1.xpose.msra.mxu0 0.0
    %7188 = vmatprep.subr.mxu0 0.0
    %7189 = vmatpush1.xpose.msra.mxu0 0.0
    %7190 = vmatprep.subr.mxu0 0.0
    %7191 = vmatpush1.xpose.msra.mxu0 0.0
    %7192 = vmatprep.subr.mxu0 0.0
    %7193 = vmatpush1.xpose.msra.mxu0 0.0
    %7194 = vmatprep.subr.mxu0 0.0
    %7195 = vmatpush1.xpose.msra.mxu0 0.0
    %7196 = vmatprep.subr.mxu0 0.0
    %7197 = vmatpush1.xpose.msra.mxu0 0.0
    %7198 = vmatprep.subr.mxu0 0.0
    %7199 = vmatpush1.xpose.msra.mxu0 0.0
    %7200 = vmatprep.subr.mxu0 0.0
    %7201 = vmatpush1.xpose.msra.mxu0 0.0
    %7202 = vmatprep.subr.mxu0 0.0
    %7203 = vmatpush1.xpose.msra.mxu0 0.0
    %7204 = vmatprep.subr.mxu0 0.0
    %7205 = vmatpush1.xpose.msra.mxu0 0.0
    %7206 = vmatprep.subr.mxu0 0.0
    %7207 = vmatpush1.xpose.msra.mxu0 0.0
    %7208 = vmatprep.subr.mxu0 0.0
    %7209 = vmatpush1.xpose.msra.mxu0 0.0
    %7210 = vmatprep.subr.mxu0 0.0
    %7211 = vmatpush1.xpose.msra.mxu0 0.0
    %7212 = vmatprep.subr.mxu0 0.0
    %7213 = vmatpush1.xpose.msra.mxu0 0.0
    %7214 = vmatprep.subr.mxu0 0.0
    %7215 = vmatpush1.xpose.msra.mxu0 0.0
    %7216 = vmatprep.subr.mxu0 0.0
    %7217 = vmatpush1.xpose.msra.mxu0 0.0
    %7218 = vmatprep.subr.mxu0 0.0
    %7219 = vmatpush1.xpose.msra.mxu0 0.0
    %7220 = vmatprep.subr.mxu0 0.0
    %7221 = vmatpush1.xpose.msra.mxu0 0.0
    %7222 = vmatprep.subr.mxu0 0.0
    %7223 = vmatpush1.xpose.msra.mxu0 0.0
    %7224 = vmatprep.subr.mxu0 0.0
    %7225 = vmatpush1.xpose.msra.mxu0 0.0
    %7226 = vmatprep.subr.mxu0 0.0
    %7227 = vmatpush1.xpose.msra.mxu0 0.0
    %7228 = vmatprep.subr.mxu0 0.0
    %7229 = vmatpush1.xpose.msra.mxu0 0.0
    %7230 = vmatprep.subr.mxu0 0.0
    %7231 = vmatpush1.xpose.msra.mxu0 0.0
    %7232 = vmatprep.subr.mxu0 0.0
    %7233 = vmatpush1.xpose.msra.mxu0 0.0
    %7234 = vmatprep.subr.mxu0 0.0
    %7235 = vmatpush1.xpose.msra.mxu0 0.0
    %7236 = vmatprep.subr.mxu0 0.0
    %7237 = vmatpush1.xpose.msra.mxu0 0.0
    %7238 = vmatprep.subr.mxu0 0.0
    %7239 = vmatpush1.xpose.msra.mxu0 0.0
    %7240 = vmatprep.mubr.f32.mxu0 0.0
    %7241 = vmatmul.mubr.f32.gmra.mrb[0].mxu0 %v7172
    %v7242 = vpop.f32.mrb[0].mxu0
    %v7243 = vadd.f32 0.0, %v7242
    %v7244 = vpop.f32.mrb[0].mxu0
    %7245 = vdwg.mxu0
    %7247 = vrot.lane.b32.xlu0 %v6712, 96
    %v7248 = vpop.permute.xlu0 %7247
    %v7249 = vsel %vm49, %v6712, 0
    %v7251 = vsel %vm49, %v7248, 0
    %7253 = vmatprep.subr.mxu0 0.0
    %7254 = vmatpush1.xpose.msra.mxu0 %v7251
    %7255 = vmatprep.subr.mxu0 0.0
    %7256 = vmatpush1.xpose.msra.mxu0 0.0
    %7257 = vmatprep.subr.mxu0 0.0
    %7258 = vmatpush1.xpose.msra.mxu0 0.0
    %7259 = vmatprep.subr.mxu0 0.0
    %7260 = vmatpush1.xpose.msra.mxu0 0.0
    %7261 = vmatprep.subr.mxu0 0.0
    %7262 = vmatpush1.xpose.msra.mxu0 0.0
    %7263 = vmatprep.subr.mxu0 0.0
    %7264 = vmatpush1.xpose.msra.mxu0 0.0
    %7265 = vmatprep.subr.mxu0 0.0
    %7266 = vmatpush1.xpose.msra.mxu0 0.0
    %7267 = vmatprep.subr.mxu0 0.0
    %7268 = vmatpush1.xpose.msra.mxu0 0.0
    %7269 = vmatprep.subr.mxu0 0.0
    %7270 = vmatpush1.xpose.msra.mxu0 0.0
    %7271 = vmatprep.subr.mxu0 0.0
    %7272 = vmatpush1.xpose.msra.mxu0 0.0
    %7273 = vmatprep.subr.mxu0 0.0
    %7274 = vmatpush1.xpose.msra.mxu0 0.0
    %7275 = vmatprep.subr.mxu0 0.0
    %7276 = vmatpush1.xpose.msra.mxu0 0.0
    %7277 = vmatprep.subr.mxu0 0.0
    %7278 = vmatpush1.xpose.msra.mxu0 0.0
    %7279 = vmatprep.subr.mxu0 0.0
    %7280 = vmatpush1.xpose.msra.mxu0 0.0
    %7281 = vmatprep.subr.mxu0 0.0
    %7282 = vmatpush1.xpose.msra.mxu0 0.0
    %7283 = vmatprep.subr.mxu0 0.0
    %7284 = vmatpush1.xpose.msra.mxu0 0.0
    %7285 = vmatprep.subr.mxu0 0.0
    %7286 = vmatpush1.xpose.msra.mxu0 0.0
    %7287 = vmatprep.subr.mxu0 0.0
    %7288 = vmatpush1.xpose.msra.mxu0 0.0
    %7289 = vmatprep.subr.mxu0 0.0
    %7290 = vmatpush1.xpose.msra.mxu0 0.0
    %7291 = vmatprep.subr.mxu0 0.0
    %7292 = vmatpush1.xpose.msra.mxu0 0.0
    %7293 = vmatprep.subr.mxu0 0.0
    %7294 = vmatpush1.xpose.msra.mxu0 0.0
    %7295 = vmatprep.subr.mxu0 0.0
    %7296 = vmatpush1.xpose.msra.mxu0 0.0
    %7297 = vmatprep.subr.mxu0 0.0
    %7298 = vmatpush1.xpose.msra.mxu0 0.0
    %7299 = vmatprep.subr.mxu0 0.0
    %7300 = vmatpush1.xpose.msra.mxu0 0.0
    %7301 = vmatprep.subr.mxu0 0.0
    %7302 = vmatpush1.xpose.msra.mxu0 0.0
    %7303 = vmatprep.subr.mxu0 0.0
    %7304 = vmatpush1.xpose.msra.mxu0 0.0
    %7305 = vmatprep.subr.mxu0 0.0
    %7306 = vmatpush1.xpose.msra.mxu0 0.0
    %7307 = vmatprep.subr.mxu0 0.0
    %7308 = vmatpush1.xpose.msra.mxu0 0.0
    %7309 = vmatprep.subr.mxu0 0.0
    %7310 = vmatpush1.xpose.msra.mxu0 0.0
    %7311 = vmatprep.subr.mxu0 0.0
    %7312 = vmatpush1.xpose.msra.mxu0 0.0
    %7313 = vmatprep.subr.mxu0 0.0
    %7314 = vmatpush1.xpose.msra.mxu0 0.0
    %7315 = vmatprep.subr.mxu0 0.0
    %7316 = vmatpush1.xpose.msra.mxu0 0.0
    %7317 = vmatprep.mubr.f32.mxu0 0.0
    %7318 = vmatmul.mubr.f32.gmra.mrb[0].mxu0 %v7249
    %v7319 = vpop.f32.mrb[0].mxu0
    %v7320 = vadd.f32 0.0, %v7319
    %v7321 = vpop.f32.mrb[0].mxu0
    %7322 = vdwg.mxu0
    %7324 = vrot.lane.b32.xlu0 %v6785, 96
    %v7325 = vpop.permute.xlu0 %7324
    %v7326 = vsel %vm49, %v6785, 0
    %v7328 = vsel %vm49, %v7325, 0
    %7330 = vmatprep.subr.mxu0 0.0
    %7331 = vmatpush1.xpose.msra.mxu0 %v7328
    %7332 = vmatprep.subr.mxu0 0.0
    %7333 = vmatpush1.xpose.msra.mxu0 0.0
    %7334 = vmatprep.subr.mxu0 0.0
    %7335 = vmatpush1.xpose.msra.mxu0 0.0
    %7336 = vmatprep.subr.mxu0 0.0
    %7337 = vmatpush1.xpose.msra.mxu0 0.0
    %7338 = vmatprep.subr.mxu0 0.0
    %7339 = vmatpush1.xpose.msra.mxu0 0.0
    %7340 = vmatprep.subr.mxu0 0.0
    %7341 = vmatpush1.xpose.msra.mxu0 0.0
    %7342 = vmatprep.subr.mxu0 0.0
    %7343 = vmatpush1.xpose.msra.mxu0 0.0
    %7344 = vmatprep.subr.mxu0 0.0
    %7345 = vmatpush1.xpose.msra.mxu0 0.0
    %7346 = vmatprep.subr.mxu0 0.0
    %7347 = vmatpush1.xpose.msra.mxu0 0.0
    %7348 = vmatprep.subr.mxu0 0.0
    %7349 = vmatpush1.xpose.msra.mxu0 0.0
    %7350 = vmatprep.subr.mxu0 0.0
    %7351 = vmatpush1.xpose.msra.mxu0 0.0
    %7352 = vmatprep.subr.mxu0 0.0
    %7353 = vmatpush1.xpose.msra.mxu0 0.0
    %7354 = vmatprep.subr.mxu0 0.0
    %7355 = vmatpush1.xpose.msra.mxu0 0.0
    %7356 = vmatprep.subr.mxu0 0.0
    %7357 = vmatpush1.xpose.msra.mxu0 0.0
    %7358 = vmatprep.subr.mxu0 0.0
    %7359 = vmatpush1.xpose.msra.mxu0 0.0
    %7360 = vmatprep.subr.mxu0 0.0
    %7361 = vmatpush1.xpose.msra.mxu0 0.0
    %7362 = vmatprep.subr.mxu0 0.0
    %7363 = vmatpush1.xpose.msra.mxu0 0.0
    %7364 = vmatprep.subr.mxu0 0.0
    %7365 = vmatpush1.xpose.msra.mxu0 0.0
    %7366 = vmatprep.subr.mxu0 0.0
    %7367 = vmatpush1.xpose.msra.mxu0 0.0
    %7368 = vmatprep.subr.mxu0 0.0
    %7369 = vmatpush1.xpose.msra.mxu0 0.0
    %7370 = vmatprep.subr.mxu0 0.0
    %7371 = vmatpush1.xpose.msra.mxu0 0.0
    %7372 = vmatprep.subr.mxu0 0.0
    %7373 = vmatpush1.xpose.msra.mxu0 0.0
    %7374 = vmatprep.subr.mxu0 0.0
    %7375 = vmatpush1.xpose.msra.mxu0 0.0
    %7376 = vmatprep.subr.mxu0 0.0
    %7377 = vmatpush1.xpose.msra.mxu0 0.0
    %7378 = vmatprep.subr.mxu0 0.0
    %7379 = vmatpush1.xpose.msra.mxu0 0.0
    %7380 = vmatprep.subr.mxu0 0.0
    %7381 = vmatpush1.xpose.msra.mxu0 0.0
    %7382 = vmatprep.subr.mxu0 0.0
    %7383 = vmatpush1.xpose.msra.mxu0 0.0
    %7384 = vmatprep.subr.mxu0 0.0
    %7385 = vmatpush1.xpose.msra.mxu0 0.0
    %7386 = vmatprep.subr.mxu0 0.0
    %7387 = vmatpush1.xpose.msra.mxu0 0.0
    %7388 = vmatprep.subr.mxu0 0.0
    %7389 = vmatpush1.xpose.msra.mxu0 0.0
    %7390 = vmatprep.subr.mxu0 0.0
    %7391 = vmatpush1.xpose.msra.mxu0 0.0
    %7392 = vmatprep.subr.mxu0 0.0
    %7393 = vmatpush1.xpose.msra.mxu0 0.0
    %7394 = vmatprep.mubr.f32.mxu0 0.0
    %7395 = vmatmul.mubr.f32.gmra.mrb[0].mxu0 %v7326
    %v7396 = vpop.f32.mrb[0].mxu0
    %v7397 = vadd.f32 0.0, %v7396
    %v7398 = vpop.f32.mrb[0].mxu0
    %7399 = vdwg.mxu0
    %7401 = vrot.lane.b32.xlu0 %v6858, 96
    %v7402 = vpop.permute.xlu0 %7401
    %v7403 = vsel %vm49, %v6858, 0
    %v7405 = vsel %vm49, %v7402, 0
    %7407 = vmatprep.subr.mxu0 0.0
    %7408 = vmatpush1.xpose.msra.mxu0 %v7405
    %7409 = vmatprep.subr.mxu0 0.0
    %7410 = vmatpush1.xpose.msra.mxu0 0.0
    %7411 = vmatprep.subr.mxu0 0.0
    %7412 = vmatpush1.xpose.msra.mxu0 0.0
    %7413 = vmatprep.subr.mxu0 0.0
    %7414 = vmatpush1.xpose.msra.mxu0 0.0
    %7415 = vmatprep.subr.mxu0 0.0
    %7416 = vmatpush1.xpose.msra.mxu0 0.0
    %7417 = vmatprep.subr.mxu0 0.0
    %7418 = vmatpush1.xpose.msra.mxu0 0.0
    %7419 = vmatprep.subr.mxu0 0.0
    %7420 = vmatpush1.xpose.msra.mxu0 0.0
    %7421 = vmatprep.subr.mxu0 0.0
    %7422 = vmatpush1.xpose.msra.mxu0 0.0
    %7423 = vmatprep.subr.mxu0 0.0
    %7424 = vmatpush1.xpose.msra.mxu0 0.0
    %7425 = vmatprep.subr.mxu0 0.0
    %7426 = vmatpush1.xpose.msra.mxu0 0.0
    %7427 = vmatprep.subr.mxu0 0.0
    %7428 = vmatpush1.xpose.msra.mxu0 0.0
    %7429 = vmatprep.subr.mxu0 0.0
    %7430 = vmatpush1.xpose.msra.mxu0 0.0
    %7431 = vmatprep.subr.mxu0 0.0
    %7432 = vmatpush1.xpose.msra.mxu0 0.0
    %7433 = vmatprep.subr.mxu0 0.0
    %7434 = vmatpush1.xpose.msra.mxu0 0.0
    %7435 = vmatprep.subr.mxu0 0.0
    %7436 = vmatpush1.xpose.msra.mxu0 0.0
    %7437 = vmatprep.subr.mxu0 0.0
    %7438 = vmatpush1.xpose.msra.mxu0 0.0
    %7439 = vmatprep.subr.mxu0 0.0
    %7440 = vmatpush1.xpose.msra.mxu0 0.0
    %7441 = vmatprep.subr.mxu0 0.0
    %7442 = vmatpush1.xpose.msra.mxu0 0.0
    %7443 = vmatprep.subr.mxu0 0.0
    %7444 = vmatpush1.xpose.msra.mxu0 0.0
    %7445 = vmatprep.subr.mxu0 0.0
    %7446 = vmatpush1.xpose.msra.mxu0 0.0
    %7447 = vmatprep.subr.mxu0 0.0
    %7448 = vmatpush1.xpose.msra.mxu0 0.0
    %7449 = vmatprep.subr.mxu0 0.0
    %7450 = vmatpush1.xpose.msra.mxu0 0.0
    %7451 = vmatprep.subr.mxu0 0.0
    %7452 = vmatpush1.xpose.msra.mxu0 0.0
    %7453 = vmatprep.subr.mxu0 0.0
    %7454 = vmatpush1.xpose.msra.mxu0 0.0
    %7455 = vmatprep.subr.mxu0 0.0
    %7456 = vmatpush1.xpose.msra.mxu0 0.0
    %7457 = vmatprep.subr.mxu0 0.0
    %7458 = vmatpush1.xpose.msra.mxu0 0.0
    %7459 = vmatprep.subr.mxu0 0.0
    %7460 = vmatpush1.xpose.msra.mxu0 0.0
    %7461 = vmatprep.subr.mxu0 0.0
    %7462 = vmatpush1.xpose.msra.mxu0 0.0
    %7463 = vmatprep.subr.mxu0 0.0
    %7464 = vmatpush1.xpose.msra.mxu0 0.0
    %7465 = vmatprep.subr.mxu0 0.0
    %7466 = vmatpush1.xpose.msra.mxu0 0.0
    %7467 = vmatprep.subr.mxu0 0.0
    %7468 = vmatpush1.xpose.msra.mxu0 0.0
    %7469 = vmatprep.subr.mxu0 0.0
    %7470 = vmatpush1.xpose.msra.mxu0 0.0
    %7471 = vmatprep.mubr.f32.mxu0 0.0
    %7472 = vmatmul.mubr.f32.gmra.mrb[0].mxu0 %v7403
    %v7473 = vpop.f32.mrb[0].mxu0
    %v7474 = vadd.f32 0.0, %v7473
    %v7475 = vpop.f32.mrb[0].mxu0
    %7476 = vdwg.mxu0
    %v7477 = vmul.f32 %v6935, 0.25
    %v7478 = vmul.f32 %v7012, 0.25
    %v7479 = vmul.f32 %v7089, 0.25
    %v7480 = vmul.f32 %v7166, 0.25
    %v7481 = vmul.f32 %v7243, 0.25
    %v7482 = vmul.f32 %v7320, 0.25
    %v7483 = vmul.f32 %v7397, 0.25
    %v7484 = vmul.f32 %v7474, 0.25
    %v7485 = vadd.f32 %v7477, %v2156
    %v7486 = vadd.f32 %v7478, %v2157
    %v7487 = vadd.f32 %v7479, %v2158
    %v7488 = vadd.f32 %v7480, %v2159
    %v7489 = vadd.f32 %v7481, %v2160
    %v7490 = vadd.f32 %v7482, %v2161
    %v7491 = vadd.f32 %v7483, %v2162
    %v7492 = vadd.f32 %v7484, %v2163
    %v7493 = vsel %vm2164, %v7485, -inf
    %7494 = vmax.xlane.f32.xlu0 %v7493
    %v7495 = vpop.xlane.xlu0 %7494
    %v7496 = vsel %vm2164, %v7486, -inf
    %7497 = vmax.xlane.f32.xlu0 %v7496
    %v7498 = vpop.xlane.xlu0 %7497
    %v7499 = vsel %vm2164, %v7487, -inf
    %7500 = vmax.xlane.f32.xlu0 %v7499
    %v7501 = vpop.xlane.xlu0 %7500
    %v7502 = vsel %vm2164, %v7488, -inf
    %7503 = vmax.xlane.f32.xlu0 %v7502
    %v7504 = vpop.xlane.xlu0 %7503
    %v7505 = vsel %vm2164, %v7489, -inf
    %7506 = vmax.xlane.f32.xlu0 %v7505
    %v7507 = vpop.xlane.xlu0 %7506
    %v7508 = vsel %vm2164, %v7490, -inf
    %7509 = vmax.xlane.f32.xlu0 %v7508
    %v7510 = vpop.xlane.xlu0 %7509
    %v7511 = vsel %vm2164, %v7491, -inf
    %7512 = vmax.xlane.f32.xlu0 %v7511
    %v7513 = vpop.xlane.xlu0 %7512
    %v7514 = vsel %vm2164, %v7492, -inf
    %7515 = vmax.xlane.f32.xlu0 %v7514
    %v7516 = vpop.xlane.xlu0 %7515
    %v7517 = vsub.f32 %v7485, %v7495
    %v7518 = vsub.f32 %v7486, %v7498
    %v7519 = vsub.f32 %v7487, %v7501
    %v7520 = vsub.f32 %v7488, %v7504
    %v7521 = vsub.f32 %v7489, %v7507
    %v7522 = vsub.f32 %v7490, %v7510
    %v7523 = vsub.f32 %v7491, %v7513
    %v7524 = vsub.f32 %v7492, %v7516
    %v7525 = vmul.f32 %v7517, 1.442695
    %v7526 = vpow.pop %v7525
    %v7527 = vmul.f32 %v7518, 1.442695
    %v7528 = vpow.pop %v7527
    %v7529 = vmul.f32 %v7519, 1.442695
    %v7530 = vpow.pop %v7529
    %v7531 = vmul.f32 %v7520, 1.442695
    %v7532 = vpow.pop %v7531
    %v7533 = vmul.f32 %v7521, 1.442695
    %v7534 = vpow.pop %v7533
    %v7535 = vmul.f32 %v7522, 1.442695
    %v7536 = vpow.pop %v7535
    %v7537 = vmul.f32 %v7523, 1.442695
    %v7538 = vpow.pop %v7537
    %v7539 = vmul.f32 %v7524, 1.442695
    %v7540 = vpow.pop %v7539
    %v7541 = vsel %vm2164, %v7526, 0.0
    %7542 = vadd.xlane.f32.xlu0 %v7541
    %v7543 = vpop.xlane.xlu0 %7542
    %v7544 = vsel %vm2164, %v7528, 0.0
    %7545 = vadd.xlane.f32.xlu0 %v7544
    %v7546 = vpop.xlane.xlu0 %7545
    %v7547 = vsel %vm2164, %v7530, 0.0
    %7548 = vadd.xlane.f32.xlu0 %v7547
    %v7549 = vpop.xlane.xlu0 %7548
    %v7550 = vsel %vm2164, %v7532, 0.0
    %7551 = vadd.xlane.f32.xlu0 %v7550
    %v7552 = vpop.xlane.xlu0 %7551
    %v7553 = vsel %vm2164, %v7534, 0.0
    %7554 = vadd.xlane.f32.xlu0 %v7553
    %v7555 = vpop.xlane.xlu0 %7554
    %v7556 = vsel %vm2164, %v7536, 0.0
    %7557 = vadd.xlane.f32.xlu0 %v7556
    %v7558 = vpop.xlane.xlu0 %7557
    %v7559 = vsel %vm2164, %v7538, 0.0
    %7560 = vadd.xlane.f32.xlu0 %v7559
    %v7561 = vpop.xlane.xlu0 %7560
    %v7562 = vsel %vm2164, %v7540, 0.0
    %7563 = vadd.xlane.f32.xlu0 %v7562
    %v7564 = vpop.xlane.xlu0 %7563
    %v7565 = vrcp.pop %v7543
    %v7566 = vmul.f32 %v7526, %v7565
    %v7567 = vrcp.pop %v7546
    %v7568 = vmul.f32 %v7528, %v7567
    %v7569 = vrcp.pop %v7549
    %v7570 = vmul.f32 %v7530, %v7569
    %v7571 = vrcp.pop %v7552
    %v7572 = vmul.f32 %v7532, %v7571
    %v7573 = vrcp.pop %v7555
    %v7574 = vmul.f32 %v7534, %v7573
    %v7575 = vrcp.pop %v7558
    %v7576 = vmul.f32 %v7536, %v7575
    %v7577 = vrcp.pop %v7561
    %v7578 = vmul.f32 %v7538, %v7577
    %v7579 = vrcp.pop %v7564
    %v7580 = vmul.f32 %v7540, %v7579
    %7581 = vrot.lane.b32.xlu0 %v6347, 64
    %v7582 = vpop.permute.xlu0 %7581
    %v7584 = vsel %vm2255, %v7566, 0
    %v7586 = vsel %vm2259, %v7582, 0
    %7588 = vmatprep.subr.mxu0 0.0
    %7589 = vmatpush1.msra.mxu0 %v7586
    %7590 = vmatprep.subr.mxu0 0.0
    %7591 = vmatpush1.msra.mxu0 0.0
    %7592 = vmatprep.subr.mxu0 0.0
    %7593 = vmatpush1.msra.mxu0 0.0
    %7594 = vmatprep.subr.mxu0 0.0
    %7595 = vmatpush1.msra.mxu0 0.0
    %7596 = vmatprep.subr.mxu0 0.0
    %7597 = vmatpush1.msra.mxu0 0.0
    %7598 = vmatprep.subr.mxu0 0.0
    %7599 = vmatpush1.msra.mxu0 0.0
    %7600 = vmatprep.subr.mxu0 0.0
    %7601 = vmatpush1.msra.mxu0 0.0
    %7602 = vmatprep.subr.mxu0 0.0
    %7603 = vmatpush1.msra.mxu0 0.0
    %7604 = vmatprep.subr.mxu0 0.0
    %7605 = vmatpush1.msra.mxu0 0.0
    %7606 = vmatprep.subr.mxu0 0.0
    %7607 = vmatpush1.msra.mxu0 0.0
    %7608 = vmatprep.subr.mxu0 0.0
    %7609 = vmatpush1.msra.mxu0 0.0
    %7610 = vmatprep.subr.mxu0 0.0
    %7611 = vmatpush1.msra.mxu0 0.0
    %7612 = vmatprep.subr.mxu0 0.0
    %7613 = vmatpush1.msra.mxu0 0.0
    %7614 = vmatprep.subr.mxu0 0.0
    %7615 = vmatpush1.msra.mxu0 0.0
    %7616 = vmatprep.subr.mxu0 0.0
    %7617 = vmatpush1.msra.mxu0 0.0
    %7618 = vmatprep.subr.mxu0 0.0
    %7619 = vmatpush1.msra.mxu0 0.0
    %7620 = vmatprep.subr.mxu0 0.0
    %7621 = vmatpush1.msra.mxu0 0.0
    %7622 = vmatprep.subr.mxu0 0.0
    %7623 = vmatpush1.msra.mxu0 0.0
    %7624 = vmatprep.subr.mxu0 0.0
    %7625 = vmatpush1.msra.mxu0 0.0
    %7626 = vmatprep.subr.mxu0 0.0
    %7627 = vmatpush1.msra.mxu0 0.0
    %7628 = vmatprep.subr.mxu0 0.0
    %7629 = vmatpush1.msra.mxu0 0.0
    %7630 = vmatprep.subr.mxu0 0.0
    %7631 = vmatpush1.msra.mxu0 0.0
    %7632 = vmatprep.subr.mxu0 0.0
    %7633 = vmatpush1.msra.mxu0 0.0
    %7634 = vmatprep.subr.mxu0 0.0
    %7635 = vmatpush1.msra.mxu0 0.0
    %7636 = vmatprep.subr.mxu0 0.0
    %7637 = vmatpush1.msra.mxu0 0.0
    %7638 = vmatprep.subr.mxu0 0.0
    %7639 = vmatpush1.msra.mxu0 0.0
    %7640 = vmatprep.subr.mxu0 0.0
    %7641 = vmatpush1.msra.mxu0 0.0
    %7642 = vmatprep.subr.mxu0 0.0
    %7643 = vmatpush1.msra.mxu0 0.0
    %7644 = vmatprep.subr.mxu0 0.0
    %7645 = vmatpush1.msra.mxu0 0.0
    %7646 = vmatprep.subr.mxu0 0.0
    %7647 = vmatpush1.msra.mxu0 0.0
    %7648 = vmatprep.subr.mxu0 0.0
    %7649 = vmatpush1.msra.mxu0 0.0
    %7650 = vmatprep.subr.mxu0 0.0
    %7651 = vmatpush1.msra.mxu0 0.0
    %7652 = vmatprep.mubr.f32.mxu0 0.0
    %7653 = vmatmul.mubr.f32.gmra.mrb[0].mxu0 %v7584
    %v7654 = vpop.f32.mrb[0].mxu0
    %v7655 = vadd.f32 0.0, %v7654
    %v7656 = vpop.f32.mrb[0].mxu0
    %7657 = vdwg.mxu0
    %7658 = vrot.lane.b32.xlu0 %v6420, 64
    %v7659 = vpop.permute.xlu0 %7658
    %v7661 = vsel %vm2255, %v7568, 0
    %v7663 = vsel %vm2259, %v7659, 0
    %7665 = vmatprep.subr.mxu0 0.0
    %7666 = vmatpush1.msra.mxu0 %v7663
    %7667 = vmatprep.subr.mxu0 0.0
    %7668 = vmatpush1.msra.mxu0 0.0
    %7669 = vmatprep.subr.mxu0 0.0
    %7670 = vmatpush1.msra.mxu0 0.0
    %7671 = vmatprep.subr.mxu0 0.0
    %7672 = vmatpush1.msra.mxu0 0.0
    %7673 = vmatprep.subr.mxu0 0.0
    %7674 = vmatpush1.msra.mxu0 0.0
    %7675 = vmatprep.subr.mxu0 0.0
    %7676 = vmatpush1.msra.mxu0 0.0
    %7677 = vmatprep.subr.mxu0 0.0
    %7678 = vmatpush1.msra.mxu0 0.0
    %7679 = vmatprep.subr.mxu0 0.0
    %7680 = vmatpush1.msra.mxu0 0.0
    %7681 = vmatprep.subr.mxu0 0.0
    %7682 = vmatpush1.msra.mxu0 0.0
    %7683 = vmatprep.subr.mxu0 0.0
    %7684 = vmatpush1.msra.mxu0 0.0
    %7685 = vmatprep.subr.mxu0 0.0
    %7686 = vmatpush1.msra.mxu0 0.0
    %7687 = vmatprep.subr.mxu0 0.0
    %7688 = vmatpush1.msra.mxu0 0.0
    %7689 = vmatprep.subr.mxu0 0.0
    %7690 = vmatpush1.msra.mxu0 0.0
    %7691 = vmatprep.subr.mxu0 0.0
    %7692 = vmatpush1.msra.mxu0 0.0
    %7693 = vmatprep.subr.mxu0 0.0
    %7694 = vmatpush1.msra.mxu0 0.0
    %7695 = vmatprep.subr.mxu0 0.0
    %7696 = vmatpush1.msra.mxu0 0.0
    %7697 = vmatprep.subr.mxu0 0.0
    %7698 = vmatpush1.msra.mxu0 0.0
    %7699 = vmatprep.subr.mxu0 0.0
    %7700 = vmatpush1.msra.mxu0 0.0
    %7701 = vmatprep.subr.mxu0 0.0
    %7702 = vmatpush1.msra.mxu0 0.0
    %7703 = vmatprep.subr.mxu0 0.0
    %7704 = vmatpush1.msra.mxu0 0.0
    %7705 = vmatprep.subr.mxu0 0.0
    %7706 = vmatpush1.msra.mxu0 0.0
    %7707 = vmatprep.subr.mxu0 0.0
    %7708 = vmatpush1.msra.mxu0 0.0
    %7709 = vmatprep.subr.mxu0 0.0
    %7710 = vmatpush1.msra.mxu0 0.0
    %7711 = vmatprep.subr.mxu0 0.0
    %7712 = vmatpush1.msra.mxu0 0.0
    %7713 = vmatprep.subr.mxu0 0.0
    %7714 = vmatpush1.msra.mxu0 0.0
    %7715 = vmatprep.subr.mxu0 0.0
    %7716 = vmatpush1.msra.mxu0 0.0
    %7717 = vmatprep.subr.mxu0 0.0
    %7718 = vmatpush1.msra.mxu0 0.0
    %7719 = vmatprep.subr.mxu0 0.0
    %7720 = vmatpush1.msra.mxu0 0.0
    %7721 = vmatprep.subr.mxu0 0.0
    %7722 = vmatpush1.msra.mxu0 0.0
    %7723 = vmatprep.subr.mxu0 0.0
    %7724 = vmatpush1.msra.mxu0 0.0
    %7725 = vmatprep.subr.mxu0 0.0
    %7726 = vmatpush1.msra.mxu0 0.0
    %7727 = vmatprep.subr.mxu0 0.0
    %7728 = vmatpush1.msra.mxu0 0.0
    %7729 = vmatprep.mubr.f32.mxu0 0.0
    %7730 = vmatmul.mubr.f32.gmra.mrb[0].mxu0 %v7661
    %v7731 = vpop.f32.mrb[0].mxu0
    %v7732 = vadd.f32 0.0, %v7731
    %v7733 = vpop.f32.mrb[0].mxu0
    %7734 = vdwg.mxu0
    %7735 = vrot.lane.b32.xlu0 %v6493, 64
    %v7736 = vpop.permute.xlu0 %7735
    %v7738 = vsel %vm2255, %v7570, 0
    %v7740 = vsel %vm2259, %v7736, 0
    %7742 = vmatprep.subr.mxu0 0.0
    %7743 = vmatpush1.msra.mxu0 %v7740
    %7744 = vmatprep.subr.mxu0 0.0
    %7745 = vmatpush1.msra.mxu0 0.0
    %7746 = vmatprep.subr.mxu0 0.0
    %7747 = vmatpush1.msra.mxu0 0.0
    %7748 = vmatprep.subr.mxu0 0.0
    %7749 = vmatpush1.msra.mxu0 0.0
    %7750 = vmatprep.subr.mxu0 0.0
    %7751 = vmatpush1.msra.mxu0 0.0
    %7752 = vmatprep.subr.mxu0 0.0
    %7753 = vmatpush1.msra.mxu0 0.0
    %7754 = vmatprep.subr.mxu0 0.0
    %7755 = vmatpush1.msra.mxu0 0.0
    %7756 = vmatprep.subr.mxu0 0.0
    %7757 = vmatpush1.msra.mxu0 0.0
    %7758 = vmatprep.subr.mxu0 0.0
    %7759 = vmatpush1.msra.mxu0 0.0
    %7760 = vmatprep.subr.mxu0 0.0
    %7761 = vmatpush1.msra.mxu0 0.0
    %7762 = vmatprep.subr.mxu0 0.0
    %7763 = vmatpush1.msra.mxu0 0.0
    %7764 = vmatprep.subr.mxu0 0.0
    %7765 = vmatpush1.msra.mxu0 0.0
    %7766 = vmatprep.subr.mxu0 0.0
    %7767 = vmatpush1.msra.mxu0 0.0
    %7768 = vmatprep.subr.mxu0 0.0
    %7769 = vmatpush1.msra.mxu0 0.0
    %7770 = vmatprep.subr.mxu0 0.0
    %7771 = vmatpush1.msra.mxu0 0.0
    %7772 = vmatprep.subr.mxu0 0.0
    %7773 = vmatpush1.msra.mxu0 0.0
    %7774 = vmatprep.subr.mxu0 0.0
    %7775 = vmatpush1.msra.mxu0 0.0
    %7776 = vmatprep.subr.mxu0 0.0
    %7777 = vmatpush1.msra.mxu0 0.0
    %7778 = vmatprep.subr.mxu0 0.0
    %7779 = vmatpush1.msra.mxu0 0.0
    %7780 = vmatprep.subr.mxu0 0.0
    %7781 = vmatpush1.msra.mxu0 0.0
    %7782 = vmatprep.subr.mxu0 0.0
    %7783 = vmatpush1.msra.mxu0 0.0
    %7784 = vmatprep.subr.mxu0 0.0
    %7785 = vmatpush1.msra.mxu0 0.0
    %7786 = vmatprep.subr.mxu0 0.0
    %7787 = vmatpush1.msra.mxu0 0.0
    %7788 = vmatprep.subr.mxu0 0.0
    %7789 = vmatpush1.msra.mxu0 0.0
    %7790 = vmatprep.subr.mxu0 0.0
    %7791 = vmatpush1.msra.mxu0 0.0
    %7792 = vmatprep.subr.mxu0 0.0
    %7793 = vmatpush1.msra.mxu0 0.0
    %7794 = vmatprep.subr.mxu0 0.0
    %7795 = vmatpush1.msra.mxu0 0.0
    %7796 = vmatprep.subr.mxu0 0.0
    %7797 = vmatpush1.msra.mxu0 0.0
    %7798 = vmatprep.subr.mxu0 0.0
    %7799 = vmatpush1.msra.mxu0 0.0
    %7800 = vmatprep.subr.mxu0 0.0
    %7801 = vmatpush1.msra.mxu0 0.0
    %7802 = vmatprep.subr.mxu0 0.0
    %7803 = vmatpush1.msra.mxu0 0.0
    %7804 = vmatprep.subr.mxu0 0.0
    %7805 = vmatpush1.msra.mxu0 0.0
    %7806 = vmatprep.mubr.f32.mxu0 0.0
    %7807 = vmatmul.mubr.f32.gmra.mrb[0].mxu0 %v7738
    %v7808 = vpop.f32.mrb[0].mxu0
    %v7809 = vadd.f32 0.0, %v7808
    %v7810 = vpop.f32.mrb[0].mxu0
    %7811 = vdwg.mxu0
    %7812 = vrot.lane.b32.xlu0 %v6566, 64
    %v7813 = vpop.permute.xlu0 %7812
    %v7815 = vsel %vm2255, %v7572, 0
    %v7817 = vsel %vm2259, %v7813, 0
    %7819 = vmatprep.subr.mxu0 0.0
    %7820 = vmatpush1.msra.mxu0 %v7817
    %7821 = vmatprep.subr.mxu0 0.0
    %7822 = vmatpush1.msra.mxu0 0.0
    %7823 = vmatprep.subr.mxu0 0.0
    %7824 = vmatpush1.msra.mxu0 0.0
    %7825 = vmatprep.subr.mxu0 0.0
    %7826 = vmatpush1.msra.mxu0 0.0
    %7827 = vmatprep.subr.mxu0 0.0
    %7828 = vmatpush1.msra.mxu0 0.0
    %7829 = vmatprep.subr.mxu0 0.0
    %7830 = vmatpush1.msra.mxu0 0.0
    %7831 = vmatprep.subr.mxu0 0.0
    %7832 = vmatpush1.msra.mxu0 0.0
    %7833 = vmatprep.subr.mxu0 0.0
    %7834 = vmatpush1.msra.mxu0 0.0
    %7835 = vmatprep.subr.mxu0 0.0
    %7836 = vmatpush1.msra.mxu0 0.0
    %7837 = vmatprep.subr.mxu0 0.0
    %7838 = vmatpush1.msra.mxu0 0.0
    %7839 = vmatprep.subr.mxu0 0.0
    %7840 = vmatpush1.msra.mxu0 0.0
    %7841 = vmatprep.subr.mxu0 0.0
    %7842 = vmatpush1.msra.mxu0 0.0
    %7843 = vmatprep.subr.mxu0 0.0
    %7844 = vmatpush1.msra.mxu0 0.0
    %7845 = vmatprep.subr.mxu0 0.0
    %7846 = vmatpush1.msra.mxu0 0.0
    %7847 = vmatprep.subr.mxu0 0.0
    %7848 = vmatpush1.msra.mxu0 0.0
    %7849 = vmatprep.subr.mxu0 0.0
    %7850 = vmatpush1.msra.mxu0 0.0
    %7851 = vmatprep.subr.mxu0 0.0
    %7852 = vmatpush1.msra.mxu0 0.0
    %7853 = vmatprep.subr.mxu0 0.0
    %7854 = vmatpush1.msra.mxu0 0.0
    %7855 = vmatprep.subr.mxu0 0.0
    %7856 = vmatpush1.msra.mxu0 0.0
    %7857 = vmatprep.subr.mxu0 0.0
    %7858 = vmatpush1.msra.mxu0 0.0
    %7859 = vmatprep.subr.mxu0 0.0
    %7860 = vmatpush1.msra.mxu0 0.0
    %7861 = vmatprep.subr.mxu0 0.0
    %7862 = vmatpush1.msra.mxu0 0.0
    %7863 = vmatprep.subr.mxu0 0.0
    %7864 = vmatpush1.msra.mxu0 0.0
    %7865 = vmatprep.subr.mxu0 0.0
    %7866 = vmatpush1.msra.mxu0 0.0
    %7867 = vmatprep.subr.mxu0 0.0
    %7868 = vmatpush1.msra.mxu0 0.0
    %7869 = vmatprep.subr.mxu0 0.0
    %7870 = vmatpush1.msra.mxu0 0.0
    %7871 = vmatprep.subr.mxu0 0.0
    %7872 = vmatpush1.msra.mxu0 0.0
    %7873 = vmatprep.subr.mxu0 0.0
    %7874 = vmatpush1.msra.mxu0 0.0
    %7875 = vmatprep.subr.mxu0 0.0
    %7876 = vmatpush1.msra.mxu0 0.0
    %7877 = vmatprep.subr.mxu0 0.0
    %7878 = vmatpush1.msra.mxu0 0.0
    %7879 = vmatprep.subr.mxu0 0.0
    %7880 = vmatpush1.msra.mxu0 0.0
    %7881 = vmatprep.subr.mxu0 0.0
    %7882 = vmatpush1.msra.mxu0 0.0
    %7883 = vmatprep.mubr.f32.mxu0 0.0
    %7884 = vmatmul.mubr.f32.gmra.mrb[0].mxu0 %v7815
    %v7885 = vpop.f32.mrb[0].mxu0
    %v7886 = vadd.f32 0.0, %v7885
    %v7887 = vpop.f32.mrb[0].mxu0
    %7888 = vdwg.mxu0
    %7889 = vrot.lane.b32.xlu0 %v6639, 64
    %v7890 = vpop.permute.xlu0 %7889
    %v7892 = vsel %vm2255, %v7574, 0
    %v7894 = vsel %vm2259, %v7890, 0
    %7896 = vmatprep.subr.mxu0 0.0
    %7897 = vmatpush1.msra.mxu0 %v7894
    %7898 = vmatprep.subr.mxu0 0.0
    %7899 = vmatpush1.msra.mxu0 0.0
    %7900 = vmatprep.subr.mxu0 0.0
    %7901 = vmatpush1.msra.mxu0 0.0
    %7902 = vmatprep.subr.mxu0 0.0
    %7903 = vmatpush1.msra.mxu0 0.0
    %7904 = vmatprep.subr.mxu0 0.0
    %7905 = vmatpush1.msra.mxu0 0.0
    %7906 = vmatprep.subr.mxu0 0.0
    %7907 = vmatpush1.msra.mxu0 0.0
    %7908 = vmatprep.subr.mxu0 0.0
    %7909 = vmatpush1.msra.mxu0 0.0
    %7910 = vmatprep.subr.mxu0 0.0
    %7911 = vmatpush1.msra.mxu0 0.0
    %7912 = vmatprep.subr.mxu0 0.0
    %7913 = vmatpush1.msra.mxu0 0.0
    %7914 = vmatprep.subr.mxu0 0.0
    %7915 = vmatpush1.msra.mxu0 0.0
    %7916 = vmatprep.subr.mxu0 0.0
    %7917 = vmatpush1.msra.mxu0 0.0
    %7918 = vmatprep.subr.mxu0 0.0
    %7919 = vmatpush1.msra.mxu0 0.0
    %7920 = vmatprep.subr.mxu0 0.0
    %7921 = vmatpush1.msra.mxu0 0.0
    %7922 = vmatprep.subr.mxu0 0.0
    %7923 = vmatpush1.msra.mxu0 0.0
    %7924 = vmatprep.subr.mxu0 0.0
    %7925 = vmatpush1.msra.mxu0 0.0
    %7926 = vmatprep.subr.mxu0 0.0
    %7927 = vmatpush1.msra.mxu0 0.0
    %7928 = vmatprep.subr.mxu0 0.0
    %7929 = vmatpush1.msra.mxu0 0.0
    %7930 = vmatprep.subr.mxu0 0.0
    %7931 = vmatpush1.msra.mxu0 0.0
    %7932 = vmatprep.subr.mxu0 0.0
    %7933 = vmatpush1.msra.mxu0 0.0
    %7934 = vmatprep.subr.mxu0 0.0
    %7935 = vmatpush1.msra.mxu0 0.0
    %7936 = vmatprep.subr.mxu0 0.0
    %7937 = vmatpush1.msra.mxu0 0.0
    %7938 = vmatprep.subr.mxu0 0.0
    %7939 = vmatpush1.msra.mxu0 0.0
    %7940 = vmatprep.subr.mxu0 0.0
    %7941 = vmatpush1.msra.mxu0 0.0
    %7942 = vmatprep.subr.mxu0 0.0
    %7943 = vmatpush1.msra.mxu0 0.0
    %7944 = vmatprep.subr.mxu0 0.0
    %7945 = vmatpush1.msra.mxu0 0.0
    %7946 = vmatprep.subr.mxu0 0.0
    %7947 = vmatpush1.msra.mxu0 0.0
    %7948 = vmatprep.subr.mxu0 0.0
    %7949 = vmatpush1.msra.mxu0 0.0
    %7950 = vmatprep.subr.mxu0 0.0
    %7951 = vmatpush1.msra.mxu0 0.0
    %7952 = vmatprep.subr.mxu0 0.0
    %7953 = vmatpush1.msra.mxu0 0.0
    %7954 = vmatprep.subr.mxu0 0.0
    %7955 = vmatpush1.msra.mxu0 0.0
    %7956 = vmatprep.subr.mxu0 0.0
    %7957 = vmatpush1.msra.mxu0 0.0
    %7958 = vmatprep.subr.mxu0 0.0
    %7959 = vmatpush1.msra.mxu0 0.0
    %7960 = vmatprep.mubr.f32.mxu0 0.0
    %7961 = vmatmul.mubr.f32.gmra.mrb[0].mxu0 %v7892
    %v7962 = vpop.f32.mrb[0].mxu0
    %v7963 = vadd.f32 0.0, %v7962
    %v7964 = vpop.f32.mrb[0].mxu0
    %7965 = vdwg.mxu0
    %7966 = vrot.lane.b32.xlu0 %v6712, 64
    %v7967 = vpop.permute.xlu0 %7966
    %v7969 = vsel %vm2255, %v7576, 0
    %v7971 = vsel %vm2259, %v7967, 0
    %7973 = vmatprep.subr.mxu0 0.0
    %7974 = vmatpush1.msra.mxu0 %v7971
    %7975 = vmatprep.subr.mxu0 0.0
    %7976 = vmatpush1.msra.mxu0 0.0
    %7977 = vmatprep.subr.mxu0 0.0
    %7978 = vmatpush1.msra.mxu0 0.0
    %7979 = vmatprep.subr.mxu0 0.0
    %7980 = vmatpush1.msra.mxu0 0.0
    %7981 = vmatprep.subr.mxu0 0.0
    %7982 = vmatpush1.msra.mxu0 0.0
    %7983 = vmatprep.subr.mxu0 0.0
    %7984 = vmatpush1.msra.mxu0 0.0
    %7985 = vmatprep.subr.mxu0 0.0
    %7986 = vmatpush1.msra.mxu0 0.0
    %7987 = vmatprep.subr.mxu0 0.0
    %7988 = vmatpush1.msra.mxu0 0.0
    %7989 = vmatprep.subr.mxu0 0.0
    %7990 = vmatpush1.msra.mxu0 0.0
    %7991 = vmatprep.subr.mxu0 0.0
    %7992 = vmatpush1.msra.mxu0 0.0
    %7993 = vmatprep.subr.mxu0 0.0
    %7994 = vmatpush1.msra.mxu0 0.0
    %7995 = vmatprep.subr.mxu0 0.0
    %7996 = vmatpush1.msra.mxu0 0.0
    %7997 = vmatprep.subr.mxu0 0.0
    %7998 = vmatpush1.msra.mxu0 0.0
    %7999 = vmatprep.subr.mxu0 0.0
    %8000 = vmatpush1.msra.mxu0 0.0
    %8001 = vmatprep.subr.mxu0 0.0
    %8002 = vmatpush1.msra.mxu0 0.0
    %8003 = vmatprep.subr.mxu0 0.0
    %8004 = vmatpush1.msra.mxu0 0.0
    %8005 = vmatprep.subr.mxu0 0.0
    %8006 = vmatpush1.msra.mxu0 0.0
    %8007 = vmatprep.subr.mxu0 0.0
    %8008 = vmatpush1.msra.mxu0 0.0
    %8009 = vmatprep.subr.mxu0 0.0
    %8010 = vmatpush1.msra.mxu0 0.0
    %8011 = vmatprep.subr.mxu0 0.0
    %8012 = vmatpush1.msra.mxu0 0.0
    %8013 = vmatprep.subr.mxu0 0.0
    %8014 = vmatpush1.msra.mxu0 0.0
    %8015 = vmatprep.subr.mxu0 0.0
    %8016 = vmatpush1.msra.mxu0 0.0
    %8017 = vmatprep.subr.mxu0 0.0
    %8018 = vmatpush1.msra.mxu0 0.0
    %8019 = vmatprep.subr.mxu0 0.0
    %8020 = vmatpush1.msra.mxu0 0.0
    %8021 = vmatprep.subr.mxu0 0.0
    %8022 = vmatpush1.msra.mxu0 0.0
    %8023 = vmatprep.subr.mxu0 0.0
    %8024 = vmatpush1.msra.mxu0 0.0
    %8025 = vmatprep.subr.mxu0 0.0
    %8026 = vmatpush1.msra.mxu0 0.0
    %8027 = vmatprep.subr.mxu0 0.0
    %8028 = vmatpush1.msra.mxu0 0.0
    %8029 = vmatprep.subr.mxu0 0.0
    %8030 = vmatpush1.msra.mxu0 0.0
    %8031 = vmatprep.subr.mxu0 0.0
    %8032 = vmatpush1.msra.mxu0 0.0
    %8033 = vmatprep.subr.mxu0 0.0
    %8034 = vmatpush1.msra.mxu0 0.0
    %8035 = vmatprep.subr.mxu0 0.0
    %8036 = vmatpush1.msra.mxu0 0.0
    %8037 = vmatprep.mubr.f32.mxu0 0.0
    %8038 = vmatmul.mubr.f32.gmra.mrb[0].mxu0 %v7969
    %v8039 = vpop.f32.mrb[0].mxu0
    %v8040 = vadd.f32 0.0, %v8039
    %v8041 = vpop.f32.mrb[0].mxu0
    %8042 = vdwg.mxu0
    %8043 = vrot.lane.b32.xlu0 %v6785, 64
    %v8044 = vpop.permute.xlu0 %8043
    %v8046 = vsel %vm2255, %v7578, 0
    %v8048 = vsel %vm2259, %v8044, 0
    %8050 = vmatprep.subr.mxu0 0.0
    %8051 = vmatpush1.msra.mxu0 %v8048
    %8052 = vmatprep.subr.mxu0 0.0
    %8053 = vmatpush1.msra.mxu0 0.0
    %8054 = vmatprep.subr.mxu0 0.0
    %8055 = vmatpush1.msra.mxu0 0.0
    %8056 = vmatprep.subr.mxu0 0.0
    %8057 = vmatpush1.msra.mxu0 0.0
    %8058 = vmatprep.subr.mxu0 0.0
    %8059 = vmatpush1.msra.mxu0 0.0
    %8060 = vmatprep.subr.mxu0 0.0
    %8061 = vmatpush1.msra.mxu0 0.0
    %8062 = vmatprep.subr.mxu0 0.0
    %8063 = vmatpush1.msra.mxu0 0.0
    %8064 = vmatprep.subr.mxu0 0.0
    %8065 = vmatpush1.msra.mxu0 0.0
    %8066 = vmatprep.subr.mxu0 0.0
    %8067 = vmatpush1.msra.mxu0 0.0
    %8068 = vmatprep.subr.mxu0 0.0
    %8069 = vmatpush1.msra.mxu0 0.0
    %8070 = vmatprep.subr.mxu0 0.0
    %8071 = vmatpush1.msra.mxu0 0.0
    %8072 = vmatprep.subr.mxu0 0.0
    %8073 = vmatpush1.msra.mxu0 0.0
    %8074 = vmatprep.subr.mxu0 0.0
    %8075 = vmatpush1.msra.mxu0 0.0
    %8076 = vmatprep.subr.mxu0 0.0
    %8077 = vmatpush1.msra.mxu0 0.0
    %8078 = vmatprep.subr.mxu0 0.0
    %8079 = vmatpush1.msra.mxu0 0.0
    %8080 = vmatprep.subr.mxu0 0.0
    %8081 = vmatpush1.msra.mxu0 0.0
    %8082 = vmatprep.subr.mxu0 0.0
    %8083 = vmatpush1.msra.mxu0 0.0
    %8084 = vmatprep.subr.mxu0 0.0
    %8085 = vmatpush1.msra.mxu0 0.0
    %8086 = vmatprep.subr.mxu0 0.0
    %8087 = vmatpush1.msra.mxu0 0.0
    %8088 = vmatprep.subr.mxu0 0.0
    %8089 = vmatpush1.msra.mxu0 0.0
    %8090 = vmatprep.subr.mxu0 0.0
    %8091 = vmatpush1.msra.mxu0 0.0
    %8092 = vmatprep.subr.mxu0 0.0
    %8093 = vmatpush1.msra.mxu0 0.0
    %8094 = vmatprep.subr.mxu0 0.0
    %8095 = vmatpush1.msra.mxu0 0.0
    %8096 = vmatprep.subr.mxu0 0.0
    %8097 = vmatpush1.msra.mxu0 0.0
    %8098 = vmatprep.subr.mxu0 0.0
    %8099 = vmatpush1.msra.mxu0 0.0
    %8100 = vmatprep.subr.mxu0 0.0
    %8101 = vmatpush1.msra.mxu0 0.0
    %8102 = vmatprep.subr.mxu0 0.0
    %8103 = vmatpush1.msra.mxu0 0.0
    %8104 = vmatprep.subr.mxu0 0.0
    %8105 = vmatpush1.msra.mxu0 0.0
    %8106 = vmatprep.subr.mxu0 0.0
    %8107 = vmatpush1.msra.mxu0 0.0
    %8108 = vmatprep.subr.mxu0 0.0
    %8109 = vmatpush1.msra.mxu0 0.0
    %8110 = vmatprep.subr.mxu0 0.0
    %8111 = vmatpush1.msra.mxu0 0.0
    %8112 = vmatprep.subr.mxu0 0.0
    %8113 = vmatpush1.msra.mxu0 0.0
    %8114 = vmatprep.mubr.f32.mxu0 0.0
    %8115 = vmatmul.mubr.f32.gmra.mrb[0].mxu0 %v8046
    %v8116 = vpop.f32.mrb[0].mxu0
    %v8117 = vadd.f32 0.0, %v8116
    %v8118 = vpop.f32.mrb[0].mxu0
    %8119 = vdwg.mxu0
    %8120 = vrot.lane.b32.xlu0 %v6858, 64
    %v8121 = vpop.permute.xlu0 %8120
    %v8123 = vsel %vm2255, %v7580, 0
    %v8125 = vsel %vm2259, %v8121, 0
    %8127 = vmatprep.subr.mxu0 0.0
    %8128 = vmatpush1.msra.mxu0 %v8125
    %8129 = vmatprep.subr.mxu0 0.0
    %8130 = vmatpush1.msra.mxu0 0.0
    %8131 = vmatprep.subr.mxu0 0.0
    %8132 = vmatpush1.msra.mxu0 0.0
    %8133 = vmatprep.subr.mxu0 0.0
    %8134 = vmatpush1.msra.mxu0 0.0
    %8135 = vmatprep.subr.mxu0 0.0
    %8136 = vmatpush1.msra.mxu0 0.0
    %8137 = vmatprep.subr.mxu0 0.0
    %8138 = vmatpush1.msra.mxu0 0.0
    %8139 = vmatprep.subr.mxu0 0.0
    %8140 = vmatpush1.msra.mxu0 0.0
    %8141 = vmatprep.subr.mxu0 0.0
    %8142 = vmatpush1.msra.mxu0 0.0
    %8143 = vmatprep.subr.mxu0 0.0
    %8144 = vmatpush1.msra.mxu0 0.0
    %8145 = vmatprep.subr.mxu0 0.0
    %8146 = vmatpush1.msra.mxu0 0.0
    %8147 = vmatprep.subr.mxu0 0.0
    %8148 = vmatpush1.msra.mxu0 0.0
    %8149 = vmatprep.subr.mxu0 0.0
    %8150 = vmatpush1.msra.mxu0 0.0
    %8151 = vmatprep.subr.mxu0 0.0
    %8152 = vmatpush1.msra.mxu0 0.0
    %8153 = vmatprep.subr.mxu0 0.0
    %8154 = vmatpush1.msra.mxu0 0.0
    %8155 = vmatprep.subr.mxu0 0.0
    %8156 = vmatpush1.msra.mxu0 0.0
    %8157 = vmatprep.subr.mxu0 0.0
    %8158 = vmatpush1.msra.mxu0 0.0
    %8159 = vmatprep.subr.mxu0 0.0
    %8160 = vmatpush1.msra.mxu0 0.0
    %8161 = vmatprep.subr.mxu0 0.0
    %8162 = vmatpush1.msra.mxu0 0.0
    %8163 = vmatprep.subr.mxu0 0.0
    %8164 = vmatpush1.msra.mxu0 0.0
    %8165 = vmatprep.subr.mxu0 0.0
    %8166 = vmatpush1.msra.mxu0 0.0
    %8167 = vmatprep.subr.mxu0 0.0
    %8168 = vmatpush1.msra.mxu0 0.0
    %8169 = vmatprep.subr.mxu0 0.0
    %8170 = vmatpush1.msra.mxu0 0.0
    %8171 = vmatprep.subr.mxu0 0.0
    %8172 = vmatpush1.msra.mxu0 0.0
    %8173 = vmatprep.subr.mxu0 0.0
    %8174 = vmatpush1.msra.mxu0 0.0
    %8175 = vmatprep.subr.mxu0 0.0
    %8176 = vmatpush1.msra.mxu0 0.0
    %8177 = vmatprep.subr.mxu0 0.0
    %8178 = vmatpush1.msra.mxu0 0.0
    %8179 = vmatprep.subr.mxu0 0.0
    %8180 = vmatpush1.msra.mxu0 0.0
    %8181 = vmatprep.subr.mxu0 0.0
    %8182 = vmatpush1.msra.mxu0 0.0
    %8183 = vmatprep.subr.mxu0 0.0
    %8184 = vmatpush1.msra.mxu0 0.0
    %8185 = vmatprep.subr.mxu0 0.0
    %8186 = vmatpush1.msra.mxu0 0.0
    %8187 = vmatprep.subr.mxu0 0.0
    %8188 = vmatpush1.msra.mxu0 0.0
    %8189 = vmatprep.subr.mxu0 0.0
    %8190 = vmatpush1.msra.mxu0 0.0
    %8191 = vmatprep.mubr.f32.mxu0 0.0
    %8192 = vmatmul.mubr.f32.gmra.mrb[0].mxu0 %v8123
    %v8193 = vpop.f32.mrb[0].mxu0
    %v8194 = vadd.f32 0.0, %v8193
    %v8195 = vpop.f32.mrb[0].mxu0
    %8196 = vdwg.mxu0
    %8197 = vrot.lane.b32.xlu0 %v6347, 112
    %v8198 = vpop.permute.xlu0 %8197
    %8199 = vrot.lane.b32.xlu0 %v6347, 80
    %v8200 = vpop.permute.xlu0 %8199
    %v8201 = vsel %vm49, %v8198, 0
    %v8203 = vsel %vm49, %v8200, 0
    %8205 = vmatprep.subr.mxu0 0.0
    %8206 = vmatpush1.xpose.msra.mxu0 %v8203
    %8207 = vmatprep.subr.mxu0 0.0
    %8208 = vmatpush1.xpose.msra.mxu0 0.0
    %8209 = vmatprep.subr.mxu0 0.0
    %8210 = vmatpush1.xpose.msra.mxu0 0.0
    %8211 = vmatprep.subr.mxu0 0.0
    %8212 = vmatpush1.xpose.msra.mxu0 0.0
    %8213 = vmatprep.subr.mxu0 0.0
    %8214 = vmatpush1.xpose.msra.mxu0 0.0
    %8215 = vmatprep.subr.mxu0 0.0
    %8216 = vmatpush1.xpose.msra.mxu0 0.0
    %8217 = vmatprep.subr.mxu0 0.0
    %8218 = vmatpush1.xpose.msra.mxu0 0.0
    %8219 = vmatprep.subr.mxu0 0.0
    %8220 = vmatpush1.xpose.msra.mxu0 0.0
    %8221 = vmatprep.subr.mxu0 0.0
    %8222 = vmatpush1.xpose.msra.mxu0 0.0
    %8223 = vmatprep.subr.mxu0 0.0
    %8224 = vmatpush1.xpose.msra.mxu0 0.0
    %8225 = vmatprep.subr.mxu0 0.0
    %8226 = vmatpush1.xpose.msra.mxu0 0.0
    %8227 = vmatprep.subr.mxu0 0.0
    %8228 = vmatpush1.xpose.msra.mxu0 0.0
    %8229 = vmatprep.subr.mxu0 0.0
    %8230 = vmatpush1.xpose.msra.mxu0 0.0
    %8231 = vmatprep.subr.mxu0 0.0
    %8232 = vmatpush1.xpose.msra.mxu0 0.0
    %8233 = vmatprep.subr.mxu0 0.0
    %8234 = vmatpush1.xpose.msra.mxu0 0.0
    %8235 = vmatprep.subr.mxu0 0.0
    %8236 = vmatpush1.xpose.msra.mxu0 0.0
    %8237 = vmatprep.subr.mxu0 0.0
    %8238 = vmatpush1.xpose.msra.mxu0 0.0
    %8239 = vmatprep.subr.mxu0 0.0
    %8240 = vmatpush1.xpose.msra.mxu0 0.0
    %8241 = vmatprep.subr.mxu0 0.0
    %8242 = vmatpush1.xpose.msra.mxu0 0.0
    %8243 = vmatprep.subr.mxu0 0.0
    %8244 = vmatpush1.xpose.msra.mxu0 0.0
    %8245 = vmatprep.subr.mxu0 0.0
    %8246 = vmatpush1.xpose.msra.mxu0 0.0
    %8247 = vmatprep.subr.mxu0 0.0
    %8248 = vmatpush1.xpose.msra.mxu0 0.0
    %8249 = vmatprep.subr.mxu0 0.0
    %8250 = vmatpush1.xpose.msra.mxu0 0.0
    %8251 = vmatprep.subr.mxu0 0.0
    %8252 = vmatpush1.xpose.msra.mxu0 0.0
    %8253 = vmatprep.subr.mxu0 0.0
    %8254 = vmatpush1.xpose.msra.mxu0 0.0
    %8255 = vmatprep.subr.mxu0 0.0
    %8256 = vmatpush1.xpose.msra.mxu0 0.0
    %8257 = vmatprep.subr.mxu0 0.0
    %8258 = vmatpush1.xpose.msra.mxu0 0.0
    %8259 = vmatprep.subr.mxu0 0.0
    %8260 = vmatpush1.xpose.msra.mxu0 0.0
    %8261 = vmatprep.subr.mxu0 0.0
    %8262 = vmatpush1.xpose.msra.mxu0 0.0
    %8263 = vmatprep.subr.mxu0 0.0
    %8264 = vmatpush1.xpose.msra.mxu0 0.0
    %8265 = vmatprep.subr.mxu0 0.0
    %8266 = vmatpush1.xpose.msra.mxu0 0.0
    %8267 = vmatprep.subr.mxu0 0.0
    %8268 = vmatpush1.xpose.msra.mxu0 0.0
    %8269 = vmatprep.mubr.f32.mxu0 0.0
    %8270 = vmatmul.mubr.f32.gmra.mrb[0].mxu0 %v8201
    %v8271 = vpop.f32.mrb[0].mxu0
    %v8272 = vadd.f32 0.0, %v8271
    %v8273 = vpop.f32.mrb[0].mxu0
    %8274 = vdwg.mxu0
    %8275 = vrot.lane.b32.xlu0 %v6420, 112
    %v8276 = vpop.permute.xlu0 %8275
    %8277 = vrot.lane.b32.xlu0 %v6420, 80
    %v8278 = vpop.permute.xlu0 %8277
    %v8279 = vsel %vm49, %v8276, 0
    %v8281 = vsel %vm49, %v8278, 0
    %8283 = vmatprep.subr.mxu0 0.0
    %8284 = vmatpush1.xpose.msra.mxu0 %v8281
    %8285 = vmatprep.subr.mxu0 0.0
    %8286 = vmatpush1.xpose.msra.mxu0 0.0
    %8287 = vmatprep.subr.mxu0 0.0
    %8288 = vmatpush1.xpose.msra.mxu0 0.0
    %8289 = vmatprep.subr.mxu0 0.0
    %8290 = vmatpush1.xpose.msra.mxu0 0.0
    %8291 = vmatprep.subr.mxu0 0.0
    %8292 = vmatpush1.xpose.msra.mxu0 0.0
    %8293 = vmatprep.subr.mxu0 0.0
    %8294 = vmatpush1.xpose.msra.mxu0 0.0
    %8295 = vmatprep.subr.mxu0 0.0
    %8296 = vmatpush1.xpose.msra.mxu0 0.0
    %8297 = vmatprep.subr.mxu0 0.0
    %8298 = vmatpush1.xpose.msra.mxu0 0.0
    %8299 = vmatprep.subr.mxu0 0.0
    %8300 = vmatpush1.xpose.msra.mxu0 0.0
    %8301 = vmatprep.subr.mxu0 0.0
    %8302 = vmatpush1.xpose.msra.mxu0 0.0
    %8303 = vmatprep.subr.mxu0 0.0
    %8304 = vmatpush1.xpose.msra.mxu0 0.0
    %8305 = vmatprep.subr.mxu0 0.0
    %8306 = vmatpush1.xpose.msra.mxu0 0.0
    %8307 = vmatprep.subr.mxu0 0.0
    %8308 = vmatpush1.xpose.msra.mxu0 0.0
    %8309 = vmatprep.subr.mxu0 0.0
    %8310 = vmatpush1.xpose.msra.mxu0 0.0
    %8311 = vmatprep.subr.mxu0 0.0
    %8312 = vmatpush1.xpose.msra.mxu0 0.0
    %8313 = vmatprep.subr.mxu0 0.0
    %8314 = vmatpush1.xpose.msra.mxu0 0.0
    %8315 = vmatprep.subr.mxu0 0.0
    %8316 = vmatpush1.xpose.msra.mxu0 0.0
    %8317 = vmatprep.subr.mxu0 0.0
    %8318 = vmatpush1.xpose.msra.mxu0 0.0
    %8319 = vmatprep.subr.mxu0 0.0
    %8320 = vmatpush1.xpose.msra.mxu0 0.0
    %8321 = vmatprep.subr.mxu0 0.0
    %8322 = vmatpush1.xpose.msra.mxu0 0.0
    %8323 = vmatprep.subr.mxu0 0.0
    %8324 = vmatpush1.xpose.msra.mxu0 0.0
    %8325 = vmatprep.subr.mxu0 0.0
    %8326 = vmatpush1.xpose.msra.mxu0 0.0
    %8327 = vmatprep.subr.mxu0 0.0
    %8328 = vmatpush1.xpose.msra.mxu0 0.0
    %8329 = vmatprep.subr.mxu0 0.0
    %8330 = vmatpush1.xpose.msra.mxu0 0.0
    %8331 = vmatprep.subr.mxu0 0.0
    %8332 = vmatpush1.xpose.msra.mxu0 0.0
    %8333 = vmatprep.subr.mxu0 0.0
    %8334 = vmatpush1.xpose.msra.mxu0 0.0
    %8335 = vmatprep.subr.mxu0 0.0
    %8336 = vmatpush1.xpose.msra.mxu0 0.0
    %8337 = vmatprep.subr.mxu0 0.0
    %8338 = vmatpush1.xpose.msra.mxu0 0.0
    %8339 = vmatprep.subr.mxu0 0.0
    %8340 = vmatpush1.xpose.msra.mxu0 0.0
    %8341 = vmatprep.subr.mxu0 0.0
    %8342 = vmatpush1.xpose.msra.mxu0 0.0
    %8343 = vmatprep.subr.mxu0 0.0
    %8344 = vmatpush1.xpose.msra.mxu0 0.0
    %8345 = vmatprep.subr.mxu0 0.0
    %8346 = vmatpush1.xpose.msra.mxu0 0.0
    %8347 = vmatprep.mubr.f32.mxu0 0.0
    %8348 = vmatmul.mubr.f32.gmra.mrb[0].mxu0 %v8279
    %v8349 = vpop.f32.mrb[0].mxu0
    %v8350 = vadd.f32 0.0, %v8349
    %v8351 = vpop.f32.mrb[0].mxu0
    %8352 = vdwg.mxu0
    %8353 = vrot.lane.b32.xlu0 %v6493, 112
    %v8354 = vpop.permute.xlu0 %8353
    %8355 = vrot.lane.b32.xlu0 %v6493, 80
    %v8356 = vpop.permute.xlu0 %8355
    %v8357 = vsel %vm49, %v8354, 0
    %v8359 = vsel %vm49, %v8356, 0
    %8361 = vmatprep.subr.mxu0 0.0
    %8362 = vmatpush1.xpose.msra.mxu0 %v8359
    %8363 = vmatprep.subr.mxu0 0.0
    %8364 = vmatpush1.xpose.msra.mxu0 0.0
    %8365 = vmatprep.subr.mxu0 0.0
    %8366 = vmatpush1.xpose.msra.mxu0 0.0
    %8367 = vmatprep.subr.mxu0 0.0
    %8368 = vmatpush1.xpose.msra.mxu0 0.0
    %8369 = vmatprep.subr.mxu0 0.0
    %8370 = vmatpush1.xpose.msra.mxu0 0.0
    %8371 = vmatprep.subr.mxu0 0.0
    %8372 = vmatpush1.xpose.msra.mxu0 0.0
    %8373 = vmatprep.subr.mxu0 0.0
    %8374 = vmatpush1.xpose.msra.mxu0 0.0
    %8375 = vmatprep.subr.mxu0 0.0
    %8376 = vmatpush1.xpose.msra.mxu0 0.0
    %8377 = vmatprep.subr.mxu0 0.0
    %8378 = vmatpush1.xpose.msra.mxu0 0.0
    %8379 = vmatprep.subr.mxu0 0.0
    %8380 = vmatpush1.xpose.msra.mxu0 0.0
    %8381 = vmatprep.subr.mxu0 0.0
    %8382 = vmatpush1.xpose.msra.mxu0 0.0
    %8383 = vmatprep.subr.mxu0 0.0
    %8384 = vmatpush1.xpose.msra.mxu0 0.0
    %8385 = vmatprep.subr.mxu0 0.0
    %8386 = vmatpush1.xpose.msra.mxu0 0.0
    %8387 = vmatprep.subr.mxu0 0.0
    %8388 = vmatpush1.xpose.msra.mxu0 0.0
    %8389 = vmatprep.subr.mxu0 0.0
    %8390 = vmatpush1.xpose.msra.mxu0 0.0
    %8391 = vmatprep.subr.mxu0 0.0
    %8392 = vmatpush1.xpose.msra.mxu0 0.0
    %8393 = vmatprep.subr.mxu0 0.0
    %8394 = vmatpush1.xpose.msra.mxu0 0.0
    %8395 = vmatprep.subr.mxu0 0.0
    %8396 = vmatpush1.xpose.msra.mxu0 0.0
    %8397 = vmatprep.subr.mxu0 0.0
    %8398 = vmatpush1.xpose.msra.mxu0 0.0
    %8399 = vmatprep.subr.mxu0 0.0
    %8400 = vmatpush1.xpose.msra.mxu0 0.0
    %8401 = vmatprep.subr.mxu0 0.0
    %8402 = vmatpush1.xpose.msra.mxu0 0.0
    %8403 = vmatprep.subr.mxu0 0.0
    %8404 = vmatpush1.xpose.msra.mxu0 0.0
    %8405 = vmatprep.subr.mxu0 0.0
    %8406 = vmatpush1.xpose.msra.mxu0 0.0
    %8407 = vmatprep.subr.mxu0 0.0
    %8408 = vmatpush1.xpose.msra.mxu0 0.0
    %8409 = vmatprep.subr.mxu0 0.0
    %8410 = vmatpush1.xpose.msra.mxu0 0.0
    %8411 = vmatprep.subr.mxu0 0.0
    %8412 = vmatpush1.xpose.msra.mxu0 0.0
    %8413 = vmatprep.subr.mxu0 0.0
    %8414 = vmatpush1.xpose.msra.mxu0 0.0
    %8415 = vmatprep.subr.mxu0 0.0
    %8416 = vmatpush1.xpose.msra.mxu0 0.0
    %8417 = vmatprep.subr.mxu0 0.0
    %8418 = vmatpush1.xpose.msra.mxu0 0.0
    %8419 = vmatprep.subr.mxu0 0.0
    %8420 = vmatpush1.xpose.msra.mxu0 0.0
    %8421 = vmatprep.subr.mxu0 0.0
    %8422 = vmatpush1.xpose.msra.mxu0 0.0
    %8423 = vmatprep.subr.mxu0 0.0
    %8424 = vmatpush1.xpose.msra.mxu0 0.0
    %8425 = vmatprep.mubr.f32.mxu0 0.0
    %8426 = vmatmul.mubr.f32.gmra.mrb[0].mxu0 %v8357
    %v8427 = vpop.f32.mrb[0].mxu0
    %v8428 = vadd.f32 0.0, %v8427
    %v8429 = vpop.f32.mrb[0].mxu0
    %8430 = vdwg.mxu0
    %8431 = vrot.lane.b32.xlu0 %v6566, 112
    %v8432 = vpop.permute.xlu0 %8431
    %8433 = vrot.lane.b32.xlu0 %v6566, 80
    %v8434 = vpop.permute.xlu0 %8433
    %v8435 = vsel %vm49, %v8432, 0
    %v8437 = vsel %vm49, %v8434, 0
    %8439 = vmatprep.subr.mxu0 0.0
    %8440 = vmatpush1.xpose.msra.mxu0 %v8437
    %8441 = vmatprep.subr.mxu0 0.0
    %8442 = vmatpush1.xpose.msra.mxu0 0.0
    %8443 = vmatprep.subr.mxu0 0.0
    %8444 = vmatpush1.xpose.msra.mxu0 0.0
    %8445 = vmatprep.subr.mxu0 0.0
    %8446 = vmatpush1.xpose.msra.mxu0 0.0
    %8447 = vmatprep.subr.mxu0 0.0
    %8448 = vmatpush1.xpose.msra.mxu0 0.0
    %8449 = vmatprep.subr.mxu0 0.0
    %8450 = vmatpush1.xpose.msra.mxu0 0.0
    %8451 = vmatprep.subr.mxu0 0.0
    %8452 = vmatpush1.xpose.msra.mxu0 0.0
    %8453 = vmatprep.subr.mxu0 0.0
    %8454 = vmatpush1.xpose.msra.mxu0 0.0
    %8455 = vmatprep.subr.mxu0 0.0
    %8456 = vmatpush1.xpose.msra.mxu0 0.0
    %8457 = vmatprep.subr.mxu0 0.0
    %8458 = vmatpush1.xpose.msra.mxu0 0.0
    %8459 = vmatprep.subr.mxu0 0.0
    %8460 = vmatpush1.xpose.msra.mxu0 0.0
    %8461 = vmatprep.subr.mxu0 0.0
    %8462 = vmatpush1.xpose.msra.mxu0 0.0
    %8463 = vmatprep.subr.mxu0 0.0
    %8464 = vmatpush1.xpose.msra.mxu0 0.0
    %8465 = vmatprep.subr.mxu0 0.0
    %8466 = vmatpush1.xpose.msra.mxu0 0.0
    %8467 = vmatprep.subr.mxu0 0.0
    %8468 = vmatpush1.xpose.msra.mxu0 0.0
    %8469 = vmatprep.subr.mxu0 0.0
    %8470 = vmatpush1.xpose.msra.mxu0 0.0
    %8471 = vmatprep.subr.mxu0 0.0
    %8472 = vmatpush1.xpose.msra.mxu0 0.0
    %8473 = vmatprep.subr.mxu0 0.0
    %8474 = vmatpush1.xpose.msra.mxu0 0.0
    %8475 = vmatprep.subr.mxu0 0.0
    %8476 = vmatpush1.xpose.msra.mxu0 0.0
    %8477 = vmatprep.subr.mxu0 0.0
    %8478 = vmatpush1.xpose.msra.mxu0 0.0
    %8479 = vmatprep.subr.mxu0 0.0
    %8480 = vmatpush1.xpose.msra.mxu0 0.0
    %8481 = vmatprep.subr.mxu0 0.0
    %8482 = vmatpush1.xpose.msra.mxu0 0.0
    %8483 = vmatprep.subr.mxu0 0.0
    %8484 = vmatpush1.xpose.msra.mxu0 0.0
    %8485 = vmatprep.subr.mxu0 0.0
    %8486 = vmatpush1.xpose.msra.mxu0 0.0
    %8487 = vmatprep.subr.mxu0 0.0
    %8488 = vmatpush1.xpose.msra.mxu0 0.0
    %8489 = vmatprep.subr.mxu0 0.0
    %8490 = vmatpush1.xpose.msra.mxu0 0.0
    %8491 = vmatprep.subr.mxu0 0.0
    %8492 = vmatpush1.xpose.msra.mxu0 0.0
    %8493 = vmatprep.subr.mxu0 0.0
    %8494 = vmatpush1.xpose.msra.mxu0 0.0
    %8495 = vmatprep.subr.mxu0 0.0
    %8496 = vmatpush1.xpose.msra.mxu0 0.0
    %8497 = vmatprep.subr.mxu0 0.0
    %8498 = vmatpush1.xpose.msra.mxu0 0.0
    %8499 = vmatprep.subr.mxu0 0.0
    %8500 = vmatpush1.xpose.msra.mxu0 0.0
    %8501 = vmatprep.subr.mxu0 0.0
    %8502 = vmatpush1.xpose.msra.mxu0 0.0
    %8503 = vmatprep.mubr.f32.mxu0 0.0
    %8504 = vmatmul.mubr.f32.gmra.mrb[0].mxu0 %v8435
    %v8505 = vpop.f32.mrb[0].mxu0
    %v8506 = vadd.f32 0.0, %v8505
    %v8507 = vpop.f32.mrb[0].mxu0
    %8508 = vdwg.mxu0
    %8509 = vrot.lane.b32.xlu0 %v6639, 112
    %v8510 = vpop.permute.xlu0 %8509
    %8511 = vrot.lane.b32.xlu0 %v6639, 80
    %v8512 = vpop.permute.xlu0 %8511
    %v8513 = vsel %vm49, %v8510, 0
    %v8515 = vsel %vm49, %v8512, 0
    %8517 = vmatprep.subr.mxu0 0.0
    %8518 = vmatpush1.xpose.msra.mxu0 %v8515
    %8519 = vmatprep.subr.mxu0 0.0
    %8520 = vmatpush1.xpose.msra.mxu0 0.0
    %8521 = vmatprep.subr.mxu0 0.0
    %8522 = vmatpush1.xpose.msra.mxu0 0.0
    %8523 = vmatprep.subr.mxu0 0.0
    %8524 = vmatpush1.xpose.msra.mxu0 0.0
    %8525 = vmatprep.subr.mxu0 0.0
    %8526 = vmatpush1.xpose.msra.mxu0 0.0
    %8527 = vmatprep.subr.mxu0 0.0
    %8528 = vmatpush1.xpose.msra.mxu0 0.0
    %8529 = vmatprep.subr.mxu0 0.0
    %8530 = vmatpush1.xpose.msra.mxu0 0.0
    %8531 = vmatprep.subr.mxu0 0.0
    %8532 = vmatpush1.xpose.msra.mxu0 0.0
    %8533 = vmatprep.subr.mxu0 0.0
    %8534 = vmatpush1.xpose.msra.mxu0 0.0
    %8535 = vmatprep.subr.mxu0 0.0
    %8536 = vmatpush1.xpose.msra.mxu0 0.0
    %8537 = vmatprep.subr.mxu0 0.0
    %8538 = vmatpush1.xpose.msra.mxu0 0.0
    %8539 = vmatprep.subr.mxu0 0.0
    %8540 = vmatpush1.xpose.msra.mxu0 0.0
    %8541 = vmatprep.subr.mxu0 0.0
    %8542 = vmatpush1.xpose.msra.mxu0 0.0
    %8543 = vmatprep.subr.mxu0 0.0
    %8544 = vmatpush1.xpose.msra.mxu0 0.0
    %8545 = vmatprep.subr.mxu0 0.0
    %8546 = vmatpush1.xpose.msra.mxu0 0.0
    %8547 = vmatprep.subr.mxu0 0.0
    %8548 = vmatpush1.xpose.msra.mxu0 0.0
    %8549 = vmatprep.subr.mxu0 0.0
    %8550 = vmatpush1.xpose.msra.mxu0 0.0
    %8551 = vmatprep.subr.mxu0 0.0
    %8552 = vmatpush1.xpose.msra.mxu0 0.0
    %8553 = vmatprep.subr.mxu0 0.0
    %8554 = vmatpush1.xpose.msra.mxu0 0.0
    %8555 = vmatprep.subr.mxu0 0.0
    %8556 = vmatpush1.xpose.msra.mxu0 0.0
    %8557 = vmatprep.subr.mxu0 0.0
    %8558 = vmatpush1.xpose.msra.mxu0 0.0
    %8559 = vmatprep.subr.mxu0 0.0
    %8560 = vmatpush1.xpose.msra.mxu0 0.0
    %8561 = vmatprep.subr.mxu0 0.0
    %8562 = vmatpush1.xpose.msra.mxu0 0.0
    %8563 = vmatprep.subr.mxu0 0.0
    %8564 = vmatpush1.xpose.msra.mxu0 0.0
    %8565 = vmatprep.subr.mxu0 0.0
    %8566 = vmatpush1.xpose.msra.mxu0 0.0
    %8567 = vmatprep.subr.mxu0 0.0
    %8568 = vmatpush1.xpose.msra.mxu0 0.0
    %8569 = vmatprep.subr.mxu0 0.0
    %8570 = vmatpush1.xpose.msra.mxu0 0.0
    %8571 = vmatprep.subr.mxu0 0.0
    %8572 = vmatpush1.xpose.msra.mxu0 0.0
    %8573 = vmatprep.subr.mxu0 0.0
    %8574 = vmatpush1.xpose.msra.mxu0 0.0
    %8575 = vmatprep.subr.mxu0 0.0
    %8576 = vmatpush1.xpose.msra.mxu0 0.0
    %8577 = vmatprep.subr.mxu0 0.0
    %8578 = vmatpush1.xpose.msra.mxu0 0.0
    %8579 = vmatprep.subr.mxu0 0.0
    %8580 = vmatpush1.xpose.msra.mxu0 0.0
    %8581 = vmatprep.mubr.f32.mxu0 0.0
    %8582 = vmatmul.mubr.f32.gmra.mrb[0].mxu0 %v8513
    %v8583 = vpop.f32.mrb[0].mxu0
    %v8584 = vadd.f32 0.0, %v8583
    %v8585 = vpop.f32.mrb[0].mxu0
    %8586 = vdwg.mxu0
    %8587 = vrot.lane.b32.xlu0 %v6712, 112
    %v8588 = vpop.permute.xlu0 %8587
    %8589 = vrot.lane.b32.xlu0 %v6712, 80
    %v8590 = vpop.permute.xlu0 %8589
    %v8591 = vsel %vm49, %v8588, 0
    %v8593 = vsel %vm49, %v8590, 0
    %8595 = vmatprep.subr.mxu0 0.0
    %8596 = vmatpush1.xpose.msra.mxu0 %v8593
    %8597 = vmatprep.subr.mxu0 0.0
    %8598 = vmatpush1.xpose.msra.mxu0 0.0
    %8599 = vmatprep.subr.mxu0 0.0
    %8600 = vmatpush1.xpose.msra.mxu0 0.0
    %8601 = vmatprep.subr.mxu0 0.0
    %8602 = vmatpush1.xpose.msra.mxu0 0.0
    %8603 = vmatprep.subr.mxu0 0.0
    %8604 = vmatpush1.xpose.msra.mxu0 0.0
    %8605 = vmatprep.subr.mxu0 0.0
    %8606 = vmatpush1.xpose.msra.mxu0 0.0
    %8607 = vmatprep.subr.mxu0 0.0
    %8608 = vmatpush1.xpose.msra.mxu0 0.0
    %8609 = vmatprep.subr.mxu0 0.0
    %8610 = vmatpush1.xpose.msra.mxu0 0.0
    %8611 = vmatprep.subr.mxu0 0.0
    %8612 = vmatpush1.xpose.msra.mxu0 0.0
    %8613 = vmatprep.subr.mxu0 0.0
    %8614 = vmatpush1.xpose.msra.mxu0 0.0
    %8615 = vmatprep.subr.mxu0 0.0
    %8616 = vmatpush1.xpose.msra.mxu0 0.0
    %8617 = vmatprep.subr.mxu0 0.0
    %8618 = vmatpush1.xpose.msra.mxu0 0.0
    %8619 = vmatprep.subr.mxu0 0.0
    %8620 = vmatpush1.xpose.msra.mxu0 0.0
    %8621 = vmatprep.subr.mxu0 0.0
    %8622 = vmatpush1.xpose.msra.mxu0 0.0
    %8623 = vmatprep.subr.mxu0 0.0
    %8624 = vmatpush1.xpose.msra.mxu0 0.0
    %8625 = vmatprep.subr.mxu0 0.0
    %8626 = vmatpush1.xpose.msra.mxu0 0.0
    %8627 = vmatprep.subr.mxu0 0.0
    %8628 = vmatpush1.xpose.msra.mxu0 0.0
    %8629 = vmatprep.subr.mxu0 0.0
    %8630 = vmatpush1.xpose.msra.mxu0 0.0
    %8631 = vmatprep.subr.mxu0 0.0
    %8632 = vmatpush1.xpose.msra.mxu0 0.0
    %8633 = vmatprep.subr.mxu0 0.0
    %8634 = vmatpush1.xpose.msra.mxu0 0.0
    %8635 = vmatprep.subr.mxu0 0.0
    %8636 = vmatpush1.xpose.msra.mxu0 0.0
    %8637 = vmatprep.subr.mxu0 0.0
    %8638 = vmatpush1.xpose.msra.mxu0 0.0
    %8639 = vmatprep.subr.mxu0 0.0
    %8640 = vmatpush1.xpose.msra.mxu0 0.0
    %8641 = vmatprep.subr.mxu0 0.0
    %8642 = vmatpush1.xpose.msra.mxu0 0.0
    %8643 = vmatprep.subr.mxu0 0.0
    %8644 = vmatpush1.xpose.msra.mxu0 0.0
    %8645 = vmatprep.subr.mxu0 0.0
    %8646 = vmatpush1.xpose.msra.mxu0 0.0
    %8647 = vmatprep.subr.mxu0 0.0
    %8648 = vmatpush1.xpose.msra.mxu0 0.0
    %8649 = vmatprep.subr.mxu0 0.0
    %8650 = vmatpush1.xpose.msra.mxu0 0.0
    %8651 = vmatprep.subr.mxu0 0.0
    %8652 = vmatpush1.xpose.msra.mxu0 0.0
    %8653 = vmatprep.subr.mxu0 0.0
    %8654 = vmatpush1.xpose.msra.mxu0 0.0
    %8655 = vmatprep.subr.mxu0 0.0
    %8656 = vmatpush1.xpose.msra.mxu0 0.0
    %8657 = vmatprep.subr.mxu0 0.0
    %8658 = vmatpush1.xpose.msra.mxu0 0.0
    %8659 = vmatprep.mubr.f32.mxu0 0.0
    %8660 = vmatmul.mubr.f32.gmra.mrb[0].mxu0 %v8591
    %v8661 = vpop.f32.mrb[0].mxu0
    %v8662 = vadd.f32 0.0, %v8661
    %v8663 = vpop.f32.mrb[0].mxu0
    %8664 = vdwg.mxu0
    %8665 = vrot.lane.b32.xlu0 %v6785, 112
    %v8666 = vpop.permute.xlu0 %8665
    %8667 = vrot.lane.b32.xlu0 %v6785, 80
    %v8668 = vpop.permute.xlu0 %8667
    %v8669 = vsel %vm49, %v8666, 0
    %v8671 = vsel %vm49, %v8668, 0
    %8673 = vmatprep.subr.mxu0 0.0
    %8674 = vmatpush1.xpose.msra.mxu0 %v8671
    %8675 = vmatprep.subr.mxu0 0.0
    %8676 = vmatpush1.xpose.msra.mxu0 0.0
    %8677 = vmatprep.subr.mxu0 0.0
    %8678 = vmatpush1.xpose.msra.mxu0 0.0
    %8679 = vmatprep.subr.mxu0 0.0
    %8680 = vmatpush1.xpose.msra.mxu0 0.0
    %8681 = vmatprep.subr.mxu0 0.0
    %8682 = vmatpush1.xpose.msra.mxu0 0.0
    %8683 = vmatprep.subr.mxu0 0.0
    %8684 = vmatpush1.xpose.msra.mxu0 0.0
    %8685 = vmatprep.subr.mxu0 0.0
    %8686 = vmatpush1.xpose.msra.mxu0 0.0
    %8687 = vmatprep.subr.mxu0 0.0
    %8688 = vmatpush1.xpose.msra.mxu0 0.0
    %8689 = vmatprep.subr.mxu0 0.0
    %8690 = vmatpush1.xpose.msra.mxu0 0.0
    %8691 = vmatprep.subr.mxu0 0.0
    %8692 = vmatpush1.xpose.msra.mxu0 0.0
    %8693 = vmatprep.subr.mxu0 0.0
    %8694 = vmatpush1.xpose.msra.mxu0 0.0
    %8695 = vmatprep.subr.mxu0 0.0
    %8696 = vmatpush1.xpose.msra.mxu0 0.0
    %8697 = vmatprep.subr.mxu0 0.0
    %8698 = vmatpush1.xpose.msra.mxu0 0.0
    %8699 = vmatprep.subr.mxu0 0.0
    %8700 = vmatpush1.xpose.msra.mxu0 0.0
    %8701 = vmatprep.subr.mxu0 0.0
    %8702 = vmatpush1.xpose.msra.mxu0 0.0
    %8703 = vmatprep.subr.mxu0 0.0
    %8704 = vmatpush1.xpose.msra.mxu0 0.0
    %8705 = vmatprep.subr.mxu0 0.0
    %8706 = vmatpush1.xpose.msra.mxu0 0.0
    %8707 = vmatprep.subr.mxu0 0.0
    %8708 = vmatpush1.xpose.msra.mxu0 0.0
    %8709 = vmatprep.subr.mxu0 0.0
    %8710 = vmatpush1.xpose.msra.mxu0 0.0
    %8711 = vmatprep.subr.mxu0 0.0
    %8712 = vmatpush1.xpose.msra.mxu0 0.0
    %8713 = vmatprep.subr.mxu0 0.0
    %8714 = vmatpush1.xpose.msra.mxu0 0.0
    %8715 = vmatprep.subr.mxu0 0.0
    %8716 = vmatpush1.xpose.msra.mxu0 0.0
    %8717 = vmatprep.subr.mxu0 0.0
    %8718 = vmatpush1.xpose.msra.mxu0 0.0
    %8719 = vmatprep.subr.mxu0 0.0
    %8720 = vmatpush1.xpose.msra.mxu0 0.0
    %8721 = vmatprep.subr.mxu0 0.0
    %8722 = vmatpush1.xpose.msra.mxu0 0.0
    %8723 = vmatprep.subr.mxu0 0.0
    %8724 = vmatpush1.xpose.msra.mxu0 0.0
    %8725 = vmatprep.subr.mxu0 0.0
    %8726 = vmatpush1.xpose.msra.mxu0 0.0
    %8727 = vmatprep.subr.mxu0 0.0
    %8728 = vmatpush1.xpose.msra.mxu0 0.0
    %8729 = vmatprep.subr.mxu0 0.0
    %8730 = vmatpush1.xpose.msra.mxu0 0.0
    %8731 = vmatprep.subr.mxu0 0.0
    %8732 = vmatpush1.xpose.msra.mxu0 0.0
    %8733 = vmatprep.subr.mxu0 0.0
    %8734 = vmatpush1.xpose.msra.mxu0 0.0
    %8735 = vmatprep.subr.mxu0 0.0
    %8736 = vmatpush1.xpose.msra.mxu0 0.0
    %8737 = vmatprep.mubr.f32.mxu0 0.0
    %8738 = vmatmul.mubr.f32.gmra.mrb[0].mxu0 %v8669
    %v8739 = vpop.f32.mrb[0].mxu0
    %v8740 = vadd.f32 0.0, %v8739
    %v8741 = vpop.f32.mrb[0].mxu0
    %8742 = vdwg.mxu0
    %8743 = vrot.lane.b32.xlu0 %v6858, 112
    %v8744 = vpop.permute.xlu0 %8743
    %8745 = vrot.lane.b32.xlu0 %v6858, 80
    %v8746 = vpop.permute.xlu0 %8745
    %v8747 = vsel %vm49, %v8744, 0
    %v8749 = vsel %vm49, %v8746, 0
    %8751 = vmatprep.subr.mxu0 0.0
    %8752 = vmatpush1.xpose.msra.mxu0 %v8749
    %8753 = vmatprep.subr.mxu0 0.0
    %8754 = vmatpush1.xpose.msra.mxu0 0.0
    %8755 = vmatprep.subr.mxu0 0.0
    %8756 = vmatpush1.xpose.msra.mxu0 0.0
    %8757 = vmatprep.subr.mxu0 0.0
    %8758 = vmatpush1.xpose.msra.mxu0 0.0
    %8759 = vmatprep.subr.mxu0 0.0
    %8760 = vmatpush1.xpose.msra.mxu0 0.0
    %8761 = vmatprep.subr.mxu0 0.0
    %8762 = vmatpush1.xpose.msra.mxu0 0.0
    %8763 = vmatprep.subr.mxu0 0.0
    %8764 = vmatpush1.xpose.msra.mxu0 0.0
    %8765 = vmatprep.subr.mxu0 0.0
    %8766 = vmatpush1.xpose.msra.mxu0 0.0
    %8767 = vmatprep.subr.mxu0 0.0
    %8768 = vmatpush1.xpose.msra.mxu0 0.0
    %8769 = vmatprep.subr.mxu0 0.0
    %8770 = vmatpush1.xpose.msra.mxu0 0.0
    %8771 = vmatprep.subr.mxu0 0.0
    %8772 = vmatpush1.xpose.msra.mxu0 0.0
    %8773 = vmatprep.subr.mxu0 0.0
    %8774 = vmatpush1.xpose.msra.mxu0 0.0
    %8775 = vmatprep.subr.mxu0 0.0
    %8776 = vmatpush1.xpose.msra.mxu0 0.0
    %8777 = vmatprep.subr.mxu0 0.0
    %8778 = vmatpush1.xpose.msra.mxu0 0.0
    %8779 = vmatprep.subr.mxu0 0.0
    %8780 = vmatpush1.xpose.msra.mxu0 0.0
    %8781 = vmatprep.subr.mxu0 0.0
    %8782 = vmatpush1.xpose.msra.mxu0 0.0
    %8783 = vmatprep.subr.mxu0 0.0
    %8784 = vmatpush1.xpose.msra.mxu0 0.0
    %8785 = vmatprep.subr.mxu0 0.0
    %8786 = vmatpush1.xpose.msra.mxu0 0.0
    %8787 = vmatprep.subr.mxu0 0.0
    %8788 = vmatpush1.xpose.msra.mxu0 0.0
    %8789 = vmatprep.subr.mxu0 0.0
    %8790 = vmatpush1.xpose.msra.mxu0 0.0
    %8791 = vmatprep.subr.mxu0 0.0
    %8792 = vmatpush1.xpose.msra.mxu0 0.0
    %8793 = vmatprep.subr.mxu0 0.0
    %8794 = vmatpush1.xpose.msra.mxu0 0.0
    %8795 = vmatprep.subr.mxu0 0.0
    %8796 = vmatpush1.xpose.msra.mxu0 0.0
    %8797 = vmatprep.subr.mxu0 0.0
    %8798 = vmatpush1.xpose.msra.mxu0 0.0
    %8799 = vmatprep.subr.mxu0 0.0
    %8800 = vmatpush1.xpose.msra.mxu0 0.0
    %8801 = vmatprep.subr.mxu0 0.0
    %8802 = vmatpush1.xpose.msra.mxu0 0.0
    %8803 = vmatprep.subr.mxu0 0.0
    %8804 = vmatpush1.xpose.msra.mxu0 0.0
    %8805 = vmatprep.subr.mxu0 0.0
    %8806 = vmatpush1.xpose.msra.mxu0 0.0
    %8807 = vmatprep.subr.mxu0 0.0
    %8808 = vmatpush1.xpose.msra.mxu0 0.0
    %8809 = vmatprep.subr.mxu0 0.0
    %8810 = vmatpush1.xpose.msra.mxu0 0.0
    %8811 = vmatprep.subr.mxu0 0.0
    %8812 = vmatpush1.xpose.msra.mxu0 0.0
    %8813 = vmatprep.subr.mxu0 0.0
    %8814 = vmatpush1.xpose.msra.mxu0 0.0
    %8815 = vmatprep.mubr.f32.mxu0 0.0
    %8816 = vmatmul.mubr.f32.gmra.mrb[0].mxu0 %v8747
    %v8817 = vpop.f32.mrb[0].mxu0
    %v8818 = vadd.f32 0.0, %v8817
    %v8819 = vpop.f32.mrb[0].mxu0
    %8820 = vdwg.mxu0
    %v8821 = vmul.f32 %v8272, 0.25
    %v8822 = vmul.f32 %v8350, 0.25
    %v8823 = vmul.f32 %v8428, 0.25
    %v8824 = vmul.f32 %v8506, 0.25
    %v8825 = vmul.f32 %v8584, 0.25
    %v8826 = vmul.f32 %v8662, 0.25
    %v8827 = vmul.f32 %v8740, 0.25
    %v8828 = vmul.f32 %v8818, 0.25
    %v8829 = vadd.f32 %v8821, %v3495
    %v8830 = vadd.f32 %v8822, %v3496
    %v8831 = vadd.f32 %v8823, %v3497
    %v8832 = vadd.f32 %v8824, %v3498
    %v8833 = vadd.f32 %v8825, %v3499
    %v8834 = vadd.f32 %v8826, %v3500
    %v8835 = vadd.f32 %v8827, %v3501
    %v8836 = vadd.f32 %v8828, %v3502
    %v8837 = vsel %vm2164, %v8829, -inf
    %8838 = vmax.xlane.f32.xlu0 %v8837
    %v8839 = vpop.xlane.xlu0 %8838
    %v8840 = vsel %vm2164, %v8830, -inf
    %8841 = vmax.xlane.f32.xlu0 %v8840
    %v8842 = vpop.xlane.xlu0 %8841
    %v8843 = vsel %vm2164, %v8831, -inf
    %8844 = vmax.xlane.f32.xlu0 %v8843
    %v8845 = vpop.xlane.xlu0 %8844
    %v8846 = vsel %vm2164, %v8832, -inf
    %8847 = vmax.xlane.f32.xlu0 %v8846
    %v8848 = vpop.xlane.xlu0 %8847
    %v8849 = vsel %vm2164, %v8833, -inf
    %8850 = vmax.xlane.f32.xlu0 %v8849
    %v8851 = vpop.xlane.xlu0 %8850
    %v8852 = vsel %vm2164, %v8834, -inf
    %8853 = vmax.xlane.f32.xlu0 %v8852
    %v8854 = vpop.xlane.xlu0 %8853
    %v8855 = vsel %vm2164, %v8835, -inf
    %8856 = vmax.xlane.f32.xlu0 %v8855
    %v8857 = vpop.xlane.xlu0 %8856
    %v8858 = vsel %vm2164, %v8836, -inf
    %8859 = vmax.xlane.f32.xlu0 %v8858
    %v8860 = vpop.xlane.xlu0 %8859
    %v8861 = vsub.f32 %v8829, %v8839
    %v8862 = vsub.f32 %v8830, %v8842
    %v8863 = vsub.f32 %v8831, %v8845
    %v8864 = vsub.f32 %v8832, %v8848
    %v8865 = vsub.f32 %v8833, %v8851
    %v8866 = vsub.f32 %v8834, %v8854
    %v8867 = vsub.f32 %v8835, %v8857
    %v8868 = vsub.f32 %v8836, %v8860
    %v8869 = vmul.f32 %v8861, 1.442695
    %v8870 = vpow.pop %v8869
    %v8871 = vmul.f32 %v8862, 1.442695
    %v8872 = vpow.pop %v8871
    %v8873 = vmul.f32 %v8863, 1.442695
    %v8874 = vpow.pop %v8873
    %v8875 = vmul.f32 %v8864, 1.442695
    %v8876 = vpow.pop %v8875
    %v8877 = vmul.f32 %v8865, 1.442695
    %v8878 = vpow.pop %v8877
    %v8879 = vmul.f32 %v8866, 1.442695
    %v8880 = vpow.pop %v8879
    %v8881 = vmul.f32 %v8867, 1.442695
    %v8882 = vpow.pop %v8881
    %v8883 = vmul.f32 %v8868, 1.442695
    %v8884 = vpow.pop %v8883
    %v8885 = vsel %vm2164, %v8870, 0.0
    %8886 = vadd.xlane.f32.xlu0 %v8885
    %v8887 = vpop.xlane.xlu0 %8886
    %v8888 = vsel %vm2164, %v8872, 0.0
    %8889 = vadd.xlane.f32.xlu0 %v8888
    %v8890 = vpop.xlane.xlu0 %8889
    %v8891 = vsel %vm2164, %v8874, 0.0
    %8892 = vadd.xlane.f32.xlu0 %v8891
    %v8893 = vpop.xlane.xlu0 %8892
    %v8894 = vsel %vm2164, %v8876, 0.0
    %8895 = vadd.xlane.f32.xlu0 %v8894
    %v8896 = vpop.xlane.xlu0 %8895
    %v8897 = vsel %vm2164, %v8878, 0.0
    %8898 = vadd.xlane.f32.xlu0 %v8897
    %v8899 = vpop.xlane.xlu0 %8898
    %v8900 = vsel %vm2164, %v8880, 0.0
    %8901 = vadd.xlane.f32.xlu0 %v8900
    %v8902 = vpop.xlane.xlu0 %8901
    %v8903 = vsel %vm2164, %v8882, 0.0
    %8904 = vadd.xlane.f32.xlu0 %v8903
    %v8905 = vpop.xlane.xlu0 %8904
    %v8906 = vsel %vm2164, %v8884, 0.0
    %8907 = vadd.xlane.f32.xlu0 %v8906
    %v8908 = vpop.xlane.xlu0 %8907
    %v8909 = vrcp.pop %v8887
    %v8910 = vmul.f32 %v8870, %v8909
    %v8911 = vrcp.pop %v8890
    %v8912 = vmul.f32 %v8872, %v8911
    %v8913 = vrcp.pop %v8893
    %v8914 = vmul.f32 %v8874, %v8913
    %v8915 = vrcp.pop %v8896
    %v8916 = vmul.f32 %v8876, %v8915
    %v8917 = vrcp.pop %v8899
    %v8918 = vmul.f32 %v8878, %v8917
    %v8919 = vrcp.pop %v8902
    %v8920 = vmul.f32 %v8880, %v8919
    %v8921 = vrcp.pop %v8905
    %v8922 = vmul.f32 %v8882, %v8921
    %v8923 = vrcp.pop %v8908
    %v8924 = vmul.f32 %v8884, %v8923
    %8925 = vrot.lane.b32.xlu0 %v6347, 48
    %v8926 = vpop.permute.xlu0 %8925
    %v8928 = vsel %vm2255, %v8910, 0
    %v8930 = vsel %vm2259, %v8926, 0
    %8932 = vmatprep.subr.mxu0 0.0
    %8933 = vmatpush1.msra.mxu0 %v8930
    %8934 = vmatprep.subr.mxu0 0.0
    %8935 = vmatpush1.msra.mxu0 0.0
    %8936 = vmatprep.subr.mxu0 0.0
    %8937 = vmatpush1.msra.mxu0 0.0
    %8938 = vmatprep.subr.mxu0 0.0
    %8939 = vmatpush1.msra.mxu0 0.0
    %8940 = vmatprep.subr.mxu0 0.0
    %8941 = vmatpush1.msra.mxu0 0.0
    %8942 = vmatprep.subr.mxu0 0.0
    %8943 = vmatpush1.msra.mxu0 0.0
    %8944 = vmatprep.subr.mxu0 0.0
    %8945 = vmatpush1.msra.mxu0 0.0
    %8946 = vmatprep.subr.mxu0 0.0
    %8947 = vmatpush1.msra.mxu0 0.0
    %8948 = vmatprep.subr.mxu0 0.0
    %8949 = vmatpush1.msra.mxu0 0.0
    %8950 = vmatprep.subr.mxu0 0.0
    %8951 = vmatpush1.msra.mxu0 0.0
    %8952 = vmatprep.subr.mxu0 0.0
    %8953 = vmatpush1.msra.mxu0 0.0
    %8954 = vmatprep.subr.mxu0 0.0
    %8955 = vmatpush1.msra.mxu0 0.0
    %8956 = vmatprep.subr.mxu0 0.0
    %8957 = vmatpush1.msra.mxu0 0.0
    %8958 = vmatprep.subr.mxu0 0.0
    %8959 = vmatpush1.msra.mxu0 0.0
    %8960 = vmatprep.subr.mxu0 0.0
    %8961 = vmatpush1.msra.mxu0 0.0
    %8962 = vmatprep.subr.mxu0 0.0
    %8963 = vmatpush1.msra.mxu0 0.0
    %8964 = vmatprep.subr.mxu0 0.0
    %8965 = vmatpush1.msra.mxu0 0.0
    %8966 = vmatprep.subr.mxu0 0.0
    %8967 = vmatpush1.msra.mxu0 0.0
    %8968 = vmatprep.subr.mxu0 0.0
    %8969 = vmatpush1.msra.mxu0 0.0
    %8970 = vmatprep.subr.mxu0 0.0
    %8971 = vmatpush1.msra.mxu0 0.0
    %8972 = vmatprep.subr.mxu0 0.0
    %8973 = vmatpush1.msra.mxu0 0.0
    %8974 = vmatprep.subr.mxu0 0.0
    %8975 = vmatpush1.msra.mxu0 0.0
    %8976 = vmatprep.subr.mxu0 0.0
    %8977 = vmatpush1.msra.mxu0 0.0
    %8978 = vmatprep.subr.mxu0 0.0
    %8979 = vmatpush1.msra.mxu0 0.0
    %8980 = vmatprep.subr.mxu0 0.0
    %8981 = vmatpush1.msra.mxu0 0.0
    %8982 = vmatprep.subr.mxu0 0.0
    %8983 = vmatpush1.msra.mxu0 0.0
    %8984 = vmatprep.subr.mxu0 0.0
    %8985 = vmatpush1.msra.mxu0 0.0
    %8986 = vmatprep.subr.mxu0 0.0
    %8987 = vmatpush1.msra.mxu0 0.0
    %8988 = vmatprep.subr.mxu0 0.0
    %8989 = vmatpush1.msra.mxu0 0.0
    %8990 = vmatprep.subr.mxu0 0.0
    %8991 = vmatpush1.msra.mxu0 0.0
    %8992 = vmatprep.subr.mxu0 0.0
    %8993 = vmatpush1.msra.mxu0 0.0
    %8994 = vmatprep.subr.mxu0 0.0
    %8995 = vmatpush1.msra.mxu0 0.0
    %8996 = vmatprep.mubr.f32.mxu0 0.0
    %8997 = vmatmul.mubr.f32.gmra.mrb[0].mxu0 %v8928
    %v8998 = vpop.f32.mrb[0].mxu0
    %v8999 = vadd.f32 0.0, %v8998
    %v9000 = vpop.f32.mrb[0].mxu0
    %9001 = vdwg.mxu0
    %9002 = vrot.lane.b32.xlu0 %v6420, 48
    %v9003 = vpop.permute.xlu0 %9002
    %v9005 = vsel %vm2255, %v8912, 0
    %v9007 = vsel %vm2259, %v9003, 0
    %9009 = vmatprep.subr.mxu0 0.0
    %9010 = vmatpush1.msra.mxu0 %v9007
    %9011 = vmatprep.subr.mxu0 0.0
    %9012 = vmatpush1.msra.mxu0 0.0
    %9013 = vmatprep.subr.mxu0 0.0
    %9014 = vmatpush1.msra.mxu0 0.0
    %9015 = vmatprep.subr.mxu0 0.0
    %9016 = vmatpush1.msra.mxu0 0.0
    %9017 = vmatprep.subr.mxu0 0.0
    %9018 = vmatpush1.msra.mxu0 0.0
    %9019 = vmatprep.subr.mxu0 0.0
    %9020 = vmatpush1.msra.mxu0 0.0
    %9021 = vmatprep.subr.mxu0 0.0
    %9022 = vmatpush1.msra.mxu0 0.0
    %9023 = vmatprep.subr.mxu0 0.0
    %9024 = vmatpush1.msra.mxu0 0.0
    %9025 = vmatprep.subr.mxu0 0.0
    %9026 = vmatpush1.msra.mxu0 0.0
    %9027 = vmatprep.subr.mxu0 0.0
    %9028 = vmatpush1.msra.mxu0 0.0
    %9029 = vmatprep.subr.mxu0 0.0
    %9030 = vmatpush1.msra.mxu0 0.0
    %9031 = vmatprep.subr.mxu0 0.0
    %9032 = vmatpush1.msra.mxu0 0.0
    %9033 = vmatprep.subr.mxu0 0.0
    %9034 = vmatpush1.msra.mxu0 0.0
    %9035 = vmatprep.subr.mxu0 0.0
    %9036 = vmatpush1.msra.mxu0 0.0
    %9037 = vmatprep.subr.mxu0 0.0
    %9038 = vmatpush1.msra.mxu0 0.0
    %9039 = vmatprep.subr.mxu0 0.0
    %9040 = vmatpush1.msra.mxu0 0.0
    %9041 = vmatprep.subr.mxu0 0.0
    %9042 = vmatpush1.msra.mxu0 0.0
    %9043 = vmatprep.subr.mxu0 0.0
    %9044 = vmatpush1.msra.mxu0 0.0
    %9045 = vmatprep.subr.mxu0 0.0
    %9046 = vmatpush1.msra.mxu0 0.0
    %9047 = vmatprep.subr.mxu0 0.0
    %9048 = vmatpush1.msra.mxu0 0.0
    %9049 = vmatprep.subr.mxu0 0.0
    %9050 = vmatpush1.msra.mxu0 0.0
    %9051 = vmatprep.subr.mxu0 0.0
    %9052 = vmatpush1.msra.mxu0 0.0
    %9053 = vmatprep.subr.mxu0 0.0
    %9054 = vmatpush1.msra.mxu0 0.0
    %9055 = vmatprep.subr.mxu0 0.0
    %9056 = vmatpush1.msra.mxu0 0.0
    %9057 = vmatprep.subr.mxu0 0.0
    %9058 = vmatpush1.msra.mxu0 0.0
    %9059 = vmatprep.subr.mxu0 0.0
    %9060 = vmatpush1.msra.mxu0 0.0
    %9061 = vmatprep.subr.mxu0 0.0
    %9062 = vmatpush1.msra.mxu0 0.0
    %9063 = vmatprep.subr.mxu0 0.0
    %9064 = vmatpush1.msra.mxu0 0.0
    %9065 = vmatprep.subr.mxu0 0.0
    %9066 = vmatpush1.msra.mxu0 0.0
    %9067 = vmatprep.subr.mxu0 0.0
    %9068 = vmatpush1.msra.mxu0 0.0
    %9069 = vmatprep.subr.mxu0 0.0
    %9070 = vmatpush1.msra.mxu0 0.0
    %9071 = vmatprep.subr.mxu0 0.0
    %9072 = vmatpush1.msra.mxu0 0.0
    %9073 = vmatprep.mubr.f32.mxu0 0.0
    %9074 = vmatmul.mubr.f32.gmra.mrb[0].mxu0 %v9005
    %v9075 = vpop.f32.mrb[0].mxu0
    %v9076 = vadd.f32 0.0, %v9075
    %v9077 = vpop.f32.mrb[0].mxu0
    %9078 = vdwg.mxu0
    %9079 = vrot.lane.b32.xlu0 %v6493, 48
    %v9080 = vpop.permute.xlu0 %9079
    %v9082 = vsel %vm2255, %v8914, 0
    %v9084 = vsel %vm2259, %v9080, 0
    %9086 = vmatprep.subr.mxu0 0.0
    %9087 = vmatpush1.msra.mxu0 %v9084
    %9088 = vmatprep.subr.mxu0 0.0
    %9089 = vmatpush1.msra.mxu0 0.0
    %9090 = vmatprep.subr.mxu0 0.0
    %9091 = vmatpush1.msra.mxu0 0.0
    %9092 = vmatprep.subr.mxu0 0.0
    %9093 = vmatpush1.msra.mxu0 0.0
    %9094 = vmatprep.subr.mxu0 0.0
    %9095 = vmatpush1.msra.mxu0 0.0
    %9096 = vmatprep.subr.mxu0 0.0
    %9097 = vmatpush1.msra.mxu0 0.0
    %9098 = vmatprep.subr.mxu0 0.0
    %9099 = vmatpush1.msra.mxu0 0.0
    %9100 = vmatprep.subr.mxu0 0.0
    %9101 = vmatpush1.msra.mxu0 0.0
    %9102 = vmatprep.subr.mxu0 0.0
    %9103 = vmatpush1.msra.mxu0 0.0
    %9104 = vmatprep.subr.mxu0 0.0
    %9105 = vmatpush1.msra.mxu0 0.0
    %9106 = vmatprep.subr.mxu0 0.0
    %9107 = vmatpush1.msra.mxu0 0.0
    %9108 = vmatprep.subr.mxu0 0.0
    %9109 = vmatpush1.msra.mxu0 0.0
    %9110 = vmatprep.subr.mxu0 0.0
    %9111 = vmatpush1.msra.mxu0 0.0
    %9112 = vmatprep.subr.mxu0 0.0
    %9113 = vmatpush1.msra.mxu0 0.0
    %9114 = vmatprep.subr.mxu0 0.0
    %9115 = vmatpush1.msra.mxu0 0.0
    %9116 = vmatprep.subr.mxu0 0.0
    %9117 = vmatpush1.msra.mxu0 0.0
    %9118 = vmatprep.subr.mxu0 0.0
    %9119 = vmatpush1.msra.mxu0 0.0
    %9120 = vmatprep.subr.mxu0 0.0
    %9121 = vmatpush1.msra.mxu0 0.0
    %9122 = vmatprep.subr.mxu0 0.0
    %9123 = vmatpush1.msra.mxu0 0.0
    %9124 = vmatprep.subr.mxu0 0.0
    %9125 = vmatpush1.msra.mxu0 0.0
    %9126 = vmatprep.subr.mxu0 0.0
    %9127 = vmatpush1.msra.mxu0 0.0
    %9128 = vmatprep.subr.mxu0 0.0
    %9129 = vmatpush1.msra.mxu0 0.0
    %9130 = vmatprep.subr.mxu0 0.0
    %9131 = vmatpush1.msra.mxu0 0.0
    %9132 = vmatprep.subr.mxu0 0.0
    %9133 = vmatpush1.msra.mxu0 0.0
    %9134 = vmatprep.subr.mxu0 0.0
    %9135 = vmatpush1.msra.mxu0 0.0
    %9136 = vmatprep.subr.mxu0 0.0
    %9137 = vmatpush1.msra.mxu0 0.0
    %9138 = vmatprep.subr.mxu0 0.0
    %9139 = vmatpush1.msra.mxu0 0.0
    %9140 = vmatprep.subr.mxu0 0.0
    %9141 = vmatpush1.msra.mxu0 0.0
    %9142 = vmatprep.subr.mxu0 0.0
    %9143 = vmatpush1.msra.mxu0 0.0
    %9144 = vmatprep.subr.mxu0 0.0
    %9145 = vmatpush1.msra.mxu0 0.0
    %9146 = vmatprep.subr.mxu0 0.0
    %9147 = vmatpush1.msra.mxu0 0.0
    %9148 = vmatprep.subr.mxu0 0.0
    %9149 = vmatpush1.msra.mxu0 0.0
    %9150 = vmatprep.mubr.f32.mxu0 0.0
    %9151 = vmatmul.mubr.f32.gmra.mrb[0].mxu0 %v9082
    %v9152 = vpop.f32.mrb[0].mxu0
    %v9153 = vadd.f32 0.0, %v9152
    %v9154 = vpop.f32.mrb[0].mxu0
    %9155 = vdwg.mxu0
    %9156 = vrot.lane.b32.xlu0 %v6566, 48
    %v9157 = vpop.permute.xlu0 %9156
    %v9159 = vsel %vm2255, %v8916, 0
    %v9161 = vsel %vm2259, %v9157, 0
    %9163 = vmatprep.subr.mxu0 0.0
    %9164 = vmatpush1.msra.mxu0 %v9161
    %9165 = vmatprep.subr.mxu0 0.0
    %9166 = vmatpush1.msra.mxu0 0.0
    %9167 = vmatprep.subr.mxu0 0.0
    %9168 = vmatpush1.msra.mxu0 0.0
    %9169 = vmatprep.subr.mxu0 0.0
    %9170 = vmatpush1.msra.mxu0 0.0
    %9171 = vmatprep.subr.mxu0 0.0
    %9172 = vmatpush1.msra.mxu0 0.0
    %9173 = vmatprep.subr.mxu0 0.0
    %9174 = vmatpush1.msra.mxu0 0.0
    %9175 = vmatprep.subr.mxu0 0.0
    %9176 = vmatpush1.msra.mxu0 0.0
    %9177 = vmatprep.subr.mxu0 0.0
    %9178 = vmatpush1.msra.mxu0 0.0
    %9179 = vmatprep.subr.mxu0 0.0
    %9180 = vmatpush1.msra.mxu0 0.0
    %9181 = vmatprep.subr.mxu0 0.0
    %9182 = vmatpush1.msra.mxu0 0.0
    %9183 = vmatprep.subr.mxu0 0.0
    %9184 = vmatpush1.msra.mxu0 0.0
    %9185 = vmatprep.subr.mxu0 0.0
    %9186 = vmatpush1.msra.mxu0 0.0
    %9187 = vmatprep.subr.mxu0 0.0
    %9188 = vmatpush1.msra.mxu0 0.0
    %9189 = vmatprep.subr.mxu0 0.0
    %9190 = vmatpush1.msra.mxu0 0.0
    %9191 = vmatprep.subr.mxu0 0.0
    %9192 = vmatpush1.msra.mxu0 0.0
    %9193 = vmatprep.subr.mxu0 0.0
    %9194 = vmatpush1.msra.mxu0 0.0
    %9195 = vmatprep.subr.mxu0 0.0
    %9196 = vmatpush1.msra.mxu0 0.0
    %9197 = vmatprep.subr.mxu0 0.0
    %9198 = vmatpush1.msra.mxu0 0.0
    %9199 = vmatprep.subr.mxu0 0.0
    %9200 = vmatpush1.msra.mxu0 0.0
    %9201 = vmatprep.subr.mxu0 0.0
    %9202 = vmatpush1.msra.mxu0 0.0
    %9203 = vmatprep.subr.mxu0 0.0
    %9204 = vmatpush1.msra.mxu0 0.0
    %9205 = vmatprep.subr.mxu0 0.0
    %9206 = vmatpush1.msra.mxu0 0.0
    %9207 = vmatprep.subr.mxu0 0.0
    %9208 = vmatpush1.msra.mxu0 0.0
    %9209 = vmatprep.subr.mxu0 0.0
    %9210 = vmatpush1.msra.mxu0 0.0
    %9211 = vmatprep.subr.mxu0 0.0
    %9212 = vmatpush1.msra.mxu0 0.0
    %9213 = vmatprep.subr.mxu0 0.0
    %9214 = vmatpush1.msra.mxu0 0.0
    %9215 = vmatprep.subr.mxu0 0.0
    %9216 = vmatpush1.msra.mxu0 0.0
    %9217 = vmatprep.subr.mxu0 0.0
    %9218 = vmatpush1.msra.mxu0 0.0
    %9219 = vmatprep.subr.mxu0 0.0
    %9220 = vmatpush1.msra.mxu0 0.0
    %9221 = vmatprep.subr.mxu0 0.0
    %9222 = vmatpush1.msra.mxu0 0.0
    %9223 = vmatprep.subr.mxu0 0.0
    %9224 = vmatpush1.msra.mxu0 0.0
    %9225 = vmatprep.subr.mxu0 0.0
    %9226 = vmatpush1.msra.mxu0 0.0
    %9227 = vmatprep.mubr.f32.mxu0 0.0
    %9228 = vmatmul.mubr.f32.gmra.mrb[0].mxu0 %v9159
    %v9229 = vpop.f32.mrb[0].mxu0
    %v9230 = vadd.f32 0.0, %v9229
    %v9231 = vpop.f32.mrb[0].mxu0
    %9232 = vdwg.mxu0
    %9233 = vrot.lane.b32.xlu0 %v6639, 48
    %v9234 = vpop.permute.xlu0 %9233
    %v9236 = vsel %vm2255, %v8918, 0
    %v9238 = vsel %vm2259, %v9234, 0
    %9240 = vmatprep.subr.mxu0 0.0
    %9241 = vmatpush1.msra.mxu0 %v9238
    %9242 = vmatprep.subr.mxu0 0.0
    %9243 = vmatpush1.msra.mxu0 0.0
    %9244 = vmatprep.subr.mxu0 0.0
    %9245 = vmatpush1.msra.mxu0 0.0
    %9246 = vmatprep.subr.mxu0 0.0
    %9247 = vmatpush1.msra.mxu0 0.0
    %9248 = vmatprep.subr.mxu0 0.0
    %9249 = vmatpush1.msra.mxu0 0.0
    %9250 = vmatprep.subr.mxu0 0.0
    %9251 = vmatpush1.msra.mxu0 0.0
    %9252 = vmatprep.subr.mxu0 0.0
    %9253 = vmatpush1.msra.mxu0 0.0
    %9254 = vmatprep.subr.mxu0 0.0
    %9255 = vmatpush1.msra.mxu0 0.0
    %9256 = vmatprep.subr.mxu0 0.0
    %9257 = vmatpush1.msra.mxu0 0.0
    %9258 = vmatprep.subr.mxu0 0.0
    %9259 = vmatpush1.msra.mxu0 0.0
    %9260 = vmatprep.subr.mxu0 0.0
    %9261 = vmatpush1.msra.mxu0 0.0
    %9262 = vmatprep.subr.mxu0 0.0
    %9263 = vmatpush1.msra.mxu0 0.0
    %9264 = vmatprep.subr.mxu0 0.0
    %9265 = vmatpush1.msra.mxu0 0.0
    %9266 = vmatprep.subr.mxu0 0.0
    %9267 = vmatpush1.msra.mxu0 0.0
    %9268 = vmatprep.subr.mxu0 0.0
    %9269 = vmatpush1.msra.mxu0 0.0
    %9270 = vmatprep.subr.mxu0 0.0
    %9271 = vmatpush1.msra.mxu0 0.0
    %9272 = vmatprep.subr.mxu0 0.0
    %9273 = vmatpush1.msra.mxu0 0.0
    %9274 = vmatprep.subr.mxu0 0.0
    %9275 = vmatpush1.msra.mxu0 0.0
    %9276 = vmatprep.subr.mxu0 0.0
    %9277 = vmatpush1.msra.mxu0 0.0
    %9278 = vmatprep.subr.mxu0 0.0
    %9279 = vmatpush1.msra.mxu0 0.0
    %9280 = vmatprep.subr.mxu0 0.0
    %9281 = vmatpush1.msra.mxu0 0.0
    %9282 = vmatprep.subr.mxu0 0.0
    %9283 = vmatpush1.msra.mxu0 0.0
    %9284 = vmatprep.subr.mxu0 0.0
    %9285 = vmatpush1.msra.mxu0 0.0
    %9286 = vmatprep.subr.mxu0 0.0
    %9287 = vmatpush1.msra.mxu0 0.0
    %9288 = vmatprep.subr.mxu0 0.0
    %9289 = vmatpush1.msra.mxu0 0.0
    %9290 = vmatprep.subr.mxu0 0.0
    %9291 = vmatpush1.msra.mxu0 0.0
    %9292 = vmatprep.subr.mxu0 0.0
    %9293 = vmatpush1.msra.mxu0 0.0
    %9294 = vmatprep.subr.mxu0 0.0
    %9295 = vmatpush1.msra.mxu0 0.0
    %9296 = vmatprep.subr.mxu0 0.0
    %9297 = vmatpush1.msra.mxu0 0.0
    %9298 = vmatprep.subr.mxu0 0.0
    %9299 = vmatpush1.msra.mxu0 0.0
    %9300 = vmatprep.subr.mxu0 0.0
    %9301 = vmatpush1.msra.mxu0 0.0
    %9302 = vmatprep.subr.mxu0 0.0
    %9303 = vmatpush1.msra.mxu0 0.0
    %9304 = vmatprep.mubr.f32.mxu0 0.0
    %9305 = vmatmul.mubr.f32.gmra.mrb[0].mxu0 %v9236
    %v9306 = vpop.f32.mrb[0].mxu0
    %v9307 = vadd.f32 0.0, %v9306
    %v9308 = vpop.f32.mrb[0].mxu0
    %9309 = vdwg.mxu0
    %9310 = vrot.lane.b32.xlu0 %v6712, 48
    %v9311 = vpop.permute.xlu0 %9310
    %v9313 = vsel %vm2255, %v8920, 0
    %v9315 = vsel %vm2259, %v9311, 0
    %9317 = vmatprep.subr.mxu0 0.0
    %9318 = vmatpush1.msra.mxu0 %v9315
    %9319 = vmatprep.subr.mxu0 0.0
    %9320 = vmatpush1.msra.mxu0 0.0
    %9321 = vmatprep.subr.mxu0 0.0
    %9322 = vmatpush1.msra.mxu0 0.0
    %9323 = vmatprep.subr.mxu0 0.0
    %9324 = vmatpush1.msra.mxu0 0.0
    %9325 = vmatprep.subr.mxu0 0.0
    %9326 = vmatpush1.msra.mxu0 0.0
    %9327 = vmatprep.subr.mxu0 0.0
    %9328 = vmatpush1.msra.mxu0 0.0
    %9329 = vmatprep.subr.mxu0 0.0
    %9330 = vmatpush1.msra.mxu0 0.0
    %9331 = vmatprep.subr.mxu0 0.0
    %9332 = vmatpush1.msra.mxu0 0.0
    %9333 = vmatprep.subr.mxu0 0.0
    %9334 = vmatpush1.msra.mxu0 0.0
    %9335 = vmatprep.subr.mxu0 0.0
    %9336 = vmatpush1.msra.mxu0 0.0
    %9337 = vmatprep.subr.mxu0 0.0
    %9338 = vmatpush1.msra.mxu0 0.0
    %9339 = vmatprep.subr.mxu0 0.0
    %9340 = vmatpush1.msra.mxu0 0.0
    %9341 = vmatprep.subr.mxu0 0.0
    %9342 = vmatpush1.msra.mxu0 0.0
    %9343 = vmatprep.subr.mxu0 0.0
    %9344 = vmatpush1.msra.mxu0 0.0
    %9345 = vmatprep.subr.mxu0 0.0
    %9346 = vmatpush1.msra.mxu0 0.0
    %9347 = vmatprep.subr.mxu0 0.0
    %9348 = vmatpush1.msra.mxu0 0.0
    %9349 = vmatprep.subr.mxu0 0.0
    %9350 = vmatpush1.msra.mxu0 0.0
    %9351 = vmatprep.subr.mxu0 0.0
    %9352 = vmatpush1.msra.mxu0 0.0
    %9353 = vmatprep.subr.mxu0 0.0
    %9354 = vmatpush1.msra.mxu0 0.0
    %9355 = vmatprep.subr.mxu0 0.0
    %9356 = vmatpush1.msra.mxu0 0.0
    %9357 = vmatprep.subr.mxu0 0.0
    %9358 = vmatpush1.msra.mxu0 0.0
    %9359 = vmatprep.subr.mxu0 0.0
    %9360 = vmatpush1.msra.mxu0 0.0
    %9361 = vmatprep.subr.mxu0 0.0
    %9362 = vmatpush1.msra.mxu0 0.0
    %9363 = vmatprep.subr.mxu0 0.0
    %9364 = vmatpush1.msra.mxu0 0.0
    %9365 = vmatprep.subr.mxu0 0.0
    %9366 = vmatpush1.msra.mxu0 0.0
    %9367 = vmatprep.subr.mxu0 0.0
    %9368 = vmatpush1.msra.mxu0 0.0
    %9369 = vmatprep.subr.mxu0 0.0
    %9370 = vmatpush1.msra.mxu0 0.0
    %9371 = vmatprep.subr.mxu0 0.0
    %9372 = vmatpush1.msra.mxu0 0.0
    %9373 = vmatprep.subr.mxu0 0.0
    %9374 = vmatpush1.msra.mxu0 0.0
    %9375 = vmatprep.subr.mxu0 0.0
    %9376 = vmatpush1.msra.mxu0 0.0
    %9377 = vmatprep.subr.mxu0 0.0
    %9378 = vmatpush1.msra.mxu0 0.0
    %9379 = vmatprep.subr.mxu0 0.0
    %9380 = vmatpush1.msra.mxu0 0.0
    %9381 = vmatprep.mubr.f32.mxu0 0.0
    %9382 = vmatmul.mubr.f32.gmra.mrb[0].mxu0 %v9313
    %v9383 = vpop.f32.mrb[0].mxu0
    %v9384 = vadd.f32 0.0, %v9383
    %v9385 = vpop.f32.mrb[0].mxu0
    %9386 = vdwg.mxu0
    %9387 = vrot.lane.b32.xlu0 %v6785, 48
    %v9388 = vpop.permute.xlu0 %9387
    %v9390 = vsel %vm2255, %v8922, 0
    %v9392 = vsel %vm2259, %v9388, 0
    %9394 = vmatprep.subr.mxu0 0.0
    %9395 = vmatpush1.msra.mxu0 %v9392
    %9396 = vmatprep.subr.mxu0 0.0
    %9397 = vmatpush1.msra.mxu0 0.0
    %9398 = vmatprep.subr.mxu0 0.0
    %9399 = vmatpush1.msra.mxu0 0.0
    %9400 = vmatprep.subr.mxu0 0.0
    %9401 = vmatpush1.msra.mxu0 0.0
    %9402 = vmatprep.subr.mxu0 0.0
    %9403 = vmatpush1.msra.mxu0 0.0
    %9404 = vmatprep.subr.mxu0 0.0
    %9405 = vmatpush1.msra.mxu0 0.0
    %9406 = vmatprep.subr.mxu0 0.0
    %9407 = vmatpush1.msra.mxu0 0.0
    %9408 = vmatprep.subr.mxu0 0.0
    %9409 = vmatpush1.msra.mxu0 0.0
    %9410 = vmatprep.subr.mxu0 0.0
    %9411 = vmatpush1.msra.mxu0 0.0
    %9412 = vmatprep.subr.mxu0 0.0
    %9413 = vmatpush1.msra.mxu0 0.0
    %9414 = vmatprep.subr.mxu0 0.0
    %9415 = vmatpush1.msra.mxu0 0.0
    %9416 = vmatprep.subr.mxu0 0.0
    %9417 = vmatpush1.msra.mxu0 0.0
    %9418 = vmatprep.subr.mxu0 0.0
    %9419 = vmatpush1.msra.mxu0 0.0
    %9420 = vmatprep.subr.mxu0 0.0
    %9421 = vmatpush1.msra.mxu0 0.0
    %9422 = vmatprep.subr.mxu0 0.0
    %9423 = vmatpush1.msra.mxu0 0.0
    %9424 = vmatprep.subr.mxu0 0.0
    %9425 = vmatpush1.msra.mxu0 0.0
    %9426 = vmatprep.subr.mxu0 0.0
    %9427 = vmatpush1.msra.mxu0 0.0
    %9428 = vmatprep.subr.mxu0 0.0
    %9429 = vmatpush1.msra.mxu0 0.0
    %9430 = vmatprep.subr.mxu0 0.0
    %9431 = vmatpush1.msra.mxu0 0.0
    %9432 = vmatprep.subr.mxu0 0.0
    %9433 = vmatpush1.msra.mxu0 0.0
    %9434 = vmatprep.subr.mxu0 0.0
    %9435 = vmatpush1.msra.mxu0 0.0
    %9436 = vmatprep.subr.mxu0 0.0
    %9437 = vmatpush1.msra.mxu0 0.0
    %9438 = vmatprep.subr.mxu0 0.0
    %9439 = vmatpush1.msra.mxu0 0.0
    %9440 = vmatprep.subr.mxu0 0.0
    %9441 = vmatpush1.msra.mxu0 0.0
    %9442 = vmatprep.subr.mxu0 0.0
    %9443 = vmatpush1.msra.mxu0 0.0
    %9444 = vmatprep.subr.mxu0 0.0
    %9445 = vmatpush1.msra.mxu0 0.0
    %9446 = vmatprep.subr.mxu0 0.0
    %9447 = vmatpush1.msra.mxu0 0.0
    %9448 = vmatprep.subr.mxu0 0.0
    %9449 = vmatpush1.msra.mxu0 0.0
    %9450 = vmatprep.subr.mxu0 0.0
    %9451 = vmatpush1.msra.mxu0 0.0
    %9452 = vmatprep.subr.mxu0 0.0
    %9453 = vmatpush1.msra.mxu0 0.0
    %9454 = vmatprep.subr.mxu0 0.0
    %9455 = vmatpush1.msra.mxu0 0.0
    %9456 = vmatprep.subr.mxu0 0.0
    %9457 = vmatpush1.msra.mxu0 0.0
    %9458 = vmatprep.mubr.f32.mxu0 0.0
    %9459 = vmatmul.mubr.f32.gmra.mrb[0].mxu0 %v9390
    %v9460 = vpop.f32.mrb[0].mxu0
    %v9461 = vadd.f32 0.0, %v9460
    %v9462 = vpop.f32.mrb[0].mxu0
    %9463 = vdwg.mxu0
    %9464 = vrot.lane.b32.xlu0 %v6858, 48
    %v9465 = vpop.permute.xlu0 %9464
    %v9467 = vsel %vm2255, %v8924, 0
    %v9469 = vsel %vm2259, %v9465, 0
    %9471 = vmatprep.subr.mxu0 0.0
    %9472 = vmatpush1.msra.mxu0 %v9469
    %9473 = vmatprep.subr.mxu0 0.0
    %9474 = vmatpush1.msra.mxu0 0.0
    %9475 = vmatprep.subr.mxu0 0.0
    %9476 = vmatpush1.msra.mxu0 0.0
    %9477 = vmatprep.subr.mxu0 0.0
    %9478 = vmatpush1.msra.mxu0 0.0
    %9479 = vmatprep.subr.mxu0 0.0
    %9480 = vmatpush1.msra.mxu0 0.0
    %9481 = vmatprep.subr.mxu0 0.0
    %9482 = vmatpush1.msra.mxu0 0.0
    %9483 = vmatprep.subr.mxu0 0.0
    %9484 = vmatpush1.msra.mxu0 0.0
    %9485 = vmatprep.subr.mxu0 0.0
    %9486 = vmatpush1.msra.mxu0 0.0
    %9487 = vmatprep.subr.mxu0 0.0
    %9488 = vmatpush1.msra.mxu0 0.0
    %9489 = vmatprep.subr.mxu0 0.0
    %9490 = vmatpush1.msra.mxu0 0.0
    %9491 = vmatprep.subr.mxu0 0.0
    %9492 = vmatpush1.msra.mxu0 0.0
    %9493 = vmatprep.subr.mxu0 0.0
    %9494 = vmatpush1.msra.mxu0 0.0
    %9495 = vmatprep.subr.mxu0 0.0
    %9496 = vmatpush1.msra.mxu0 0.0
    %9497 = vmatprep.subr.mxu0 0.0
    %9498 = vmatpush1.msra.mxu0 0.0
    %9499 = vmatprep.subr.mxu0 0.0
    %9500 = vmatpush1.msra.mxu0 0.0
    %9501 = vmatprep.subr.mxu0 0.0
    %9502 = vmatpush1.msra.mxu0 0.0
    %9503 = vmatprep.subr.mxu0 0.0
    %9504 = vmatpush1.msra.mxu0 0.0
    %9505 = vmatprep.subr.mxu0 0.0
    %9506 = vmatpush1.msra.mxu0 0.0
    %9507 = vmatprep.subr.mxu0 0.0
    %9508 = vmatpush1.msra.mxu0 0.0
    %9509 = vmatprep.subr.mxu0 0.0
    %9510 = vmatpush1.msra.mxu0 0.0
    %9511 = vmatprep.subr.mxu0 0.0
    %9512 = vmatpush1.msra.mxu0 0.0
    %9513 = vmatprep.subr.mxu0 0.0
    %9514 = vmatpush1.msra.mxu0 0.0
    %9515 = vmatprep.subr.mxu0 0.0
    %9516 = vmatpush1.msra.mxu0 0.0
    %9517 = vmatprep.subr.mxu0 0.0
    %9518 = vmatpush1.msra.mxu0 0.0
    %9519 = vmatprep.subr.mxu0 0.0
    %9520 = vmatpush1.msra.mxu0 0.0
    %9521 = vmatprep.subr.mxu0 0.0
    %9522 = vmatpush1.msra.mxu0 0.0
    %9523 = vmatprep.subr.mxu0 0.0
    %9524 = vmatpush1.msra.mxu0 0.0
    %9525 = vmatprep.subr.mxu0 0.0
    %9526 = vmatpush1.msra.mxu0 0.0
    %9527 = vmatprep.subr.mxu0 0.0
    %9528 = vmatpush1.msra.mxu0 0.0
    %9529 = vmatprep.subr.mxu0 0.0
    %9530 = vmatpush1.msra.mxu0 0.0
    %9531 = vmatprep.subr.mxu0 0.0
    %9532 = vmatpush1.msra.mxu0 0.0
    %9533 = vmatprep.subr.mxu0 0.0
    %9534 = vmatpush1.msra.mxu0 0.0
    %9535 = vmatprep.mubr.f32.mxu0 0.0
    %9536 = vmatmul.mubr.f32.gmra.mrb[0].mxu0 %v9467
    %v9537 = vpop.f32.mrb[0].mxu0
    %v9538 = vadd.f32 0.0, %v9537
    %v9539 = vpop.f32.mrb[0].mxu0
    %9540 = vdwg.mxu0
    %9549 = vrot.lane.b32.xlu0 %v8999, 16
    %v9550 = vpop.permute.xlu0 %9549
    %9551 = vrot.lane.b32.xlu0 %v9076, 16
    %v9552 = vpop.permute.xlu0 %9551
    %9553 = vrot.lane.b32.xlu0 %v9153, 16
    %v9554 = vpop.permute.xlu0 %9553
    %9555 = vrot.lane.b32.xlu0 %v9230, 16
    %v9556 = vpop.permute.xlu0 %9555
    %9557 = vrot.lane.b32.xlu0 %v9307, 16
    %v9558 = vpop.permute.xlu0 %9557
    %9559 = vrot.lane.b32.xlu0 %v9384, 16
    %v9560 = vpop.permute.xlu0 %9559
    %9561 = vrot.lane.b32.xlu0 %v9461, 16
    %v9562 = vpop.permute.xlu0 %9561
    %9563 = vrot.lane.b32.xlu0 %v9538, 16
    %v9564 = vpop.permute.xlu0 %9563
    %v9573 = vsel %vm49, %v7655, %v9550
    %v9574 = vsel %vm49, %v7732, %v9552
    %v9575 = vsel %vm49, %v7809, %v9554
    %v9576 = vsel %vm49, %v7886, %v9556
    %v9577 = vsel %vm49, %v7963, %v9558
    %v9578 = vsel %vm49, %v8040, %v9560
    %v9579 = vsel %vm49, %v8117, %v9562
    %v9580 = vsel %vm49, %v8194, %v9564
    %s9581 = scalar_lea.vmem %s7, 1
    %v9582 = vld [vmem:[%s9581] sm:$0x1]
    %v9584 = vlaneseq
    %v9585 = vshrl.u32 %v9584, 7
    %v9586 = vsub.s32 0, %v9585
    %v9587 = vrot.slane %v9582, %v9586
    %v9590 = vsel %vm955, %v9573, 0
    %9592 = vmatprep.subr.mxu0 0.0
    %9593 = vmatpush1.msra.mxu0 %v314
    %9594 = vmatprep.subr.mxu0 0.0
    %9595 = vmatpush1.msra.mxu0 %v315
    %9596 = vmatprep.subr.mxu0 0.0
    %9597 = vmatpush1.msra.mxu0 %v316
    %9598 = vmatprep.subr.mxu0 0.0
    %9599 = vmatpush1.msra.mxu0 %v317
    %9600 = vmatprep.subr.mxu0 0.0
    %9601 = vmatpush1.msra.mxu0 0.0
    %9602 = vmatprep.subr.mxu0 0.0
    %9603 = vmatpush1.msra.mxu0 0.0
    %9604 = vmatprep.subr.mxu0 0.0
    %9605 = vmatpush1.msra.mxu0 0.0
    %9606 = vmatprep.subr.mxu0 0.0
    %9607 = vmatpush1.msra.mxu0 0.0
    %9608 = vmatprep.subr.mxu0 0.0
    %9609 = vmatpush1.msra.mxu0 0.0
    %9610 = vmatprep.subr.mxu0 0.0
    %9611 = vmatpush1.msra.mxu0 0.0
    %9612 = vmatprep.subr.mxu0 0.0
    %9613 = vmatpush1.msra.mxu0 0.0
    %9614 = vmatprep.subr.mxu0 0.0
    %9615 = vmatpush1.msra.mxu0 0.0
    %9616 = vmatprep.subr.mxu0 0.0
    %9617 = vmatpush1.msra.mxu0 0.0
    %9618 = vmatprep.subr.mxu0 0.0
    %9619 = vmatpush1.msra.mxu0 0.0
    %9620 = vmatprep.subr.mxu0 0.0
    %9621 = vmatpush1.msra.mxu0 0.0
    %9622 = vmatprep.subr.mxu0 0.0
    %9623 = vmatpush1.msra.mxu0 0.0
    %9624 = vmatprep.subr.mxu0 0.0
    %9625 = vmatpush1.msra.mxu0 0.0
    %9626 = vmatprep.subr.mxu0 0.0
    %9627 = vmatpush1.msra.mxu0 0.0
    %9628 = vmatprep.subr.mxu0 0.0
    %9629 = vmatpush1.msra.mxu0 0.0
    %9630 = vmatprep.subr.mxu0 0.0
    %9631 = vmatpush1.msra.mxu0 0.0
    %9632 = vmatprep.subr.mxu0 0.0
    %9633 = vmatpush1.msra.mxu0 0.0
    %9634 = vmatprep.subr.mxu0 0.0
    %9635 = vmatpush1.msra.mxu0 0.0
    %9636 = vmatprep.subr.mxu0 0.0
    %9637 = vmatpush1.msra.mxu0 0.0
    %9638 = vmatprep.subr.mxu0 0.0
    %9639 = vmatpush1.msra.mxu0 0.0
    %9640 = vmatprep.subr.mxu0 0.0
    %9641 = vmatpush1.msra.mxu0 0.0
    %9642 = vmatprep.subr.mxu0 0.0
    %9643 = vmatpush1.msra.mxu0 0.0
    %9644 = vmatprep.subr.mxu0 0.0
    %9645 = vmatpush1.msra.mxu0 0.0
    %9646 = vmatprep.subr.mxu0 0.0
    %9647 = vmatpush1.msra.mxu0 0.0
    %9648 = vmatprep.subr.mxu0 0.0
    %9649 = vmatpush1.msra.mxu0 0.0
    %9650 = vmatprep.subr.mxu0 0.0
    %9651 = vmatpush1.msra.mxu0 0.0
    %9652 = vmatprep.subr.mxu0 0.0
    %9653 = vmatpush1.msra.mxu0 0.0
    %9654 = vmatprep.subr.mxu0 0.0
    %9655 = vmatpush1.msra.mxu0 0.0
    %9656 = vmatprep.mubr.f32.mxu0 0.0
    %9657 = vmatmul.mubr.f32.gmra.mrb[0].mxu0 %v9590
    %v9658 = vpop.f32.mrb[0].mxu0
    %v9659 = vadd.f32 %v9587, %v9658
    %v9660 = vpop.f32.mrb[0].mxu0
    %9661 = vdwg.mxu0
    %v9663 = vsel %vm955, %v9574, 0
    %9665 = vmatprep.subr.mxu0 0.0
    %9666 = vmatpush1.msra.mxu0 %v314
    %9667 = vmatprep.subr.mxu0 0.0
    %9668 = vmatpush1.msra.mxu0 %v315
    %9669 = vmatprep.subr.mxu0 0.0
    %9670 = vmatpush1.msra.mxu0 %v316
    %9671 = vmatprep.subr.mxu0 0.0
    %9672 = vmatpush1.msra.mxu0 %v317
    %9673 = vmatprep.subr.mxu0 0.0
    %9674 = vmatpush1.msra.mxu0 0.0
    %9675 = vmatprep.subr.mxu0 0.0
    %9676 = vmatpush1.msra.mxu0 0.0
    %9677 = vmatprep.subr.mxu0 0.0
    %9678 = vmatpush1.msra.mxu0 0.0
    %9679 = vmatprep.subr.mxu0 0.0
    %9680 = vmatpush1.msra.mxu0 0.0
    %9681 = vmatprep.subr.mxu0 0.0
    %9682 = vmatpush1.msra.mxu0 0.0
    %9683 = vmatprep.subr.mxu0 0.0
    %9684 = vmatpush1.msra.mxu0 0.0
    %9685 = vmatprep.subr.mxu0 0.0
    %9686 = vmatpush1.msra.mxu0 0.0
    %9687 = vmatprep.subr.mxu0 0.0
    %9688 = vmatpush1.msra.mxu0 0.0
    %9689 = vmatprep.subr.mxu0 0.0
    %9690 = vmatpush1.msra.mxu0 0.0
    %9691 = vmatprep.subr.mxu0 0.0
    %9692 = vmatpush1.msra.mxu0 0.0
    %9693 = vmatprep.subr.mxu0 0.0
    %9694 = vmatpush1.msra.mxu0 0.0
    %9695 = vmatprep.subr.mxu0 0.0
    %9696 = vmatpush1.msra.mxu0 0.0
    %9697 = vmatprep.subr.mxu0 0.0
    %9698 = vmatpush1.msra.mxu0 0.0
    %9699 = vmatprep.subr.mxu0 0.0
    %9700 = vmatpush1.msra.mxu0 0.0
    %9701 = vmatprep.subr.mxu0 0.0
    %9702 = vmatpush1.msra.mxu0 0.0
    %9703 = vmatprep.subr.mxu0 0.0
    %9704 = vmatpush1.msra.mxu0 0.0
    %9705 = vmatprep.subr.mxu0 0.0
    %9706 = vmatpush1.msra.mxu0 0.0
    %9707 = vmatprep.subr.mxu0 0.0
    %9708 = vmatpush1.msra.mxu0 0.0
    %9709 = vmatprep.subr.mxu0 0.0
    %9710 = vmatpush1.msra.mxu0 0.0
    %9711 = vmatprep.subr.mxu0 0.0
    %9712 = vmatpush1.msra.mxu0 0.0
    %9713 = vmatprep.subr.mxu0 0.0
    %9714 = vmatpush1.msra.mxu0 0.0
    %9715 = vmatprep.subr.mxu0 0.0
    %9716 = vmatpush1.msra.mxu0 0.0
    %9717 = vmatprep.subr.mxu0 0.0
    %9718 = vmatpush1.msra.mxu0 0.0
    %9719 = vmatprep.subr.mxu0 0.0
    %9720 = vmatpush1.msra.mxu0 0.0
    %9721 = vmatprep.subr.mxu0 0.0
    %9722 = vmatpush1.msra.mxu0 0.0
    %9723 = vmatprep.subr.mxu0 0.0
    %9724 = vmatpush1.msra.mxu0 0.0
    %9725 = vmatprep.subr.mxu0 0.0
    %9726 = vmatpush1.msra.mxu0 0.0
    %9727 = vmatprep.subr.mxu0 0.0
    %9728 = vmatpush1.msra.mxu0 0.0
    %9729 = vmatprep.mubr.f32.mxu0 0.0
    %9730 = vmatmul.mubr.f32.gmra.mrb[0].mxu0 %v9663
    %v9731 = vpop.f32.mrb[0].mxu0
    %v9732 = vadd.f32 %v9587, %v9731
    %v9733 = vpop.f32.mrb[0].mxu0
    %9734 = vdwg.mxu0
    %v9736 = vsel %vm955, %v9575, 0
    %9738 = vmatprep.subr.mxu0 0.0
    %9739 = vmatpush1.msra.mxu0 %v314
    %9740 = vmatprep.subr.mxu0 0.0
    %9741 = vmatpush1.msra.mxu0 %v315
    %9742 = vmatprep.subr.mxu0 0.0
    %9743 = vmatpush1.msra.mxu0 %v316
    %9744 = vmatprep.subr.mxu0 0.0
    %9745 = vmatpush1.msra.mxu0 %v317
    %9746 = vmatprep.subr.mxu0 0.0
    %9747 = vmatpush1.msra.mxu0 0.0
    %9748 = vmatprep.subr.mxu0 0.0
    %9749 = vmatpush1.msra.mxu0 0.0
    %9750 = vmatprep.subr.mxu0 0.0
    %9751 = vmatpush1.msra.mxu0 0.0
    %9752 = vmatprep.subr.mxu0 0.0
    %9753 = vmatpush1.msra.mxu0 0.0
    %9754 = vmatprep.subr.mxu0 0.0
    %9755 = vmatpush1.msra.mxu0 0.0
    %9756 = vmatprep.subr.mxu0 0.0
    %9757 = vmatpush1.msra.mxu0 0.0
    %9758 = vmatprep.subr.mxu0 0.0
    %9759 = vmatpush1.msra.mxu0 0.0
    %9760 = vmatprep.subr.mxu0 0.0
    %9761 = vmatpush1.msra.mxu0 0.0
    %9762 = vmatprep.subr.mxu0 0.0
    %9763 = vmatpush1.msra.mxu0 0.0
    %9764 = vmatprep.subr.mxu0 0.0
    %9765 = vmatpush1.msra.mxu0 0.0
    %9766 = vmatprep.subr.mxu0 0.0
    %9767 = vmatpush1.msra.mxu0 0.0
    %9768 = vmatprep.subr.mxu0 0.0
    %9769 = vmatpush1.msra.mxu0 0.0
    %9770 = vmatprep.subr.mxu0 0.0
    %9771 = vmatpush1.msra.mxu0 0.0
    %9772 = vmatprep.subr.mxu0 0.0
    %9773 = vmatpush1.msra.mxu0 0.0
    %9774 = vmatprep.subr.mxu0 0.0
    %9775 = vmatpush1.msra.mxu0 0.0
    %9776 = vmatprep.subr.mxu0 0.0
    %9777 = vmatpush1.msra.mxu0 0.0
    %9778 = vmatprep.subr.mxu0 0.0
    %9779 = vmatpush1.msra.mxu0 0.0
    %9780 = vmatprep.subr.mxu0 0.0
    %9781 = vmatpush1.msra.mxu0 0.0
    %9782 = vmatprep.subr.mxu0 0.0
    %9783 = vmatpush1.msra.mxu0 0.0
    %9784 = vmatprep.subr.mxu0 0.0
    %9785 = vmatpush1.msra.mxu0 0.0
    %9786 = vmatprep.subr.mxu0 0.0
    %9787 = vmatpush1.msra.mxu0 0.0
    %9788 = vmatprep.subr.mxu0 0.0
    %9789 = vmatpush1.msra.mxu0 0.0
    %9790 = vmatprep.subr.mxu0 0.0
    %9791 = vmatpush1.msra.mxu0 0.0
    %9792 = vmatprep.subr.mxu0 0.0
    %9793 = vmatpush1.msra.mxu0 0.0
    %9794 = vmatprep.subr.mxu0 0.0
    %9795 = vmatpush1.msra.mxu0 0.0
    %9796 = vmatprep.subr.mxu0 0.0
    %9797 = vmatpush1.msra.mxu0 0.0
    %9798 = vmatprep.subr.mxu0 0.0
    %9799 = vmatpush1.msra.mxu0 0.0
    %9800 = vmatprep.subr.mxu0 0.0
    %9801 = vmatpush1.msra.mxu0 0.0
    %9802 = vmatprep.mubr.f32.mxu0 0.0
    %9803 = vmatmul.mubr.f32.gmra.mrb[0].mxu0 %v9736
    %v9804 = vpop.f32.mrb[0].mxu0
    %v9805 = vadd.f32 %v9587, %v9804
    %v9806 = vpop.f32.mrb[0].mxu0
    %9807 = vdwg.mxu0
    %v9809 = vsel %vm955, %v9576, 0
    %9811 = vmatprep.subr.mxu0 0.0
    %9812 = vmatpush1.msra.mxu0 %v314
    %9813 = vmatprep.subr.mxu0 0.0
    %9814 = vmatpush1.msra.mxu0 %v315
    %9815 = vmatprep.subr.mxu0 0.0
    %9816 = vmatpush1.msra.mxu0 %v316
    %9817 = vmatprep.subr.mxu0 0.0
    %9818 = vmatpush1.msra.mxu0 %v317
    %9819 = vmatprep.subr.mxu0 0.0
    %9820 = vmatpush1.msra.mxu0 0.0
    %9821 = vmatprep.subr.mxu0 0.0
    %9822 = vmatpush1.msra.mxu0 0.0
    %9823 = vmatprep.subr.mxu0 0.0
    %9824 = vmatpush1.msra.mxu0 0.0
    %9825 = vmatprep.subr.mxu0 0.0
    %9826 = vmatpush1.msra.mxu0 0.0
    %9827 = vmatprep.subr.mxu0 0.0
    %9828 = vmatpush1.msra.mxu0 0.0
    %9829 = vmatprep.subr.mxu0 0.0
    %9830 = vmatpush1.msra.mxu0 0.0
    %9831 = vmatprep.subr.mxu0 0.0
    %9832 = vmatpush1.msra.mxu0 0.0
    %9833 = vmatprep.subr.mxu0 0.0
    %9834 = vmatpush1.msra.mxu0 0.0
    %9835 = vmatprep.subr.mxu0 0.0
    %9836 = vmatpush1.msra.mxu0 0.0
    %9837 = vmatprep.subr.mxu0 0.0
    %9838 = vmatpush1.msra.mxu0 0.0
    %9839 = vmatprep.subr.mxu0 0.0
    %9840 = vmatpush1.msra.mxu0 0.0
    %9841 = vmatprep.subr.mxu0 0.0
    %9842 = vmatpush1.msra.mxu0 0.0
    %9843 = vmatprep.subr.mxu0 0.0
    %9844 = vmatpush1.msra.mxu0 0.0
    %9845 = vmatprep.subr.mxu0 0.0
    %9846 = vmatpush1.msra.mxu0 0.0
    %9847 = vmatprep.subr.mxu0 0.0
    %9848 = vmatpush1.msra.mxu0 0.0
    %9849 = vmatprep.subr.mxu0 0.0
    %9850 = vmatpush1.msra.mxu0 0.0
    %9851 = vmatprep.subr.mxu0 0.0
    %9852 = vmatpush1.msra.mxu0 0.0
    %9853 = vmatprep.subr.mxu0 0.0
    %9854 = vmatpush1.msra.mxu0 0.0
    %9855 = vmatprep.subr.mxu0 0.0
    %9856 = vmatpush1.msra.mxu0 0.0
    %9857 = vmatprep.subr.mxu0 0.0
    %9858 = vmatpush1.msra.mxu0 0.0
    %9859 = vmatprep.subr.mxu0 0.0
    %9860 = vmatpush1.msra.mxu0 0.0
    %9861 = vmatprep.subr.mxu0 0.0
    %9862 = vmatpush1.msra.mxu0 0.0
    %9863 = vmatprep.subr.mxu0 0.0
    %9864 = vmatpush1.msra.mxu0 0.0
    %9865 = vmatprep.subr.mxu0 0.0
    %9866 = vmatpush1.msra.mxu0 0.0
    %9867 = vmatprep.subr.mxu0 0.0
    %9868 = vmatpush1.msra.mxu0 0.0
    %9869 = vmatprep.subr.mxu0 0.0
    %9870 = vmatpush1.msra.mxu0 0.0
    %9871 = vmatprep.subr.mxu0 0.0
    %9872 = vmatpush1.msra.mxu0 0.0
    %9873 = vmatprep.subr.mxu0 0.0
    %9874 = vmatpush1.msra.mxu0 0.0
    %9875 = vmatprep.mubr.f32.mxu0 0.0
    %9876 = vmatmul.mubr.f32.gmra.mrb[0].mxu0 %v9809
    %v9877 = vpop.f32.mrb[0].mxu0
    %v9878 = vadd.f32 %v9587, %v9877
    %v9879 = vpop.f32.mrb[0].mxu0
    %9880 = vdwg.mxu0
    %v9882 = vsel %vm955, %v9577, 0
    %9884 = vmatprep.subr.mxu0 0.0
    %9885 = vmatpush1.msra.mxu0 %v314
    %9886 = vmatprep.subr.mxu0 0.0
    %9887 = vmatpush1.msra.mxu0 %v315
    %9888 = vmatprep.subr.mxu0 0.0
    %9889 = vmatpush1.msra.mxu0 %v316
    %9890 = vmatprep.subr.mxu0 0.0
    %9891 = vmatpush1.msra.mxu0 %v317
    %9892 = vmatprep.subr.mxu0 0.0
    %9893 = vmatpush1.msra.mxu0 0.0
    %9894 = vmatprep.subr.mxu0 0.0
    %9895 = vmatpush1.msra.mxu0 0.0
    %9896 = vmatprep.subr.mxu0 0.0
    %9897 = vmatpush1.msra.mxu0 0.0
    %9898 = vmatprep.subr.mxu0 0.0
    %9899 = vmatpush1.msra.mxu0 0.0
    %9900 = vmatprep.subr.mxu0 0.0
    %9901 = vmatpush1.msra.mxu0 0.0
    %9902 = vmatprep.subr.mxu0 0.0
    %9903 = vmatpush1.msra.mxu0 0.0
    %9904 = vmatprep.subr.mxu0 0.0
    %9905 = vmatpush1.msra.mxu0 0.0
    %9906 = vmatprep.subr.mxu0 0.0
    %9907 = vmatpush1.msra.mxu0 0.0
    %9908 = vmatprep.subr.mxu0 0.0
    %9909 = vmatpush1.msra.mxu0 0.0
    %9910 = vmatprep.subr.mxu0 0.0
    %9911 = vmatpush1.msra.mxu0 0.0
    %9912 = vmatprep.subr.mxu0 0.0
    %9913 = vmatpush1.msra.mxu0 0.0
    %9914 = vmatprep.subr.mxu0 0.0
    %9915 = vmatpush1.msra.mxu0 0.0
    %9916 = vmatprep.subr.mxu0 0.0
    %9917 = vmatpush1.msra.mxu0 0.0
    %9918 = vmatprep.subr.mxu0 0.0
    %9919 = vmatpush1.msra.mxu0 0.0
    %9920 = vmatprep.subr.mxu0 0.0
    %9921 = vmatpush1.msra.mxu0 0.0
    %9922 = vmatprep.subr.mxu0 0.0
    %9923 = vmatpush1.msra.mxu0 0.0
    %9924 = vmatprep.subr.mxu0 0.0
    %9925 = vmatpush1.msra.mxu0 0.0
    %9926 = vmatprep.subr.mxu0 0.0
    %9927 = vmatpush1.msra.mxu0 0.0
    %9928 = vmatprep.subr.mxu0 0.0
    %9929 = vmatpush1.msra.mxu0 0.0
    %9930 = vmatprep.subr.mxu0 0.0
    %9931 = vmatpush1.msra.mxu0 0.0
    %9932 = vmatprep.subr.mxu0 0.0
    %9933 = vmatpush1.msra.mxu0 0.0
    %9934 = vmatprep.subr.mxu0 0.0
    %9935 = vmatpush1.msra.mxu0 0.0
    %9936 = vmatprep.subr.mxu0 0.0
    %9937 = vmatpush1.msra.mxu0 0.0
    %9938 = vmatprep.subr.mxu0 0.0
    %9939 = vmatpush1.msra.mxu0 0.0
    %9940 = vmatprep.subr.mxu0 0.0
    %9941 = vmatpush1.msra.mxu0 0.0
    %9942 = vmatprep.subr.mxu0 0.0
    %9943 = vmatpush1.msra.mxu0 0.0
    %9944 = vmatprep.subr.mxu0 0.0
    %9945 = vmatpush1.msra.mxu0 0.0
    %9946 = vmatprep.subr.mxu0 0.0
    %9947 = vmatpush1.msra.mxu0 0.0
    %9948 = vmatprep.mubr.f32.mxu0 0.0
    %9949 = vmatmul.mubr.f32.gmra.mrb[0].mxu0 %v9882
    %v9950 = vpop.f32.mrb[0].mxu0
    %v9951 = vadd.f32 %v9587, %v9950
    %v9952 = vpop.f32.mrb[0].mxu0
    %9953 = vdwg.mxu0
    %v9955 = vsel %vm955, %v9578, 0
    %9957 = vmatprep.subr.mxu0 0.0
    %9958 = vmatpush1.msra.mxu0 %v314
    %9959 = vmatprep.subr.mxu0 0.0
    %9960 = vmatpush1.msra.mxu0 %v315
    %9961 = vmatprep.subr.mxu0 0.0
    %9962 = vmatpush1.msra.mxu0 %v316
    %9963 = vmatprep.subr.mxu0 0.0
    %9964 = vmatpush1.msra.mxu0 %v317
    %9965 = vmatprep.subr.mxu0 0.0
    %9966 = vmatpush1.msra.mxu0 0.0
    %9967 = vmatprep.subr.mxu0 0.0
    %9968 = vmatpush1.msra.mxu0 0.0
    %9969 = vmatprep.subr.mxu0 0.0
    %9970 = vmatpush1.msra.mxu0 0.0
    %9971 = vmatprep.subr.mxu0 0.0
    %9972 = vmatpush1.msra.mxu0 0.0
    %9973 = vmatprep.subr.mxu0 0.0
    %9974 = vmatpush1.msra.mxu0 0.0
    %9975 = vmatprep.subr.mxu0 0.0
    %9976 = vmatpush1.msra.mxu0 0.0
    %9977 = vmatprep.subr.mxu0 0.0
    %9978 = vmatpush1.msra.mxu0 0.0
    %9979 = vmatprep.subr.mxu0 0.0
    %9980 = vmatpush1.msra.mxu0 0.0
    %9981 = vmatprep.subr.mxu0 0.0
    %9982 = vmatpush1.msra.mxu0 0.0
    %9983 = vmatprep.subr.mxu0 0.0
    %9984 = vmatpush1.msra.mxu0 0.0
    %9985 = vmatprep.subr.mxu0 0.0
    %9986 = vmatpush1.msra.mxu0 0.0
    %9987 = vmatprep.subr.mxu0 0.0
    %9988 = vmatpush1.msra.mxu0 0.0
    %9989 = vmatprep.subr.mxu0 0.0
    %9990 = vmatpush1.msra.mxu0 0.0
    %9991 = vmatprep.subr.mxu0 0.0
    %9992 = vmatpush1.msra.mxu0 0.0
    %9993 = vmatprep.subr.mxu0 0.0
    %9994 = vmatpush1.msra.mxu0 0.0
    %9995 = vmatprep.subr.mxu0 0.0
    %9996 = vmatpush1.msra.mxu0 0.0
    %9997 = vmatprep.subr.mxu0 0.0
    %9998 = vmatpush1.msra.mxu0 0.0
    %9999 = vmatprep.subr.mxu0 0.0
    %10000 = vmatpush1.msra.mxu0 0.0
    %10001 = vmatprep.subr.mxu0 0.0
    %10002 = vmatpush1.msra.mxu0 0.0
    %10003 = vmatprep.subr.mxu0 0.0
    %10004 = vmatpush1.msra.mxu0 0.0
    %10005 = vmatprep.subr.mxu0 0.0
    %10006 = vmatpush1.msra.mxu0 0.0
    %10007 = vmatprep.subr.mxu0 0.0
    %10008 = vmatpush1.msra.mxu0 0.0
    %10009 = vmatprep.subr.mxu0 0.0
    %10010 = vmatpush1.msra.mxu0 0.0
    %10011 = vmatprep.subr.mxu0 0.0
    %10012 = vmatpush1.msra.mxu0 0.0
    %10013 = vmatprep.subr.mxu0 0.0
    %10014 = vmatpush1.msra.mxu0 0.0
    %10015 = vmatprep.subr.mxu0 0.0
    %10016 = vmatpush1.msra.mxu0 0.0
    %10017 = vmatprep.subr.mxu0 0.0
    %10018 = vmatpush1.msra.mxu0 0.0
    %10019 = vmatprep.subr.mxu0 0.0
    %10020 = vmatpush1.msra.mxu0 0.0
    %10021 = vmatprep.mubr.f32.mxu0 0.0
    %10022 = vmatmul.mubr.f32.gmra.mrb[0].mxu0 %v9955
    %v10023 = vpop.f32.mrb[0].mxu0
    %v10024 = vadd.f32 %v9587, %v10023
    %v10025 = vpop.f32.mrb[0].mxu0
    %10026 = vdwg.mxu0
    %v10028 = vsel %vm955, %v9579, 0
    %10030 = vmatprep.subr.mxu0 0.0
    %10031 = vmatpush1.msra.mxu0 %v314
    %10032 = vmatprep.subr.mxu0 0.0
    %10033 = vmatpush1.msra.mxu0 %v315
    %10034 = vmatprep.subr.mxu0 0.0
    %10035 = vmatpush1.msra.mxu0 %v316
    %10036 = vmatprep.subr.mxu0 0.0
    %10037 = vmatpush1.msra.mxu0 %v317
    %10038 = vmatprep.subr.mxu0 0.0
    %10039 = vmatpush1.msra.mxu0 0.0
    %10040 = vmatprep.subr.mxu0 0.0
    %10041 = vmatpush1.msra.mxu0 0.0
    %10042 = vmatprep.subr.mxu0 0.0
    %10043 = vmatpush1.msra.mxu0 0.0
    %10044 = vmatprep.subr.mxu0 0.0
    %10045 = vmatpush1.msra.mxu0 0.0
    %10046 = vmatprep.subr.mxu0 0.0
    %10047 = vmatpush1.msra.mxu0 0.0
    %10048 = vmatprep.subr.mxu0 0.0
    %10049 = vmatpush1.msra.mxu0 0.0
    %10050 = vmatprep.subr.mxu0 0.0
    %10051 = vmatpush1.msra.mxu0 0.0
    %10052 = vmatprep.subr.mxu0 0.0
    %10053 = vmatpush1.msra.mxu0 0.0
    %10054 = vmatprep.subr.mxu0 0.0
    %10055 = vmatpush1.msra.mxu0 0.0
    %10056 = vmatprep.subr.mxu0 0.0
    %10057 = vmatpush1.msra.mxu0 0.0
    %10058 = vmatprep.subr.mxu0 0.0
    %10059 = vmatpush1.msra.mxu0 0.0
    %10060 = vmatprep.subr.mxu0 0.0
    %10061 = vmatpush1.msra.mxu0 0.0
    %10062 = vmatprep.subr.mxu0 0.0
    %10063 = vmatpush1.msra.mxu0 0.0
    %10064 = vmatprep.subr.mxu0 0.0
    %10065 = vmatpush1.msra.mxu0 0.0
    %10066 = vmatprep.subr.mxu0 0.0
    %10067 = vmatpush1.msra.mxu0 0.0
    %10068 = vmatprep.subr.mxu0 0.0
    %10069 = vmatpush1.msra.mxu0 0.0
    %10070 = vmatprep.subr.mxu0 0.0
    %10071 = vmatpush1.msra.mxu0 0.0
    %10072 = vmatprep.subr.mxu0 0.0
    %10073 = vmatpush1.msra.mxu0 0.0
    %10074 = vmatprep.subr.mxu0 0.0
    %10075 = vmatpush1.msra.mxu0 0.0
    %10076 = vmatprep.subr.mxu0 0.0
    %10077 = vmatpush1.msra.mxu0 0.0
    %10078 = vmatprep.subr.mxu0 0.0
    %10079 = vmatpush1.msra.mxu0 0.0
    %10080 = vmatprep.subr.mxu0 0.0
    %10081 = vmatpush1.msra.mxu0 0.0
    %10082 = vmatprep.subr.mxu0 0.0
    %10083 = vmatpush1.msra.mxu0 0.0
    %10084 = vmatprep.subr.mxu0 0.0
    %10085 = vmatpush1.msra.mxu0 0.0
    %10086 = vmatprep.subr.mxu0 0.0
    %10087 = vmatpush1.msra.mxu0 0.0
    %10088 = vmatprep.subr.mxu0 0.0
    %10089 = vmatpush1.msra.mxu0 0.0
    %10090 = vmatprep.subr.mxu0 0.0
    %10091 = vmatpush1.msra.mxu0 0.0
    %10092 = vmatprep.subr.mxu0 0.0
    %10093 = vmatpush1.msra.mxu0 0.0
    %10094 = vmatprep.mubr.f32.mxu0 0.0
    %10095 = vmatmul.mubr.f32.gmra.mrb[0].mxu0 %v10028
    %v10096 = vpop.f32.mrb[0].mxu0
    %v10097 = vadd.f32 %v9587, %v10096
    %v10098 = vpop.f32.mrb[0].mxu0
    %10099 = vdwg.mxu0
    %v10101 = vsel %vm955, %v9580, 0
    %10103 = vmatprep.subr.mxu0 0.0
    %10104 = vmatpush1.msra.mxu0 %v314
    %10105 = vmatprep.subr.mxu0 0.0
    %10106 = vmatpush1.msra.mxu0 %v315
    %10107 = vmatprep.subr.mxu0 0.0
    %10108 = vmatpush1.msra.mxu0 %v316
    %10109 = vmatprep.subr.mxu0 0.0
    %10110 = vmatpush1.msra.mxu0 %v317
    %10111 = vmatprep.subr.mxu0 0.0
    %10112 = vmatpush1.msra.mxu0 0.0
    %10113 = vmatprep.subr.mxu0 0.0
    %10114 = vmatpush1.msra.mxu0 0.0
    %10115 = vmatprep.subr.mxu0 0.0
    %10116 = vmatpush1.msra.mxu0 0.0
    %10117 = vmatprep.subr.mxu0 0.0
    %10118 = vmatpush1.msra.mxu0 0.0
    %10119 = vmatprep.subr.mxu0 0.0
    %10120 = vmatpush1.msra.mxu0 0.0
    %10121 = vmatprep.subr.mxu0 0.0
    %10122 = vmatpush1.msra.mxu0 0.0
    %10123 = vmatprep.subr.mxu0 0.0
    %10124 = vmatpush1.msra.mxu0 0.0
    %10125 = vmatprep.subr.mxu0 0.0
    %10126 = vmatpush1.msra.mxu0 0.0
    %10127 = vmatprep.subr.mxu0 0.0
    %10128 = vmatpush1.msra.mxu0 0.0
    %10129 = vmatprep.subr.mxu0 0.0
    %10130 = vmatpush1.msra.mxu0 0.0
    %10131 = vmatprep.subr.mxu0 0.0
    %10132 = vmatpush1.msra.mxu0 0.0
    %10133 = vmatprep.subr.mxu0 0.0
    %10134 = vmatpush1.msra.mxu0 0.0
    %10135 = vmatprep.subr.mxu0 0.0
    %10136 = vmatpush1.msra.mxu0 0.0
    %10137 = vmatprep.subr.mxu0 0.0
    %10138 = vmatpush1.msra.mxu0 0.0
    %10139 = vmatprep.subr.mxu0 0.0
    %10140 = vmatpush1.msra.mxu0 0.0
    %10141 = vmatprep.subr.mxu0 0.0
    %10142 = vmatpush1.msra.mxu0 0.0
    %10143 = vmatprep.subr.mxu0 0.0
    %10144 = vmatpush1.msra.mxu0 0.0
    %10145 = vmatprep.subr.mxu0 0.0
    %10146 = vmatpush1.msra.mxu0 0.0
    %10147 = vmatprep.subr.mxu0 0.0
    %10148 = vmatpush1.msra.mxu0 0.0
    %10149 = vmatprep.subr.mxu0 0.0
    %10150 = vmatpush1.msra.mxu0 0.0
    %10151 = vmatprep.subr.mxu0 0.0
    %10152 = vmatpush1.msra.mxu0 0.0
    %10153 = vmatprep.subr.mxu0 0.0
    %10154 = vmatpush1.msra.mxu0 0.0
    %10155 = vmatprep.subr.mxu0 0.0
    %10156 = vmatpush1.msra.mxu0 0.0
    %10157 = vmatprep.subr.mxu0 0.0
    %10158 = vmatpush1.msra.mxu0 0.0
    %10159 = vmatprep.subr.mxu0 0.0
    %10160 = vmatpush1.msra.mxu0 0.0
    %10161 = vmatprep.subr.mxu0 0.0
    %10162 = vmatpush1.msra.mxu0 0.0
    %10163 = vmatprep.subr.mxu0 0.0
    %10164 = vmatpush1.msra.mxu0 0.0
    %10165 = vmatprep.subr.mxu0 0.0
    %10166 = vmatpush1.msra.mxu0 0.0
    %10167 = vmatprep.mubr.f32.mxu0 0.0
    %10168 = vmatmul.mubr.f32.gmra.mrb[0].mxu0 %v10101
    %v10169 = vpop.f32.mrb[0].mxu0
    %v10170 = vadd.f32 %v9587, %v10169
    %v10171 = vpop.f32.mrb[0].mxu0
    %10172 = vdwg.mxu0
    %v10173 = vadd.f32 %v6261, %v9659
    %v10174 = vadd.f32 %v6262, %v9732
    %v10175 = vadd.f32 %v6263, %v9805
    %v10176 = vadd.f32 %v6264, %v9878
    %v10177 = vadd.f32 %v6265, %v9951
    %v10178 = vadd.f32 %v6266, %v10024
    %v10179 = vadd.f32 %v6267, %v10097
    %v10180 = vadd.f32 %v6268, %v10170
    %v10181 = vmul.f32 %v10173, 0.999995
    %v10182 = vmul.f32 %v10174, 0.999995
    %v10183 = vmul.f32 %v10175, 0.999995
    %v10184 = vmul.f32 %v10176, 0.999995
    %v10185 = vmul.f32 %v10177, 0.999995
    %v10186 = vmul.f32 %v10178, 0.999995
    %v10187 = vmul.f32 %v10179, 0.999995
    %v10188 = vmul.f32 %v10180, 0.999995
    %s10189 = scalar_lea.vmem %s9, 1
    %v10190 = vld [vmem:[%s10189] sm:$0x1]
    %v10192 = vlaneseq
    %v10193 = vshrl.u32 %v10192, 7
    %v10194 = vsub.s32 0, %v10193
    %v10195 = vrot.slane %v10190, %v10194
    %v10198 = vsel %vm955, %v10181, 0
    %10200 = vmatprep.subr.mxu0 0.0
    %10201 = vmatpush1.msra.mxu0 %v323
    %10202 = vmatprep.subr.mxu0 0.0
    %10203 = vmatpush1.msra.mxu0 %v324
    %10204 = vmatprep.subr.mxu0 0.0
    %10205 = vmatpush1.msra.mxu0 %v325
    %10206 = vmatprep.subr.mxu0 0.0
    %10207 = vmatpush1.msra.mxu0 %v326
    %10208 = vmatprep.subr.mxu0 0.0
    %10209 = vmatpush1.msra.mxu0 0.0
    %10210 = vmatprep.subr.mxu0 0.0
    %10211 = vmatpush1.msra.mxu0 0.0
    %10212 = vmatprep.subr.mxu0 0.0
    %10213 = vmatpush1.msra.mxu0 0.0
    %10214 = vmatprep.subr.mxu0 0.0
    %10215 = vmatpush1.msra.mxu0 0.0
    %10216 = vmatprep.subr.mxu0 0.0
    %10217 = vmatpush1.msra.mxu0 0.0
    %10218 = vmatprep.subr.mxu0 0.0
    %10219 = vmatpush1.msra.mxu0 0.0
    %10220 = vmatprep.subr.mxu0 0.0
    %10221 = vmatpush1.msra.mxu0 0.0
    %10222 = vmatprep.subr.mxu0 0.0
    %10223 = vmatpush1.msra.mxu0 0.0
    %10224 = vmatprep.subr.mxu0 0.0
    %10225 = vmatpush1.msra.mxu0 0.0
    %10226 = vmatprep.subr.mxu0 0.0
    %10227 = vmatpush1.msra.mxu0 0.0
    %10228 = vmatprep.subr.mxu0 0.0
    %10229 = vmatpush1.msra.mxu0 0.0
    %10230 = vmatprep.subr.mxu0 0.0
    %10231 = vmatpush1.msra.mxu0 0.0
    %10232 = vmatprep.subr.mxu0 0.0
    %10233 = vmatpush1.msra.mxu0 0.0
    %10234 = vmatprep.subr.mxu0 0.0
    %10235 = vmatpush1.msra.mxu0 0.0
    %10236 = vmatprep.subr.mxu0 0.0
    %10237 = vmatpush1.msra.mxu0 0.0
    %10238 = vmatprep.subr.mxu0 0.0
    %10239 = vmatpush1.msra.mxu0 0.0
    %10240 = vmatprep.subr.mxu0 0.0
    %10241 = vmatpush1.msra.mxu0 0.0
    %10242 = vmatprep.subr.mxu0 0.0
    %10243 = vmatpush1.msra.mxu0 0.0
    %10244 = vmatprep.subr.mxu0 0.0
    %10245 = vmatpush1.msra.mxu0 0.0
    %10246 = vmatprep.subr.mxu0 0.0
    %10247 = vmatpush1.msra.mxu0 0.0
    %10248 = vmatprep.subr.mxu0 0.0
    %10249 = vmatpush1.msra.mxu0 0.0
    %10250 = vmatprep.subr.mxu0 0.0
    %10251 = vmatpush1.msra.mxu0 0.0
    %10252 = vmatprep.subr.mxu0 0.0
    %10253 = vmatpush1.msra.mxu0 0.0
    %10254 = vmatprep.subr.mxu0 0.0
    %10255 = vmatpush1.msra.mxu0 0.0
    %10256 = vmatprep.subr.mxu0 0.0
    %10257 = vmatpush1.msra.mxu0 0.0
    %10258 = vmatprep.subr.mxu0 0.0
    %10259 = vmatpush1.msra.mxu0 0.0
    %10260 = vmatprep.subr.mxu0 0.0
    %10261 = vmatpush1.msra.mxu0 0.0
    %10262 = vmatprep.subr.mxu0 0.0
    %10263 = vmatpush1.msra.mxu0 0.0
    %10264 = vmatprep.mubr.f32.mxu0 0.0
    %10265 = vmatmul.mubr.f32.gmra.mrb[0].mxu0 %v10198
    %v10266 = vpop.f32.mrb[0].mxu0
    %v10267 = vadd.f32 %v10195, %v10266
    %v10268 = vpop.f32.mrb[0].mxu0
    %10269 = vdwg.mxu0
    %v10271 = vsel %vm955, %v10182, 0
    %10273 = vmatprep.subr.mxu0 0.0
    %10274 = vmatpush1.msra.mxu0 %v323
    %10275 = vmatprep.subr.mxu0 0.0
    %10276 = vmatpush1.msra.mxu0 %v324
    %10277 = vmatprep.subr.mxu0 0.0
    %10278 = vmatpush1.msra.mxu0 %v325
    %10279 = vmatprep.subr.mxu0 0.0
    %10280 = vmatpush1.msra.mxu0 %v326
    %10281 = vmatprep.subr.mxu0 0.0
    %10282 = vmatpush1.msra.mxu0 0.0
    %10283 = vmatprep.subr.mxu0 0.0
    %10284 = vmatpush1.msra.mxu0 0.0
    %10285 = vmatprep.subr.mxu0 0.0
    %10286 = vmatpush1.msra.mxu0 0.0
    %10287 = vmatprep.subr.mxu0 0.0
    %10288 = vmatpush1.msra.mxu0 0.0
    %10289 = vmatprep.subr.mxu0 0.0
    %10290 = vmatpush1.msra.mxu0 0.0
    %10291 = vmatprep.subr.mxu0 0.0
    %10292 = vmatpush1.msra.mxu0 0.0
    %10293 = vmatprep.subr.mxu0 0.0
    %10294 = vmatpush1.msra.mxu0 0.0
    %10295 = vmatprep.subr.mxu0 0.0
    %10296 = vmatpush1.msra.mxu0 0.0
    %10297 = vmatprep.subr.mxu0 0.0
    %10298 = vmatpush1.msra.mxu0 0.0
    %10299 = vmatprep.subr.mxu0 0.0
    %10300 = vmatpush1.msra.mxu0 0.0
    %10301 = vmatprep.subr.mxu0 0.0
    %10302 = vmatpush1.msra.mxu0 0.0
    %10303 = vmatprep.subr.mxu0 0.0
    %10304 = vmatpush1.msra.mxu0 0.0
    %10305 = vmatprep.subr.mxu0 0.0
    %10306 = vmatpush1.msra.mxu0 0.0
    %10307 = vmatprep.subr.mxu0 0.0
    %10308 = vmatpush1.msra.mxu0 0.0
    %10309 = vmatprep.subr.mxu0 0.0
    %10310 = vmatpush1.msra.mxu0 0.0
    %10311 = vmatprep.subr.mxu0 0.0
    %10312 = vmatpush1.msra.mxu0 0.0
    %10313 = vmatprep.subr.mxu0 0.0
    %10314 = vmatpush1.msra.mxu0 0.0
    %10315 = vmatprep.subr.mxu0 0.0
    %10316 = vmatpush1.msra.mxu0 0.0
    %10317 = vmatprep.subr.mxu0 0.0
    %10318 = vmatpush1.msra.mxu0 0.0
    %10319 = vmatprep.subr.mxu0 0.0
    %10320 = vmatpush1.msra.mxu0 0.0
    %10321 = vmatprep.subr.mxu0 0.0
    %10322 = vmatpush1.msra.mxu0 0.0
    %10323 = vmatprep.subr.mxu0 0.0
    %10324 = vmatpush1.msra.mxu0 0.0
    %10325 = vmatprep.subr.mxu0 0.0
    %10326 = vmatpush1.msra.mxu0 0.0
    %10327 = vmatprep.subr.mxu0 0.0
    %10328 = vmatpush1.msra.mxu0 0.0
    %10329 = vmatprep.subr.mxu0 0.0
    %10330 = vmatpush1.msra.mxu0 0.0
    %10331 = vmatprep.subr.mxu0 0.0
    %10332 = vmatpush1.msra.mxu0 0.0
    %10333 = vmatprep.subr.mxu0 0.0
    %10334 = vmatpush1.msra.mxu0 0.0
    %10335 = vmatprep.subr.mxu0 0.0
    %10336 = vmatpush1.msra.mxu0 0.0
    %10337 = vmatprep.mubr.f32.mxu0 0.0
    %10338 = vmatmul.mubr.f32.gmra.mrb[0].mxu0 %v10271
    %v10339 = vpop.f32.mrb[0].mxu0
    %v10340 = vadd.f32 %v10195, %v10339
    %v10341 = vpop.f32.mrb[0].mxu0
    %10342 = vdwg.mxu0
    %v10344 = vsel %vm955, %v10183, 0
    %10346 = vmatprep.subr.mxu0 0.0
    %10347 = vmatpush1.msra.mxu0 %v323
    %10348 = vmatprep.subr.mxu0 0.0
    %10349 = vmatpush1.msra.mxu0 %v324
    %10350 = vmatprep.subr.mxu0 0.0
    %10351 = vmatpush1.msra.mxu0 %v325
    %10352 = vmatprep.subr.mxu0 0.0
    %10353 = vmatpush1.msra.mxu0 %v326
    %10354 = vmatprep.subr.mxu0 0.0
    %10355 = vmatpush1.msra.mxu0 0.0
    %10356 = vmatprep.subr.mxu0 0.0
    %10357 = vmatpush1.msra.mxu0 0.0
    %10358 = vmatprep.subr.mxu0 0.0
    %10359 = vmatpush1.msra.mxu0 0.0
    %10360 = vmatprep.subr.mxu0 0.0
    %10361 = vmatpush1.msra.mxu0 0.0
    %10362 = vmatprep.subr.mxu0 0.0
    %10363 = vmatpush1.msra.mxu0 0.0
    %10364 = vmatprep.subr.mxu0 0.0
    %10365 = vmatpush1.msra.mxu0 0.0
    %10366 = vmatprep.subr.mxu0 0.0
    %10367 = vmatpush1.msra.mxu0 0.0
    %10368 = vmatprep.subr.mxu0 0.0
    %10369 = vmatpush1.msra.mxu0 0.0
    %10370 = vmatprep.subr.mxu0 0.0
    %10371 = vmatpush1.msra.mxu0 0.0
    %10372 = vmatprep.subr.mxu0 0.0
    %10373 = vmatpush1.msra.mxu0 0.0
    %10374 = vmatprep.subr.mxu0 0.0
    %10375 = vmatpush1.msra.mxu0 0.0
    %10376 = vmatprep.subr.mxu0 0.0
    %10377 = vmatpush1.msra.mxu0 0.0
    %10378 = vmatprep.subr.mxu0 0.0
    %10379 = vmatpush1.msra.mxu0 0.0
    %10380 = vmatprep.subr.mxu0 0.0
    %10381 = vmatpush1.msra.mxu0 0.0
    %10382 = vmatprep.subr.mxu0 0.0
    %10383 = vmatpush1.msra.mxu0 0.0
    %10384 = vmatprep.subr.mxu0 0.0
    %10385 = vmatpush1.msra.mxu0 0.0
    %10386 = vmatprep.subr.mxu0 0.0
    %10387 = vmatpush1.msra.mxu0 0.0
    %10388 = vmatprep.subr.mxu0 0.0
    %10389 = vmatpush1.msra.mxu0 0.0
    %10390 = vmatprep.subr.mxu0 0.0
    %10391 = vmatpush1.msra.mxu0 0.0
    %10392 = vmatprep.subr.mxu0 0.0
    %10393 = vmatpush1.msra.mxu0 0.0
    %10394 = vmatprep.subr.mxu0 0.0
    %10395 = vmatpush1.msra.mxu0 0.0
    %10396 = vmatprep.subr.mxu0 0.0
    %10397 = vmatpush1.msra.mxu0 0.0
    %10398 = vmatprep.subr.mxu0 0.0
    %10399 = vmatpush1.msra.mxu0 0.0
    %10400 = vmatprep.subr.mxu0 0.0
    %10401 = vmatpush1.msra.mxu0 0.0
    %10402 = vmatprep.subr.mxu0 0.0
    %10403 = vmatpush1.msra.mxu0 0.0
    %10404 = vmatprep.subr.mxu0 0.0
    %10405 = vmatpush1.msra.mxu0 0.0
    %10406 = vmatprep.subr.mxu0 0.0
    %10407 = vmatpush1.msra.mxu0 0.0
    %10408 = vmatprep.subr.mxu0 0.0
    %10409 = vmatpush1.msra.mxu0 0.0
    %10410 = vmatprep.mubr.f32.mxu0 0.0
    %10411 = vmatmul.mubr.f32.gmra.mrb[0].mxu0 %v10344
    %v10412 = vpop.f32.mrb[0].mxu0
    %v10413 = vadd.f32 %v10195, %v10412
    %v10414 = vpop.f32.mrb[0].mxu0
    %10415 = vdwg.mxu0
    %v10417 = vsel %vm955, %v10184, 0
    %10419 = vmatprep.subr.mxu0 0.0
    %10420 = vmatpush1.msra.mxu0 %v323
    %10421 = vmatprep.subr.mxu0 0.0
    %10422 = vmatpush1.msra.mxu0 %v324
    %10423 = vmatprep.subr.mxu0 0.0
    %10424 = vmatpush1.msra.mxu0 %v325
    %10425 = vmatprep.subr.mxu0 0.0
    %10426 = vmatpush1.msra.mxu0 %v326
    %10427 = vmatprep.subr.mxu0 0.0
    %10428 = vmatpush1.msra.mxu0 0.0
    %10429 = vmatprep.subr.mxu0 0.0
    %10430 = vmatpush1.msra.mxu0 0.0
    %10431 = vmatprep.subr.mxu0 0.0
    %10432 = vmatpush1.msra.mxu0 0.0
    %10433 = vmatprep.subr.mxu0 0.0
    %10434 = vmatpush1.msra.mxu0 0.0
    %10435 = vmatprep.subr.mxu0 0.0
    %10436 = vmatpush1.msra.mxu0 0.0
    %10437 = vmatprep.subr.mxu0 0.0
    %10438 = vmatpush1.msra.mxu0 0.0
    %10439 = vmatprep.subr.mxu0 0.0
    %10440 = vmatpush1.msra.mxu0 0.0
    %10441 = vmatprep.subr.mxu0 0.0
    %10442 = vmatpush1.msra.mxu0 0.0
    %10443 = vmatprep.subr.mxu0 0.0
    %10444 = vmatpush1.msra.mxu0 0.0
    %10445 = vmatprep.subr.mxu0 0.0
    %10446 = vmatpush1.msra.mxu0 0.0
    %10447 = vmatprep.subr.mxu0 0.0
    %10448 = vmatpush1.msra.mxu0 0.0
    %10449 = vmatprep.subr.mxu0 0.0
    %10450 = vmatpush1.msra.mxu0 0.0
    %10451 = vmatprep.subr.mxu0 0.0
    %10452 = vmatpush1.msra.mxu0 0.0
    %10453 = vmatprep.subr.mxu0 0.0
    %10454 = vmatpush1.msra.mxu0 0.0
    %10455 = vmatprep.subr.mxu0 0.0
    %10456 = vmatpush1.msra.mxu0 0.0
    %10457 = vmatprep.subr.mxu0 0.0
    %10458 = vmatpush1.msra.mxu0 0.0
    %10459 = vmatprep.subr.mxu0 0.0
    %10460 = vmatpush1.msra.mxu0 0.0
    %10461 = vmatprep.subr.mxu0 0.0
    %10462 = vmatpush1.msra.mxu0 0.0
    %10463 = vmatprep.subr.mxu0 0.0
    %10464 = vmatpush1.msra.mxu0 0.0
    %10465 = vmatprep.subr.mxu0 0.0
    %10466 = vmatpush1.msra.mxu0 0.0
    %10467 = vmatprep.subr.mxu0 0.0
    %10468 = vmatpush1.msra.mxu0 0.0
    %10469 = vmatprep.subr.mxu0 0.0
    %10470 = vmatpush1.msra.mxu0 0.0
    %10471 = vmatprep.subr.mxu0 0.0
    %10472 = vmatpush1.msra.mxu0 0.0
    %10473 = vmatprep.subr.mxu0 0.0
    %10474 = vmatpush1.msra.mxu0 0.0
    %10475 = vmatprep.subr.mxu0 0.0
    %10476 = vmatpush1.msra.mxu0 0.0
    %10477 = vmatprep.subr.mxu0 0.0
    %10478 = vmatpush1.msra.mxu0 0.0
    %10479 = vmatprep.subr.mxu0 0.0
    %10480 = vmatpush1.msra.mxu0 0.0
    %10481 = vmatprep.subr.mxu0 0.0
    %10482 = vmatpush1.msra.mxu0 0.0
    %10483 = vmatprep.mubr.f32.mxu0 0.0
    %10484 = vmatmul.mubr.f32.gmra.mrb[0].mxu0 %v10417
    %v10485 = vpop.f32.mrb[0].mxu0
    %v10486 = vadd.f32 %v10195, %v10485
    %v10487 = vpop.f32.mrb[0].mxu0
    %10488 = vdwg.mxu0
    %v10490 = vsel %vm955, %v10185, 0
    %10492 = vmatprep.subr.mxu0 0.0
    %10493 = vmatpush1.msra.mxu0 %v323
    %10494 = vmatprep.subr.mxu0 0.0
    %10495 = vmatpush1.msra.mxu0 %v324
    %10496 = vmatprep.subr.mxu0 0.0
    %10497 = vmatpush1.msra.mxu0 %v325
    %10498 = vmatprep.subr.mxu0 0.0
    %10499 = vmatpush1.msra.mxu0 %v326
    %10500 = vmatprep.subr.mxu0 0.0
    %10501 = vmatpush1.msra.mxu0 0.0
    %10502 = vmatprep.subr.mxu0 0.0
    %10503 = vmatpush1.msra.mxu0 0.0
    %10504 = vmatprep.subr.mxu0 0.0
    %10505 = vmatpush1.msra.mxu0 0.0
    %10506 = vmatprep.subr.mxu0 0.0
    %10507 = vmatpush1.msra.mxu0 0.0
    %10508 = vmatprep.subr.mxu0 0.0
    %10509 = vmatpush1.msra.mxu0 0.0
    %10510 = vmatprep.subr.mxu0 0.0
    %10511 = vmatpush1.msra.mxu0 0.0
    %10512 = vmatprep.subr.mxu0 0.0
    %10513 = vmatpush1.msra.mxu0 0.0
    %10514 = vmatprep.subr.mxu0 0.0
    %10515 = vmatpush1.msra.mxu0 0.0
    %10516 = vmatprep.subr.mxu0 0.0
    %10517 = vmatpush1.msra.mxu0 0.0
    %10518 = vmatprep.subr.mxu0 0.0
    %10519 = vmatpush1.msra.mxu0 0.0
    %10520 = vmatprep.subr.mxu0 0.0
    %10521 = vmatpush1.msra.mxu0 0.0
    %10522 = vmatprep.subr.mxu0 0.0
    %10523 = vmatpush1.msra.mxu0 0.0
    %10524 = vmatprep.subr.mxu0 0.0
    %10525 = vmatpush1.msra.mxu0 0.0
    %10526 = vmatprep.subr.mxu0 0.0
    %10527 = vmatpush1.msra.mxu0 0.0
    %10528 = vmatprep.subr.mxu0 0.0
    %10529 = vmatpush1.msra.mxu0 0.0
    %10530 = vmatprep.subr.mxu0 0.0
    %10531 = vmatpush1.msra.mxu0 0.0
    %10532 = vmatprep.subr.mxu0 0.0
    %10533 = vmatpush1.msra.mxu0 0.0
    %10534 = vmatprep.subr.mxu0 0.0
    %10535 = vmatpush1.msra.mxu0 0.0
    %10536 = vmatprep.subr.mxu0 0.0
    %10537 = vmatpush1.msra.mxu0 0.0
    %10538 = vmatprep.subr.mxu0 0.0
    %10539 = vmatpush1.msra.mxu0 0.0
    %10540 = vmatprep.subr.mxu0 0.0
    %10541 = vmatpush1.msra.mxu0 0.0
    %10542 = vmatprep.subr.mxu0 0.0
    %10543 = vmatpush1.msra.mxu0 0.0
    %10544 = vmatprep.subr.mxu0 0.0
    %10545 = vmatpush1.msra.mxu0 0.0
    %10546 = vmatprep.subr.mxu0 0.0
    %10547 = vmatpush1.msra.mxu0 0.0
    %10548 = vmatprep.subr.mxu0 0.0
    %10549 = vmatpush1.msra.mxu0 0.0
    %10550 = vmatprep.subr.mxu0 0.0
    %10551 = vmatpush1.msra.mxu0 0.0
    %10552 = vmatprep.subr.mxu0 0.0
    %10553 = vmatpush1.msra.mxu0 0.0
    %10554 = vmatprep.subr.mxu0 0.0
    %10555 = vmatpush1.msra.mxu0 0.0
    %10556 = vmatprep.mubr.f32.mxu0 0.0
    %10557 = vmatmul.mubr.f32.gmra.mrb[0].mxu0 %v10490
    %v10558 = vpop.f32.mrb[0].mxu0
    %v10559 = vadd.f32 %v10195, %v10558
    %v10560 = vpop.f32.mrb[0].mxu0
    %10561 = vdwg.mxu0
    %v10563 = vsel %vm955, %v10186, 0
    %10565 = vmatprep.subr.mxu0 0.0
    %10566 = vmatpush1.msra.mxu0 %v323
    %10567 = vmatprep.subr.mxu0 0.0
    %10568 = vmatpush1.msra.mxu0 %v324
    %10569 = vmatprep.subr.mxu0 0.0
    %10570 = vmatpush1.msra.mxu0 %v325
    %10571 = vmatprep.subr.mxu0 0.0
    %10572 = vmatpush1.msra.mxu0 %v326
    %10573 = vmatprep.subr.mxu0 0.0
    %10574 = vmatpush1.msra.mxu0 0.0
    %10575 = vmatprep.subr.mxu0 0.0
    %10576 = vmatpush1.msra.mxu0 0.0
    %10577 = vmatprep.subr.mxu0 0.0
    %10578 = vmatpush1.msra.mxu0 0.0
    %10579 = vmatprep.subr.mxu0 0.0
    %10580 = vmatpush1.msra.mxu0 0.0
    %10581 = vmatprep.subr.mxu0 0.0
    %10582 = vmatpush1.msra.mxu0 0.0
    %10583 = vmatprep.subr.mxu0 0.0
    %10584 = vmatpush1.msra.mxu0 0.0
    %10585 = vmatprep.subr.mxu0 0.0
    %10586 = vmatpush1.msra.mxu0 0.0
    %10587 = vmatprep.subr.mxu0 0.0
    %10588 = vmatpush1.msra.mxu0 0.0
    %10589 = vmatprep.subr.mxu0 0.0
    %10590 = vmatpush1.msra.mxu0 0.0
    %10591 = vmatprep.subr.mxu0 0.0
    %10592 = vmatpush1.msra.mxu0 0.0
    %10593 = vmatprep.subr.mxu0 0.0
    %10594 = vmatpush1.msra.mxu0 0.0
    %10595 = vmatprep.subr.mxu0 0.0
    %10596 = vmatpush1.msra.mxu0 0.0
    %10597 = vmatprep.subr.mxu0 0.0
    %10598 = vmatpush1.msra.mxu0 0.0
    %10599 = vmatprep.subr.mxu0 0.0
    %10600 = vmatpush1.msra.mxu0 0.0
    %10601 = vmatprep.subr.mxu0 0.0
    %10602 = vmatpush1.msra.mxu0 0.0
    %10603 = vmatprep.subr.mxu0 0.0
    %10604 = vmatpush1.msra.mxu0 0.0
    %10605 = vmatprep.subr.mxu0 0.0
    %10606 = vmatpush1.msra.mxu0 0.0
    %10607 = vmatprep.subr.mxu0 0.0
    %10608 = vmatpush1.msra.mxu0 0.0
    %10609 = vmatprep.subr.mxu0 0.0
    %10610 = vmatpush1.msra.mxu0 0.0
    %10611 = vmatprep.subr.mxu0 0.0
    %10612 = vmatpush1.msra.mxu0 0.0
    %10613 = vmatprep.subr.mxu0 0.0
    %10614 = vmatpush1.msra.mxu0 0.0
    %10615 = vmatprep.subr.mxu0 0.0
    %10616 = vmatpush1.msra.mxu0 0.0
    %10617 = vmatprep.subr.mxu0 0.0
    %10618 = vmatpush1.msra.mxu0 0.0
    %10619 = vmatprep.subr.mxu0 0.0
    %10620 = vmatpush1.msra.mxu0 0.0
    %10621 = vmatprep.subr.mxu0 0.0
    %10622 = vmatpush1.msra.mxu0 0.0
    %10623 = vmatprep.subr.mxu0 0.0
    %10624 = vmatpush1.msra.mxu0 0.0
    %10625 = vmatprep.subr.mxu0 0.0
    %10626 = vmatpush1.msra.mxu0 0.0
    %10627 = vmatprep.subr.mxu0 0.0
    %10628 = vmatpush1.msra.mxu0 0.0
    %10629 = vmatprep.mubr.f32.mxu0 0.0
    %10630 = vmatmul.mubr.f32.gmra.mrb[0].mxu0 %v10563
    %v10631 = vpop.f32.mrb[0].mxu0
    %v10632 = vadd.f32 %v10195, %v10631
    %v10633 = vpop.f32.mrb[0].mxu0
    %10634 = vdwg.mxu0
    %v10636 = vsel %vm955, %v10187, 0
    %10638 = vmatprep.subr.mxu0 0.0
    %10639 = vmatpush1.msra.mxu0 %v323
    %10640 = vmatprep.subr.mxu0 0.0
    %10641 = vmatpush1.msra.mxu0 %v324
    %10642 = vmatprep.subr.mxu0 0.0
    %10643 = vmatpush1.msra.mxu0 %v325
    %10644 = vmatprep.subr.mxu0 0.0
    %10645 = vmatpush1.msra.mxu0 %v326
    %10646 = vmatprep.subr.mxu0 0.0
    %10647 = vmatpush1.msra.mxu0 0.0
    %10648 = vmatprep.subr.mxu0 0.0
    %10649 = vmatpush1.msra.mxu0 0.0
    %10650 = vmatprep.subr.mxu0 0.0
    %10651 = vmatpush1.msra.mxu0 0.0
    %10652 = vmatprep.subr.mxu0 0.0
    %10653 = vmatpush1.msra.mxu0 0.0
    %10654 = vmatprep.subr.mxu0 0.0
    %10655 = vmatpush1.msra.mxu0 0.0
    %10656 = vmatprep.subr.mxu0 0.0
    %10657 = vmatpush1.msra.mxu0 0.0
    %10658 = vmatprep.subr.mxu0 0.0
    %10659 = vmatpush1.msra.mxu0 0.0
    %10660 = vmatprep.subr.mxu0 0.0
    %10661 = vmatpush1.msra.mxu0 0.0
    %10662 = vmatprep.subr.mxu0 0.0
    %10663 = vmatpush1.msra.mxu0 0.0
    %10664 = vmatprep.subr.mxu0 0.0
    %10665 = vmatpush1.msra.mxu0 0.0
    %10666 = vmatprep.subr.mxu0 0.0
    %10667 = vmatpush1.msra.mxu0 0.0
    %10668 = vmatprep.subr.mxu0 0.0
    %10669 = vmatpush1.msra.mxu0 0.0
    %10670 = vmatprep.subr.mxu0 0.0
    %10671 = vmatpush1.msra.mxu0 0.0
    %10672 = vmatprep.subr.mxu0 0.0
    %10673 = vmatpush1.msra.mxu0 0.0
    %10674 = vmatprep.subr.mxu0 0.0
    %10675 = vmatpush1.msra.mxu0 0.0
    %10676 = vmatprep.subr.mxu0 0.0
    %10677 = vmatpush1.msra.mxu0 0.0
    %10678 = vmatprep.subr.mxu0 0.0
    %10679 = vmatpush1.msra.mxu0 0.0
    %10680 = vmatprep.subr.mxu0 0.0
    %10681 = vmatpush1.msra.mxu0 0.0
    %10682 = vmatprep.subr.mxu0 0.0
    %10683 = vmatpush1.msra.mxu0 0.0
    %10684 = vmatprep.subr.mxu0 0.0
    %10685 = vmatpush1.msra.mxu0 0.0
    %10686 = vmatprep.subr.mxu0 0.0
    %10687 = vmatpush1.msra.mxu0 0.0
    %10688 = vmatprep.subr.mxu0 0.0
    %10689 = vmatpush1.msra.mxu0 0.0
    %10690 = vmatprep.subr.mxu0 0.0
    %10691 = vmatpush1.msra.mxu0 0.0
    %10692 = vmatprep.subr.mxu0 0.0
    %10693 = vmatpush1.msra.mxu0 0.0
    %10694 = vmatprep.subr.mxu0 0.0
    %10695 = vmatpush1.msra.mxu0 0.0
    %10696 = vmatprep.subr.mxu0 0.0
    %10697 = vmatpush1.msra.mxu0 0.0
    %10698 = vmatprep.subr.mxu0 0.0
    %10699 = vmatpush1.msra.mxu0 0.0
    %10700 = vmatprep.subr.mxu0 0.0
    %10701 = vmatpush1.msra.mxu0 0.0
    %10702 = vmatprep.mubr.f32.mxu0 0.0
    %10703 = vmatmul.mubr.f32.gmra.mrb[0].mxu0 %v10636
    %v10704 = vpop.f32.mrb[0].mxu0
    %v10705 = vadd.f32 %v10195, %v10704
    %v10706 = vpop.f32.mrb[0].mxu0
    %10707 = vdwg.mxu0
    %v10709 = vsel %vm955, %v10188, 0
    %10711 = vmatprep.subr.mxu0 0.0
    %10712 = vmatpush1.msra.mxu0 %v323
    %10713 = vmatprep.subr.mxu0 0.0
    %10714 = vmatpush1.msra.mxu0 %v324
    %10715 = vmatprep.subr.mxu0 0.0
    %10716 = vmatpush1.msra.mxu0 %v325
    %10717 = vmatprep.subr.mxu0 0.0
    %10718 = vmatpush1.msra.mxu0 %v326
    %10719 = vmatprep.subr.mxu0 0.0
    %10720 = vmatpush1.msra.mxu0 0.0
    %10721 = vmatprep.subr.mxu0 0.0
    %10722 = vmatpush1.msra.mxu0 0.0
    %10723 = vmatprep.subr.mxu0 0.0
    %10724 = vmatpush1.msra.mxu0 0.0
    %10725 = vmatprep.subr.mxu0 0.0
    %10726 = vmatpush1.msra.mxu0 0.0
    %10727 = vmatprep.subr.mxu0 0.0
    %10728 = vmatpush1.msra.mxu0 0.0
    %10729 = vmatprep.subr.mxu0 0.0
    %10730 = vmatpush1.msra.mxu0 0.0
    %10731 = vmatprep.subr.mxu0 0.0
    %10732 = vmatpush1.msra.mxu0 0.0
    %10733 = vmatprep.subr.mxu0 0.0
    %10734 = vmatpush1.msra.mxu0 0.0
    %10735 = vmatprep.subr.mxu0 0.0
    %10736 = vmatpush1.msra.mxu0 0.0
    %10737 = vmatprep.subr.mxu0 0.0
    %10738 = vmatpush1.msra.mxu0 0.0
    %10739 = vmatprep.subr.mxu0 0.0
    %10740 = vmatpush1.msra.mxu0 0.0
    %10741 = vmatprep.subr.mxu0 0.0
    %10742 = vmatpush1.msra.mxu0 0.0
    %10743 = vmatprep.subr.mxu0 0.0
    %10744 = vmatpush1.msra.mxu0 0.0
    %10745 = vmatprep.subr.mxu0 0.0
    %10746 = vmatpush1.msra.mxu0 0.0
    %10747 = vmatprep.subr.mxu0 0.0
    %10748 = vmatpush1.msra.mxu0 0.0
    %10749 = vmatprep.subr.mxu0 0.0
    %10750 = vmatpush1.msra.mxu0 0.0
    %10751 = vmatprep.subr.mxu0 0.0
    %10752 = vmatpush1.msra.mxu0 0.0
    %10753 = vmatprep.subr.mxu0 0.0
    %10754 = vmatpush1.msra.mxu0 0.0
    %10755 = vmatprep.subr.mxu0 0.0
    %10756 = vmatpush1.msra.mxu0 0.0
    %10757 = vmatprep.subr.mxu0 0.0
    %10758 = vmatpush1.msra.mxu0 0.0
    %10759 = vmatprep.subr.mxu0 0.0
    %10760 = vmatpush1.msra.mxu0 0.0
    %10761 = vmatprep.subr.mxu0 0.0
    %10762 = vmatpush1.msra.mxu0 0.0
    %10763 = vmatprep.subr.mxu0 0.0
    %10764 = vmatpush1.msra.mxu0 0.0
    %10765 = vmatprep.subr.mxu0 0.0
    %10766 = vmatpush1.msra.mxu0 0.0
    %10767 = vmatprep.subr.mxu0 0.0
    %10768 = vmatpush1.msra.mxu0 0.0
    %10769 = vmatprep.subr.mxu0 0.0
    %10770 = vmatpush1.msra.mxu0 0.0
    %10771 = vmatprep.subr.mxu0 0.0
    %10772 = vmatpush1.msra.mxu0 0.0
    %10773 = vmatprep.subr.mxu0 0.0
    %10774 = vmatpush1.msra.mxu0 0.0
    %10775 = vmatprep.mubr.f32.mxu0 0.0
    %10776 = vmatmul.mubr.f32.gmra.mrb[0].mxu0 %v10709
    %v10777 = vpop.f32.mrb[0].mxu0
    %v10778 = vadd.f32 %v10195, %v10777
    %v10779 = vpop.f32.mrb[0].mxu0
    %10780 = vdwg.mxu0
    %v10781 = vmul.f32 %v10267, 0.70710677
    %v10782 = vmul.f32 %v10340, 0.70710677
    %v10783 = vmul.f32 %v10413, 0.70710677
    %v10784 = vmul.f32 %v10486, 0.70710677
    %v10785 = vmul.f32 %v10559, 0.70710677
    %v10786 = vmul.f32 %v10632, 0.70710677
    %v10787 = vmul.f32 %v10705, 0.70710677
    %v10788 = vmul.f32 %v10778, 0.70710677
    %v10789 = vand.u32 2147483647, %v10781
    %v10790 = vand.u32 2147483647, %v10782
    %v10791 = vand.u32 2147483647, %v10783
    %v10792 = vand.u32 2147483647, %v10784
    %v10793 = vand.u32 2147483647, %v10785
    %v10794 = vand.u32 2147483647, %v10786
    %v10795 = vand.u32 2147483647, %v10787
    %v10796 = vand.u32 2147483647, %v10788
    %v10797 = vmul.f32 %v10789, 0.3275911
    %v10798 = vmul.f32 %v10790, 0.3275911
    %v10799 = vmul.f32 %v10791, 0.3275911
    %v10800 = vmul.f32 %v10792, 0.3275911
    %v10801 = vmul.f32 %v10793, 0.3275911
    %v10802 = vmul.f32 %v10794, 0.3275911
    %v10803 = vmul.f32 %v10795, 0.3275911
    %v10804 = vmul.f32 %v10796, 0.3275911
    %v10805 = vadd.f32 %v10797, 1.0
    %v10806 = vadd.f32 %v10798, 1.0
    %v10807 = vadd.f32 %v10799, 1.0
    %v10808 = vadd.f32 %v10800, 1.0
    %v10809 = vadd.f32 %v10801, 1.0
    %v10810 = vadd.f32 %v10802, 1.0
    %v10811 = vadd.f32 %v10803, 1.0
    %v10812 = vadd.f32 %v10804, 1.0
    %v10813 = vrcp.pop %v10805
    %v10814 = vmul.f32 1.0, %v10813
    %v10815 = vrcp.pop %v10806
    %v10816 = vmul.f32 1.0, %v10815
    %v10817 = vrcp.pop %v10807
    %v10818 = vmul.f32 1.0, %v10817
    %v10819 = vrcp.pop %v10808
    %v10820 = vmul.f32 1.0, %v10819
    %v10821 = vrcp.pop %v10809
    %v10822 = vmul.f32 1.0, %v10821
    %v10823 = vrcp.pop %v10810
    %v10824 = vmul.f32 1.0, %v10823
    %v10825 = vrcp.pop %v10811
    %v10826 = vmul.f32 1.0, %v10825
    %v10827 = vrcp.pop %v10812
    %v10828 = vmul.f32 1.0, %v10827
    %v10829 = vmul.f32 %v10814, 1.0614054
    %v10830 = vmul.f32 %v10816, 1.0614054
    %v10831 = vmul.f32 %v10818, 1.0614054
    %v10832 = vmul.f32 %v10820, 1.0614054
    %v10833 = vmul.f32 %v10822, 1.0614054
    %v10834 = vmul.f32 %v10824, 1.0614054
    %v10835 = vmul.f32 %v10826, 1.0614054
    %v10836 = vmul.f32 %v10828, 1.0614054
    %v10837 = vadd.f32 %v10829, -1.4531521
    %v10838 = vadd.f32 %v10830, -1.4531521
    %v10839 = vadd.f32 %v10831, -1.4531521
    %v10840 = vadd.f32 %v10832, -1.4531521
    %v10841 = vadd.f32 %v10833, -1.4531521
    %v10842 = vadd.f32 %v10834, -1.4531521
    %v10843 = vadd.f32 %v10835, -1.4531521
    %v10844 = vadd.f32 %v10836, -1.4531521
    %v10845 = vmul.f32 %v10837, %v10814
    %v10846 = vmul.f32 %v10838, %v10816
    %v10847 = vmul.f32 %v10839, %v10818
    %v10848 = vmul.f32 %v10840, %v10820
    %v10849 = vmul.f32 %v10841, %v10822
    %v10850 = vmul.f32 %v10842, %v10824
    %v10851 = vmul.f32 %v10843, %v10826
    %v10852 = vmul.f32 %v10844, %v10828
    %v10853 = vadd.f32 %v10845, 1.4214138
    %v10854 = vadd.f32 %v10846, 1.4214138
    %v10855 = vadd.f32 %v10847, 1.4214138
    %v10856 = vadd.f32 %v10848, 1.4214138
    %v10857 = vadd.f32 %v10849, 1.4214138
    %v10858 = vadd.f32 %v10850, 1.4214138
    %v10859 = vadd.f32 %v10851, 1.4214138
    %v10860 = vadd.f32 %v10852, 1.4214138
    %v10861 = vmul.f32 %v10853, %v10814
    %v10862 = vmul.f32 %v10854, %v10816
    %v10863 = vmul.f32 %v10855, %v10818
    %v10864 = vmul.f32 %v10856, %v10820
    %v10865 = vmul.f32 %v10857, %v10822
    %v10866 = vmul.f32 %v10858, %v10824
    %v10867 = vmul.f32 %v10859, %v10826
    %v10868 = vmul.f32 %v10860, %v10828
    %v10869 = vadd.f32 %v10861, -0.28449672
    %v10870 = vadd.f32 %v10862, -0.28449672
    %v10871 = vadd.f32 %v10863, -0.28449672
    %v10872 = vadd.f32 %v10864, -0.28449672
    %v10873 = vadd.f32 %v10865, -0.28449672
    %v10874 = vadd.f32 %v10866, -0.28449672
    %v10875 = vadd.f32 %v10867, -0.28449672
    %v10876 = vadd.f32 %v10868, -0.28449672
    %v10877 = vmul.f32 %v10869, %v10814
    %v10878 = vmul.f32 %v10870, %v10816
    %v10879 = vmul.f32 %v10871, %v10818
    %v10880 = vmul.f32 %v10872, %v10820
    %v10881 = vmul.f32 %v10873, %v10822
    %v10882 = vmul.f32 %v10874, %v10824
    %v10883 = vmul.f32 %v10875, %v10826
    %v10884 = vmul.f32 %v10876, %v10828
    %v10885 = vadd.f32 %v10877, 0.2548296
    %v10886 = vadd.f32 %v10878, 0.2548296
    %v10887 = vadd.f32 %v10879, 0.2548296
    %v10888 = vadd.f32 %v10880, 0.2548296
    %v10889 = vadd.f32 %v10881, 0.2548296
    %v10890 = vadd.f32 %v10882, 0.2548296
    %v10891 = vadd.f32 %v10883, 0.2548296
    %v10892 = vadd.f32 %v10884, 0.2548296
    %v10893 = vmul.f32 %v10885, %v10814
    %v10894 = vmul.f32 %v10886, %v10816
    %v10895 = vmul.f32 %v10887, %v10818
    %v10896 = vmul.f32 %v10888, %v10820
    %v10897 = vmul.f32 %v10889, %v10822
    %v10898 = vmul.f32 %v10890, %v10824
    %v10899 = vmul.f32 %v10891, %v10826
    %v10900 = vmul.f32 %v10892, %v10828
    %v10901 = vsub.f32 0.0, %v10789
    %v10902 = vsub.f32 0.0, %v10790
    %v10903 = vsub.f32 0.0, %v10791
    %v10904 = vsub.f32 0.0, %v10792
    %v10905 = vsub.f32 0.0, %v10793
    %v10906 = vsub.f32 0.0, %v10794
    %v10907 = vsub.f32 0.0, %v10795
    %v10908 = vsub.f32 0.0, %v10796
    %v10909 = vmul.f32 %v10901, %v10789
    %v10910 = vmul.f32 %v10902, %v10790
    %v10911 = vmul.f32 %v10903, %v10791
    %v10912 = vmul.f32 %v10904, %v10792
    %v10913 = vmul.f32 %v10905, %v10793
    %v10914 = vmul.f32 %v10906, %v10794
    %v10915 = vmul.f32 %v10907, %v10795
    %v10916 = vmul.f32 %v10908, %v10796
    %v10917 = vmul.f32 %v10909, 1.442695
    %v10918 = vpow.pop %v10917
    %v10919 = vmul.f32 %v10910, 1.442695
    %v10920 = vpow.pop %v10919
    %v10921 = vmul.f32 %v10911, 1.442695
    %v10922 = vpow.pop %v10921
    %v10923 = vmul.f32 %v10912, 1.442695
    %v10924 = vpow.pop %v10923
    %v10925 = vmul.f32 %v10913, 1.442695
    %v10926 = vpow.pop %v10925
    %v10927 = vmul.f32 %v10914, 1.442695
    %v10928 = vpow.pop %v10927
    %v10929 = vmul.f32 %v10915, 1.442695
    %v10930 = vpow.pop %v10929
    %v10931 = vmul.f32 %v10916, 1.442695
    %v10932 = vpow.pop %v10931
    %v10933 = vmul.f32 %v10893, %v10918
    %v10934 = vmul.f32 %v10894, %v10920
    %v10935 = vmul.f32 %v10895, %v10922
    %v10936 = vmul.f32 %v10896, %v10924
    %v10937 = vmul.f32 %v10897, %v10926
    %v10938 = vmul.f32 %v10898, %v10928
    %v10939 = vmul.f32 %v10899, %v10930
    %v10940 = vmul.f32 %v10900, %v10932
    %v10941 = vsub.f32 1.0, %v10933
    %v10942 = vsub.f32 1.0, %v10934
    %v10943 = vsub.f32 1.0, %v10935
    %v10944 = vsub.f32 1.0, %v10936
    %v10945 = vsub.f32 1.0, %v10937
    %v10946 = vsub.f32 1.0, %v10938
    %v10947 = vsub.f32 1.0, %v10939
    %v10948 = vsub.f32 1.0, %v10940
    %vm10949 = vcmp.ge.f32.partialorder %v10781, 0.0
    %vm10950 = vcmp.ge.f32.partialorder %v10782, 0.0
    %vm10951 = vcmp.ge.f32.partialorder %v10783, 0.0
    %vm10952 = vcmp.ge.f32.partialorder %v10784, 0.0
    %vm10953 = vcmp.ge.f32.partialorder %v10785, 0.0
    %vm10954 = vcmp.ge.f32.partialorder %v10786, 0.0
    %vm10955 = vcmp.ge.f32.partialorder %v10787, 0.0
    %vm10956 = vcmp.ge.f32.partialorder %v10788, 0.0
    %v10957 = vsub.f32 0.0, %v10941
    %v10958 = vsub.f32 0.0, %v10942
    %v10959 = vsub.f32 0.0, %v10943
    %v10960 = vsub.f32 0.0, %v10944
    %v10961 = vsub.f32 0.0, %v10945
    %v10962 = vsub.f32 0.0, %v10946
    %v10963 = vsub.f32 0.0, %v10947
    %v10964 = vsub.f32 0.0, %v10948
    %v10965 = vsel %vm10949, %v10941, %v10957
    %v10966 = vsel %vm10950, %v10942, %v10958
    %v10967 = vsel %vm10951, %v10943, %v10959
    %v10968 = vsel %vm10952, %v10944, %v10960
    %v10969 = vsel %vm10953, %v10945, %v10961
    %v10970 = vsel %vm10954, %v10946, %v10962
    %v10971 = vsel %vm10955, %v10947, %v10963
    %v10972 = vsel %vm10956, %v10948, %v10964
    %v10973 = vmul.f32 %v10267, 0.5
    %v10974 = vmul.f32 %v10340, 0.5
    %v10975 = vmul.f32 %v10413, 0.5
    %v10976 = vmul.f32 %v10486, 0.5
    %v10977 = vmul.f32 %v10559, 0.5
    %v10978 = vmul.f32 %v10632, 0.5
    %v10979 = vmul.f32 %v10705, 0.5
    %v10980 = vmul.f32 %v10778, 0.5
    %v10981 = vadd.f32 %v10965, 1.0
    %v10982 = vadd.f32 %v10966, 1.0
    %v10983 = vadd.f32 %v10967, 1.0
    %v10984 = vadd.f32 %v10968, 1.0
    %v10985 = vadd.f32 %v10969, 1.0
    %v10986 = vadd.f32 %v10970, 1.0
    %v10987 = vadd.f32 %v10971, 1.0
    %v10988 = vadd.f32 %v10972, 1.0
    %v10989 = vmul.f32 %v10973, %v10981
    %v10990 = vmul.f32 %v10974, %v10982
    %v10991 = vmul.f32 %v10975, %v10983
    %v10992 = vmul.f32 %v10976, %v10984
    %v10993 = vmul.f32 %v10977, %v10985
    %v10994 = vmul.f32 %v10978, %v10986
    %v10995 = vmul.f32 %v10979, %v10987
    %v10996 = vmul.f32 %v10980, %v10988
    %s10997 = scalar_lea.vmem %s11, 1
    %v10998 = vld [vmem:[%s10997] sm:$0x1]
    %v11000 = vlaneseq
    %v11001 = vshrl.u32 %v11000, 7
    %v11002 = vsub.s32 0, %v11001
    %v11003 = vrot.slane %v10998, %v11002
    %v11006 = vsel %vm5668, %v10989, 0
    %11008 = vmatprep.subr.mxu0 0.0
    %11009 = vmatpush1.msra.mxu0 %v336
    %11010 = vmatprep.subr.mxu0 0.0
    %11011 = vmatpush1.msra.mxu0 %v337
    %11012 = vmatprep.subr.mxu0 0.0
    %11013 = vmatpush1.msra.mxu0 %v338
    %11014 = vmatprep.subr.mxu0 0.0
    %11015 = vmatpush1.msra.mxu0 %v339
    %11016 = vmatprep.subr.mxu0 0.0
    %11017 = vmatpush1.msra.mxu0 %v340
    %11018 = vmatprep.subr.mxu0 0.0
    %11019 = vmatpush1.msra.mxu0 %v341
    %11020 = vmatprep.subr.mxu0 0.0
    %11021 = vmatpush1.msra.mxu0 %v342
    %11022 = vmatprep.subr.mxu0 0.0
    %11023 = vmatpush1.msra.mxu0 %v343
    %11024 = vmatprep.subr.mxu0 0.0
    %11025 = vmatpush1.msra.mxu0 0.0
    %11026 = vmatprep.subr.mxu0 0.0
    %11027 = vmatpush1.msra.mxu0 0.0
    %11028 = vmatprep.subr.mxu0 0.0
    %11029 = vmatpush1.msra.mxu0 0.0
    %11030 = vmatprep.subr.mxu0 0.0
    %11031 = vmatpush1.msra.mxu0 0.0
    %11032 = vmatprep.subr.mxu0 0.0
    %11033 = vmatpush1.msra.mxu0 0.0
    %11034 = vmatprep.subr.mxu0 0.0
    %11035 = vmatpush1.msra.mxu0 0.0
    %11036 = vmatprep.subr.mxu0 0.0
    %11037 = vmatpush1.msra.mxu0 0.0
    %11038 = vmatprep.subr.mxu0 0.0
    %11039 = vmatpush1.msra.mxu0 0.0
    %11040 = vmatprep.subr.mxu0 0.0
    %11041 = vmatpush1.msra.mxu0 0.0
    %11042 = vmatprep.subr.mxu0 0.0
    %11043 = vmatpush1.msra.mxu0 0.0
    %11044 = vmatprep.subr.mxu0 0.0
    %11045 = vmatpush1.msra.mxu0 0.0
    %11046 = vmatprep.subr.mxu0 0.0
    %11047 = vmatpush1.msra.mxu0 0.0
    %11048 = vmatprep.subr.mxu0 0.0
    %11049 = vmatpush1.msra.mxu0 0.0
    %11050 = vmatprep.subr.mxu0 0.0
    %11051 = vmatpush1.msra.mxu0 0.0
    %11052 = vmatprep.subr.mxu0 0.0
    %11053 = vmatpush1.msra.mxu0 0.0
    %11054 = vmatprep.subr.mxu0 0.0
    %11055 = vmatpush1.msra.mxu0 0.0
    %11056 = vmatprep.subr.mxu0 0.0
    %11057 = vmatpush1.msra.mxu0 0.0
    %11058 = vmatprep.subr.mxu0 0.0
    %11059 = vmatpush1.msra.mxu0 0.0
    %11060 = vmatprep.subr.mxu0 0.0
    %11061 = vmatpush1.msra.mxu0 0.0
    %11062 = vmatprep.subr.mxu0 0.0
    %11063 = vmatpush1.msra.mxu0 0.0
    %11064 = vmatprep.subr.mxu0 0.0
    %11065 = vmatpush1.msra.mxu0 0.0
    %11066 = vmatprep.subr.mxu0 0.0
    %11067 = vmatpush1.msra.mxu0 0.0
    %11068 = vmatprep.subr.mxu0 0.0
    %11069 = vmatpush1.msra.mxu0 0.0
    %11070 = vmatprep.subr.mxu0 0.0
    %11071 = vmatpush1.msra.mxu0 0.0
    %11072 = vmatprep.mubr.f32.mxu0 0.0
    %11073 = vmatmul.mubr.f32.gmra.mrb[0].mxu0 %v11006
    %v11074 = vpop.f32.mrb[0].mxu0
    %v11075 = vadd.f32 %v11003, %v11074
    %v11076 = vpop.f32.mrb[0].mxu0
    %11077 = vdwg.mxu0
    %v11079 = vsel %vm5668, %v10990, 0
    %11081 = vmatprep.subr.mxu0 0.0
    %11082 = vmatpush1.msra.mxu0 %v336
    %11083 = vmatprep.subr.mxu0 0.0
    %11084 = vmatpush1.msra.mxu0 %v337
    %11085 = vmatprep.subr.mxu0 0.0
    %11086 = vmatpush1.msra.mxu0 %v338
    %11087 = vmatprep.subr.mxu0 0.0
    %11088 = vmatpush1.msra.mxu0 %v339
    %11089 = vmatprep.subr.mxu0 0.0
    %11090 = vmatpush1.msra.mxu0 %v340
    %11091 = vmatprep.subr.mxu0 0.0
    %11092 = vmatpush1.msra.mxu0 %v341
    %11093 = vmatprep.subr.mxu0 0.0
    %11094 = vmatpush1.msra.mxu0 %v342
    %11095 = vmatprep.subr.mxu0 0.0
    %11096 = vmatpush1.msra.mxu0 %v343
    %11097 = vmatprep.subr.mxu0 0.0
    %11098 = vmatpush1.msra.mxu0 0.0
    %11099 = vmatprep.subr.mxu0 0.0
    %11100 = vmatpush1.msra.mxu0 0.0
    %11101 = vmatprep.subr.mxu0 0.0
    %11102 = vmatpush1.msra.mxu0 0.0
    %11103 = vmatprep.subr.mxu0 0.0
    %11104 = vmatpush1.msra.mxu0 0.0
    %11105 = vmatprep.subr.mxu0 0.0
    %11106 = vmatpush1.msra.mxu0 0.0
    %11107 = vmatprep.subr.mxu0 0.0
    %11108 = vmatpush1.msra.mxu0 0.0
    %11109 = vmatprep.subr.mxu0 0.0
    %11110 = vmatpush1.msra.mxu0 0.0
    %11111 = vmatprep.subr.mxu0 0.0
    %11112 = vmatpush1.msra.mxu0 0.0
    %11113 = vmatprep.subr.mxu0 0.0
    %11114 = vmatpush1.msra.mxu0 0.0
    %11115 = vmatprep.subr.mxu0 0.0
    %11116 = vmatpush1.msra.mxu0 0.0
    %11117 = vmatprep.subr.mxu0 0.0
    %11118 = vmatpush1.msra.mxu0 0.0
    %11119 = vmatprep.subr.mxu0 0.0
    %11120 = vmatpush1.msra.mxu0 0.0
    %11121 = vmatprep.subr.mxu0 0.0
    %11122 = vmatpush1.msra.mxu0 0.0
    %11123 = vmatprep.subr.mxu0 0.0
    %11124 = vmatpush1.msra.mxu0 0.0
    %11125 = vmatprep.subr.mxu0 0.0
    %11126 = vmatpush1.msra.mxu0 0.0
    %11127 = vmatprep.subr.mxu0 0.0
    %11128 = vmatpush1.msra.mxu0 0.0
    %11129 = vmatprep.subr.mxu0 0.0
    %11130 = vmatpush1.msra.mxu0 0.0
    %11131 = vmatprep.subr.mxu0 0.0
    %11132 = vmatpush1.msra.mxu0 0.0
    %11133 = vmatprep.subr.mxu0 0.0
    %11134 = vmatpush1.msra.mxu0 0.0
    %11135 = vmatprep.subr.mxu0 0.0
    %11136 = vmatpush1.msra.mxu0 0.0
    %11137 = vmatprep.subr.mxu0 0.0
    %11138 = vmatpush1.msra.mxu0 0.0
    %11139 = vmatprep.subr.mxu0 0.0
    %11140 = vmatpush1.msra.mxu0 0.0
    %11141 = vmatprep.subr.mxu0 0.0
    %11142 = vmatpush1.msra.mxu0 0.0
    %11143 = vmatprep.subr.mxu0 0.0
    %11144 = vmatpush1.msra.mxu0 0.0
    %11145 = vmatprep.mubr.f32.mxu0 0.0
    %11146 = vmatmul.mubr.f32.gmra.mrb[0].mxu0 %v11079
    %v11147 = vpop.f32.mrb[0].mxu0
    %v11148 = vadd.f32 %v11003, %v11147
    %v11149 = vpop.f32.mrb[0].mxu0
    %11150 = vdwg.mxu0
    %v11152 = vsel %vm5668, %v10991, 0
    %11154 = vmatprep.subr.mxu0 0.0
    %11155 = vmatpush1.msra.mxu0 %v336
    %11156 = vmatprep.subr.mxu0 0.0
    %11157 = vmatpush1.msra.mxu0 %v337
    %11158 = vmatprep.subr.mxu0 0.0
    %11159 = vmatpush1.msra.mxu0 %v338
    %11160 = vmatprep.subr.mxu0 0.0
    %11161 = vmatpush1.msra.mxu0 %v339
    %11162 = vmatprep.subr.mxu0 0.0
    %11163 = vmatpush1.msra.mxu0 %v340
    %11164 = vmatprep.subr.mxu0 0.0
    %11165 = vmatpush1.msra.mxu0 %v341
    %11166 = vmatprep.subr.mxu0 0.0
    %11167 = vmatpush1.msra.mxu0 %v342
    %11168 = vmatprep.subr.mxu0 0.0
    %11169 = vmatpush1.msra.mxu0 %v343
    %11170 = vmatprep.subr.mxu0 0.0
    %11171 = vmatpush1.msra.mxu0 0.0
    %11172 = vmatprep.subr.mxu0 0.0
    %11173 = vmatpush1.msra.mxu0 0.0
    %11174 = vmatprep.subr.mxu0 0.0
    %11175 = vmatpush1.msra.mxu0 0.0
    %11176 = vmatprep.subr.mxu0 0.0
    %11177 = vmatpush1.msra.mxu0 0.0
    %11178 = vmatprep.subr.mxu0 0.0
    %11179 = vmatpush1.msra.mxu0 0.0
    %11180 = vmatprep.subr.mxu0 0.0
    %11181 = vmatpush1.msra.mxu0 0.0
    %11182 = vmatprep.subr.mxu0 0.0
    %11183 = vmatpush1.msra.mxu0 0.0
    %11184 = vmatprep.subr.mxu0 0.0
    %11185 = vmatpush1.msra.mxu0 0.0
    %11186 = vmatprep.subr.mxu0 0.0
    %11187 = vmatpush1.msra.mxu0 0.0
    %11188 = vmatprep.subr.mxu0 0.0
    %11189 = vmatpush1.msra.mxu0 0.0
    %11190 = vmatprep.subr.mxu0 0.0
    %11191 = vmatpush1.msra.mxu0 0.0
    %11192 = vmatprep.subr.mxu0 0.0
    %11193 = vmatpush1.msra.mxu0 0.0
    %11194 = vmatprep.subr.mxu0 0.0
    %11195 = vmatpush1.msra.mxu0 0.0
    %11196 = vmatprep.subr.mxu0 0.0
    %11197 = vmatpush1.msra.mxu0 0.0
    %11198 = vmatprep.subr.mxu0 0.0
    %11199 = vmatpush1.msra.mxu0 0.0
    %11200 = vmatprep.subr.mxu0 0.0
    %11201 = vmatpush1.msra.mxu0 0.0
    %11202 = vmatprep.subr.mxu0 0.0
    %11203 = vmatpush1.msra.mxu0 0.0
    %11204 = vmatprep.subr.mxu0 0.0
    %11205 = vmatpush1.msra.mxu0 0.0
    %11206 = vmatprep.subr.mxu0 0.0
    %11207 = vmatpush1.msra.mxu0 0.0
    %11208 = vmatprep.subr.mxu0 0.0
    %11209 = vmatpush1.msra.mxu0 0.0
    %11210 = vmatprep.subr.mxu0 0.0
    %11211 = vmatpush1.msra.mxu0 0.0
    %11212 = vmatprep.subr.mxu0 0.0
    %11213 = vmatpush1.msra.mxu0 0.0
    %11214 = vmatprep.subr.mxu0 0.0
    %11215 = vmatpush1.msra.mxu0 0.0
    %11216 = vmatprep.subr.mxu0 0.0
    %11217 = vmatpush1.msra.mxu0 0.0
    %11218 = vmatprep.mubr.f32.mxu0 0.0
    %11219 = vmatmul.mubr.f32.gmra.mrb[0].mxu0 %v11152
    %v11220 = vpop.f32.mrb[0].mxu0
    %v11221 = vadd.f32 %v11003, %v11220
    %v11222 = vpop.f32.mrb[0].mxu0
    %11223 = vdwg.mxu0
    %v11225 = vsel %vm5668, %v10992, 0
    %11227 = vmatprep.subr.mxu0 0.0
    %11228 = vmatpush1.msra.mxu0 %v336
    %11229 = vmatprep.subr.mxu0 0.0
    %11230 = vmatpush1.msra.mxu0 %v337
    %11231 = vmatprep.subr.mxu0 0.0
    %11232 = vmatpush1.msra.mxu0 %v338
    %11233 = vmatprep.subr.mxu0 0.0
    %11234 = vmatpush1.msra.mxu0 %v339
    %11235 = vmatprep.subr.mxu0 0.0
    %11236 = vmatpush1.msra.mxu0 %v340
    %11237 = vmatprep.subr.mxu0 0.0
    %11238 = vmatpush1.msra.mxu0 %v341
    %11239 = vmatprep.subr.mxu0 0.0
    %11240 = vmatpush1.msra.mxu0 %v342
    %11241 = vmatprep.subr.mxu0 0.0
    %11242 = vmatpush1.msra.mxu0 %v343
    %11243 = vmatprep.subr.mxu0 0.0
    %11244 = vmatpush1.msra.mxu0 0.0
    %11245 = vmatprep.subr.mxu0 0.0
    %11246 = vmatpush1.msra.mxu0 0.0
    %11247 = vmatprep.subr.mxu0 0.0
    %11248 = vmatpush1.msra.mxu0 0.0
    %11249 = vmatprep.subr.mxu0 0.0
    %11250 = vmatpush1.msra.mxu0 0.0
    %11251 = vmatprep.subr.mxu0 0.0
    %11252 = vmatpush1.msra.mxu0 0.0
    %11253 = vmatprep.subr.mxu0 0.0
    %11254 = vmatpush1.msra.mxu0 0.0
    %11255 = vmatprep.subr.mxu0 0.0
    %11256 = vmatpush1.msra.mxu0 0.0
    %11257 = vmatprep.subr.mxu0 0.0
    %11258 = vmatpush1.msra.mxu0 0.0
    %11259 = vmatprep.subr.mxu0 0.0
    %11260 = vmatpush1.msra.mxu0 0.0
    %11261 = vmatprep.subr.mxu0 0.0
    %11262 = vmatpush1.msra.mxu0 0.0
    %11263 = vmatprep.subr.mxu0 0.0
    %11264 = vmatpush1.msra.mxu0 0.0
    %11265 = vmatprep.subr.mxu0 0.0
    %11266 = vmatpush1.msra.mxu0 0.0
    %11267 = vmatprep.subr.mxu0 0.0
    %11268 = vmatpush1.msra.mxu0 0.0
    %11269 = vmatprep.subr.mxu0 0.0
    %11270 = vmatpush1.msra.mxu0 0.0
    %11271 = vmatprep.subr.mxu0 0.0
    %11272 = vmatpush1.msra.mxu0 0.0
    %11273 = vmatprep.subr.mxu0 0.0
    %11274 = vmatpush1.msra.mxu0 0.0
    %11275 = vmatprep.subr.mxu0 0.0
    %11276 = vmatpush1.msra.mxu0 0.0
    %11277 = vmatprep.subr.mxu0 0.0
    %11278 = vmatpush1.msra.mxu0 0.0
    %11279 = vmatprep.subr.mxu0 0.0
    %11280 = vmatpush1.msra.mxu0 0.0
    %11281 = vmatprep.subr.mxu0 0.0
    %11282 = vmatpush1.msra.mxu0 0.0
    %11283 = vmatprep.subr.mxu0 0.0
    %11284 = vmatpush1.msra.mxu0 0.0
    %11285 = vmatprep.subr.mxu0 0.0
    %11286 = vmatpush1.msra.mxu0 0.0
    %11287 = vmatprep.subr.mxu0 0.0
    %11288 = vmatpush1.msra.mxu0 0.0
    %11289 = vmatprep.subr.mxu0 0.0
    %11290 = vmatpush1.msra.mxu0 0.0
    %11291 = vmatprep.mubr.f32.mxu0 0.0
    %11292 = vmatmul.mubr.f32.gmra.mrb[0].mxu0 %v11225
    %v11293 = vpop.f32.mrb[0].mxu0
    %v11294 = vadd.f32 %v11003, %v11293
    %v11295 = vpop.f32.mrb[0].mxu0
    %11296 = vdwg.mxu0
    %v11298 = vsel %vm5668, %v10993, 0
    %11300 = vmatprep.subr.mxu0 0.0
    %11301 = vmatpush1.msra.mxu0 %v336
    %11302 = vmatprep.subr.mxu0 0.0
    %11303 = vmatpush1.msra.mxu0 %v337
    %11304 = vmatprep.subr.mxu0 0.0
    %11305 = vmatpush1.msra.mxu0 %v338
    %11306 = vmatprep.subr.mxu0 0.0
    %11307 = vmatpush1.msra.mxu0 %v339
    %11308 = vmatprep.subr.mxu0 0.0
    %11309 = vmatpush1.msra.mxu0 %v340
    %11310 = vmatprep.subr.mxu0 0.0
    %11311 = vmatpush1.msra.mxu0 %v341
    %11312 = vmatprep.subr.mxu0 0.0
    %11313 = vmatpush1.msra.mxu0 %v342
    %11314 = vmatprep.subr.mxu0 0.0
    %11315 = vmatpush1.msra.mxu0 %v343
    %11316 = vmatprep.subr.mxu0 0.0
    %11317 = vmatpush1.msra.mxu0 0.0
    %11318 = vmatprep.subr.mxu0 0.0
    %11319 = vmatpush1.msra.mxu0 0.0
    %11320 = vmatprep.subr.mxu0 0.0
    %11321 = vmatpush1.msra.mxu0 0.0
    %11322 = vmatprep.subr.mxu0 0.0
    %11323 = vmatpush1.msra.mxu0 0.0
    %11324 = vmatprep.subr.mxu0 0.0
    %11325 = vmatpush1.msra.mxu0 0.0
    %11326 = vmatprep.subr.mxu0 0.0
    %11327 = vmatpush1.msra.mxu0 0.0
    %11328 = vmatprep.subr.mxu0 0.0
    %11329 = vmatpush1.msra.mxu0 0.0
    %11330 = vmatprep.subr.mxu0 0.0
    %11331 = vmatpush1.msra.mxu0 0.0
    %11332 = vmatprep.subr.mxu0 0.0
    %11333 = vmatpush1.msra.mxu0 0.0
    %11334 = vmatprep.subr.mxu0 0.0
    %11335 = vmatpush1.msra.mxu0 0.0
    %11336 = vmatprep.subr.mxu0 0.0
    %11337 = vmatpush1.msra.mxu0 0.0
    %11338 = vmatprep.subr.mxu0 0.0
    %11339 = vmatpush1.msra.mxu0 0.0
    %11340 = vmatprep.subr.mxu0 0.0
    %11341 = vmatpush1.msra.mxu0 0.0
    %11342 = vmatprep.subr.mxu0 0.0
    %11343 = vmatpush1.msra.mxu0 0.0
    %11344 = vmatprep.subr.mxu0 0.0
    %11345 = vmatpush1.msra.mxu0 0.0
    %11346 = vmatprep.subr.mxu0 0.0
    %11347 = vmatpush1.msra.mxu0 0.0
    %11348 = vmatprep.subr.mxu0 0.0
    %11349 = vmatpush1.msra.mxu0 0.0
    %11350 = vmatprep.subr.mxu0 0.0
    %11351 = vmatpush1.msra.mxu0 0.0
    %11352 = vmatprep.subr.mxu0 0.0
    %11353 = vmatpush1.msra.mxu0 0.0
    %11354 = vmatprep.subr.mxu0 0.0
    %11355 = vmatpush1.msra.mxu0 0.0
    %11356 = vmatprep.subr.mxu0 0.0
    %11357 = vmatpush1.msra.mxu0 0.0
    %11358 = vmatprep.subr.mxu0 0.0
    %11359 = vmatpush1.msra.mxu0 0.0
    %11360 = vmatprep.subr.mxu0 0.0
    %11361 = vmatpush1.msra.mxu0 0.0
    %11362 = vmatprep.subr.mxu0 0.0
    %11363 = vmatpush1.msra.mxu0 0.0
    %11364 = vmatprep.mubr.f32.mxu0 0.0
    %11365 = vmatmul.mubr.f32.gmra.mrb[0].mxu0 %v11298
    %v11366 = vpop.f32.mrb[0].mxu0
    %v11367 = vadd.f32 %v11003, %v11366
    %v11368 = vpop.f32.mrb[0].mxu0
    %11369 = vdwg.mxu0
    %v11371 = vsel %vm5668, %v10994, 0
    %11373 = vmatprep.subr.mxu0 0.0
    %11374 = vmatpush1.msra.mxu0 %v336
    %11375 = vmatprep.subr.mxu0 0.0
    %11376 = vmatpush1.msra.mxu0 %v337
    %11377 = vmatprep.subr.mxu0 0.0
    %11378 = vmatpush1.msra.mxu0 %v338
    %11379 = vmatprep.subr.mxu0 0.0
    %11380 = vmatpush1.msra.mxu0 %v339
    %11381 = vmatprep.subr.mxu0 0.0
    %11382 = vmatpush1.msra.mxu0 %v340
    %11383 = vmatprep.subr.mxu0 0.0
    %11384 = vmatpush1.msra.mxu0 %v341
    %11385 = vmatprep.subr.mxu0 0.0
    %11386 = vmatpush1.msra.mxu0 %v342
    %11387 = vmatprep.subr.mxu0 0.0
    %11388 = vmatpush1.msra.mxu0 %v343
    %11389 = vmatprep.subr.mxu0 0.0
    %11390 = vmatpush1.msra.mxu0 0.0
    %11391 = vmatprep.subr.mxu0 0.0
    %11392 = vmatpush1.msra.mxu0 0.0
    %11393 = vmatprep.subr.mxu0 0.0
    %11394 = vmatpush1.msra.mxu0 0.0
    %11395 = vmatprep.subr.mxu0 0.0
    %11396 = vmatpush1.msra.mxu0 0.0
    %11397 = vmatprep.subr.mxu0 0.0
    %11398 = vmatpush1.msra.mxu0 0.0
    %11399 = vmatprep.subr.mxu0 0.0
    %11400 = vmatpush1.msra.mxu0 0.0
    %11401 = vmatprep.subr.mxu0 0.0
    %11402 = vmatpush1.msra.mxu0 0.0
    %11403 = vmatprep.subr.mxu0 0.0
    %11404 = vmatpush1.msra.mxu0 0.0
    %11405 = vmatprep.subr.mxu0 0.0
    %11406 = vmatpush1.msra.mxu0 0.0
    %11407 = vmatprep.subr.mxu0 0.0
    %11408 = vmatpush1.msra.mxu0 0.0
    %11409 = vmatprep.subr.mxu0 0.0
    %11410 = vmatpush1.msra.mxu0 0.0
    %11411 = vmatprep.subr.mxu0 0.0
    %11412 = vmatpush1.msra.mxu0 0.0
    %11413 = vmatprep.subr.mxu0 0.0
    %11414 = vmatpush1.msra.mxu0 0.0
    %11415 = vmatprep.subr.mxu0 0.0
    %11416 = vmatpush1.msra.mxu0 0.0
    %11417 = vmatprep.subr.mxu0 0.0
    %11418 = vmatpush1.msra.mxu0 0.0
    %11419 = vmatprep.subr.mxu0 0.0
    %11420 = vmatpush1.msra.mxu0 0.0
    %11421 = vmatprep.subr.mxu0 0.0
    %11422 = vmatpush1.msra.mxu0 0.0
    %11423 = vmatprep.subr.mxu0 0.0
    %11424 = vmatpush1.msra.mxu0 0.0
    %11425 = vmatprep.subr.mxu0 0.0
    %11426 = vmatpush1.msra.mxu0 0.0
    %11427 = vmatprep.subr.mxu0 0.0
    %11428 = vmatpush1.msra.mxu0 0.0
    %11429 = vmatprep.subr.mxu0 0.0
    %11430 = vmatpush1.msra.mxu0 0.0
    %11431 = vmatprep.subr.mxu0 0.0
    %11432 = vmatpush1.msra.mxu0 0.0
    %11433 = vmatprep.subr.mxu0 0.0
    %11434 = vmatpush1.msra.mxu0 0.0
    %11435 = vmatprep.subr.mxu0 0.0
    %11436 = vmatpush1.msra.mxu0 0.0
    %11437 = vmatprep.mubr.f32.mxu0 0.0
    %11438 = vmatmul.mubr.f32.gmra.mrb[0].mxu0 %v11371
    %v11439 = vpop.f32.mrb[0].mxu0
    %v11440 = vadd.f32 %v11003, %v11439
    %v11441 = vpop.f32.mrb[0].mxu0
    %11442 = vdwg.mxu0
    %v11444 = vsel %vm5668, %v10995, 0
    %11446 = vmatprep.subr.mxu0 0.0
    %11447 = vmatpush1.msra.mxu0 %v336
    %11448 = vmatprep.subr.mxu0 0.0
    %11449 = vmatpush1.msra.mxu0 %v337
    %11450 = vmatprep.subr.mxu0 0.0
    %11451 = vmatpush1.msra.mxu0 %v338
    %11452 = vmatprep.subr.mxu0 0.0
    %11453 = vmatpush1.msra.mxu0 %v339
    %11454 = vmatprep.subr.mxu0 0.0
    %11455 = vmatpush1.msra.mxu0 %v340
    %11456 = vmatprep.subr.mxu0 0.0
    %11457 = vmatpush1.msra.mxu0 %v341
    %11458 = vmatprep.subr.mxu0 0.0
    %11459 = vmatpush1.msra.mxu0 %v342
    %11460 = vmatprep.subr.mxu0 0.0
    %11461 = vmatpush1.msra.mxu0 %v343
    %11462 = vmatprep.subr.mxu0 0.0
    %11463 = vmatpush1.msra.mxu0 0.0
    %11464 = vmatprep.subr.mxu0 0.0
    %11465 = vmatpush1.msra.mxu0 0.0
    %11466 = vmatprep.subr.mxu0 0.0
    %11467 = vmatpush1.msra.mxu0 0.0
    %11468 = vmatprep.subr.mxu0 0.0
    %11469 = vmatpush1.msra.mxu0 0.0
    %11470 = vmatprep.subr.mxu0 0.0
    %11471 = vmatpush1.msra.mxu0 0.0
    %11472 = vmatprep.subr.mxu0 0.0
    %11473 = vmatpush1.msra.mxu0 0.0
    %11474 = vmatprep.subr.mxu0 0.0
    %11475 = vmatpush1.msra.mxu0 0.0
    %11476 = vmatprep.subr.mxu0 0.0
    %11477 = vmatpush1.msra.mxu0 0.0
    %11478 = vmatprep.subr.mxu0 0.0
    %11479 = vmatpush1.msra.mxu0 0.0
    %11480 = vmatprep.subr.mxu0 0.0
    %11481 = vmatpush1.msra.mxu0 0.0
    %11482 = vmatprep.subr.mxu0 0.0
    %11483 = vmatpush1.msra.mxu0 0.0
    %11484 = vmatprep.subr.mxu0 0.0
    %11485 = vmatpush1.msra.mxu0 0.0
    %11486 = vmatprep.subr.mxu0 0.0
    %11487 = vmatpush1.msra.mxu0 0.0
    %11488 = vmatprep.subr.mxu0 0.0
    %11489 = vmatpush1.msra.mxu0 0.0
    %11490 = vmatprep.subr.mxu0 0.0
    %11491 = vmatpush1.msra.mxu0 0.0
    %11492 = vmatprep.subr.mxu0 0.0
    %11493 = vmatpush1.msra.mxu0 0.0
    %11494 = vmatprep.subr.mxu0 0.0
    %11495 = vmatpush1.msra.mxu0 0.0
    %11496 = vmatprep.subr.mxu0 0.0
    %11497 = vmatpush1.msra.mxu0 0.0
    %11498 = vmatprep.subr.mxu0 0.0
    %11499 = vmatpush1.msra.mxu0 0.0
    %11500 = vmatprep.subr.mxu0 0.0
    %11501 = vmatpush1.msra.mxu0 0.0
    %11502 = vmatprep.subr.mxu0 0.0
    %11503 = vmatpush1.msra.mxu0 0.0
    %11504 = vmatprep.subr.mxu0 0.0
    %11505 = vmatpush1.msra.mxu0 0.0
    %11506 = vmatprep.subr.mxu0 0.0
    %11507 = vmatpush1.msra.mxu0 0.0
    %11508 = vmatprep.subr.mxu0 0.0
    %11509 = vmatpush1.msra.mxu0 0.0
    %11510 = vmatprep.mubr.f32.mxu0 0.0
    %11511 = vmatmul.mubr.f32.gmra.mrb[0].mxu0 %v11444
    %v11512 = vpop.f32.mrb[0].mxu0
    %v11513 = vadd.f32 %v11003, %v11512
    %v11514 = vpop.f32.mrb[0].mxu0
    %11515 = vdwg.mxu0
    %v11517 = vsel %vm5668, %v10996, 0
    %11519 = vmatprep.subr.mxu0 0.0
    %11520 = vmatpush1.msra.mxu0 %v336
    %11521 = vmatprep.subr.mxu0 0.0
    %11522 = vmatpush1.msra.mxu0 %v337
    %11523 = vmatprep.subr.mxu0 0.0
    %11524 = vmatpush1.msra.mxu0 %v338
    %11525 = vmatprep.subr.mxu0 0.0
    %11526 = vmatpush1.msra.mxu0 %v339
    %11527 = vmatprep.subr.mxu0 0.0
    %11528 = vmatpush1.msra.mxu0 %v340
    %11529 = vmatprep.subr.mxu0 0.0
    %11530 = vmatpush1.msra.mxu0 %v341
    %11531 = vmatprep.subr.mxu0 0.0
    %11532 = vmatpush1.msra.mxu0 %v342
    %11533 = vmatprep.subr.mxu0 0.0
    %11534 = vmatpush1.msra.mxu0 %v343
    %11535 = vmatprep.subr.mxu0 0.0
    %11536 = vmatpush1.msra.mxu0 0.0
    %11537 = vmatprep.subr.mxu0 0.0
    %11538 = vmatpush1.msra.mxu0 0.0
    %11539 = vmatprep.subr.mxu0 0.0
    %11540 = vmatpush1.msra.mxu0 0.0
    %11541 = vmatprep.subr.mxu0 0.0
    %11542 = vmatpush1.msra.mxu0 0.0
    %11543 = vmatprep.subr.mxu0 0.0
    %11544 = vmatpush1.msra.mxu0 0.0
    %11545 = vmatprep.subr.mxu0 0.0
    %11546 = vmatpush1.msra.mxu0 0.0
    %11547 = vmatprep.subr.mxu0 0.0
    %11548 = vmatpush1.msra.mxu0 0.0
    %11549 = vmatprep.subr.mxu0 0.0
    %11550 = vmatpush1.msra.mxu0 0.0
    %11551 = vmatprep.subr.mxu0 0.0
    %11552 = vmatpush1.msra.mxu0 0.0
    %11553 = vmatprep.subr.mxu0 0.0
    %11554 = vmatpush1.msra.mxu0 0.0
    %11555 = vmatprep.subr.mxu0 0.0
    %11556 = vmatpush1.msra.mxu0 0.0
    %11557 = vmatprep.subr.mxu0 0.0
    %11558 = vmatpush1.msra.mxu0 0.0
    %11559 = vmatprep.subr.mxu0 0.0
    %11560 = vmatpush1.msra.mxu0 0.0
    %11561 = vmatprep.subr.mxu0 0.0
    %11562 = vmatpush1.msra.mxu0 0.0
    %11563 = vmatprep.subr.mxu0 0.0
    %11564 = vmatpush1.msra.mxu0 0.0
    %11565 = vmatprep.subr.mxu0 0.0
    %11566 = vmatpush1.msra.mxu0 0.0
    %11567 = vmatprep.subr.mxu0 0.0
    %11568 = vmatpush1.msra.mxu0 0.0
    %11569 = vmatprep.subr.mxu0 0.0
    %11570 = vmatpush1.msra.mxu0 0.0
    %11571 = vmatprep.subr.mxu0 0.0
    %11572 = vmatpush1.msra.mxu0 0.0
    %11573 = vmatprep.subr.mxu0 0.0
    %11574 = vmatpush1.msra.mxu0 0.0
    %11575 = vmatprep.subr.mxu0 0.0
    %11576 = vmatpush1.msra.mxu0 0.0
    %11577 = vmatprep.subr.mxu0 0.0
    %11578 = vmatpush1.msra.mxu0 0.0
    %11579 = vmatprep.subr.mxu0 0.0
    %11580 = vmatpush1.msra.mxu0 0.0
    %11581 = vmatprep.subr.mxu0 0.0
    %11582 = vmatpush1.msra.mxu0 0.0
    %11583 = vmatprep.mubr.f32.mxu0 0.0
    %11584 = vmatmul.mubr.f32.gmra.mrb[0].mxu0 %v11517
    %v11585 = vpop.f32.mrb[0].mxu0
    %v11586 = vadd.f32 %v11003, %v11585
    %v11587 = vpop.f32.mrb[0].mxu0
    %11588 = vdwg.mxu0
    %v11589 = vadd.f32 %v10181, %v11075
    %v11590 = vadd.f32 %v10182, %v11148
    %v11591 = vadd.f32 %v10183, %v11221
    %v11592 = vadd.f32 %v10184, %v11294
    %v11593 = vadd.f32 %v10185, %v11367
    %v11594 = vadd.f32 %v10186, %v11440
    %v11595 = vadd.f32 %v10187, %v11513
    %v11596 = vadd.f32 %v10188, %v11586
    %v11597 = vmul.f32 %v11589, 0.999995
    %v11598 = vmul.f32 %v11590, 0.999995
    %v11599 = vmul.f32 %v11591, 0.999995
    %v11600 = vmul.f32 %v11592, 0.999995
    %v11601 = vmul.f32 %v11593, 0.999995
    %v11602 = vmul.f32 %v11594, 0.999995
    %v11603 = vmul.f32 %v11595, 0.999995
    %v11604 = vmul.f32 %v11596, 0.999995
    %v11605 = vld [vmem:[%s12] sm:$0xff]
    %v11606 = vld [vmem:[%s12 + $0x8] sm:$0xff]
    %v11607 = vld [vmem:[%s12 + $0x10] sm:$0xff]
    %v11608 = vld [vmem:[%s12 + $0x18] sm:$0xff]
    %v11609 = vld [vmem:[%s12 + $0x20] sm:$0xff]
    %v11610 = vld [vmem:[%s12 + $0x28] sm:$0xff]
    %v11611 = vld [vmem:[%s12 + $0x30] sm:$0xff]
    %v11612 = vld [vmem:[%s12 + $0x38] sm:$0xff]
    %v11621 = vrot.slane %v11597, 1
    %vm11622 = vcmask 1041409
    %v11623 = vsel %vm11622, %v11598, %v11621
    %v11624 = vrot.slane %v11599, 7
    %vm11625 = vcmask 1042434
    %v11626 = vsel %vm11625, %v11624, %v11623
    %v11627 = vrot.slane %v11600, 6
    %vm11628 = vcmask 1043459
    %v11629 = vsel %vm11628, %v11627, %v11626
    %v11630 = vrot.slane %v11601, 5
    %vm11631 = vcmask 1044484
    %v11632 = vsel %vm11631, %v11630, %v11629
    %v11633 = vrot.slane %v11602, 4
    %vm11634 = vcmask 1045509
    %v11635 = vsel %vm11634, %v11633, %v11632
    %v11636 = vrot.slane %v11603, 3
    %vm11637 = vcmask 1046534
    %v11638 = vsel %vm11637, %v11636, %v11635
    %v11639 = vrot.slane %v11604, 2
    %vm11640 = vcmask 1047559
    %v11641 = vsel %vm11640, %v11639, %v11638
    %v11642 = vsel %vm955, %v11641, 0
    %11644 = vmatprep.subr.mxu0 0.0
    %11645 = vmatpush1.msra.mxu0 %v11609
    %11646 = vmatprep.subr.mxu0 0.0
    %11647 = vmatpush1.msra.mxu0 %v11610
    %11648 = vmatprep.subr.mxu0 0.0
    %11649 = vmatpush1.msra.mxu0 %v11611
    %11650 = vmatprep.subr.mxu0 0.0
    %11651 = vmatpush1.msra.mxu0 %v11612
    %11652 = vmatprep.subr.mxu0 0.0
    %11653 = vmatpush1.msra.mxu0 0.0
    %11654 = vmatprep.subr.mxu0 0.0
    %11655 = vmatpush1.msra.mxu0 0.0
    %11656 = vmatprep.subr.mxu0 0.0
    %11657 = vmatpush1.msra.mxu0 0.0
    %11658 = vmatprep.subr.mxu0 0.0
    %11659 = vmatpush1.msra.mxu0 0.0
    %11660 = vmatprep.subr.mxu0 0.0
    %11661 = vmatpush1.msra.mxu0 0.0
    %11662 = vmatprep.subr.mxu0 0.0
    %11663 = vmatpush1.msra.mxu0 0.0
    %11664 = vmatprep.subr.mxu0 0.0
    %11665 = vmatpush1.msra.mxu0 0.0
    %11666 = vmatprep.subr.mxu0 0.0
    %11667 = vmatpush1.msra.mxu0 0.0
    %11668 = vmatprep.subr.mxu0 0.0
    %11669 = vmatpush1.msra.mxu0 0.0
    %11670 = vmatprep.subr.mxu0 0.0
    %11671 = vmatpush1.msra.mxu0 0.0
    %11672 = vmatprep.subr.mxu0 0.0
    %11673 = vmatpush1.msra.mxu0 0.0
    %11674 = vmatprep.subr.mxu0 0.0
    %11675 = vmatpush1.msra.mxu0 0.0
    %11676 = vmatprep.subr.mxu0 0.0
    %11677 = vmatpush1.msra.mxu0 0.0
    %11678 = vmatprep.subr.mxu0 0.0
    %11679 = vmatpush1.msra.mxu0 0.0
    %11680 = vmatprep.subr.mxu0 0.0
    %11681 = vmatpush1.msra.mxu0 0.0
    %11682 = vmatprep.subr.mxu0 0.0
    %11683 = vmatpush1.msra.mxu0 0.0
    %11684 = vmatprep.subr.mxu0 0.0
    %11685 = vmatpush1.msra.mxu0 0.0
    %11686 = vmatprep.subr.mxu0 0.0
    %11687 = vmatpush1.msra.mxu0 0.0
    %11688 = vmatprep.subr.mxu0 0.0
    %11689 = vmatpush1.msra.mxu0 0.0
    %11690 = vmatprep.subr.mxu0 0.0
    %11691 = vmatpush1.msra.mxu0 0.0
    %11692 = vmatprep.subr.mxu0 0.0
    %11693 = vmatpush1.msra.mxu0 0.0
    %11694 = vmatprep.subr.mxu0 0.0
    %11695 = vmatpush1.msra.mxu0 0.0
    %11696 = vmatprep.subr.mxu0 0.0
    %11697 = vmatpush1.msra.mxu0 0.0
    %11698 = vmatprep.subr.mxu0 0.0
    %11699 = vmatpush1.msra.mxu0 0.0
    %11700 = vmatprep.subr.mxu0 0.0
    %11701 = vmatpush1.msra.mxu0 0.0
    %11702 = vmatprep.subr.mxu0 0.0
    %11703 = vmatpush1.msra.mxu0 0.0
    %11704 = vmatprep.subr.mxu0 0.0
    %11705 = vmatpush1.msra.mxu0 0.0
    %11706 = vmatprep.subr.mxu0 0.0
    %11707 = vmatpush1.msra.mxu0 0.0
    %11708 = vmatprep.mubr.f32.mxu0 0.0
    %11709 = vmatmul.mubr.f32.gmra.mrb[0].mxu0 %v11642
    %v11710 = vpop.f32.mrb[0].mxu0
    %v11711 = vadd.f32 0.0, %v11710
    %v11712 = vpop.f32.mrb[0].mxu0
    %11713 = vdwg.mxu0
    %v11714 = vrot.slane %v11598, 7
    %v11715 = vsel %vm11622, %v11714, %v11597
    %v11716 = vrot.slane %v11599, 6
    %v11717 = vsel %vm11625, %v11716, %v11715
    %v11718 = vrot.slane %v11600, 5
    %v11719 = vsel %vm11628, %v11718, %v11717
    %v11720 = vrot.slane %v11601, 4
    %v11721 = vsel %vm11631, %v11720, %v11719
    %v11722 = vrot.slane %v11602, 3
    %v11723 = vsel %vm11634, %v11722, %v11721
    %v11724 = vrot.slane %v11603, 2
    %v11725 = vsel %vm11637, %v11724, %v11723
    %v11726 = vrot.slane %v11604, 1
    %v11727 = vsel %vm11640, %v11726, %v11725
    %v11728 = vsel %vm955, %v11727, 0
    %11730 = vmatprep.subr.mxu0 0.0
    %11731 = vmatpush1.msra.mxu0 %v11605
    %11732 = vmatprep.subr.mxu0 0.0
    %11733 = vmatpush1.msra.mxu0 %v11606
    %11734 = vmatprep.subr.mxu0 0.0
    %11735 = vmatpush1.msra.mxu0 %v11607
    %11736 = vmatprep.subr.mxu0 0.0
    %11737 = vmatpush1.msra.mxu0 %v11608
    %11738 = vmatprep.subr.mxu0 0.0
    %11739 = vmatpush1.msra.mxu0 0.0
    %11740 = vmatprep.subr.mxu0 0.0
    %11741 = vmatpush1.msra.mxu0 0.0
    %11742 = vmatprep.subr.mxu0 0.0
    %11743 = vmatpush1.msra.mxu0 0.0
    %11744 = vmatprep.subr.mxu0 0.0
    %11745 = vmatpush1.msra.mxu0 0.0
    %11746 = vmatprep.subr.mxu0 0.0
    %11747 = vmatpush1.msra.mxu0 0.0
    %11748 = vmatprep.subr.mxu0 0.0
    %11749 = vmatpush1.msra.mxu0 0.0
    %11750 = vmatprep.subr.mxu0 0.0
    %11751 = vmatpush1.msra.mxu0 0.0
    %11752 = vmatprep.subr.mxu0 0.0
    %11753 = vmatpush1.msra.mxu0 0.0
    %11754 = vmatprep.subr.mxu0 0.0
    %11755 = vmatpush1.msra.mxu0 0.0
    %11756 = vmatprep.subr.mxu0 0.0
    %11757 = vmatpush1.msra.mxu0 0.0
    %11758 = vmatprep.subr.mxu0 0.0
    %11759 = vmatpush1.msra.mxu0 0.0
    %11760 = vmatprep.subr.mxu0 0.0
    %11761 = vmatpush1.msra.mxu0 0.0
    %11762 = vmatprep.subr.mxu0 0.0
    %11763 = vmatpush1.msra.mxu0 0.0
    %11764 = vmatprep.subr.mxu0 0.0
    %11765 = vmatpush1.msra.mxu0 0.0
    %11766 = vmatprep.subr.mxu0 0.0
    %11767 = vmatpush1.msra.mxu0 0.0
    %11768 = vmatprep.subr.mxu0 0.0
    %11769 = vmatpush1.msra.mxu0 0.0
    %11770 = vmatprep.subr.mxu0 0.0
    %11771 = vmatpush1.msra.mxu0 0.0
    %11772 = vmatprep.subr.mxu0 0.0
    %11773 = vmatpush1.msra.mxu0 0.0
    %11774 = vmatprep.subr.mxu0 0.0
    %11775 = vmatpush1.msra.mxu0 0.0
    %11776 = vmatprep.subr.mxu0 0.0
    %11777 = vmatpush1.msra.mxu0 0.0
    %11778 = vmatprep.subr.mxu0 0.0
    %11779 = vmatpush1.msra.mxu0 0.0
    %11780 = vmatprep.subr.mxu0 0.0
    %11781 = vmatpush1.msra.mxu0 0.0
    %11782 = vmatprep.subr.mxu0 0.0
    %11783 = vmatpush1.msra.mxu0 0.0
    %11784 = vmatprep.subr.mxu0 0.0
    %11785 = vmatpush1.msra.mxu0 0.0
    %11786 = vmatprep.subr.mxu0 0.0
    %11787 = vmatpush1.msra.mxu0 0.0
    %11788 = vmatprep.subr.mxu0 0.0
    %11789 = vmatpush1.msra.mxu0 0.0
    %11790 = vmatprep.subr.mxu0 0.0
    %11791 = vmatpush1.msra.mxu0 0.0
    %11792 = vmatprep.subr.mxu0 0.0
    %11793 = vmatpush1.msra.mxu0 0.0
    %11794 = vmatprep.mubr.f32.mxu0 0.0
    %11795 = vmatmul.mubr.f32.gmra.mrb[0].mxu0 %v11728
    %v11796 = vpop.f32.mrb[0].mxu0
    %v11797 = vadd.f32 %v11711, %v11796
    %v11798 = vpop.f32.mrb[0].mxu0
    %11799 = vdwg.mxu0
    %v11800 = vld [vmem:[%s12 + $0x40] sm:$0xff]
    %v11801 = vld [vmem:[%s12 + $0x48] sm:$0xff]
    %v11802 = vld [vmem:[%s12 + $0x50] sm:$0xff]
    %v11803 = vld [vmem:[%s12 + $0x58] sm:$0xff]
    %v11804 = vrot.slane %v11597, 2
    %v11805 = vrot.slane %v11598, 1
    %v11806 = vsel %vm11622, %v11805, %v11804
    %v11807 = vsel %vm11625, %v11599, %v11806
    %v11808 = vrot.slane %v11600, 7
    %v11809 = vsel %vm11628, %v11808, %v11807
    %v11810 = vrot.slane %v11601, 6
    %v11811 = vsel %vm11631, %v11810, %v11809
    %v11812 = vrot.slane %v11602, 5
    %v11813 = vsel %vm11634, %v11812, %v11811
    %v11814 = vrot.slane %v11603, 4
    %v11815 = vsel %vm11637, %v11814, %v11813
    %v11816 = vrot.slane %v11604, 3
    %v11817 = vsel %vm11640, %v11816, %v11815
    %v11818 = vsel %vm955, %v11817, 0
    %11820 = vmatprep.subr.mxu0 0.0
    %11821 = vmatpush1.msra.mxu0 %v11800
    %11822 = vmatprep.subr.mxu0 0.0
    %11823 = vmatpush1.msra.mxu0 %v11801
    %11824 = vmatprep.subr.mxu0 0.0
    %11825 = vmatpush1.msra.mxu0 %v11802
    %11826 = vmatprep.subr.mxu0 0.0
    %11827 = vmatpush1.msra.mxu0 %v11803
    %11828 = vmatprep.subr.mxu0 0.0
    %11829 = vmatpush1.msra.mxu0 0.0
    %11830 = vmatprep.subr.mxu0 0.0
    %11831 = vmatpush1.msra.mxu0 0.0
    %11832 = vmatprep.subr.mxu0 0.0
    %11833 = vmatpush1.msra.mxu0 0.0
    %11834 = vmatprep.subr.mxu0 0.0
    %11835 = vmatpush1.msra.mxu0 0.0
    %11836 = vmatprep.subr.mxu0 0.0
    %11837 = vmatpush1.msra.mxu0 0.0
    %11838 = vmatprep.subr.mxu0 0.0
    %11839 = vmatpush1.msra.mxu0 0.0
    %11840 = vmatprep.subr.mxu0 0.0
    %11841 = vmatpush1.msra.mxu0 0.0
    %11842 = vmatprep.subr.mxu0 0.0
    %11843 = vmatpush1.msra.mxu0 0.0
    %11844 = vmatprep.subr.mxu0 0.0
    %11845 = vmatpush1.msra.mxu0 0.0
    %11846 = vmatprep.subr.mxu0 0.0
    %11847 = vmatpush1.msra.mxu0 0.0
    %11848 = vmatprep.subr.mxu0 0.0
    %11849 = vmatpush1.msra.mxu0 0.0
    %11850 = vmatprep.subr.mxu0 0.0
    %11851 = vmatpush1.msra.mxu0 0.0
    %11852 = vmatprep.subr.mxu0 0.0
    %11853 = vmatpush1.msra.mxu0 0.0
    %11854 = vmatprep.subr.mxu0 0.0
    %11855 = vmatpush1.msra.mxu0 0.0
    %11856 = vmatprep.subr.mxu0 0.0
    %11857 = vmatpush1.msra.mxu0 0.0
    %11858 = vmatprep.subr.mxu0 0.0
    %11859 = vmatpush1.msra.mxu0 0.0
    %11860 = vmatprep.subr.mxu0 0.0
    %11861 = vmatpush1.msra.mxu0 0.0
    %11862 = vmatprep.subr.mxu0 0.0
    %11863 = vmatpush1.msra.mxu0 0.0
    %11864 = vmatprep.subr.mxu0 0.0
    %11865 = vmatpush1.msra.mxu0 0.0
    %11866 = vmatprep.subr.mxu0 0.0
    %11867 = vmatpush1.msra.mxu0 0.0
    %11868 = vmatprep.subr.mxu0 0.0
    %11869 = vmatpush1.msra.mxu0 0.0
    %11870 = vmatprep.subr.mxu0 0.0
    %11871 = vmatpush1.msra.mxu0 0.0
    %11872 = vmatprep.subr.mxu0 0.0
    %11873 = vmatpush1.msra.mxu0 0.0
    %11874 = vmatprep.subr.mxu0 0.0
    %11875 = vmatpush1.msra.mxu0 0.0
    %11876 = vmatprep.subr.mxu0 0.0
    %11877 = vmatpush1.msra.mxu0 0.0
    %11878 = vmatprep.subr.mxu0 0.0
    %11879 = vmatpush1.msra.mxu0 0.0
    %11880 = vmatprep.subr.mxu0 0.0
    %11881 = vmatpush1.msra.mxu0 0.0
    %11882 = vmatprep.subr.mxu0 0.0
    %11883 = vmatpush1.msra.mxu0 0.0
    %11884 = vmatprep.mubr.f32.mxu0 0.0
    %11885 = vmatmul.mubr.f32.gmra.mrb[0].mxu0 %v11818
    %v11886 = vpop.f32.mrb[0].mxu0
    %v11887 = vadd.f32 0.0, %v11886
    %v11888 = vpop.f32.mrb[0].mxu0
    %11889 = vdwg.mxu0
    %v11890 = vadd.f32 %v11797, %v11887
    %v11891 = vld [vmem:[%s12 + $0x60] sm:$0xff]
    %v11892 = vld [vmem:[%s12 + $0x68] sm:$0xff]
    %v11893 = vld [vmem:[%s12 + $0x70] sm:$0xff]
    %v11894 = vld [vmem:[%s12 + $0x78] sm:$0xff]
    %v11895 = vrot.slane %v11597, 3
    %v11896 = vrot.slane %v11598, 2
    %v11897 = vsel %vm11622, %v11896, %v11895
    %v11898 = vrot.slane %v11599, 1
    %v11899 = vsel %vm11625, %v11898, %v11897
    %v11900 = vsel %vm11628, %v11600, %v11899
    %v11901 = vrot.slane %v11601, 7
    %v11902 = vsel %vm11631, %v11901, %v11900
    %v11903 = vrot.slane %v11602, 6
    %v11904 = vsel %vm11634, %v11903, %v11902
    %v11905 = vrot.slane %v11603, 5
    %v11906 = vsel %vm11637, %v11905, %v11904
    %v11907 = vrot.slane %v11604, 4
    %v11908 = vsel %vm11640, %v11907, %v11906
    %v11909 = vsel %vm955, %v11908, 0
    %11911 = vmatprep.subr.mxu0 0.0
    %11912 = vmatpush1.msra.mxu0 %v11891
    %11913 = vmatprep.subr.mxu0 0.0
    %11914 = vmatpush1.msra.mxu0 %v11892
    %11915 = vmatprep.subr.mxu0 0.0
    %11916 = vmatpush1.msra.mxu0 %v11893
    %11917 = vmatprep.subr.mxu0 0.0
    %11918 = vmatpush1.msra.mxu0 %v11894
    %11919 = vmatprep.subr.mxu0 0.0
    %11920 = vmatpush1.msra.mxu0 0.0
    %11921 = vmatprep.subr.mxu0 0.0
    %11922 = vmatpush1.msra.mxu0 0.0
    %11923 = vmatprep.subr.mxu0 0.0
    %11924 = vmatpush1.msra.mxu0 0.0
    %11925 = vmatprep.subr.mxu0 0.0
    %11926 = vmatpush1.msra.mxu0 0.0
    %11927 = vmatprep.subr.mxu0 0.0
    %11928 = vmatpush1.msra.mxu0 0.0
    %11929 = vmatprep.subr.mxu0 0.0
    %11930 = vmatpush1.msra.mxu0 0.0
    %11931 = vmatprep.subr.mxu0 0.0
    %11932 = vmatpush1.msra.mxu0 0.0
    %11933 = vmatprep.subr.mxu0 0.0
    %11934 = vmatpush1.msra.mxu0 0.0
    %11935 = vmatprep.subr.mxu0 0.0
    %11936 = vmatpush1.msra.mxu0 0.0
    %11937 = vmatprep.subr.mxu0 0.0
    %11938 = vmatpush1.msra.mxu0 0.0
    %11939 = vmatprep.subr.mxu0 0.0
    %11940 = vmatpush1.msra.mxu0 0.0
    %11941 = vmatprep.subr.mxu0 0.0
    %11942 = vmatpush1.msra.mxu0 0.0
    %11943 = vmatprep.subr.mxu0 0.0
    %11944 = vmatpush1.msra.mxu0 0.0
    %11945 = vmatprep.subr.mxu0 0.0
    %11946 = vmatpush1.msra.mxu0 0.0
    %11947 = vmatprep.subr.mxu0 0.0
    %11948 = vmatpush1.msra.mxu0 0.0
    %11949 = vmatprep.subr.mxu0 0.0
    %11950 = vmatpush1.msra.mxu0 0.0
    %11951 = vmatprep.subr.mxu0 0.0
    %11952 = vmatpush1.msra.mxu0 0.0
    %11953 = vmatprep.subr.mxu0 0.0
    %11954 = vmatpush1.msra.mxu0 0.0
    %11955 = vmatprep.subr.mxu0 0.0
    %11956 = vmatpush1.msra.mxu0 0.0
    %11957 = vmatprep.subr.mxu0 0.0
    %11958 = vmatpush1.msra.mxu0 0.0
    %11959 = vmatprep.subr.mxu0 0.0
    %11960 = vmatpush1.msra.mxu0 0.0
    %11961 = vmatprep.subr.mxu0 0.0
    %11962 = vmatpush1.msra.mxu0 0.0
    %11963 = vmatprep.subr.mxu0 0.0
    %11964 = vmatpush1.msra.mxu0 0.0
    %11965 = vmatprep.subr.mxu0 0.0
    %11966 = vmatpush1.msra.mxu0 0.0
    %11967 = vmatprep.subr.mxu0 0.0
    %11968 = vmatpush1.msra.mxu0 0.0
    %11969 = vmatprep.subr.mxu0 0.0
    %11970 = vmatpush1.msra.mxu0 0.0
    %11971 = vmatprep.subr.mxu0 0.0
    %11972 = vmatpush1.msra.mxu0 0.0
    %11973 = vmatprep.subr.mxu0 0.0
    %11974 = vmatpush1.msra.mxu0 0.0
    %11975 = vmatprep.mubr.f32.mxu0 0.0
    %11976 = vmatmul.mubr.f32.gmra.mrb[0].mxu0 %v11909
    %v11977 = vpop.f32.mrb[0].mxu0
    %v11978 = vadd.f32 0.0, %v11977
    %v11979 = vpop.f32.mrb[0].mxu0
    %11980 = vdwg.mxu0
    %v11981 = vadd.f32 %v11890, %v11978
    %v11982 = vld [vmem:[%s12 + $0x80] sm:$0xff]
    %v11983 = vld [vmem:[%s12 + $0x88] sm:$0xff]
    %v11984 = vld [vmem:[%s12 + $0x90] sm:$0xff]
    %v11985 = vld [vmem:[%s12 + $0x98] sm:$0xff]
    %v11986 = vrot.slane %v11597, 4
    %v11987 = vrot.slane %v11598, 3
    %v11988 = vsel %vm11622, %v11987, %v11986
    %v11989 = vrot.slane %v11599, 2
    %v11990 = vsel %vm11625, %v11989, %v11988
    %v11991 = vrot.slane %v11600, 1
    %v11992 = vsel %vm11628, %v11991, %v11990
    %v11993 = vsel %vm11631, %v11601, %v11992
    %v11994 = vrot.slane %v11602, 7
    %v11995 = vsel %vm11634, %v11994, %v11993
    %v11996 = vrot.slane %v11603, 6
    %v11997 = vsel %vm11637, %v11996, %v11995
    %v11998 = vrot.slane %v11604, 5
    %v11999 = vsel %vm11640, %v11998, %v11997
    %v12000 = vsel %vm955, %v11999, 0
    %12002 = vmatprep.subr.mxu0 0.0
    %12003 = vmatpush1.msra.mxu0 %v11982
    %12004 = vmatprep.subr.mxu0 0.0
    %12005 = vmatpush1.msra.mxu0 %v11983
    %12006 = vmatprep.subr.mxu0 0.0
    %12007 = vmatpush1.msra.mxu0 %v11984
    %12008 = vmatprep.subr.mxu0 0.0
    %12009 = vmatpush1.msra.mxu0 %v11985
    %12010 = vmatprep.subr.mxu0 0.0
    %12011 = vmatpush1.msra.mxu0 0.0
    %12012 = vmatprep.subr.mxu0 0.0
    %12013 = vmatpush1.msra.mxu0 0.0
    %12014 = vmatprep.subr.mxu0 0.0
    %12015 = vmatpush1.msra.mxu0 0.0
    %12016 = vmatprep.subr.mxu0 0.0
    %12017 = vmatpush1.msra.mxu0 0.0
    %12018 = vmatprep.subr.mxu0 0.0
    %12019 = vmatpush1.msra.mxu0 0.0
    %12020 = vmatprep.subr.mxu0 0.0
    %12021 = vmatpush1.msra.mxu0 0.0
    %12022 = vmatprep.subr.mxu0 0.0
    %12023 = vmatpush1.msra.mxu0 0.0
    %12024 = vmatprep.subr.mxu0 0.0
    %12025 = vmatpush1.msra.mxu0 0.0
    %12026 = vmatprep.subr.mxu0 0.0
    %12027 = vmatpush1.msra.mxu0 0.0
    %12028 = vmatprep.subr.mxu0 0.0
    %12029 = vmatpush1.msra.mxu0 0.0
    %12030 = vmatprep.subr.mxu0 0.0
    %12031 = vmatpush1.msra.mxu0 0.0
    %12032 = vmatprep.subr.mxu0 0.0
    %12033 = vmatpush1.msra.mxu0 0.0
    %12034 = vmatprep.subr.mxu0 0.0
    %12035 = vmatpush1.msra.mxu0 0.0
    %12036 = vmatprep.subr.mxu0 0.0
    %12037 = vmatpush1.msra.mxu0 0.0
    %12038 = vmatprep.subr.mxu0 0.0
    %12039 = vmatpush1.msra.mxu0 0.0
    %12040 = vmatprep.subr.mxu0 0.0
    %12041 = vmatpush1.msra.mxu0 0.0
    %12042 = vmatprep.subr.mxu0 0.0
    %12043 = vmatpush1.msra.mxu0 0.0
    %12044 = vmatprep.subr.mxu0 0.0
    %12045 = vmatpush1.msra.mxu0 0.0
    %12046 = vmatprep.subr.mxu0 0.0
    %12047 = vmatpush1.msra.mxu0 0.0
    %12048 = vmatprep.subr.mxu0 0.0
    %12049 = vmatpush1.msra.mxu0 0.0
    %12050 = vmatprep.subr.mxu0 0.0
    %12051 = vmatpush1.msra.mxu0 0.0
    %12052 = vmatprep.subr.mxu0 0.0
    %12053 = vmatpush1.msra.mxu0 0.0
    %12054 = vmatprep.subr.mxu0 0.0
    %12055 = vmatpush1.msra.mxu0 0.0
    %12056 = vmatprep.subr.mxu0 0.0
    %12057 = vmatpush1.msra.mxu0 0.0
    %12058 = vmatprep.subr.mxu0 0.0
    %12059 = vmatpush1.msra.mxu0 0.0
    %12060 = vmatprep.subr.mxu0 0.0
    %12061 = vmatpush1.msra.mxu0 0.0
    %12062 = vmatprep.subr.mxu0 0.0
    %12063 = vmatpush1.msra.mxu0 0.0
    %12064 = vmatprep.subr.mxu0 0.0
    %12065 = vmatpush1.msra.mxu0 0.0
    %12066 = vmatprep.mubr.f32.mxu0 0.0
    %12067 = vmatmul.mubr.f32.gmra.mrb[0].mxu0 %v12000
    %v12068 = vpop.f32.mrb[0].mxu0
    %v12069 = vadd.f32 0.0, %v12068
    %v12070 = vpop.f32.mrb[0].mxu0
    %12071 = vdwg.mxu0
    %v12072 = vadd.f32 %v11981, %v12069
    %v12073 = vld [vmem:[%s13] sm:$0x1]
    %v12075 = vlaneseq
    %v12076 = vshrl.u32 %v12075, 7
    %v12077 = vsub.s32 0, %v12076
    %v12078 = vrot.slane %v12073, %v12077
    %v12080 = vadd.f32 %v12072, %v12078
    %v12081 = vmul.f32 %v12080, %v68
    %v12082 = vadd.f32 %v12081, %v54
    %vm12083 = vcmask 64512
    %12084 = vst.msk [vmem:[#allocation2] sm:$0xff] %vm12083, %v12082
    // Predicated region
    $region58: #{mftnet_forward.1} parent=1 // pred_check
      _
    $region59: #{mftnet_forward.1} parent=1 // pred_check_branch
      %12086 = sbr.rel (0) target = $region61
    $region60: #{mftnet_forward.1} parent=1 // pred_region
      %s12088 = ssub.s32 128, 128
      %12089 = vsyncadd [#allocation3], %s12088
      %s12091 = sshll.u32 [#allocation2], 4
      %s12092 = int_to_ptr.vmem [resolvable:$true] %s12091
      %12094 = dma.vmem_to_hbm [thread:$0]  %s12092, 128, %s14, [#allocation3]
    $region61: #{mftnet_forward.1} parent=1 // pred_fallthru
      _
    // Predicated region
    $region62: #{mftnet_forward.1} parent=1 // pred_check
      _
    $region63: #{mftnet_forward.1} parent=1 // pred_check_branch
      %12096 = sbr.rel (0) target = $region65
    $region64: #{mftnet_forward.1} parent=1 // pred_region
      %12097 = dma.done [#allocation3], 128
    $region65: #{mftnet_forward.1} parent=1 // pred_fallthru
      _
    %12098 = vsyncpa [#allocation3], 1

</llo_original>
